<compile_context>
chip_gen: v6e
topology: v6e:2x2x1
jax: 0.10.0
libtpu: 0.0.40
codegen_flags: <defaults>
</compile_context>

<pallas_src>
import functools

import jax
import jax.numpy as jnp
from jax import lax
from jax.experimental import pallas as pl
from jax.experimental.pallas import tpu as pltpu


def _round_up(x, m):
    return (x + m - 1) // m * m


def _cdiv(a, b):
    return -(-a // b)


def clam_kernel(h_ref, w1_ref, b1_ref, wab_ref, bab_ref, wc_ref, bc_ref,
                araw_ref, m_ref, l_ref, acc_ref, *,
                n_valid, block_n, blocks_per_core, l1, l2, needs_mask):
    c = pl.program_id(0)        # core-split index ("parallel")
    i = pl.program_id(1)        # instance-block index within this core ("arbitrary")

    @pl.when(i == 0)
    def _init():
        # Finite sentinel (not -inf) so alpha = exp(m_prev - m_new) never hits inf-inf.
        m_ref[0] = jnp.full((1, 1), -1e30, jnp.float32)
        l_ref[0] = jnp.zeros((1, 1), jnp.float32)
        acc_ref[0] = jnp.zeros((1, l1), jnp.float32)

    # ---- fc: Linear(L_in, 512) + ReLU  (Dropout = identity at inference) ----
    h_blk = h_ref[...].astype(jnp.bfloat16)
    h1 = jnp.maximum(
        jnp.dot(h_blk, w1_ref[...], preferred_element_type=jnp.float32)
        + b1_ref[...], 0.0)                                      # (BN, 512) f32

    if needs_mask:
        # Rows past the end of the bag (ragged last block / phantom block of the
        # core split) carry stale VMEM data -> zero them so neither the pooling
        # contraction nor the softmax ever sees them (avoids 0 * inf/NaN).
        row = (lax.broadcasted_iota(jnp.int32, (block_n, 1), 0)
               + (c * blocks_per_core + i) * block_n)
        valid = row < n_valid
        h1 = jnp.where(valid, h1, 0.0)

    h1_b = h1.astype(jnp.bfloat16)

    # ---- Attn_Net_Gated with fused [attention_a | attention_b] weights ----
    ab = (jnp.dot(h1_b, wab_ref[...], preferred_element_type=jnp.float32)
          + bab_ref[...])                                        # (BN, 2*L2) f32
    a = jnp.tanh(ab[:, :l2])
    b = jax.nn.sigmoid(ab[:, l2:])
    g = (a * b).astype(jnp.bfloat16)                             # (BN, L2)
    s_col = (jnp.dot(g, wc_ref[...], preferred_element_type=jnp.float32)
             + bc_ref[...])                                      # (BN, 1) raw scores
    araw_ref[...] = s_col                                        # rows >= N sliced on host

    s_m = jnp.where(valid, s_col, -1e30) if needs_mask else s_col

    # ---- online (flash-style) softmax over the instance axis, per core ----
    m_prev = m_ref[0]                                            # (1, 1)
    m_new = jnp.maximum(m_prev, jnp.max(s_m, axis=0, keepdims=True))
    alpha = jnp.exp(m_prev - m_new)
    p = jnp.exp(s_m - m_new)                                     # (BN, 1) f32
    l_ref[0] = alpha * l_ref[0] + jnp.sum(p, axis=0, keepdims=True)
    # (BN,1)^T @ (BN,512): contraction over the instance axis, kept in f32
    # (tiny matmul; avoids bf16 rounding of the attention weights).
    acc_ref[0] = alpha * acc_ref[0] + lax.dot_general(
        p, h1, dimension_numbers=(((0,), (0,)), ((), ())),
        preferred_element_type=jnp.float32)                      # (1, 512)
    m_ref[0] = m_new


def _vmem_bytes_per_step(bn, l_in, l1, l2, h_itemsize):
    """Rough per-grid-step VMEM working set (flat sum, conservative)."""
    h_dbuf = 2 * bn * l_in * h_itemsize                # double-buffered h block
    weights = (l_in * l1 + l1 * 2 * l2 + l2) * 2 + (l1 + 2 * l2 + 1) * 4
    inter = bn * (l_in * 2          # h cast to bf16
                  + l1 * 6          # h1 f32 + h1 bf16
                  + 2 * l2 * 8      # ab pre-activations + a/b f32
                  + l2 * 2          # g bf16
                  + 16)             # score / p / mask columns
    outs = 2 * bn * 4 + (l1 + 2) * 4
    return h_dbuf + weights + inter + outs


def _pick_block_n(l_in, l1, l2, h_itemsize):
    try:
        vmem_cap = int(pltpu.get_tpu_info().vmem_capacity_bytes)
    except Exception:
        vmem_cap = 64 << 20          # conservative default (v7x per-TensorCore VMEM)
    budget = int(vmem_cap * 0.7)
    bn = 128
    for cand in (256, 512, 1024, 2048, 4096):
        if _vmem_bytes_per_step(cand, l_in, l1, l2, h_itemsize) <= budget:
            bn = cand
    return bn, vmem_cap


def clam_forward(h, params, *, block_n=None, attention_only=False):
    """Returns (logits, Y_prob, Y_hat, A_raw, results_dict) like CLAM.forward."""
    if h.ndim == 3:
        assert h.shape[0] == 1, "CLAM squeezes a leading batch dim of 1"
        h = jnp.squeeze(h, axis=0)
    N, L_in = h.shape
    L1 = params["w1"].shape[1]
    L2 = params["wa"].shape[1]
    C = params["wcls"].shape[1]
    f32, bf16 = jnp.float32, jnp.bfloat16
    h_itemsize = jnp.dtype(h.dtype).itemsize

    auto_bn, vmem_cap = _pick_block_n(L_in, L1, L2, h_itemsize)
    if block_n is None:
        block_n = auto_bn
    block_n = max(128, _round_up(min(block_n, _round_up(N, 128)), 128))

    n_blocks = _cdiv(N, block_n)
    # 2-way split of the instance loop across TensorCores (v7x); on single-core
    # chips the two partitions just run sequentially on one core.
    num_splits = 2 if n_blocks >= 2 else 1
    blocks_per_core = _cdiv(n_blocks, num_splits)
    grid = (num_splits, blocks_per_core)
    n_rows_out = num_splits * blocks_per_core * block_n
    needs_mask = (N % block_n != 0) or (num_splits * blocks_per_core != n_blocks)

    # Fused [attention_a | attention_b] weights; bf16 matmul operands, f32 biases.
    wab = jnp.concatenate([params["wa"], params["wb"]], axis=1).astype(bf16)
    bab = jnp.concatenate([params["ba"], params["bb"]], axis=1).astype(f32)
    args = (h,
            params["w1"].astype(bf16), params["b1"].astype(f32),
            wab, bab,
            params["wc"].astype(bf16), params["bc"].astype(f32))

    est = _vmem_bytes_per_step(block_n, L_in, L1, L2, h_itemsize)
    vmem_limit = int(min(max(est * 1.4 + (8 << 20), 48 << 20), vmem_cap * 0.85))
    vmem_limit = max(vmem_limit, 32 << 20)

    flops = n_rows_out * (2 * L_in * L1 + 4 * L1 * L2 + 2 * L2 + 2 * L1)
    transcendentals = n_rows_out * (2 * L2 + 2)
    bytes_accessed = (N * L_in * h_itemsize + n_rows_out * 4
                      + (L_in * L1 + 2 * L1 * L2 + L2) * 2 + (L1 + 2 * L2 + 1) * 4
                      + num_splits * (L1 + 2) * 4)

    kernel = functools.partial(
        clam_kernel, n_valid=N, block_n=block_n, blocks_per_core=blocks_per_core,
        l1=L1, l2=L2, needs_mask=needs_mask)

    out_shape = (
        jax.ShapeDtypeStruct((n_rows_out, 1), f32),         # raw attention scores
        jax.ShapeDtypeStruct((num_splits, 1, 1), f32),      # per-core running max
        jax.ShapeDtypeStruct((num_splits, 1, 1), f32),      # per-core running sum
        jax.ShapeDtypeStruct((num_splits, 1, L1), f32),     # per-core pooled accumulator
    )
    out_specs = (
        pl.BlockSpec((block_n, 1), lambda c, i: (c * blocks_per_core + i, 0)),
        pl.BlockSpec((1, 1, 1), lambda c, i: (c, 0, 0)),
        pl.BlockSpec((1, 1, 1), lambda c, i: (c, 0, 0)),
        pl.BlockSpec((1, 1, L1), lambda c, i: (c, 0, 0)),
    )

    def h_index(c, i):
        blk = c * blocks_per_core + i
        return (jnp.minimum(blk, n_blocks - 1), 0)          # clamp the phantom block

    def run(single_buffer_weights):
        if single_buffer_weights:
            def const(shape):
                return pl.BlockSpec(shape, lambda c, i: (0, 0),
                                    pipeline_mode=pl.Buffered(1))
        else:
            def const(shape):
                return pl.BlockSpec(shape, lambda c, i: (0, 0))
        in_specs = [
            pl.BlockSpec((block_n, L_in), h_index),          # h: streamed per block
            const((L_in, L1)), const((1, L1)),               # fc
            const((L1, 2 * L2)), const((1, 2 * L2)),         # fused attention_a|b
            const((L2, 1)), const((1, 1)),                   # attention_c
        ]
        return pl.pallas_call(
            kernel,
            out_shape=out_shape,
            grid=grid,
            in_specs=in_specs,
            out_specs=out_specs,
            compiler_params=pltpu.CompilerParams(
                dimension_semantics=("parallel", "arbitrary"),
                vmem_limit_bytes=vmem_limit),
            cost_estimate=pl.CostEstimate(
                flops=int(flops), transcendentals=int(transcendentals),
                bytes_accessed=int(bytes_accessed)),
        )(*args)

    try:
        a_raw_col, m_part, l_part, acc_part = run(True)
    except Exception:
        # Fallback if pipeline_mode / Buffered(1) is unsupported in this JAX build.
        a_raw_col, m_part, l_part, acc_part = run(False)

    A_raw = a_raw_col[:N].T                                  # (1, N) as in torch
    if attention_only:
        return A_raw

    # ---- merge per-core online-softmax partials (tiny, plain JAX) ----
    m_p = m_part[:, 0, 0]                                    # (num_splits,)
    l_p = l_part[:, 0, 0]
    acc_p = acc_part[:, 0, :]                                # (num_splits, L1)
    m_star = jnp.max(m_p)
    w = jnp.exp(m_p - m_star)                                # empty partials -> exp(-huge) = 0
    l_tot = jnp.sum(w * l_p)
    M = jnp.sum(w[:, None] * acc_p, axis=0, keepdims=True) / l_tot   # (1, 512) f32

    # ---- bag classifier + softmax ((1,512)x(512,C): negligible, plain f32) ----
    logits = M @ params["wcls"].astype(f32) + params["bcls"].astype(f32)
    Y_prob = jax.nn.softmax(logits, axis=1)
    Y_hat = jnp.argmax(logits, axis=1, keepdims=True).astype(jnp.int32)
    results_dict = {"features": M}                           # as with return_features=True
    return logits, Y_prob, Y_hat, A_raw, results_dict


def _reference_forward(h, p):
    """Pure-JAX reference with the same precision choices as the kernel."""
    f32, bf = jnp.float32, jnp.bfloat16
    c = lambda x: x.astype(bf)
    h1 = jnp.maximum(
        jnp.dot(c(h), c(p["w1"]), preferred_element_type=f32) + p["b1"], 0.0)
    h1b = c(h1)
    a = jnp.tanh(jnp.dot(h1b, c(p["wa"]), preferred_element_type=f32) + p["ba"])
    b = jax.nn.sigmoid(jnp.dot(h1b, c(p["wb"]), preferred_element_type=f32) + p["bb"])
    g = c(a * b)
    A = jnp.dot(g, c(p["wc"]), preferred_element_type=f32) + p["bc"]   # (N, 1)
    A_raw = A.T
    attn = jax.nn.softmax(A_raw, axis=1)
    M = jnp.dot(attn, h1)                                              # f32 pooling
    logits = M @ p["wcls"] + p["bcls"]
    return logits, jax.nn.softmax(logits, axis=1), A_raw, M


def make_params(key, input_dim, n_classes, size_arg="small"):
    size_dict = {"small": [input_dim, 512, 256], "big": [input_dim, 512, 384]}
    L_in, L1, L2 = size_dict[size_arg]
    ks = jax.random.split(key, 6)

    def lin(k, fan_in, fan_out):
        kw, kb = jax.random.split(k)
        lim = 1.0 / jnp.sqrt(fan_in)
        w = jax.random.uniform(kw, (fan_in, fan_out), jnp.float32, -lim, lim)
        b = jax.random.uniform(kb, (1, fan_out), jnp.float32, -lim, lim)
        return w, b

    w1, b1 = lin(ks[0], L_in, L1)            # fc Linear(input_dim, 512)
    wa, ba = lin(ks[1], L1, L2)              # attention_a Linear(512, 256)
    wb, bb = lin(ks[2], L1, L2)              # attention_b Linear(512, 256)
    wc, bc = lin(ks[3], L2, 1)               # attention_c Linear(256, 1)
    wcls, bcls = lin(ks[4], L1, n_classes)   # classifiers Linear(512, n_classes)
    return {"w1": w1, "b1": b1, "wa": wa, "ba": ba, "wb": wb, "bb": bb,
            "wc": wc, "bc": bc, "wcls": wcls, "bcls": bcls}


if __name__ == "__main__":
    key = jax.random.PRNGKey(0)
    k_param, k_data = jax.random.split(key)

    N = 700             # instances: not a block multiple, odd block count
    input_dim = 256     # small synthetic embedding dim
    n_classes = 2

    params = make_params(k_param, input_dim, n_classes, size_arg="small")
    h = jax.random.normal(k_data, (N, input_dim), jnp.float32)

    # Forced small block: exercises the 2-way core split, the ragged last block
    # and the fully-masked phantom block of the odd block count.
    logits, y_prob, y_hat, a_raw, res = clam_forward(h, params, block_n=256)
    jax.block_until_ready((logits, y_prob, y_hat, a_raw, res["features"]))

    ref_logits, ref_prob, ref_araw, ref_M = _reference_forward(h, params)
    assert logits.shape == (1, n_classes) and y_prob.shape == (1, n_classes)
    assert y_hat.shape == (1, 1) and a_raw.shape == (1, N)
    assert jnp.allclose(a_raw, ref_araw, atol=5e-3, rtol=1e-2), "A_raw mismatch"
    assert jnp.allclose(res["features"], ref_M, atol=1e-2, rtol=2e-2), "M mismatch"
    assert jnp.allclose(logits, ref_logits, atol=2e-2, rtol=2e-2), "logits mismatch"
    assert jnp.allclose(y_prob, ref_prob, atol=1e-2, rtol=2e-2), "Y_prob mismatch"

    # Auto-tuned block size path (VMEM-capacity aware; single block here).
    logits2, y_prob2, _, a_raw2, _ = clam_forward(h, params)
    jax.block_until_ready((logits2, y_prob2, a_raw2))
    assert jnp.allclose(a_raw2, ref_araw, atol=5e-3, rtol=1e-2), "A_raw mismatch (auto)"
    assert jnp.allclose(logits2, ref_logits, atol=2e-2, rtol=2e-2), "logits mismatch (auto)"

    print("KERNEL_OK")
</pallas_src>

<mosaic_0001>
module attributes {stable_mosaic.version = 11 : i64} {
  func.func @clam_kernel(%arg0: i32, %arg1: i32, %arg2: memref<256x256xf32, #tpu.memory_space<vmem>>, %arg3: memref<256x512xbf16, #tpu.memory_space<vmem>>, %arg4: memref<1x512xf32, #tpu.memory_space<vmem>>, %arg5: memref<512x512xbf16, #tpu.memory_space<vmem>>, %arg6: memref<1x512xf32, #tpu.memory_space<vmem>>, %arg7: memref<256x1xbf16, #tpu.memory_space<vmem>>, %arg8: memref<1x1xf32, #tpu.memory_space<vmem>>, %arg9: memref<256x1xf32, #tpu.memory_space<vmem>>, %arg10: memref<1x1x1xf32, #tpu.memory_space<vmem>>, %arg11: memref<1x1x1xf32, #tpu.memory_space<vmem>>, %arg12: memref<1x1x512xf32, #tpu.memory_space<vmem>>) attributes {dimension_semantics = [#tpu.dimension_semantics<parallel>, #tpu.dimension_semantics<arbitrary>], iteration_bounds = array<i64: 2, 2>, scalar_prefetch = 0 : i64, scratch_operands = 0 : i64, tpu.core_type = #tpu.core_type<tc>, window_params = [{transform_indices = @transform_0, window_bounds = array<i64: 256, 256>}, {pipeline_mode = #tpu.pipeline_mode<synchronous>, transform_indices = @transform_1, window_bounds = array<i64: 256, 512>}, {pipeline_mode = #tpu.pipeline_mode<synchronous>, transform_indices = @transform_2, window_bounds = array<i64: 1, 512>}, {pipeline_mode = #tpu.pipeline_mode<synchronous>, transform_indices = @transform_3, window_bounds = array<i64: 512, 512>}, {pipeline_mode = #tpu.pipeline_mode<synchronous>, transform_indices = @transform_4, window_bounds = array<i64: 1, 512>}, {pipeline_mode = #tpu.pipeline_mode<synchronous>, transform_indices = @transform_5, window_bounds = array<i64: 256, 1>}, {pipeline_mode = #tpu.pipeline_mode<synchronous>, transform_indices = @transform_6, window_bounds = array<i64: 1, 1>}, {transform_indices = @transform_7, window_bounds = array<i64: 256, 1>}, {transform_indices = @transform_8, window_bounds = array<i64: 1, 1, 1>}, {transform_indices = @transform_9, window_bounds = array<i64: 1, 1, 1>}, {transform_indices = @transform_10, window_bounds = array<i64: 1, 1, 512>}]} {
    %c0_i32 = arith.constant 0 : i32
    %0 = arith.cmpi eq, %arg1, %c0_i32 : i32
    %1 = arith.extui %0 : i1 to i32
    %c0_i32_0 = arith.constant 0 : i32
    %2 = arith.cmpi ne, %1, %c0_i32_0 : i32
    scf.if %2 {
      %cst_43 = arith.constant -1.000000e+30 : f32
      %79 = vector.broadcast %cst_43 : f32 to vector<1x1xf32>
      %c0_44 = arith.constant 0 : index
      %c0_45 = arith.constant 0 : index
      %c0_46 = arith.constant 0 : index
      %80 = vector.load %arg10[%c0_44, %c0_45, %c0_46] : memref<1x1x1xf32, #tpu.memory_space<vmem>>, vector<1x1x1xf32>
      %81 = vector.shape_cast %80 : vector<1x1x1xf32> to vector<1x1xf32>
      %82 = vector.shape_cast %79 : vector<1x1xf32> to vector<1x1x1xf32>
      tpu.vector_store %arg10[%c0_44, %c0_45, %c0_46], %82 {strides = array<i32>} : memref<1x1x1xf32, #tpu.memory_space<vmem>>, vector<1x1x1xf32>,
      %cst_47 = arith.constant 0.000000e+00 : f32
      %83 = vector.broadcast %cst_47 : f32 to vector<1x1xf32>
      %c0_48 = arith.constant 0 : index
      %c0_49 = arith.constant 0 : index
      %c0_50 = arith.constant 0 : index
      %84 = vector.load %arg11[%c0_48, %c0_49, %c0_50] : memref<1x1x1xf32, #tpu.memory_space<vmem>>, vector<1x1x1xf32>
      %85 = vector.shape_cast %84 : vector<1x1x1xf32> to vector<1x1xf32>
      %86 = vector.shape_cast %83 : vector<1x1xf32> to vector<1x1x1xf32>
      tpu.vector_store %arg11[%c0_48, %c0_49, %c0_50], %86 {strides = array<i32>} : memref<1x1x1xf32, #tpu.memory_space<vmem>>, vector<1x1x1xf32>,
      %cst_51 = arith.constant 0.000000e+00 : f32
      %87 = vector.broadcast %cst_51 : f32 to vector<1x512xf32>
      %c0_52 = arith.constant 0 : index
      %c0_53 = arith.constant 0 : index
      %c0_54 = arith.constant 0 : index
      %88 = vector.load %arg12[%c0_52, %c0_53, %c0_54] : memref<1x1x512xf32, #tpu.memory_space<vmem>>, vector<1x1x512xf32>
      %89 = vector.shape_cast %88 : vector<1x1x512xf32> to vector<1x512xf32>
      %90 = vector.shape_cast %87 : vector<1x512xf32> to vector<1x1x512xf32>
      tpu.vector_store %arg12[%c0_52, %c0_53, %c0_54], %90 {strides = array<i32>} : memref<1x1x512xf32, #tpu.memory_space<vmem>>, vector<1x1x512xf32>,
    } else {
    }
    %c0 = arith.constant 0 : index
    %c0_1 = arith.constant 0 : index
    %3 = vector.load %arg2[%c0, %c0_1] : memref<256x256xf32, #tpu.memory_space<vmem>>, vector<256x256xf32>
    %4 = arith.truncf %3 : vector<256x256xf32> to vector<256x256xbf16>
    %c0_2 = arith.constant 0 : index
    %c0_3 = arith.constant 0 : index
    %5 = vector.load %arg3[%c0_2, %c0_3] : memref<256x512xbf16, #tpu.memory_space<vmem>>, vector<256x512xbf16>
    %cst = arith.constant dense<0.000000e+00> : vector<256x512xf32>
    %6 = tpu.matmul %4, %5, %cst {dimension_numbers = #tpu.dot_dimension_numbers<[1], [0], [0], [1], [0, 0, 1, 1], [], []>} : vector<256x256xbf16>, vector<256x512xbf16>, vector<256x512xf32> -> vector<256x512xf32>
    %c0_4 = arith.constant 0 : index
    %c0_5 = arith.constant 0 : index
    %7 = vector.load %arg4[%c0_4, %c0_5] : memref<1x512xf32, #tpu.memory_space<vmem>>, vector<1x512xf32>
    %8 = vector.broadcast %7 : vector<1x512xf32> to vector<256x512xf32>
    %9 = arith.addf %6, %8 : vector<256x512xf32>
    %cst_6 = arith.constant 0.000000e+00 : f32
    %10 = vector.broadcast %cst_6 : f32 to vector<256x512xf32>
    %11 = arith.maximumf %9, %10 : vector<256x512xf32>
    %12 = tpu.iota {dimensions = array<i32: 0>} : vector<256x1xi32>
    %c2_i32 = arith.constant 2 : i32
    %13 = arith.muli %arg0, %c2_i32 : i32
    %14 = arith.addi %13, %arg1 : i32
    %c256_i32 = arith.constant 256 : i32
    %15 = arith.muli %14, %c256_i32 : i32
    %16 = vector.broadcast %15 : i32 to vector<256x1xi32>
    %17 = arith.addi %12, %16 : vector<256x1xi32>
    %c700_i32 = arith.constant 700 : i32
    %18 = vector.broadcast %c700_i32 : i32 to vector<256x1xi32>
    %19 = arith.cmpi slt, %17, %18 : vector<256x1xi32>
    %cst_7 = arith.constant 0.000000e+00 : f32
    %20 = vector.shape_cast %19 : vector<256x1xi1> to vector<256x1xi1>
    %21 = vector.broadcast %20 : vector<256x1xi1> to vector<256x512xi1>
    %22 = vector.broadcast %cst_7 : f32 to vector<256x512xf32>
    %23 = arith.select %21, %11, %22 : vector<256x512xi1>, vector<256x512xf32>
    %24 = arith.truncf %23 : vector<256x512xf32> to vector<256x512xbf16>
    %c0_8 = arith.constant 0 : index
    %c0_9 = arith.constant 0 : index
    %25 = vector.load %arg5[%c0_8, %c0_9] : memref<512x512xbf16, #tpu.memory_space<vmem>>, vector<512x512xbf16>
    %cst_10 = arith.constant dense<0.000000e+00> : vector<256x512xf32>
    %26 = tpu.matmul %24, %25, %cst_10 {dimension_numbers = #tpu.dot_dimension_numbers<[1], [0], [0], [1], [0, 0, 1, 1], [], []>} : vector<256x512xbf16>, vector<512x512xbf16>, vector<256x512xf32> -> vector<256x512xf32>
    %c0_11 = arith.constant 0 : index
    %c0_12 = arith.constant 0 : index
    %27 = vector.load %arg6[%c0_11, %c0_12] : memref<1x512xf32, #tpu.memory_space<vmem>>, vector<1x512xf32>
    %28 = vector.broadcast %27 : vector<1x512xf32> to vector<256x512xf32>
    %29 = arith.addf %26, %28 : vector<256x512xf32>
    %30 = vector.extract_strided_slice %29 {offsets = [0, 0], sizes = [256, 256], strides = [1, 1]} : vector<256x512xf32> to vector<256x256xf32>
    %31 = math.tanh %30 : vector<256x256xf32>
    %32 = vector.extract_strided_slice %29 {offsets = [0, 256], sizes = [256, 256], strides = [1, 1]} : vector<256x512xf32> to vector<256x256xf32>
    %33 = arith.negf %32 : vector<256x256xf32>
    %34 = math.exp %33 : vector<256x256xf32>
    %cst_13 = arith.constant 1.000000e+00 : f32
    %35 = vector.broadcast %cst_13 : f32 to vector<256x256xf32>
    %36 = arith.addf %35, %34 : vector<256x256xf32>
    %37 = arith.divf %35, %36 : vector<256x256xf32>
    %38 = arith.mulf %31, %37 : vector<256x256xf32>
    %39 = arith.truncf %38 : vector<256x256xf32> to vector<256x256xbf16>
    %c0_14 = arith.constant 0 : index
    %c0_15 = arith.constant 0 : index
    %40 = vector.load %arg7[%c0_14, %c0_15] : memref<256x1xbf16, #tpu.memory_space<vmem>>, vector<256x1xbf16>
    %cst_16 = arith.constant dense<0.000000e+00> : vector<256x1xf32>
    %41 = tpu.matmul %39, %40, %cst_16 {dimension_numbers = #tpu.dot_dimension_numbers<[1], [0], [0], [1], [0, 0, 1, 1], [], []>} : vector<256x256xbf16>, vector<256x1xbf16>, vector<256x1xf32> -> vector<256x1xf32>
    %c0_17 = arith.constant 0 : index
    %c0_18 = arith.constant 0 : index
    %42 = vector.load %arg8[%c0_17, %c0_18] : memref<1x1xf32, #tpu.memory_space<vmem>>, vector<1x1xf32>
    %43 = vector.broadcast %42 : vector<1x1xf32> to vector<256x1xf32>
    %44 = arith.addf %41, %43 : vector<256x1xf32>
    %c0_19 = arith.constant 0 : index
    %c0_20 = arith.constant 0 : index
    %45 = vector.load %arg9[%c0_19, %c0_20] : memref<256x1xf32, #tpu.memory_space<vmem>>, vector<256x1xf32>
    tpu.vector_store %arg9[%c0_19, %c0_20], %44 {strides = array<i32>} : memref<256x1xf32, #tpu.memory_space<vmem>>, vector<256x1xf32>,
    %cst_21 = arith.constant -1.000000e+30 : f32
    %46 = vector.broadcast %cst_21 : f32 to vector<256x1xf32>
    %47 = arith.select %19, %44, %46 : vector<256x1xi1>, vector<256x1xf32>
    %c0_22 = arith.constant 0 : index
    %c0_23 = arith.constant 0 : index
    %c0_24 = arith.constant 0 : index
    %48 = vector.load %arg10[%c0_22, %c0_23, %c0_24] : memref<1x1x1xf32, #tpu.memory_space<vmem>>, vector<1x1x1xf32>
    %49 = vector.shape_cast %48 : vector<1x1x1xf32> to vector<1x1xf32>
    %cst_25 = arith.constant dense<0xFF800000> : vector<1xf32>
    %50 = vector.multi_reduction <maximumf>, %47, %cst_25 [0] : vector<256x1xf32> to vector<1xf32>
    %51 = vector.shape_cast %50 : vector<1xf32> to vector<1x1xf32>
    %52 = arith.maximumf %49, %51 : vector<1x1xf32>
    %53 = arith.subf %49, %52 : vector<1x1xf32>
    %54 = math.exp %53 : vector<1x1xf32>
    %55 = vector.broadcast %52 : vector<1x1xf32> to vector<256x1xf32>
    %56 = arith.subf %47, %55 : vector<256x1xf32>
    %57 = math.exp %56 : vector<256x1xf32>
    %c0_26 = arith.constant 0 : index
    %c0_27 = arith.constant 0 : index
    %c0_28 = arith.constant 0 : index
    %58 = vector.load %arg11[%c0_26, %c0_27, %c0_28] : memref<1x1x1xf32, #tpu.memory_space<vmem>>, vector<1x1x1xf32>
    %59 = vector.shape_cast %58 : vector<1x1x1xf32> to vector<1x1xf32>
    %60 = arith.mulf %54, %59 : vector<1x1xf32>
    %cst_29 = arith.constant dense<0.000000e+00> : vector<1xf32>
    %61 = vector.multi_reduction <add>, %57, %cst_29 [0] : vector<256x1xf32> to vector<1xf32>
    %62 = vector.shape_cast %61 : vector<1xf32> to vector<1x1xf32>
    %63 = arith.addf %60, %62 : vector<1x1xf32>
    %c0_30 = arith.constant 0 : index
    %c0_31 = arith.constant 0 : index
    %c0_32 = arith.constant 0 : index
    %64 = vector.load %arg11[%c0_30, %c0_31, %c0_32] : memref<1x1x1xf32, #tpu.memory_space<vmem>>, vector<1x1x1xf32>
    %65 = vector.shape_cast %64 : vector<1x1x1xf32> to vector<1x1xf32>
    %66 = vector.shape_cast %63 : vector<1x1xf32> to vector<1x1x1xf32>
    tpu.vector_store %arg11[%c0_30, %c0_31, %c0_32], %66 {strides = array<i32>} : memref<1x1x1xf32, #tpu.memory_space<vmem>>, vector<1x1x1xf32>,
    %c0_33 = arith.constant 0 : index
    %c0_34 = arith.constant 0 : index
    %c0_35 = arith.constant 0 : index
    %67 = vector.load %arg12[%c0_33, %c0_34, %c0_35] : memref<1x1x512xf32, #tpu.memory_space<vmem>>, vector<1x1x512xf32>
    %68 = vector.shape_cast %67 : vector<1x1x512xf32> to vector<1x512xf32>
    %69 = vector.broadcast %54 : vector<1x1xf32> to vector<1x512xf32>
    %70 = arith.mulf %69, %68 : vector<1x512xf32>
    %cst_36 = arith.constant dense<0.000000e+00> : vector<1x512xf32>
    %71 = tpu.matmul %57, %23, %cst_36 {dimension_numbers = #tpu.dot_dimension_numbers<[0], [0], [1], [1], [0, 1, 1, 1], [], []>} : vector<256x1xf32>, vector<256x512xf32>, vector<1x512xf32> -> vector<1x512xf32>
    %72 = arith.addf %70, %71 : vector<1x512xf32>
    %c0_37 = arith.constant 0 : index
    %c0_38 = arith.constant 0 : index
    %c0_39 = arith.constant 0 : index
    %73 = vector.load %arg12[%c0_37, %c0_38, %c0_39] : memref<1x1x512xf32, #tpu.memory_space<vmem>>, vector<1x1x512xf32>
    %74 = vector.shape_cast %73 : vector<1x1x512xf32> to vector<1x512xf32>
    %75 = vector.shape_cast %72 : vector<1x512xf32> to vector<1x1x512xf32>
    tpu.vector_store %arg12[%c0_37, %c0_38, %c0_39], %75 {strides = array<i32>} : memref<1x1x512xf32, #tpu.memory_space<vmem>>, vector<1x1x512xf32>,
    %c0_40 = arith.constant 0 : index
    %c0_41 = arith.constant 0 : index
    %c0_42 = arith.constant 0 : index
    %76 = vector.load %arg10[%c0_40, %c0_41, %c0_42] : memref<1x1x1xf32, #tpu.memory_space<vmem>>, vector<1x1x1xf32>
    %77 = vector.shape_cast %76 : vector<1x1x1xf32> to vector<1x1xf32>
    %78 = vector.shape_cast %52 : vector<1x1xf32> to vector<1x1x1xf32>
    tpu.vector_store %arg10[%c0_40, %c0_41, %c0_42], %78 {strides = array<i32>} : memref<1x1x1xf32, #tpu.memory_space<vmem>>, vector<1x1x1xf32>,
    return
  }
  func.func @transform_0(%arg0: i32, %arg1: i32) -> (i32, i32) {
    %c2_i32 = arith.constant 2 : i32
    %0 = arith.muli %arg0, %c2_i32 : i32
    %1 = arith.addi %0, %arg1 : i32
    %c2_i32_0 = arith.constant 2 : i32
    %2 = arith.minsi %1, %c2_i32_0 : i32
    %c0_i32 = arith.constant 0 : i32
    %c0_i32_1 = arith.constant 0 : i32
    return %2, %c0_i32 : i32, i32
  }
  func.func @transform_1(%arg0: i32, %arg1: i32) -> (i32, i32) {
    %c0_i32 = arith.constant 0 : i32
    %c0_i32_0 = arith.constant 0 : i32
    %c0_i32_1 = arith.constant 0 : i32
    return %c0_i32, %c0_i32_0 : i32, i32
  }
  func.func @transform_2(%arg0: i32, %arg1: i32) -> (i32, i32) {
    %c0_i32 = arith.constant 0 : i32
    %c0_i32_0 = arith.constant 0 : i32
    %c0_i32_1 = arith.constant 0 : i32
    return %c0_i32, %c0_i32_0 : i32, i32
  }
  func.func @transform_3(%arg0: i32, %arg1: i32) -> (i32, i32) {
    %c0_i32 = arith.constant 0 : i32
    %c0_i32_0 = arith.constant 0 : i32
    %c0_i32_1 = arith.constant 0 : i32
    return %c0_i32, %c0_i32_0 : i32, i32
  }
  func.func @transform_4(%arg0: i32, %arg1: i32) -> (i32, i32) {
    %c0_i32 = arith.constant 0 : i32
    %c0_i32_0 = arith.constant 0 : i32
    %c0_i32_1 = arith.constant 0 : i32
    return %c0_i32, %c0_i32_0 : i32, i32
  }
  func.func @transform_5(%arg0: i32, %arg1: i32) -> (i32, i32) {
    %c0_i32 = arith.constant 0 : i32
    %c0_i32_0 = arith.constant 0 : i32
    %c0_i32_1 = arith.constant 0 : i32
    return %c0_i32, %c0_i32_0 : i32, i32
  }
  func.func @transform_6(%arg0: i32, %arg1: i32) -> (i32, i32) {
    %c0_i32 = arith.constant 0 : i32
    %c0_i32_0 = arith.constant 0 : i32
    %c0_i32_1 = arith.constant 0 : i32
    return %c0_i32, %c0_i32_0 : i32, i32
  }
  func.func @transform_7(%arg0: i32, %arg1: i32) -> (i32, i32) {
    %c2_i32 = arith.constant 2 : i32
    %0 = arith.muli %arg0, %c2_i32 : i32
    %1 = arith.addi %0, %arg1 : i32
    %c0_i32 = arith.constant 0 : i32
    %c0_i32_0 = arith.constant 0 : i32
    return %1, %c0_i32 : i32, i32
  }
  func.func @transform_8(%arg0: i32, %arg1: i32) -> (i32, i32, i32) {
    %c0_i32 = arith.constant 0 : i32
    %c0_i32_0 = arith.constant 0 : i32
    %c0_i32_1 = arith.constant 0 : i32
    return %arg0, %c0_i32, %c0_i32_0 : i32, i32, i32
  }
  func.func @transform_9(%arg0: i32, %arg1: i32) -> (i32, i32, i32) {
    %c0_i32 = arith.constant 0 : i32
    %c0_i32_0 = arith.constant 0 : i32
    %c0_i32_1 = arith.constant 0 : i32
    return %arg0, %c0_i32, %c0_i32_0 : i32, i32, i32
  }
  func.func @transform_10(%arg0: i32, %arg1: i32) -> (i32, i32, i32) {
    %c0_i32 = arith.constant 0 : i32
    %c0_i32_0 = arith.constant 0 : i32
    %c0_i32_1 = arith.constant 0 : i32
    return %arg0, %c0_i32, %c0_i32_0 : i32, i32, i32
  }
}

module attributes {stable_mosaic.version = 11 : i64} {
  func.func @clam_kernel(%arg0: i32, %arg1: i32, %arg2: memref<256x256xf32, #tpu.memory_space<vmem>>, %arg3: memref<256x512xbf16, #tpu.memory_space<vmem>>, %arg4: memref<1x512xf32, #tpu.memory_space<vmem>>, %arg5: memref<512x512xbf16, #tpu.memory_space<vmem>>, %arg6: memref<1x512xf32, #tpu.memory_space<vmem>>, %arg7: memref<256x1xbf16, #tpu.memory_space<vmem>>, %arg8: memref<1x1xf32, #tpu.memory_space<vmem>>, %arg9: memref<256x1xf32, #tpu.memory_space<vmem>>, %arg10: memref<1x1x1xf32, #tpu.memory_space<vmem>>, %arg11: memref<1x1x1xf32, #tpu.memory_space<vmem>>, %arg12: memref<1x1x512xf32, #tpu.memory_space<vmem>>) attributes {dimension_semantics = [#tpu.dimension_semantics<parallel>, #tpu.dimension_semantics<arbitrary>], iteration_bounds = array<i64: 2, 2>, scalar_prefetch = 0 : i64, scratch_operands = 0 : i64, tpu.core_type = #tpu.core_type<tc>, window_params = [{transform_indices = @transform_0, window_bounds = array<i64: 256, 256>}, {pipeline_mode = #tpu.pipeline_mode<synchronous>, transform_indices = @transform_1, window_bounds = array<i64: 256, 512>}, {pipeline_mode = #tpu.pipeline_mode<synchronous>, transform_indices = @transform_2, window_bounds = array<i64: 1, 512>}, {pipeline_mode = #tpu.pipeline_mode<synchronous>, transform_indices = @transform_3, window_bounds = array<i64: 512, 512>}, {pipeline_mode = #tpu.pipeline_mode<synchronous>, transform_indices = @transform_4, window_bounds = array<i64: 1, 512>}, {pipeline_mode = #tpu.pipeline_mode<synchronous>, transform_indices = @transform_5, window_bounds = array<i64: 256, 1>}, {pipeline_mode = #tpu.pipeline_mode<synchronous>, transform_indices = @transform_6, window_bounds = array<i64: 1, 1>}, {transform_indices = @transform_7, window_bounds = array<i64: 256, 1>}, {transform_indices = @transform_8, window_bounds = array<i64: 1, 1, 1>}, {transform_indices = @transform_9, window_bounds = array<i64: 1, 1, 1>}, {transform_indices = @transform_10, window_bounds = array<i64: 1, 1, 512>}]} {
    %c0_i32 = arith.constant 0 : i32
    %0 = arith.cmpi eq, %arg1, %c0_i32 : i32
    %1 = arith.extui %0 : i1 to i32
    %c0_i32_0 = arith.constant 0 : i32
    %2 = arith.cmpi ne, %1, %c0_i32_0 : i32
    scf.if %2 {
      %cst_43 = arith.constant -1.000000e+30 : f32
      %79 = vector.broadcast %cst_43 : f32 to vector<1x1xf32>
      %c0_44 = arith.constant 0 : index
      %c0_45 = arith.constant 0 : index
      %c0_46 = arith.constant 0 : index
      %80 = vector.load %arg10[%c0_44, %c0_45, %c0_46] : memref<1x1x1xf32, #tpu.memory_space<vmem>>, vector<1x1x1xf32>
      %81 = vector.shape_cast %80 : vector<1x1x1xf32> to vector<1x1xf32>
      %82 = vector.shape_cast %79 : vector<1x1xf32> to vector<1x1x1xf32>
      tpu.vector_store %arg10[%c0_44, %c0_45, %c0_46], %82 {strides = array<i32>} : memref<1x1x1xf32, #tpu.memory_space<vmem>>, vector<1x1x1xf32>,
      %cst_47 = arith.constant 0.000000e+00 : f32
      %83 = vector.broadcast %cst_47 : f32 to vector<1x1xf32>
      %c0_48 = arith.constant 0 : index
      %c0_49 = arith.constant 0 : index
      %c0_50 = arith.constant 0 : index
      %84 = vector.load %arg11[%c0_48, %c0_49, %c0_50] : memref<1x1x1xf32, #tpu.memory_space<vmem>>, vector<1x1x1xf32>
      %85 = vector.shape_cast %84 : vector<1x1x1xf32> to vector<1x1xf32>
      %86 = vector.shape_cast %83 : vector<1x1xf32> to vector<1x1x1xf32>
      tpu.vector_store %arg11[%c0_48, %c0_49, %c0_50], %86 {strides = array<i32>} : memref<1x1x1xf32, #tpu.memory_space<vmem>>, vector<1x1x1xf32>,
      %cst_51 = arith.constant 0.000000e+00 : f32
      %87 = vector.broadcast %cst_51 : f32 to vector<1x512xf32>
      %c0_52 = arith.constant 0 : index
      %c0_53 = arith.constant 0 : index
      %c0_54 = arith.constant 0 : index
      %88 = vector.load %arg12[%c0_52, %c0_53, %c0_54] : memref<1x1x512xf32, #tpu.memory_space<vmem>>, vector<1x1x512xf32>
      %89 = vector.shape_cast %88 : vector<1x1x512xf32> to vector<1x512xf32>
      %90 = vector.shape_cast %87 : vector<1x512xf32> to vector<1x1x512xf32>
      tpu.vector_store %arg12[%c0_52, %c0_53, %c0_54], %90 {strides = array<i32>} : memref<1x1x512xf32, #tpu.memory_space<vmem>>, vector<1x1x512xf32>,
    } else {
    }
    %c0 = arith.constant 0 : index
    %c0_1 = arith.constant 0 : index
    %3 = vector.load %arg2[%c0, %c0_1] : memref<256x256xf32, #tpu.memory_space<vmem>>, vector<256x256xf32>
    %4 = arith.truncf %3 : vector<256x256xf32> to vector<256x256xbf16>
    %c0_2 = arith.constant 0 : index
    %c0_3 = arith.constant 0 : index
    %5 = vector.load %arg3[%c0_2, %c0_3] : memref<256x512xbf16, #tpu.memory_space<vmem>>, vector<256x512xbf16>
    %cst = arith.constant dense<0.000000e+00> : vector<256x512xf32>
    %6 = tpu.matmul %4, %5, %cst {dimension_numbers = #tpu.dot_dimension_numbers<[1], [0], [0], [1], [0, 0, 1, 1], [], []>} : vector<256x256xbf16>, vector<256x512xbf16>, vector<256x512xf32> -> vector<256x512xf32>
    %c0_4 = arith.constant 0 : index
    %c0_5 = arith.constant 0 : index
    %7 = vector.load %arg4[%c0_4, %c0_5] : memref<1x512xf32, #tpu.memory_space<vmem>>, vector<1x512xf32>
    %8 = vector.broadcast %7 : vector<1x512xf32> to vector<256x512xf32>
    %9 = arith.addf %6, %8 : vector<256x512xf32>
    %cst_6 = arith.constant 0.000000e+00 : f32
    %10 = vector.broadcast %cst_6 : f32 to vector<256x512xf32>
    %11 = arith.maximumf %9, %10 : vector<256x512xf32>
    %12 = tpu.iota {dimensions = array<i32: 0>} : vector<256x1xi32>
    %c2_i32 = arith.constant 2 : i32
    %13 = arith.muli %arg0, %c2_i32 : i32
    %14 = arith.addi %13, %arg1 : i32
    %c256_i32 = arith.constant 256 : i32
    %15 = arith.muli %14, %c256_i32 : i32
    %16 = vector.broadcast %15 : i32 to vector<256x1xi32>
    %17 = arith.addi %12, %16 : vector<256x1xi32>
    %c700_i32 = arith.constant 700 : i32
    %18 = vector.broadcast %c700_i32 : i32 to vector<256x1xi32>
    %19 = arith.cmpi slt, %17, %18 : vector<256x1xi32>
    %cst_7 = arith.constant 0.000000e+00 : f32
    %20 = vector.shape_cast %19 : vector<256x1xi1> to vector<256x1xi1>
    %21 = vector.broadcast %20 : vector<256x1xi1> to vector<256x512xi1>
    %22 = vector.broadcast %cst_7 : f32 to vector<256x512xf32>
    %23 = arith.select %21, %11, %22 : vector<256x512xi1>, vector<256x512xf32>
    %24 = arith.truncf %23 : vector<256x512xf32> to vector<256x512xbf16>
    %c0_8 = arith.constant 0 : index
    %c0_9 = arith.constant 0 : index
    %25 = vector.load %arg5[%c0_8, %c0_9] : memref<512x512xbf16, #tpu.memory_space<vmem>>, vector<512x512xbf16>
    %cst_10 = arith.constant dense<0.000000e+00> : vector<256x512xf32>
    %26 = tpu.matmul %24, %25, %cst_10 {dimension_numbers = #tpu.dot_dimension_numbers<[1], [0], [0], [1], [0, 0, 1, 1], [], []>} : vector<256x512xbf16>, vector<512x512xbf16>, vector<256x512xf32> -> vector<256x512xf32>
    %c0_11 = arith.constant 0 : index
    %c0_12 = arith.constant 0 : index
    %27 = vector.load %arg6[%c0_11, %c0_12] : memref<1x512xf32, #tpu.memory_space<vmem>>, vector<1x512xf32>
    %28 = vector.broadcast %27 : vector<1x512xf32> to vector<256x512xf32>
    %29 = arith.addf %26, %28 : vector<256x512xf32>
    %30 = vector.extract_strided_slice %29 {offsets = [0, 0], sizes = [256, 256], strides = [1, 1]} : vector<256x512xf32> to vector<256x256xf32>
    %31 = math.tanh %30 : vector<256x256xf32>
    %32 = vector.extract_strided_slice %29 {offsets = [0, 256], sizes = [256, 256], strides = [1, 1]} : vector<256x512xf32> to vector<256x256xf32>
    %33 = arith.negf %32 : vector<256x256xf32>
    %34 = math.exp %33 : vector<256x256xf32>
    %cst_13 = arith.constant 1.000000e+00 : f32
    %35 = vector.broadcast %cst_13 : f32 to vector<256x256xf32>
    %36 = arith.addf %35, %34 : vector<256x256xf32>
    %37 = arith.divf %35, %36 : vector<256x256xf32>
    %38 = arith.mulf %31, %37 : vector<256x256xf32>
    %39 = arith.truncf %38 : vector<256x256xf32> to vector<256x256xbf16>
    %c0_14 = arith.constant 0 : index
    %c0_15 = arith.constant 0 : index
    %40 = vector.load %arg7[%c0_14, %c0_15] : memref<256x1xbf16, #tpu.memory_space<vmem>>, vector<256x1xbf16>
    %cst_16 = arith.constant dense<0.000000e+00> : vector<256x1xf32>
    %41 = tpu.matmul %39, %40, %cst_16 {dimension_numbers = #tpu.dot_dimension_numbers<[1], [0], [0], [1], [0, 0, 1, 1], [], []>} : vector<256x256xbf16>, vector<256x1xbf16>, vector<256x1xf32> -> vector<256x1xf32>
    %c0_17 = arith.constant 0 : index
    %c0_18 = arith.constant 0 : index
    %42 = vector.load %arg8[%c0_17, %c0_18] : memref<1x1xf32, #tpu.memory_space<vmem>>, vector<1x1xf32>
    %43 = vector.broadcast %42 : vector<1x1xf32> to vector<256x1xf32>
    %44 = arith.addf %41, %43 : vector<256x1xf32>
    %c0_19 = arith.constant 0 : index
    %c0_20 = arith.constant 0 : index
    %45 = vector.load %arg9[%c0_19, %c0_20] : memref<256x1xf32, #tpu.memory_space<vmem>>, vector<256x1xf32>
    tpu.vector_store %arg9[%c0_19, %c0_20], %44 {strides = array<i32>} : memref<256x1xf32, #tpu.memory_space<vmem>>, vector<256x1xf32>,
    %cst_21 = arith.constant -1.000000e+30 : f32
    %46 = vector.broadcast %cst_21 : f32 to vector<256x1xf32>
    %47 = arith.select %19, %44, %46 : vector<256x1xi1>, vector<256x1xf32>
    %c0_22 = arith.constant 0 : index
    %c0_23 = arith.constant 0 : index
    %c0_24 = arith.constant 0 : index
    %48 = vector.load %arg10[%c0_22, %c0_23, %c0_24] : memref<1x1x1xf32, #tpu.memory_space<vmem>>, vector<1x1x1xf32>
    %49 = vector.shape_cast %48 : vector<1x1x1xf32> to vector<1x1xf32>
    %cst_25 = arith.constant dense<0xFF800000> : vector<1xf32>
    %50 = vector.multi_reduction <maximumf>, %47, %cst_25 [0] : vector<256x1xf32> to vector<1xf32>
    %51 = vector.shape_cast %50 : vector<1xf32> to vector<1x1xf32>
    %52 = arith.maximumf %49, %51 : vector<1x1xf32>
    %53 = arith.subf %49, %52 : vector<1x1xf32>
    %54 = math.exp %53 : vector<1x1xf32>
    %55 = vector.broadcast %52 : vector<1x1xf32> to vector<256x1xf32>
    %56 = arith.subf %47, %55 : vector<256x1xf32>
    %57 = math.exp %56 : vector<256x1xf32>
    %c0_26 = arith.constant 0 : index
    %c0_27 = arith.constant 0 : index
    %c0_28 = arith.constant 0 : index
    %58 = vector.load %arg11[%c0_26, %c0_27, %c0_28] : memref<1x1x1xf32, #tpu.memory_space<vmem>>, vector<1x1x1xf32>
    %59 = vector.shape_cast %58 : vector<1x1x1xf32> to vector<1x1xf32>
    %60 = arith.mulf %54, %59 : vector<1x1xf32>
    %cst_29 = arith.constant dense<0.000000e+00> : vector<1xf32>
    %61 = vector.multi_reduction <add>, %57, %cst_29 [0] : vector<256x1xf32> to vector<1xf32>
    %62 = vector.shape_cast %61 : vector<1xf32> to vector<1x1xf32>
    %63 = arith.addf %60, %62 : vector<1x1xf32>
    %c0_30 = arith.constant 0 : index
    %c0_31 = arith.constant 0 : index
    %c0_32 = arith.constant 0 : index
    %64 = vector.load %arg11[%c0_30, %c0_31, %c0_32] : memref<1x1x1xf32, #tpu.memory_space<vmem>>, vector<1x1x1xf32>
    %65 = vector.shape_cast %64 : vector<1x1x1xf32> to vector<1x1xf32>
    %66 = vector.shape_cast %63 : vector<1x1xf32> to vector<1x1x1xf32>
    tpu.vector_store %arg11[%c0_30, %c0_31, %c0_32], %66 {strides = array<i32>} : memref<1x1x1xf32, #tpu.memory_space<vmem>>, vector<1x1x1xf32>,
    %c0_33 = arith.constant 0 : index
    %c0_34 = arith.constant 0 : index
    %c0_35 = arith.constant 0 : index
    %67 = vector.load %arg12[%c0_33, %c0_34, %c0_35] : memref<1x1x512xf32, #tpu.memory_space<vmem>>, vector<1x1x512xf32>
    %68 = vector.shape_cast %67 : vector<1x1x512xf32> to vector<1x512xf32>
    %69 = vector.broadcast %54 : vector<1x1xf32> to vector<1x512xf32>
    %70 = arith.mulf %69, %68 : vector<1x512xf32>
    %cst_36 = arith.constant dense<0.000000e+00> : vector<1x512xf32>
    %71 = tpu.matmul %57, %23, %cst_36 {dimension_numbers = #tpu.dot_dimension_numbers<[0], [0], [1], [1], [0, 1, 1, 1], [], []>} : vector<256x1xf32>, vector<256x512xf32>, vector<1x512xf32> -> vector<1x512xf32>
    %72 = arith.addf %70, %71 : vector<1x512xf32>
    %c0_37 = arith.constant 0 : index
    %c0_38 = arith.constant 0 : index
    %c0_39 = arith.constant 0 : index
    %73 = vector.load %arg12[%c0_37, %c0_38, %c0_39] : memref<1x1x512xf32, #tpu.memory_space<vmem>>, vector<1x1x512xf32>
    %74 = vector.shape_cast %73 : vector<1x1x512xf32> to vector<1x512xf32>
    %75 = vector.shape_cast %72 : vector<1x512xf32> to vector<1x1x512xf32>
    tpu.vector_store %arg12[%c0_37, %c0_38, %c0_39], %75 {strides = array<i32>} : memref<1x1x512xf32, #tpu.memory_space<vmem>>, vector<1x1x512xf32>,
    %c0_40 = arith.constant 0 : index
    %c0_41 = arith.constant 0 : index
    %c0_42 = arith.constant 0 : index
    %76 = vector.load %arg10[%c0_40, %c0_41, %c0_42] : memref<1x1x1xf32, #tpu.memory_space<vmem>>, vector<1x1x1xf32>
    %77 = vector.shape_cast %76 : vector<1x1x1xf32> to vector<1x1xf32>
    %78 = vector.shape_cast %52 : vector<1x1xf32> to vector<1x1x1xf32>
    tpu.vector_store %arg10[%c0_40, %c0_41, %c0_42], %78 {strides = array<i32>} : memref<1x1x1xf32, #tpu.memory_space<vmem>>, vector<1x1x1xf32>,
    return
  }
  func.func @transform_0(%arg0: i32, %arg1: i32) -> (i32, i32) {
    %c2_i32 = arith.constant 2 : i32
    %0 = arith.muli %arg0, %c2_i32 : i32
    %1 = arith.addi %0, %arg1 : i32
    %c2_i32_0 = arith.constant 2 : i32
    %2 = arith.minsi %1, %c2_i32_0 : i32
    %c0_i32 = arith.constant 0 : i32
    %c0_i32_1 = arith.constant 0 : i32
    return %2, %c0_i32 : i32, i32
  }
  func.func @transform_1(%arg0: i32, %arg1: i32) -> (i32, i32) {
    %c0_i32 = arith.constant 0 : i32
    %c0_i32_0 = arith.constant 0 : i32
    %c0_i32_1 = arith.constant 0 : i32
    return %c0_i32, %c0_i32_0 : i32, i32
  }
  func.func @transform_2(%arg0: i32, %arg1: i32) -> (i32, i32) {
    %c0_i32 = arith.constant 0 : i32
    %c0_i32_0 = arith.constant 0 : i32
    %c0_i32_1 = arith.constant 0 : i32
    return %c0_i32, %c0_i32_0 : i32, i32
  }
  func.func @transform_3(%arg0: i32, %arg1: i32) -> (i32, i32) {
    %c0_i32 = arith.constant 0 : i32
    %c0_i32_0 = arith.constant 0 : i32
    %c0_i32_1 = arith.constant 0 : i32
    return %c0_i32, %c0_i32_0 : i32, i32
  }
  func.func @transform_4(%arg0: i32, %arg1: i32) -> (i32, i32) {
    %c0_i32 = arith.constant 0 : i32
    %c0_i32_0 = arith.constant 0 : i32
    %c0_i32_1 = arith.constant 0 : i32
    return %c0_i32, %c0_i32_0 : i32, i32
  }
  func.func @transform_5(%arg0: i32, %arg1: i32) -> (i32, i32) {
    %c0_i32 = arith.constant 0 : i32
    %c0_i32_0 = arith.constant 0 : i32
    %c0_i32_1 = arith.constant 0 : i32
    return %c0_i32, %c0_i32_0 : i32, i32
  }
  func.func @transform_6(%arg0: i32, %arg1: i32) -> (i32, i32) {
    %c0_i32 = arith.constant 0 : i32
    %c0_i32_0 = arith.constant 0 : i32
    %c0_i32_1 = arith.constant 0 : i32
    return %c0_i32, %c0_i32_0 : i32, i32
  }
  func.func @transform_7(%arg0: i32, %arg1: i32) -> (i32, i32) {
    %c2_i32 = arith.constant 2 : i32
    %0 = arith.muli %arg0, %c2_i32 : i32
    %1 = arith.addi %0, %arg1 : i32
    %c0_i32 = arith.constant 0 : i32
    %c0_i32_0 = arith.constant 0 : i32
    return %1, %c0_i32 : i32, i32
  }
  func.func @transform_8(%arg0: i32, %arg1: i32) -> (i32, i32, i32) {
    %c0_i32 = arith.constant 0 : i32
    %c0_i32_0 = arith.constant 0 : i32
    %c0_i32_1 = arith.constant 0 : i32
    return %arg0, %c0_i32, %c0_i32_0 : i32, i32, i32
  }
  func.func @transform_9(%arg0: i32, %arg1: i32) -> (i32, i32, i32) {
    %c0_i32 = arith.constant 0 : i32
    %c0_i32_0 = arith.constant 0 : i32
    %c0_i32_1 = arith.constant 0 : i32
    return %arg0, %c0_i32, %c0_i32_0 : i32, i32, i32
  }
  func.func @transform_10(%arg0: i32, %arg1: i32) -> (i32, i32, i32) {
    %c0_i32 = arith.constant 0 : i32
    %c0_i32_0 = arith.constant 0 : i32
    %c0_i32_1 = arith.constant 0 : i32
    return %arg0, %c0_i32, %c0_i32_0 : i32, i32, i32
  }
}

</mosaic_0001>

<llo_original>
// kernel: tpu_custom_call.1
$region0: #{tpu_custom_call.1}
  #allocation0 [shape = 'u32[]', space=smem, size = 0x4, offset = 0x4, fixed_abs, tag = 'smem constant byte address 0x4 - core index']
  #allocation1 [shape = 'u32[144,128]{1,0:T(1,128)}', space=vmem, size = 0x12000, scoped, tag = 'internal scratch']
  #allocation2 [shape = 'f32[1,1]{1,0:T(1,128)S(1)}', space=vmem, size = 0x200, scoped, tag = 'scoped memory for tpu_custom_call.1']
  %s0 = inlined_call_operand.hbm [shape: f32[700,256], index: 0, kind: input, shape index: {}]
  %s1 = inlined_call_operand.hbm [shape: bf16[256,512], index: 1, kind: input, shape index: {}]
  %s2 = inlined_call_operand.vmem [shape: f32[1,512], index: 2, kind: input, shape index: {}]
  %s3 = inlined_call_operand.hbm [shape: bf16[512,512], index: 3, kind: input, shape index: {}]
  %s4 = inlined_call_operand.vmem [shape: f32[1,512], index: 4, kind: input, shape index: {}]
  %s5 = inlined_call_operand.vmem [shape: bf16[256,1], index: 5, kind: input, shape index: {}]
  %s6 = inlined_call_operand.<no memory space> [shape: f32[1,1], index: 6, kind: input, shape index: {}]
  %s7 = inlined_call_operand.vmem [shape: f32[1024,1], index: 7, kind: output, shape index: {0}]
  %s8 = inlined_call_operand.vmem [shape: f32[2,1,1], index: 8, kind: output, shape index: {1}]
  %s9 = inlined_call_operand.vmem [shape: f32[2,1,1], index: 9, kind: output, shape index: {2}]
  %s10 = inlined_call_operand.hbm [shape: f32[2,1,512], index: 10, kind: output, shape index: {3}]
  %11 = xla_tuple %s7, %s8, %s9, %s10
  %s12 = sld [smem:[#allocation0]]
  $region101: #{tpu_custom_call.1} parent=0
    _
  %s14 = ssub.s32 1, %s12
  %s15 = scalar_select 0, %s14, %s12
  %v16 = vstv %s6
  %17 = vst [vmem:[#allocation2] sm:$0x1] %v16
  $region1: #{tpu_custom_call.1} parent=0
    #allocation3 [shape = 'u8[524288]{0}', space=vmem, size = 0x80000, scoped, tag = 'input window, operand 0']
    #allocation4 [shape = 's32[2]{0}', space=sflag, size = 0x8, scoped, tag = 'scoped memory for tpu_custom_call.1']
    #allocation5 [shape = 's32[2]{0}', space=sflag, size = 0x8, scoped, tag = 'scoped memory for tpu_custom_call.1']
    #allocation6 [shape = 'u8[262144]{0}', space=vmem, size = 0x40000, scoped, tag = 'input window, operand 1, single buffered']
    #allocation7 [shape = 's32[1]{0}', space=sflag, size = 0x4, scoped, tag = 'scoped memory for tpu_custom_call.1']
    #allocation8 [shape = 'u8[524288]{0}', space=vmem, size = 0x80000, scoped, tag = 'input window, operand 3, single buffered']
    #allocation9 [shape = 'u8[4096]{0}', space=vmem, size = 0x1000, scoped, tag = 'output window, operand 3']
    %18 = vsyncpa [#allocation4], 0
    %s19 = scalar_lea.sflag [#allocation4], 1
    %20 = vsyncpa %s19, 0
    %21 = vsyncpa [#allocation7], 0
    %22 = vsyncpa [#allocation5], 0
    %s23 = scalar_lea.sflag [#allocation5], 1
    %24 = vsyncpa %s23, 0
    loop: start=0, step=1, limit=6
    $region2: #{tpu_custom_call.1} parent=1 // loop_pre_header
      _
    $region3: #{tpu_custom_call.1} parent=1 // loop_header
      %s26 = sphi 0, %s30
      %p27 = scmp.ge.s32.totalorder %s26, 6
      %s33 = sphi 0, %s45
      %s34 = sphi 0, %s41
      %s35 = sphi 0, %s33
      %s36 = sphi 0, %s34
      %s37 = sphi 0, %s35
      %s38 = sphi 0, %s36
      %s56 = sphi 0, %s58
      %s59 = sphi 0, %s56
      %s60 = sphi 0, %s59
      %s76 = sphi 0, %s60
      %s80 = sphi 0, %s80
      %s82 = sphi 0, %s80
      %s83 = sphi 0, %s82
      %s97 = sphi 0, %s83
      %s101 = sphi 0, %s101
      %s103 = sphi 0, %s101
      %s104 = sphi 0, %s103
      %s118 = sphi 0, %s104
      %s122 = sphi 0, %s122
      %s124 = sphi 0, %s122
      %s125 = sphi 0, %s124
      %s139 = sphi 0, %s125
      %s143 = sphi 0, %s143
      %s145 = sphi 0, %s143
      %s146 = sphi 0, %s145
      %s160 = sphi 0, %s146
      %s164 = sphi 0, %s164
      %s166 = sphi 0, %s164
      %s167 = sphi 0, %s166
      %s181 = sphi 0, %s167
      %s185 = sphi 0, %s185
      %s187 = sphi 0, %s185
      %s188 = sphi 0, %s187
      %s202 = sphi 0, %s188
      %s212 = sphi 0, %s214
      %s215 = sphi 0, %s212
      %s216 = sphi 0, %s215
      %s232 = sphi 0, %s216
      %s238 = sphi 0, %s240
      %s241 = sphi 0, %s238
      %s242 = sphi 0, %s241
      %s258 = sphi 0, %s242
      %s264 = sphi 0, %s266
      %s267 = sphi 0, %s264
      %s268 = sphi 0, %s267
      %s284 = sphi 0, %s268
      %s290 = sphi 0, %s292
      %s293 = sphi 0, %s290
      %s294 = sphi 0, %s293
      %s310 = sphi 0, %s294
    $region4: #{tpu_custom_call.1} parent=1 // loop_header_branch
      %29 = sbr.rel (%p27) target = $region8
    $region5: #{tpu_custom_call.1} parent=1 // loop_body
      %s31 = ssub.s32 %s26, 1
      %s32 = ssub.s32 %s26, 2
      %s39 = sadd.s32 1, %s34
      %p40 = scmp.ge.s32.totalorder %s39, 2
      %s41 = scalar_select %p40, 0, %s39
      %s42 = sadd.s32 1, %s33
      %s43 = scalar_select %p40, %s42, %s33
      %p44 = scmp.ge.s32.totalorder %s43, 2
      %s45 = scalar_select %p44, 0, %s43
      %s46 = smul.u32 %s33, 2
      %s47 = sadd.s32 %s46, %s34
      %p48 = scmp.lt.s32.totalorder %s47, 2
      %s49 = scalar_select %p48, %s47, 2
      %s50 = smul.u32 %s45, 2
      %s51 = sadd.s32 %s50, %s41
      %p52 = scmp.lt.s32.totalorder %s51, 2
      %s53 = scalar_select %p52, %s51, 2
      %s54 = ssub.s32 %s49, %s53
      %p55 = scmp.eq.s32.totalorder %s54, 0
      %s57 = sadd.s32 %s56, 1
      %s58 = scalar_select %p55, %s56, %s57
      %p61 = pneg %p55
      %p62 = scmp.eq.s32.totalorder %s26, 3
      %p63 = por %p61, %p62
      %p64 = scmp.ne.s32.totalorder %s56, %s59
      %p65 = scmp.eq.s32.totalorder %s26, 0
      %p66 = por %p64, %p65
      %p67 = scmp.ne.s32.totalorder %s56, %s59
      %p68 = scmp.eq.s32.totalorder %s31, 3
      %p69 = por %p67, %p68
      %p70 = scmp.ne.s32.totalorder %s59, %s60
      %p71 = scmp.eq.s32.totalorder %s31, 0
      %p72 = por %p70, %p71
      %p73 = scmp.ne.s32.totalorder %s59, %s60
      %p74 = scmp.eq.s32.totalorder %s32, 3
      %p75 = por %p73, %p74
      %p77 = scmp.ne.s32.totalorder %s60, %s76
      %p78 = scmp.eq.s32.totalorder %s32, 0
      %p79 = por %p77, %p78
      %s81 = sadd.s32 %s80, 1
      %p84 = scmp.eq.s32.totalorder %s26, 3
      %p85 = scmp.ne.s32.totalorder %s80, %s82
      %p86 = scmp.eq.s32.totalorder %s26, 0
      %p87 = por %p85, %p86
      %p88 = scmp.ne.s32.totalorder %s80, %s82
      %p89 = scmp.eq.s32.totalorder %s31, 3
      %p90 = por %p88, %p89
      %p91 = scmp.ne.s32.totalorder %s82, %s83
      %p92 = scmp.eq.s32.totalorder %s31, 0
      %p93 = por %p91, %p92
      %p94 = scmp.ne.s32.totalorder %s82, %s83
      %p95 = scmp.eq.s32.totalorder %s32, 3
      %p96 = por %p94, %p95
      %p98 = scmp.ne.s32.totalorder %s83, %s97
      %p99 = scmp.eq.s32.totalorder %s32, 0
      %p100 = por %p98, %p99
      %s102 = sadd.s32 %s101, 1
      %p105 = scmp.eq.s32.totalorder %s26, 3
      %p106 = scmp.ne.s32.totalorder %s101, %s103
      %p107 = scmp.eq.s32.totalorder %s26, 0
      %p108 = por %p106, %p107
      %p109 = scmp.ne.s32.totalorder %s101, %s103
      %p110 = scmp.eq.s32.totalorder %s31, 3
      %p111 = por %p109, %p110
      %p112 = scmp.ne.s32.totalorder %s103, %s104
      %p113 = scmp.eq.s32.totalorder %s31, 0
      %p114 = por %p112, %p113
      %p115 = scmp.ne.s32.totalorder %s103, %s104
      %p116 = scmp.eq.s32.totalorder %s32, 3
      %p117 = por %p115, %p116
      %p119 = scmp.ne.s32.totalorder %s104, %s118
      %p120 = scmp.eq.s32.totalorder %s32, 0
      %p121 = por %p119, %p120
      %s123 = sadd.s32 %s122, 1
      %p126 = scmp.eq.s32.totalorder %s26, 3
      %p127 = scmp.ne.s32.totalorder %s122, %s124
      %p128 = scmp.eq.s32.totalorder %s26, 0
      %p129 = por %p127, %p128
      %p130 = scmp.ne.s32.totalorder %s122, %s124
      %p131 = scmp.eq.s32.totalorder %s31, 3
      %p132 = por %p130, %p131
      %p133 = scmp.ne.s32.totalorder %s124, %s125
      %p134 = scmp.eq.s32.totalorder %s31, 0
      %p135 = por %p133, %p134
      %p136 = scmp.ne.s32.totalorder %s124, %s125
      %p137 = scmp.eq.s32.totalorder %s32, 3
      %p138 = por %p136, %p137
      %p140 = scmp.ne.s32.totalorder %s125, %s139
      %p141 = scmp.eq.s32.totalorder %s32, 0
      %p142 = por %p140, %p141
      %s144 = sadd.s32 %s143, 1
      %p147 = scmp.eq.s32.totalorder %s26, 3
      %p148 = scmp.ne.s32.totalorder %s143, %s145
      %p149 = scmp.eq.s32.totalorder %s26, 0
      %p150 = por %p148, %p149
      %p151 = scmp.ne.s32.totalorder %s143, %s145
      %p152 = scmp.eq.s32.totalorder %s31, 3
      %p153 = por %p151, %p152
      %p154 = scmp.ne.s32.totalorder %s145, %s146
      %p155 = scmp.eq.s32.totalorder %s31, 0
      %p156 = por %p154, %p155
      %p157 = scmp.ne.s32.totalorder %s145, %s146
      %p158 = scmp.eq.s32.totalorder %s32, 3
      %p159 = por %p157, %p158
      %p161 = scmp.ne.s32.totalorder %s146, %s160
      %p162 = scmp.eq.s32.totalorder %s32, 0
      %p163 = por %p161, %p162
      %s165 = sadd.s32 %s164, 1
      %p168 = scmp.eq.s32.totalorder %s26, 3
      %p169 = scmp.ne.s32.totalorder %s164, %s166
      %p170 = scmp.eq.s32.totalorder %s26, 0
      %p171 = por %p169, %p170
      %p172 = scmp.ne.s32.totalorder %s164, %s166
      %p173 = scmp.eq.s32.totalorder %s31, 3
      %p174 = por %p172, %p173
      %p175 = scmp.ne.s32.totalorder %s166, %s167
      %p176 = scmp.eq.s32.totalorder %s31, 0
      %p177 = por %p175, %p176
      %p178 = scmp.ne.s32.totalorder %s166, %s167
      %p179 = scmp.eq.s32.totalorder %s32, 3
      %p180 = por %p178, %p179
      %p182 = scmp.ne.s32.totalorder %s167, %s181
      %p183 = scmp.eq.s32.totalorder %s32, 0
      %p184 = por %p182, %p183
      %s186 = sadd.s32 %s185, 1
      %p189 = scmp.eq.s32.totalorder %s26, 3
      %p190 = scmp.ne.s32.totalorder %s185, %s187
      %p191 = scmp.eq.s32.totalorder %s26, 0
      %p192 = por %p190, %p191
      %p193 = scmp.ne.s32.totalorder %s185, %s187
      %p194 = scmp.eq.s32.totalorder %s31, 3
      %p195 = por %p193, %p194
      %p196 = scmp.ne.s32.totalorder %s187, %s188
      %p197 = scmp.eq.s32.totalorder %s31, 0
      %p198 = por %p196, %p197
      %p199 = scmp.ne.s32.totalorder %s187, %s188
      %p200 = scmp.eq.s32.totalorder %s32, 3
      %p201 = por %p199, %p200
      %p203 = scmp.ne.s32.totalorder %s188, %s202
      %p204 = scmp.eq.s32.totalorder %s32, 0
      %p205 = por %p203, %p204
      %s206 = smul.u32 %s33, 2
      %s207 = sadd.s32 %s206, %s34
      %s208 = smul.u32 %s45, 2
      %s209 = sadd.s32 %s208, %s41
      %s210 = ssub.s32 %s207, %s209
      %p211 = scmp.eq.s32.totalorder %s210, 0
      %s213 = sadd.s32 %s212, 1
      %s214 = scalar_select %p211, %s212, %s213
      %p217 = pneg %p211
      %p218 = scmp.eq.s32.totalorder %s26, 3
      %p219 = por %p217, %p218
      %p220 = scmp.ne.s32.totalorder %s212, %s215
      %p221 = scmp.eq.s32.totalorder %s26, 0
      %p222 = por %p220, %p221
      %p223 = scmp.ne.s32.totalorder %s212, %s215
      %p224 = scmp.eq.s32.totalorder %s31, 3
      %p225 = por %p223, %p224
      %p226 = scmp.ne.s32.totalorder %s215, %s216
      %p227 = scmp.eq.s32.totalorder %s31, 0
      %p228 = por %p226, %p227
      %p229 = scmp.ne.s32.totalorder %s215, %s216
      %p230 = scmp.eq.s32.totalorder %s32, 3
      %p231 = por %p229, %p230
      %p233 = scmp.ne.s32.totalorder %s216, %s232
      %p234 = scmp.eq.s32.totalorder %s32, 0
      %p235 = por %p233, %p234
      %s236 = ssub.s32 %s33, %s45
      %p237 = scmp.eq.s32.totalorder %s236, 0
      %s239 = sadd.s32 %s238, 1
      %s240 = scalar_select %p237, %s238, %s239
      %p243 = pneg %p237
      %p244 = scmp.eq.s32.totalorder %s26, 3
      %p245 = por %p243, %p244
      %p246 = scmp.ne.s32.totalorder %s238, %s241
      %p247 = scmp.eq.s32.totalorder %s26, 0
      %p248 = por %p246, %p247
      %p249 = scmp.ne.s32.totalorder %s238, %s241
      %p250 = scmp.eq.s32.totalorder %s31, 3
      %p251 = por %p249, %p250
      %p252 = scmp.ne.s32.totalorder %s241, %s242
      %p253 = scmp.eq.s32.totalorder %s31, 0
      %p254 = por %p252, %p253
      %p255 = scmp.ne.s32.totalorder %s241, %s242
      %p256 = scmp.eq.s32.totalorder %s32, 3
      %p257 = por %p255, %p256
      %p259 = scmp.ne.s32.totalorder %s242, %s258
      %p260 = scmp.eq.s32.totalorder %s32, 0
      %p261 = por %p259, %p260
      %s262 = ssub.s32 %s33, %s45
      %p263 = scmp.eq.s32.totalorder %s262, 0
      %s265 = sadd.s32 %s264, 1
      %s266 = scalar_select %p263, %s264, %s265
      %p269 = pneg %p263
      %p270 = scmp.eq.s32.totalorder %s26, 3
      %p271 = por %p269, %p270
      %p272 = scmp.ne.s32.totalorder %s264, %s267
      %p273 = scmp.eq.s32.totalorder %s26, 0
      %p274 = por %p272, %p273
      %p275 = scmp.ne.s32.totalorder %s264, %s267
      %p276 = scmp.eq.s32.totalorder %s31, 3
      %p277 = por %p275, %p276
      %p278 = scmp.ne.s32.totalorder %s267, %s268
      %p279 = scmp.eq.s32.totalorder %s31, 0
      %p280 = por %p278, %p279
      %p281 = scmp.ne.s32.totalorder %s267, %s268
      %p282 = scmp.eq.s32.totalorder %s32, 3
      %p283 = por %p281, %p282
      %p285 = scmp.ne.s32.totalorder %s268, %s284
      %p286 = scmp.eq.s32.totalorder %s32, 0
      %p287 = por %p285, %p286
      %s288 = ssub.s32 %s33, %s45
      %p289 = scmp.eq.s32.totalorder %s288, 0
      %s291 = sadd.s32 %s290, 1
      %s292 = scalar_select %p289, %s290, %s291
      %p295 = pneg %p289
      %p296 = scmp.eq.s32.totalorder %s26, 3
      %p297 = por %p295, %p296
      %p298 = scmp.ne.s32.totalorder %s290, %s293
      %p299 = scmp.eq.s32.totalorder %s26, 0
      %p300 = por %p298, %p299
      %p301 = scmp.ne.s32.totalorder %s290, %s293
      %p302 = scmp.eq.s32.totalorder %s31, 3
      %p303 = por %p301, %p302
      %p304 = scmp.ne.s32.totalorder %s293, %s294
      %p305 = scmp.eq.s32.totalorder %s31, 0
      %p306 = por %p304, %p305
      %p307 = scmp.ne.s32.totalorder %s293, %s294
      %p308 = scmp.eq.s32.totalorder %s32, 3
      %p309 = por %p307, %p308
      %p311 = scmp.ne.s32.totalorder %s294, %s310
      %p312 = scmp.eq.s32.totalorder %s32, 0
      %p313 = por %p311, %p312
      %p314 = scmp.le.s32.totalorder 1, %s26
      %p315 = scmp.lt.s32.totalorder %s26, 5
      %p316 = pnand %p314, %p315
      %p317 = pneg %p316
      // Predicated region
      $region9: #{tpu_custom_call.1} parent=5 // pred_check
        _
      $region10: #{tpu_custom_call.1} parent=5 // pred_check_branch
        %319 = sbr.rel (%p316) target = $region12
      $region11: #{tpu_custom_call.1} parent=5 // pred_region
        %s320 = ssub.s32 %s26, 1
        // Predicated region
        $region13: #{tpu_custom_call.1} parent=11 // pred_check
          %p321 = pneg %p93
        $region14: #{tpu_custom_call.1} parent=11 // pred_check_branch
          %323 = sbr.rel (%p321) target = $region16
        $region15: #{tpu_custom_call.1} parent=11 // pred_region
          %s325 = ssub.s32 8192, 8192
          %326 = vsyncadd [#allocation7], %s325
          %s327 = sshll.u32 [#allocation6], 4
          %s328 = int_to_ptr.vmem [resolvable:$true] %s327
          %333 = dma.hbm_to_vmem [thread:$0]  %s1, 8192, %s328, [#allocation7], 256, 256, 16
        $region16: #{tpu_custom_call.1} parent=11 // pred_fallthru
          _
        // Predicated region
        $region17: #{tpu_custom_call.1} parent=11 // pred_check
          %p334 = pneg %p114
        $region18: #{tpu_custom_call.1} parent=11 // pred_check_branch
          %336 = sbr.rel (%p334) target = $region20
        $region19: #{tpu_custom_call.1} parent=11 // pred_region
          _
        $region20: #{tpu_custom_call.1} parent=11 // pred_fallthru
          _
        // Predicated region
        $region21: #{tpu_custom_call.1} parent=11 // pred_check
          %p337 = pneg %p135
        $region22: #{tpu_custom_call.1} parent=11 // pred_check_branch
          %339 = sbr.rel (%p337) target = $region24
        $region23: #{tpu_custom_call.1} parent=11 // pred_region
          %s341 = ssub.s32 16384, 16384
          %342 = vsyncadd [#allocation7], %s341
          %s343 = sshll.u32 [#allocation8], 4
          %s344 = int_to_ptr.vmem [resolvable:$true] %s343
          %349 = dma.hbm_to_vmem [thread:$0]  %s3, 16384, %s344, [#allocation7], 256, 256, 16
        $region24: #{tpu_custom_call.1} parent=11 // pred_fallthru
          _
        // Predicated region
        $region25: #{tpu_custom_call.1} parent=11 // pred_check
          %p350 = pneg %p156
        $region26: #{tpu_custom_call.1} parent=11 // pred_check_branch
          %352 = sbr.rel (%p350) target = $region28
        $region27: #{tpu_custom_call.1} parent=11 // pred_region
          _
        $region28: #{tpu_custom_call.1} parent=11 // pred_fallthru
          _
        // Predicated region
        $region29: #{tpu_custom_call.1} parent=11 // pred_check
          %p353 = pneg %p177
        $region30: #{tpu_custom_call.1} parent=11 // pred_check_branch
          %355 = sbr.rel (%p353) target = $region32
        $region31: #{tpu_custom_call.1} parent=11 // pred_region
          _
        $region32: #{tpu_custom_call.1} parent=11 // pred_fallthru
          _
        // Predicated region
        $region33: #{tpu_custom_call.1} parent=11 // pred_check
          %p356 = pneg %p198
        $region34: #{tpu_custom_call.1} parent=11 // pred_check_branch
          %358 = sbr.rel (%p356) target = $region36
        $region35: #{tpu_custom_call.1} parent=11 // pred_region
          _
        $region36: #{tpu_custom_call.1} parent=11 // pred_fallthru
          _
      $region12: #{tpu_custom_call.1} parent=5 // pred_fallthru
        _
      %p359 = scmp.lt.s32.totalorder %s26, 4
      // Predicated region
      $region37: #{tpu_custom_call.1} parent=5 // pred_check
        %p360 = pneg %p359
      $region38: #{tpu_custom_call.1} parent=5 // pred_check_branch
        %362 = sbr.rel (%p360) target = $region40
      $region39: #{tpu_custom_call.1} parent=5 // pred_region
        // Predicated region
        $region41: #{tpu_custom_call.1} parent=39 // pred_check
          %p363 = pneg %p66
        $region42: #{tpu_custom_call.1} parent=39 // pred_check_branch
          %365 = sbr.rel (%p363) target = $region44
        $region43: #{tpu_custom_call.1} parent=39 // pred_region
          %s366 = sand.u32 %s56, 1
          %s367 = scalar_lea.sflag [#allocation4], %s366
          %s368 = sand.u32 %s56, 1
          %s369 = smul.addr %s368, 512
          %s370 = scalar_lea.vmem [#allocation3], %s369
          %s371 = smul.u32 %s33, 2
          %s372 = sadd.s32 %s371, %s34
          %p373 = scmp.lt.s32.totalorder %s372, 2
          %s374 = scalar_select %p373, %s372, 2
          %s375 = smul.u32 32, %s374
          %s376 = ssub.s32 88, %s375
          %p377 = scmp.lt.s32.totalorder %s376, 32
          %s378 = scalar_select %p377, %s376, 32
          %s379 = smul.u32 128, %s378
          %s380 = smul.u32 %s379, 2
          %s382 = ssub.s32 8192, %s380
          %383 = vsyncadd %s367, %s382
          %p384 = scmp.ne.s32.totalorder 0, %s380
          %s385 = smul.addr %s375, 2
          %s386 = smul.addr %s385, 128
          %s387 = scalar_lea.hbm %s0, %s386
          %s388 = smul.u32 16, %s378
          %s389 = sshll.u32 %s370, 4
          %s390 = int_to_ptr.vmem [resolvable:$true] %s389
          %s391 = sshll.u32 %s388, 4
          %395 = dma.hbm_to_vmem [thread:$0]  (%p384), %s387, %s391, %s390, %s367, 256, 256, 16
        $region44: #{tpu_custom_call.1} parent=39 // pred_fallthru
          _
      $region40: #{tpu_custom_call.1} parent=5 // pred_fallthru
        _
      %p396 = scmp.le.s32.totalorder 1, %s26
      %p397 = scmp.lt.s32.totalorder %s26, 5
      %p398 = pnand %p396, %p397
      %p399 = pneg %p398
      // Predicated region
      $region45: #{tpu_custom_call.1} parent=5 // pred_check
        _
      $region46: #{tpu_custom_call.1} parent=5 // pred_check_branch
        %401 = sbr.rel (%p398) target = $region48
      $region47: #{tpu_custom_call.1} parent=5 // pred_region
        %s402 = ssub.s32 %s26, 1
        %s403 = sand.u32 %s59, 1
        %s404 = scalar_lea.sflag [#allocation4], %s403
        %s405 = sand.u32 %s59, 1
        %s406 = smul.addr %s405, 512
        %s407 = scalar_lea.vmem [#allocation3], %s406
        // Predicated region
        $region49: #{tpu_custom_call.1} parent=47 // pred_check
          %p408 = pneg %p72
        $region50: #{tpu_custom_call.1} parent=47 // pred_check_branch
          %410 = sbr.rel (%p408) target = $region52
        $region51: #{tpu_custom_call.1} parent=47 // pred_region
          %411 = dma.done %s404, 8192
        $region52: #{tpu_custom_call.1} parent=47 // pred_fallthru
          _
        // Predicated region
        $region53: #{tpu_custom_call.1} parent=47 // pred_check
          %p412 = pneg %p93
        $region54: #{tpu_custom_call.1} parent=47 // pred_check_branch
          %414 = sbr.rel (%p412) target = $region56
        $region55: #{tpu_custom_call.1} parent=47 // pred_region
          %415 = dma.done [#allocation7], 8192
        $region56: #{tpu_custom_call.1} parent=47 // pred_fallthru
          _
        // Predicated region
        $region57: #{tpu_custom_call.1} parent=47 // pred_check
          %p416 = pneg %p135
        $region58: #{tpu_custom_call.1} parent=47 // pred_check_branch
          %418 = sbr.rel (%p416) target = $region60
        $region59: #{tpu_custom_call.1} parent=47 // pred_region
          %419 = dma.done [#allocation7], 16384
        $region60: #{tpu_custom_call.1} parent=47 // pred_fallthru
          _
        %s420 = sand.u32 %s59, 1
        %s421 = scalar_lea.sflag [#allocation4], %s420
        %s422 = sand.u32 %s59, 1
        %s423 = smul.addr %s422, 512
        %s424 = scalar_lea.vmem [#allocation3], %s423
        %p425 = pneg %p72
        %p426 = pneg %p69
        %p427 = pneg %p93
        %p428 = pneg %p90
        %p429 = pneg %p114
        %p430 = pneg %p111
        %p431 = pneg %p135
        %p432 = pneg %p132
        %p433 = pneg %p156
        %p434 = pneg %p153
        %p435 = pneg %p177
        %p436 = pneg %p174
        %p437 = pneg %p198
        %p438 = pneg %p195
        %p439 = pneg %p228
        %p440 = pneg %p225
        %s441 = smul.u32 %s35, 2
        %s442 = sadd.s32 %s441, %s36
        %s443 = smul.u32 32, %s442
        %p444 = scmp.lt.s32.totalorder %s443, 127
        %s445 = scalar_select %p444, %s443, 127
        %s446 = smul.addr %s445, 8
        %s447 = scalar_lea.vmem %s7, %s446
        %p448 = pneg %p254
        %p449 = pneg %p251
        %p450 = scmp.lt.s32.totalorder %s35, 1
        %s451 = scalar_select %p450, %s35, 1
        %s452 = scalar_lea.vmem %s8, %s451
        %p453 = pneg %p280
        %p454 = pneg %p277
        %p455 = scmp.lt.s32.totalorder %s35, 1
        %s456 = scalar_select %p455, %s35, 1
        %s457 = scalar_lea.vmem %s9, %s456
        %p458 = pneg %p306
        %p459 = pneg %p303
        %s460 = sand.u32 %s293, 1
        %s461 = scalar_lea.sflag [#allocation5], %s460
        %s462 = sand.u32 %s293, 1
        %s463 = smul.addr %s462, 4
        %s464 = scalar_lea.vmem [#allocation9], %s463
        %s465 = smul.u32 %s35, 2
        %s466 = sadd.s32 %s465, %s36
        %p467 = scmp.lt.s32.totalorder %s466, 2
        %s468 = scalar_select %p467, %s466, 2
        %s469 = smul.u32 32, %s468
        %s470 = ssub.s32 88, %s469
        %p471 = scmp.lt.s32.totalorder %s470, 32
        %s472 = scalar_select %p471, %s470, 32
        %s473 = smul.u32 128, %s472
        %s474 = smul.u32 %s473, 2
        %s475 = smul.u32 %s35, 2
        %s476 = sadd.s32 %s475, %s36
        %s477 = smul.u32 32, %s476
        %p478 = scmp.lt.s32.totalorder %s477, 127
        %s479 = scalar_select %p478, %s477, 127
        %s480 = smul.addr %s479, 8
        %s481 = scalar_lea.vmem %s7, %s480
        %s482 = smul.u32 %s35, 2
        %s483 = sadd.s32 %s482, %s36
        %s484 = smul.u32 32, %s483
        %p485 = scmp.lt.s32.totalorder %s35, 1
        %s486 = scalar_select %p485, %s35, 1
        %s487 = scalar_lea.vmem %s8, %s486
        %p488 = scmp.lt.s32.totalorder %s35, 1
        %s489 = scalar_select %p488, %s35, 1
        %s490 = scalar_lea.vmem %s9, %s489
        %p492 = scmp.eq.s32.totalorder %s36, 0
        // Predicated region
        $region61: #{tpu_custom_call.1} parent=47 // pred_check
          %p493 = pneg %p492
        $region62: #{tpu_custom_call.1} parent=47 // pred_check_branch
          %495 = sbr.rel (%p493) target = $region64
        $region63: #{tpu_custom_call.1} parent=47 // pred_region
          %vm496 = vcmask 0
          %497 = vst.msk [vmem:[%s487] sm:$0x1] %vm496, -1e+30
          %498 = vst.msk [vmem:[%s490] sm:$0x1] %vm496, 0.0
          %v499 = vlaneseq
          %vm500 = vcmp.ge.s32.totalorder %v499, 0
          %vm501 = vcmp.lt.s32.totalorder %v499, 512
          %vm502 = vmand %vm500, %vm501
          %503 = vst.msk [vmem:[%s464] sm:$0xf] %vm502, 0.0
        $region64: #{tpu_custom_call.1} parent=47 // pred_fallthru
          _
        %v504 = vld [vmem:[%s407] sm:$0xff]
        %v505 = vld [vmem:[%s407 + $0x8] sm:$0xff]
        %v506 = vld [vmem:[%s407 + $0x10] sm:$0xff]
        %v507 = vld [vmem:[%s407 + $0x18] sm:$0xff]
        %v508 = vld [vmem:[%s407 + $0x20] sm:$0xff]
        %v509 = vld [vmem:[%s407 + $0x28] sm:$0xff]
        %v510 = vld [vmem:[%s407 + $0x30] sm:$0xff]
        %v511 = vld [vmem:[%s407 + $0x38] sm:$0xff]
        %v512 = vld [vmem:[%s407 + $0x40] sm:$0xff]
        %v513 = vld [vmem:[%s407 + $0x48] sm:$0xff]
        %v514 = vld [vmem:[%s407 + $0x50] sm:$0xff]
        %v515 = vld [vmem:[%s407 + $0x58] sm:$0xff]
        %v516 = vld [vmem:[%s407 + $0x60] sm:$0xff]
        %v517 = vld [vmem:[%s407 + $0x68] sm:$0xff]
        %v518 = vld [vmem:[%s407 + $0x70] sm:$0xff]
        %v519 = vld [vmem:[%s407 + $0x78] sm:$0xff]
        %v520 = vld [vmem:[%s407 + $0x80] sm:$0xff]
        %v521 = vld [vmem:[%s407 + $0x88] sm:$0xff]
        %v522 = vld [vmem:[%s407 + $0x90] sm:$0xff]
        %v523 = vld [vmem:[%s407 + $0x98] sm:$0xff]
        %v524 = vld [vmem:[%s407 + $0xa0] sm:$0xff]
        %v525 = vld [vmem:[%s407 + $0xa8] sm:$0xff]
        %v526 = vld [vmem:[%s407 + $0xb0] sm:$0xff]
        %v527 = vld [vmem:[%s407 + $0xb8] sm:$0xff]
        %v528 = vld [vmem:[%s407 + $0xc0] sm:$0xff]
        %v529 = vld [vmem:[%s407 + $0xc8] sm:$0xff]
        %v530 = vld [vmem:[%s407 + $0xd0] sm:$0xff]
        %v531 = vld [vmem:[%s407 + $0xd8] sm:$0xff]
        %v532 = vld [vmem:[%s407 + $0xe0] sm:$0xff]
        %v533 = vld [vmem:[%s407 + $0xe8] sm:$0xff]
        %v534 = vld [vmem:[%s407 + $0xf0] sm:$0xff]
        %v535 = vld [vmem:[%s407 + $0xf8] sm:$0xff]
        %v536 = vld [vmem:[%s407 + $0x100] sm:$0xff]
        %v537 = vld [vmem:[%s407 + $0x108] sm:$0xff]
        %v538 = vld [vmem:[%s407 + $0x110] sm:$0xff]
        %v539 = vld [vmem:[%s407 + $0x118] sm:$0xff]
        %v540 = vld [vmem:[%s407 + $0x120] sm:$0xff]
        %v541 = vld [vmem:[%s407 + $0x128] sm:$0xff]
        %v542 = vld [vmem:[%s407 + $0x130] sm:$0xff]
        %v543 = vld [vmem:[%s407 + $0x138] sm:$0xff]
        %v544 = vld [vmem:[%s407 + $0x140] sm:$0xff]
        %v545 = vld [vmem:[%s407 + $0x148] sm:$0xff]
        %v546 = vld [vmem:[%s407 + $0x150] sm:$0xff]
        %v547 = vld [vmem:[%s407 + $0x158] sm:$0xff]
        %v548 = vld [vmem:[%s407 + $0x160] sm:$0xff]
        %v549 = vld [vmem:[%s407 + $0x168] sm:$0xff]
        %v550 = vld [vmem:[%s407 + $0x170] sm:$0xff]
        %v551 = vld [vmem:[%s407 + $0x178] sm:$0xff]
        %v552 = vld [vmem:[%s407 + $0x180] sm:$0xff]
        %v553 = vld [vmem:[%s407 + $0x188] sm:$0xff]
        %v554 = vld [vmem:[%s407 + $0x190] sm:$0xff]
        %v555 = vld [vmem:[%s407 + $0x198] sm:$0xff]
        %v556 = vld [vmem:[%s407 + $0x1a0] sm:$0xff]
        %v557 = vld [vmem:[%s407 + $0x1a8] sm:$0xff]
        %v558 = vld [vmem:[%s407 + $0x1b0] sm:$0xff]
        %v559 = vld [vmem:[%s407 + $0x1b8] sm:$0xff]
        %v560 = vld [vmem:[%s407 + $0x1c0] sm:$0xff]
        %v561 = vld [vmem:[%s407 + $0x1c8] sm:$0xff]
        %v562 = vld [vmem:[%s407 + $0x1d0] sm:$0xff]
        %v563 = vld [vmem:[%s407 + $0x1d8] sm:$0xff]
        %v564 = vld [vmem:[%s407 + $0x1e0] sm:$0xff]
        %v565 = vld [vmem:[%s407 + $0x1e8] sm:$0xff]
        %v566 = vld [vmem:[%s407 + $0x1f0] sm:$0xff]
        %v567 = vld [vmem:[%s407 + $0x1f8] sm:$0xff]
        %v568 = vpack.c.bf16 %v506, %v504
        %v569 = vpack.c.bf16 %v507, %v505
        %v570 = vpack.c.bf16 %v510, %v508
        %v571 = vpack.c.bf16 %v511, %v509
        %v572 = vpack.c.bf16 %v514, %v512
        %v573 = vpack.c.bf16 %v515, %v513
        %v574 = vpack.c.bf16 %v518, %v516
        %v575 = vpack.c.bf16 %v519, %v517
        %v576 = vpack.c.bf16 %v522, %v520
        %v577 = vpack.c.bf16 %v523, %v521
        %v578 = vpack.c.bf16 %v526, %v524
        %v579 = vpack.c.bf16 %v527, %v525
        %v580 = vpack.c.bf16 %v530, %v528
        %v581 = vpack.c.bf16 %v531, %v529
        %v582 = vpack.c.bf16 %v534, %v532
        %v583 = vpack.c.bf16 %v535, %v533
        %v584 = vpack.c.bf16 %v538, %v536
        %v585 = vpack.c.bf16 %v539, %v537
        %v586 = vpack.c.bf16 %v542, %v540
        %v587 = vpack.c.bf16 %v543, %v541
        %v588 = vpack.c.bf16 %v546, %v544
        %v589 = vpack.c.bf16 %v547, %v545
        %v590 = vpack.c.bf16 %v550, %v548
        %v591 = vpack.c.bf16 %v551, %v549
        %v592 = vpack.c.bf16 %v554, %v552
        %v593 = vpack.c.bf16 %v555, %v553
        %v594 = vpack.c.bf16 %v558, %v556
        %v595 = vpack.c.bf16 %v559, %v557
        %v596 = vpack.c.bf16 %v562, %v560
        %v597 = vpack.c.bf16 %v563, %v561
        %v598 = vpack.c.bf16 %v566, %v564
        %v599 = vpack.c.bf16 %v567, %v565
        %v600 = vld [vmem:[#allocation6] sm:$0xff]
        %v601 = vld [vmem:[#allocation6 + $0x8] sm:$0xff]
        %v602 = vld [vmem:[#allocation6 + $0x10] sm:$0xff]
        %v603 = vld [vmem:[#allocation6 + $0x18] sm:$0xff]
        %v604 = vld [vmem:[#allocation6 + $0x20] sm:$0xff]
        %v605 = vld [vmem:[#allocation6 + $0x28] sm:$0xff]
        %v606 = vld [vmem:[#allocation6 + $0x30] sm:$0xff]
        %v607 = vld [vmem:[#allocation6 + $0x38] sm:$0xff]
        %v608 = vld [vmem:[#allocation6 + $0x40] sm:$0xff]
        %v609 = vld [vmem:[#allocation6 + $0x48] sm:$0xff]
        %v610 = vld [vmem:[#allocation6 + $0x50] sm:$0xff]
        %v611 = vld [vmem:[#allocation6 + $0x58] sm:$0xff]
        %v612 = vld [vmem:[#allocation6 + $0x60] sm:$0xff]
        %v613 = vld [vmem:[#allocation6 + $0x68] sm:$0xff]
        %v614 = vld [vmem:[#allocation6 + $0x70] sm:$0xff]
        %v615 = vld [vmem:[#allocation6 + $0x78] sm:$0xff]
        %v616 = vld [vmem:[#allocation6 + $0x80] sm:$0xff]
        %v617 = vld [vmem:[#allocation6 + $0x88] sm:$0xff]
        %v618 = vld [vmem:[#allocation6 + $0x90] sm:$0xff]
        %v619 = vld [vmem:[#allocation6 + $0x98] sm:$0xff]
        %v620 = vld [vmem:[#allocation6 + $0xa0] sm:$0xff]
        %v621 = vld [vmem:[#allocation6 + $0xa8] sm:$0xff]
        %v622 = vld [vmem:[#allocation6 + $0xb0] sm:$0xff]
        %v623 = vld [vmem:[#allocation6 + $0xb8] sm:$0xff]
        %v624 = vld [vmem:[#allocation6 + $0xc0] sm:$0xff]
        %v625 = vld [vmem:[#allocation6 + $0xc8] sm:$0xff]
        %v626 = vld [vmem:[#allocation6 + $0xd0] sm:$0xff]
        %v627 = vld [vmem:[#allocation6 + $0xd8] sm:$0xff]
        %v628 = vld [vmem:[#allocation6 + $0xe0] sm:$0xff]
        %v629 = vld [vmem:[#allocation6 + $0xe8] sm:$0xff]
        %v630 = vld [vmem:[#allocation6 + $0xf0] sm:$0xff]
        %v631 = vld [vmem:[#allocation6 + $0xf8] sm:$0xff]
        %v632 = vld [vmem:[#allocation6 + $0x100] sm:$0xff]
        %v633 = vld [vmem:[#allocation6 + $0x108] sm:$0xff]
        %v634 = vld [vmem:[#allocation6 + $0x110] sm:$0xff]
        %v635 = vld [vmem:[#allocation6 + $0x118] sm:$0xff]
        %v636 = vld [vmem:[#allocation6 + $0x120] sm:$0xff]
        %v637 = vld [vmem:[#allocation6 + $0x128] sm:$0xff]
        %v638 = vld [vmem:[#allocation6 + $0x130] sm:$0xff]
        %v639 = vld [vmem:[#allocation6 + $0x138] sm:$0xff]
        %v640 = vld [vmem:[#allocation6 + $0x140] sm:$0xff]
        %v641 = vld [vmem:[#allocation6 + $0x148] sm:$0xff]
        %v642 = vld [vmem:[#allocation6 + $0x150] sm:$0xff]
        %v643 = vld [vmem:[#allocation6 + $0x158] sm:$0xff]
        %v644 = vld [vmem:[#allocation6 + $0x160] sm:$0xff]
        %v645 = vld [vmem:[#allocation6 + $0x168] sm:$0xff]
        %v646 = vld [vmem:[#allocation6 + $0x170] sm:$0xff]
        %v647 = vld [vmem:[#allocation6 + $0x178] sm:$0xff]
        %v648 = vld [vmem:[#allocation6 + $0x180] sm:$0xff]
        %v649 = vld [vmem:[#allocation6 + $0x188] sm:$0xff]
        %v650 = vld [vmem:[#allocation6 + $0x190] sm:$0xff]
        %v651 = vld [vmem:[#allocation6 + $0x198] sm:$0xff]
        %v652 = vld [vmem:[#allocation6 + $0x1a0] sm:$0xff]
        %v653 = vld [vmem:[#allocation6 + $0x1a8] sm:$0xff]
        %v654 = vld [vmem:[#allocation6 + $0x1b0] sm:$0xff]
        %v655 = vld [vmem:[#allocation6 + $0x1b8] sm:$0xff]
        %v656 = vld [vmem:[#allocation6 + $0x1c0] sm:$0xff]
        %v657 = vld [vmem:[#allocation6 + $0x1c8] sm:$0xff]
        %v658 = vld [vmem:[#allocation6 + $0x1d0] sm:$0xff]
        %v659 = vld [vmem:[#allocation6 + $0x1d8] sm:$0xff]
        %v660 = vld [vmem:[#allocation6 + $0x1e0] sm:$0xff]
        %v661 = vld [vmem:[#allocation6 + $0x1e8] sm:$0xff]
        %v662 = vld [vmem:[#allocation6 + $0x1f0] sm:$0xff]
        %v663 = vld [vmem:[#allocation6 + $0x1f8] sm:$0xff]
        %v664 = vld [vmem:[%s2] sm:$0xf]
        %v666 = vlaneseq
        %v667 = vshrl.u32 %v666, 7
        %v668 = vsub.s32 0, %v667
        %v669 = vrot.slane %v664, %v668
        %v670 = vlaneseq
        %v671 = vshrl.u32 %v670, 7
        %v672 = vsub.s32 1, %v671
        %v673 = vrot.slane %v664, %v672
        %v674 = vlaneseq
        %v675 = vshrl.u32 %v674, 7
        %v676 = vsub.s32 2, %v675
        %v677 = vrot.slane %v664, %v676
        %v678 = vlaneseq
        %v679 = vshrl.u32 %v678, 7
        %v680 = vsub.s32 3, %v679
        %v681 = vrot.slane %v664, %v680
        %v750 = vunpack.c.l.b16 %v600
        %v751 = vunpack.c.h.b16 %v600
        %v752 = vunpack.c.l.b16 %v601
        %v753 = vunpack.c.h.b16 %v601
        %v754 = vunpack.c.l.b16 %v602
        %v755 = vunpack.c.h.b16 %v602
        %v756 = vunpack.c.l.b16 %v603
        %v757 = vunpack.c.h.b16 %v603
        %v758 = vunpack.c.l.b16 %v604
        %v759 = vunpack.c.h.b16 %v604
        %v760 = vunpack.c.l.b16 %v605
        %v761 = vunpack.c.h.b16 %v605
        %v762 = vunpack.c.l.b16 %v606
        %v763 = vunpack.c.h.b16 %v606
        %v764 = vunpack.c.l.b16 %v607
        %v765 = vunpack.c.h.b16 %v607
        %v766 = vunpack.c.l.b16 %v608
        %v767 = vunpack.c.h.b16 %v608
        %v768 = vunpack.c.l.b16 %v609
        %v769 = vunpack.c.h.b16 %v609
        %v770 = vunpack.c.l.b16 %v610
        %v771 = vunpack.c.h.b16 %v610
        %v772 = vunpack.c.l.b16 %v611
        %v773 = vunpack.c.h.b16 %v611
        %v774 = vunpack.c.l.b16 %v612
        %v775 = vunpack.c.h.b16 %v612
        %v776 = vunpack.c.l.b16 %v613
        %v777 = vunpack.c.h.b16 %v613
        %v778 = vunpack.c.l.b16 %v614
        %v779 = vunpack.c.h.b16 %v614
        %v780 = vunpack.c.l.b16 %v615
        %v781 = vunpack.c.h.b16 %v615
        %v782 = vunpack.c.l.b16 %v616
        %v783 = vunpack.c.h.b16 %v616
        %v784 = vunpack.c.l.b16 %v617
        %v785 = vunpack.c.h.b16 %v617
        %v786 = vunpack.c.l.b16 %v618
        %v787 = vunpack.c.h.b16 %v618
        %v788 = vunpack.c.l.b16 %v619
        %v789 = vunpack.c.h.b16 %v619
        %v790 = vunpack.c.l.b16 %v620
        %v791 = vunpack.c.h.b16 %v620
        %v792 = vunpack.c.l.b16 %v621
        %v793 = vunpack.c.h.b16 %v621
        %v794 = vunpack.c.l.b16 %v622
        %v795 = vunpack.c.h.b16 %v622
        %v796 = vunpack.c.l.b16 %v623
        %v797 = vunpack.c.h.b16 %v623
        %v798 = vunpack.c.l.b16 %v624
        %v799 = vunpack.c.h.b16 %v624
        %v800 = vunpack.c.l.b16 %v625
        %v801 = vunpack.c.h.b16 %v625
        %v802 = vunpack.c.l.b16 %v626
        %v803 = vunpack.c.h.b16 %v626
        %v804 = vunpack.c.l.b16 %v627
        %v805 = vunpack.c.h.b16 %v627
        %v806 = vunpack.c.l.b16 %v628
        %v807 = vunpack.c.h.b16 %v628
        %v808 = vunpack.c.l.b16 %v629
        %v809 = vunpack.c.h.b16 %v629
        %v810 = vunpack.c.l.b16 %v630
        %v811 = vunpack.c.h.b16 %v630
        %v812 = vunpack.c.l.b16 %v631
        %v813 = vunpack.c.h.b16 %v631
        %v814 = vunpack.c.l.b16 %v632
        %v815 = vunpack.c.h.b16 %v632
        %v816 = vunpack.c.l.b16 %v633
        %v817 = vunpack.c.h.b16 %v633
        %v818 = vunpack.c.l.b16 %v634
        %v819 = vunpack.c.h.b16 %v634
        %v820 = vunpack.c.l.b16 %v635
        %v821 = vunpack.c.h.b16 %v635
        %v822 = vunpack.c.l.b16 %v636
        %v823 = vunpack.c.h.b16 %v636
        %v824 = vunpack.c.l.b16 %v637
        %v825 = vunpack.c.h.b16 %v637
        %v826 = vunpack.c.l.b16 %v638
        %v827 = vunpack.c.h.b16 %v638
        %v828 = vunpack.c.l.b16 %v639
        %v829 = vunpack.c.h.b16 %v639
        %v830 = vunpack.c.l.b16 %v640
        %v831 = vunpack.c.h.b16 %v640
        %v832 = vunpack.c.l.b16 %v641
        %v833 = vunpack.c.h.b16 %v641
        %v834 = vunpack.c.l.b16 %v642
        %v835 = vunpack.c.h.b16 %v642
        %v836 = vunpack.c.l.b16 %v643
        %v837 = vunpack.c.h.b16 %v643
        %v838 = vunpack.c.l.b16 %v644
        %v839 = vunpack.c.h.b16 %v644
        %v840 = vunpack.c.l.b16 %v645
        %v841 = vunpack.c.h.b16 %v645
        %v842 = vunpack.c.l.b16 %v646
        %v843 = vunpack.c.h.b16 %v646
        %v844 = vunpack.c.l.b16 %v647
        %v845 = vunpack.c.h.b16 %v647
        %v846 = vunpack.c.l.b16 %v648
        %v847 = vunpack.c.h.b16 %v648
        %v848 = vunpack.c.l.b16 %v649
        %v849 = vunpack.c.h.b16 %v649
        %v850 = vunpack.c.l.b16 %v650
        %v851 = vunpack.c.h.b16 %v650
        %v852 = vunpack.c.l.b16 %v651
        %v853 = vunpack.c.h.b16 %v651
        %v854 = vunpack.c.l.b16 %v652
        %v855 = vunpack.c.h.b16 %v652
        %v856 = vunpack.c.l.b16 %v653
        %v857 = vunpack.c.h.b16 %v653
        %v858 = vunpack.c.l.b16 %v654
        %v859 = vunpack.c.h.b16 %v654
        %v860 = vunpack.c.l.b16 %v655
        %v861 = vunpack.c.h.b16 %v655
        %v862 = vunpack.c.l.b16 %v656
        %v863 = vunpack.c.h.b16 %v656
        %v864 = vunpack.c.l.b16 %v657
        %v865 = vunpack.c.h.b16 %v657
        %v866 = vunpack.c.l.b16 %v658
        %v867 = vunpack.c.h.b16 %v658
        %v868 = vunpack.c.l.b16 %v659
        %v869 = vunpack.c.h.b16 %v659
        %v870 = vunpack.c.l.b16 %v660
        %v871 = vunpack.c.h.b16 %v660
        %v872 = vunpack.c.l.b16 %v661
        %v873 = vunpack.c.h.b16 %v661
        %v874 = vunpack.c.l.b16 %v662
        %v875 = vunpack.c.h.b16 %v662
        %v876 = vunpack.c.l.b16 %v663
        %v877 = vunpack.c.h.b16 %v663
        %v878 = vpack.c.b16 %v754, %v750
        %v879 = vpack.c.b16 %v755, %v751
        %v880 = vpack.c.b16 %v756, %v752
        %v881 = vpack.c.b16 %v757, %v753
        %v882 = vpack.c.b16 %v762, %v758
        %v883 = vpack.c.b16 %v763, %v759
        %v884 = vpack.c.b16 %v764, %v760
        %v885 = vpack.c.b16 %v765, %v761
        %v886 = vpack.c.b16 %v770, %v766
        %v887 = vpack.c.b16 %v771, %v767
        %v888 = vpack.c.b16 %v772, %v768
        %v889 = vpack.c.b16 %v773, %v769
        %v890 = vpack.c.b16 %v778, %v774
        %v891 = vpack.c.b16 %v779, %v775
        %v892 = vpack.c.b16 %v780, %v776
        %v893 = vpack.c.b16 %v781, %v777
        %v894 = vpack.c.b16 %v786, %v782
        %v895 = vpack.c.b16 %v787, %v783
        %v896 = vpack.c.b16 %v788, %v784
        %v897 = vpack.c.b16 %v789, %v785
        %v898 = vpack.c.b16 %v794, %v790
        %v899 = vpack.c.b16 %v795, %v791
        %v900 = vpack.c.b16 %v796, %v792
        %v901 = vpack.c.b16 %v797, %v793
        %v902 = vpack.c.b16 %v802, %v798
        %v903 = vpack.c.b16 %v803, %v799
        %v904 = vpack.c.b16 %v804, %v800
        %v905 = vpack.c.b16 %v805, %v801
        %v906 = vpack.c.b16 %v810, %v806
        %v907 = vpack.c.b16 %v811, %v807
        %v908 = vpack.c.b16 %v812, %v808
        %v909 = vpack.c.b16 %v813, %v809
        %v910 = vpack.c.b16 %v818, %v814
        %v911 = vpack.c.b16 %v819, %v815
        %v912 = vpack.c.b16 %v820, %v816
        %v913 = vpack.c.b16 %v821, %v817
        %v914 = vpack.c.b16 %v826, %v822
        %v915 = vpack.c.b16 %v827, %v823
        %v916 = vpack.c.b16 %v828, %v824
        %v917 = vpack.c.b16 %v829, %v825
        %v918 = vpack.c.b16 %v834, %v830
        %v919 = vpack.c.b16 %v835, %v831
        %v920 = vpack.c.b16 %v836, %v832
        %v921 = vpack.c.b16 %v837, %v833
        %v922 = vpack.c.b16 %v842, %v838
        %v923 = vpack.c.b16 %v843, %v839
        %v924 = vpack.c.b16 %v844, %v840
        %v925 = vpack.c.b16 %v845, %v841
        %v926 = vpack.c.b16 %v850, %v846
        %v927 = vpack.c.b16 %v851, %v847
        %v928 = vpack.c.b16 %v852, %v848
        %v929 = vpack.c.b16 %v853, %v849
        %v930 = vpack.c.b16 %v858, %v854
        %v931 = vpack.c.b16 %v859, %v855
        %v932 = vpack.c.b16 %v860, %v856
        %v933 = vpack.c.b16 %v861, %v857
        %v934 = vpack.c.b16 %v866, %v862
        %v935 = vpack.c.b16 %v867, %v863
        %v936 = vpack.c.b16 %v868, %v864
        %v937 = vpack.c.b16 %v869, %v865
        %v938 = vpack.c.b16 %v874, %v870
        %v939 = vpack.c.b16 %v875, %v871
        %v940 = vpack.c.b16 %v876, %v872
        %v941 = vpack.c.b16 %v877, %v873
        %1006 = vmatprep.subr.bf16.mxu0 %v907
        %1007 = vmatpush1.bf16.msra.mxu0 %v906
        %1008 = vmatprep.subr.bf16.mxu0 %v903
        %1009 = vmatpush1.bf16.msra.mxu0 %v902
        %1010 = vmatprep.subr.bf16.mxu0 %v899
        %1011 = vmatpush1.bf16.msra.mxu0 %v898
        %1012 = vmatprep.subr.bf16.mxu0 %v895
        %1013 = vmatpush1.bf16.msra.mxu0 %v894
        %1014 = vmatprep.subr.bf16.mxu0 %v891
        %1015 = vmatpush1.bf16.msra.mxu0 %v890
        %1016 = vmatprep.subr.bf16.mxu0 %v887
        %1017 = vmatpush1.bf16.msra.mxu0 %v886
        %1018 = vmatprep.subr.bf16.mxu0 %v883
        %1019 = vmatpush1.bf16.msra.mxu0 %v882
        %1020 = vmatprep.subr.bf16.mxu0 %v879
        %1021 = vmatpush1.bf16.msra.mxu0 %v878
        %1022 = vmatprep.subr.bf16.mxu0 %v939
        %1023 = vmatpush2.bf16.msra.mxu0 %v938
        %1024 = vmatprep.subr.bf16.mxu0 %v935
        %1025 = vmatpush2.bf16.msra.mxu0 %v934
        %1026 = vmatprep.subr.bf16.mxu0 %v931
        %1027 = vmatpush2.bf16.msra.mxu0 %v930
        %1028 = vmatprep.subr.bf16.mxu0 %v927
        %1029 = vmatpush2.bf16.msra.mxu0 %v926
        %1030 = vmatprep.subr.bf16.mxu0 %v923
        %1031 = vmatpush2.bf16.msra.mxu0 %v922
        %1032 = vmatprep.subr.bf16.mxu0 %v919
        %1033 = vmatpush2.bf16.msra.mxu0 %v918
        %1034 = vmatprep.subr.bf16.mxu0 %v915
        %1035 = vmatpush2.bf16.msra.mxu0 %v914
        %1036 = vmatprep.subr.bf16.mxu0 %v911
        %1037 = vmatpush2.bf16.msra.mxu0 %v910
        %1038 = vmatprep.mubr.bf16.mxu0 %v569
        %1039 = vmatmul.mubr.bf16.gmra.mxu0 %v568
        %v1040 = vpop.f32.mrf.mxu0
        %v1041 = vadd.f32 %v669, %v1040
        %v1042 = vpop.f32.mrf.mxu0
        %v1043 = vadd.f32 %v673, %v1042
        %v1044 = vpop.f32.mrf.mxu0
        %v1045 = vadd.f32 %v669, %v1044
        %v1046 = vpop.f32.mrf.mxu0
        %v1047 = vadd.f32 %v673, %v1046
        %1048 = vmatprep.mubr.bf16.mxu0 %v571
        %1049 = vmatmul.mubr.bf16.gmra.mxu0 %v570
        %v1050 = vpop.f32.mrf.mxu0
        %v1051 = vadd.f32 %v669, %v1050
        %v1052 = vpop.f32.mrf.mxu0
        %v1053 = vadd.f32 %v673, %v1052
        %v1054 = vpop.f32.mrf.mxu0
        %v1055 = vadd.f32 %v669, %v1054
        %v1056 = vpop.f32.mrf.mxu0
        %v1057 = vadd.f32 %v673, %v1056
        %1058 = vmatprep.mubr.bf16.mxu0 %v573
        %1059 = vmatmul.mubr.bf16.gmra.mxu0 %v572
        %v1060 = vpop.f32.mrf.mxu0
        %v1061 = vadd.f32 %v669, %v1060
        %v1062 = vpop.f32.mrf.mxu0
        %v1063 = vadd.f32 %v673, %v1062
        %v1064 = vpop.f32.mrf.mxu0
        %v1065 = vadd.f32 %v669, %v1064
        %v1066 = vpop.f32.mrf.mxu0
        %v1067 = vadd.f32 %v673, %v1066
        %1068 = vmatprep.mubr.bf16.mxu0 %v575
        %1069 = vmatmul.mubr.bf16.gmra.mxu0 %v574
        %v1070 = vpop.f32.mrf.mxu0
        %v1071 = vadd.f32 %v669, %v1070
        %v1072 = vpop.f32.mrf.mxu0
        %v1073 = vadd.f32 %v673, %v1072
        %v1074 = vpop.f32.mrf.mxu0
        %v1075 = vadd.f32 %v669, %v1074
        %v1076 = vpop.f32.mrf.mxu0
        %v1077 = vadd.f32 %v673, %v1076
        %1078 = vmatprep.mubr.bf16.mxu0 %v577
        %1079 = vmatmul.mubr.bf16.gmra.mxu0 %v576
        %v1080 = vpop.f32.mrf.mxu0
        %v1081 = vadd.f32 %v669, %v1080
        %v1082 = vpop.f32.mrf.mxu0
        %v1083 = vadd.f32 %v673, %v1082
        %v1084 = vpop.f32.mrf.mxu0
        %v1085 = vadd.f32 %v669, %v1084
        %v1086 = vpop.f32.mrf.mxu0
        %v1087 = vadd.f32 %v673, %v1086
        %1088 = vmatprep.mubr.bf16.mxu0 %v579
        %1089 = vmatmul.mubr.bf16.gmra.mxu0 %v578
        %v1090 = vpop.f32.mrf.mxu0
        %v1091 = vadd.f32 %v669, %v1090
        %v1092 = vpop.f32.mrf.mxu0
        %v1093 = vadd.f32 %v673, %v1092
        %v1094 = vpop.f32.mrf.mxu0
        %v1095 = vadd.f32 %v669, %v1094
        %v1096 = vpop.f32.mrf.mxu0
        %v1097 = vadd.f32 %v673, %v1096
        %1098 = vmatprep.mubr.bf16.mxu0 %v581
        %1099 = vmatmul.mubr.bf16.gmra.mxu0 %v580
        %v1100 = vpop.f32.mrf.mxu0
        %v1101 = vadd.f32 %v669, %v1100
        %v1102 = vpop.f32.mrf.mxu0
        %v1103 = vadd.f32 %v673, %v1102
        %v1104 = vpop.f32.mrf.mxu0
        %v1105 = vadd.f32 %v669, %v1104
        %v1106 = vpop.f32.mrf.mxu0
        %v1107 = vadd.f32 %v673, %v1106
        %1108 = vmatprep.mubr.bf16.mxu0 %v583
        %1109 = vmatmul.mubr.bf16.gmra.mxu0 %v582
        %v1110 = vpop.f32.mrf.mxu0
        %v1111 = vadd.f32 %v669, %v1110
        %v1112 = vpop.f32.mrf.mxu0
        %v1113 = vadd.f32 %v673, %v1112
        %v1114 = vpop.f32.mrf.mxu0
        %v1115 = vadd.f32 %v669, %v1114
        %v1116 = vpop.f32.mrf.mxu0
        %v1117 = vadd.f32 %v673, %v1116
        %1118 = vmatprep.mubr.bf16.mxu0 %v585
        %1119 = vmatmul.mubr.bf16.gmra.mxu0 %v584
        %v1120 = vpop.f32.mrf.mxu0
        %v1121 = vadd.f32 %v669, %v1120
        %v1122 = vpop.f32.mrf.mxu0
        %v1123 = vadd.f32 %v673, %v1122
        %v1124 = vpop.f32.mrf.mxu0
        %v1125 = vadd.f32 %v669, %v1124
        %v1126 = vpop.f32.mrf.mxu0
        %v1127 = vadd.f32 %v673, %v1126
        %1128 = vmatprep.mubr.bf16.mxu0 %v587
        %1129 = vmatmul.mubr.bf16.gmra.mxu0 %v586
        %v1130 = vpop.f32.mrf.mxu0
        %v1131 = vadd.f32 %v669, %v1130
        %v1132 = vpop.f32.mrf.mxu0
        %v1133 = vadd.f32 %v673, %v1132
        %v1134 = vpop.f32.mrf.mxu0
        %v1135 = vadd.f32 %v669, %v1134
        %v1136 = vpop.f32.mrf.mxu0
        %v1137 = vadd.f32 %v673, %v1136
        %1138 = vmatprep.mubr.bf16.mxu0 %v589
        %1139 = vmatmul.mubr.bf16.gmra.mxu0 %v588
        %v1140 = vpop.f32.mrf.mxu0
        %v1141 = vadd.f32 %v669, %v1140
        %v1142 = vpop.f32.mrf.mxu0
        %v1143 = vadd.f32 %v673, %v1142
        %v1144 = vpop.f32.mrf.mxu0
        %v1145 = vadd.f32 %v669, %v1144
        %v1146 = vpop.f32.mrf.mxu0
        %v1147 = vadd.f32 %v673, %v1146
        %1148 = vmatprep.mubr.bf16.mxu0 %v591
        %1149 = vmatmul.mubr.bf16.gmra.mxu0 %v590
        %v1150 = vpop.f32.mrf.mxu0
        %v1151 = vadd.f32 %v669, %v1150
        %v1152 = vpop.f32.mrf.mxu0
        %v1153 = vadd.f32 %v673, %v1152
        %v1154 = vpop.f32.mrf.mxu0
        %v1155 = vadd.f32 %v669, %v1154
        %v1156 = vpop.f32.mrf.mxu0
        %v1157 = vadd.f32 %v673, %v1156
        %1158 = vmatprep.mubr.bf16.mxu0 %v593
        %1159 = vmatmul.mubr.bf16.gmra.mxu0 %v592
        %v1160 = vpop.f32.mrf.mxu0
        %v1161 = vadd.f32 %v669, %v1160
        %v1162 = vpop.f32.mrf.mxu0
        %v1163 = vadd.f32 %v673, %v1162
        %v1164 = vpop.f32.mrf.mxu0
        %v1165 = vadd.f32 %v669, %v1164
        %v1166 = vpop.f32.mrf.mxu0
        %v1167 = vadd.f32 %v673, %v1166
        %1168 = vmatprep.mubr.bf16.mxu0 %v595
        %1169 = vmatmul.mubr.bf16.gmra.mxu0 %v594
        %v1170 = vpop.f32.mrf.mxu0
        %v1171 = vadd.f32 %v669, %v1170
        %v1172 = vpop.f32.mrf.mxu0
        %v1173 = vadd.f32 %v673, %v1172
        %v1174 = vpop.f32.mrf.mxu0
        %v1175 = vadd.f32 %v669, %v1174
        %v1176 = vpop.f32.mrf.mxu0
        %v1177 = vadd.f32 %v673, %v1176
        %1178 = vmatprep.mubr.bf16.mxu0 %v597
        %1179 = vmatmul.mubr.bf16.gmra.mxu0 %v596
        %v1180 = vpop.f32.mrf.mxu0
        %v1181 = vadd.f32 %v669, %v1180
        %v1182 = vpop.f32.mrf.mxu0
        %v1183 = vadd.f32 %v673, %v1182
        %v1184 = vpop.f32.mrf.mxu0
        %v1185 = vadd.f32 %v669, %v1184
        %v1186 = vpop.f32.mrf.mxu0
        %v1187 = vadd.f32 %v673, %v1186
        %1188 = vmatprep.mubr.bf16.mxu0 %v599
        %1189 = vmatmul.mubr.bf16.gmra.mxu0 %v598
        %v1190 = vpop.f32.mrf.mxu0
        %v1191 = vadd.f32 %v669, %v1190
        %v1192 = vpop.f32.mrf.mxu0
        %v1193 = vadd.f32 %v673, %v1192
        %v1194 = vpop.f32.mrf.mxu0
        %v1195 = vadd.f32 %v669, %v1194
        %v1196 = vpop.f32.mrf.mxu0
        %v1197 = vadd.f32 %v673, %v1196
        %1198 = vdwg.mxu0
        %1199 = vmatprep.subr.bf16.mxu0 %v909
        %1200 = vmatpush1.bf16.msra.mxu0 %v908
        %1201 = vmatprep.subr.bf16.mxu0 %v905
        %1202 = vmatpush1.bf16.msra.mxu0 %v904
        %1203 = vmatprep.subr.bf16.mxu0 %v901
        %1204 = vmatpush1.bf16.msra.mxu0 %v900
        %1205 = vmatprep.subr.bf16.mxu0 %v897
        %1206 = vmatpush1.bf16.msra.mxu0 %v896
        %1207 = vmatprep.subr.bf16.mxu0 %v893
        %1208 = vmatpush1.bf16.msra.mxu0 %v892
        %1209 = vmatprep.subr.bf16.mxu0 %v889
        %1210 = vmatpush1.bf16.msra.mxu0 %v888
        %1211 = vmatprep.subr.bf16.mxu0 %v885
        %1212 = vmatpush1.bf16.msra.mxu0 %v884
        %1213 = vmatprep.subr.bf16.mxu0 %v881
        %1214 = vmatpush1.bf16.msra.mxu0 %v880
        %1215 = vmatprep.subr.bf16.mxu0 %v941
        %1216 = vmatpush2.bf16.msra.mxu0 %v940
        %1217 = vmatprep.subr.bf16.mxu0 %v937
        %1218 = vmatpush2.bf16.msra.mxu0 %v936
        %1219 = vmatprep.subr.bf16.mxu0 %v933
        %1220 = vmatpush2.bf16.msra.mxu0 %v932
        %1221 = vmatprep.subr.bf16.mxu0 %v929
        %1222 = vmatpush2.bf16.msra.mxu0 %v928
        %1223 = vmatprep.subr.bf16.mxu0 %v925
        %1224 = vmatpush2.bf16.msra.mxu0 %v924
        %1225 = vmatprep.subr.bf16.mxu0 %v921
        %1226 = vmatpush2.bf16.msra.mxu0 %v920
        %1227 = vmatprep.subr.bf16.mxu0 %v917
        %1228 = vmatpush2.bf16.msra.mxu0 %v916
        %1229 = vmatprep.subr.bf16.mxu0 %v913
        %1230 = vmatpush2.bf16.msra.mxu0 %v912
        %1231 = vmatprep.mubr.bf16.mxu0 %v569
        %1232 = vmatmul.mubr.bf16.gmra.mxu0 %v568
        %v1233 = vpop.f32.mrf.mxu0
        %v1234 = vadd.f32 %v677, %v1233
        %v1235 = vpop.f32.mrf.mxu0
        %v1236 = vadd.f32 %v681, %v1235
        %v1237 = vpop.f32.mrf.mxu0
        %v1238 = vadd.f32 %v677, %v1237
        %v1239 = vpop.f32.mrf.mxu0
        %v1240 = vadd.f32 %v681, %v1239
        %1241 = vmatprep.mubr.bf16.mxu0 %v571
        %1242 = vmatmul.mubr.bf16.gmra.mxu0 %v570
        %v1243 = vpop.f32.mrf.mxu0
        %v1244 = vadd.f32 %v677, %v1243
        %v1245 = vpop.f32.mrf.mxu0
        %v1246 = vadd.f32 %v681, %v1245
        %v1247 = vpop.f32.mrf.mxu0
        %v1248 = vadd.f32 %v677, %v1247
        %v1249 = vpop.f32.mrf.mxu0
        %v1250 = vadd.f32 %v681, %v1249
        %1251 = vmatprep.mubr.bf16.mxu0 %v573
        %1252 = vmatmul.mubr.bf16.gmra.mxu0 %v572
        %v1253 = vpop.f32.mrf.mxu0
        %v1254 = vadd.f32 %v677, %v1253
        %v1255 = vpop.f32.mrf.mxu0
        %v1256 = vadd.f32 %v681, %v1255
        %v1257 = vpop.f32.mrf.mxu0
        %v1258 = vadd.f32 %v677, %v1257
        %v1259 = vpop.f32.mrf.mxu0
        %v1260 = vadd.f32 %v681, %v1259
        %1261 = vmatprep.mubr.bf16.mxu0 %v575
        %1262 = vmatmul.mubr.bf16.gmra.mxu0 %v574
        %v1263 = vpop.f32.mrf.mxu0
        %v1264 = vadd.f32 %v677, %v1263
        %v1265 = vpop.f32.mrf.mxu0
        %v1266 = vadd.f32 %v681, %v1265
        %v1267 = vpop.f32.mrf.mxu0
        %v1268 = vadd.f32 %v677, %v1267
        %v1269 = vpop.f32.mrf.mxu0
        %v1270 = vadd.f32 %v681, %v1269
        %1271 = vmatprep.mubr.bf16.mxu0 %v577
        %1272 = vmatmul.mubr.bf16.gmra.mxu0 %v576
        %v1273 = vpop.f32.mrf.mxu0
        %v1274 = vadd.f32 %v677, %v1273
        %v1275 = vpop.f32.mrf.mxu0
        %v1276 = vadd.f32 %v681, %v1275
        %v1277 = vpop.f32.mrf.mxu0
        %v1278 = vadd.f32 %v677, %v1277
        %v1279 = vpop.f32.mrf.mxu0
        %v1280 = vadd.f32 %v681, %v1279
        %1281 = vmatprep.mubr.bf16.mxu0 %v579
        %1282 = vmatmul.mubr.bf16.gmra.mxu0 %v578
        %v1283 = vpop.f32.mrf.mxu0
        %v1284 = vadd.f32 %v677, %v1283
        %v1285 = vpop.f32.mrf.mxu0
        %v1286 = vadd.f32 %v681, %v1285
        %v1287 = vpop.f32.mrf.mxu0
        %v1288 = vadd.f32 %v677, %v1287
        %v1289 = vpop.f32.mrf.mxu0
        %v1290 = vadd.f32 %v681, %v1289
        %1291 = vmatprep.mubr.bf16.mxu0 %v581
        %1292 = vmatmul.mubr.bf16.gmra.mxu0 %v580
        %v1293 = vpop.f32.mrf.mxu0
        %v1294 = vadd.f32 %v677, %v1293
        %v1295 = vpop.f32.mrf.mxu0
        %v1296 = vadd.f32 %v681, %v1295
        %v1297 = vpop.f32.mrf.mxu0
        %v1298 = vadd.f32 %v677, %v1297
        %v1299 = vpop.f32.mrf.mxu0
        %v1300 = vadd.f32 %v681, %v1299
        %1301 = vmatprep.mubr.bf16.mxu0 %v583
        %1302 = vmatmul.mubr.bf16.gmra.mxu0 %v582
        %v1303 = vpop.f32.mrf.mxu0
        %v1304 = vadd.f32 %v677, %v1303
        %v1305 = vpop.f32.mrf.mxu0
        %v1306 = vadd.f32 %v681, %v1305
        %v1307 = vpop.f32.mrf.mxu0
        %v1308 = vadd.f32 %v677, %v1307
        %v1309 = vpop.f32.mrf.mxu0
        %v1310 = vadd.f32 %v681, %v1309
        %1311 = vmatprep.mubr.bf16.mxu0 %v585
        %1312 = vmatmul.mubr.bf16.gmra.mxu0 %v584
        %v1313 = vpop.f32.mrf.mxu0
        %v1314 = vadd.f32 %v677, %v1313
        %v1315 = vpop.f32.mrf.mxu0
        %v1316 = vadd.f32 %v681, %v1315
        %v1317 = vpop.f32.mrf.mxu0
        %v1318 = vadd.f32 %v677, %v1317
        %v1319 = vpop.f32.mrf.mxu0
        %v1320 = vadd.f32 %v681, %v1319
        %1321 = vmatprep.mubr.bf16.mxu0 %v587
        %1322 = vmatmul.mubr.bf16.gmra.mxu0 %v586
        %v1323 = vpop.f32.mrf.mxu0
        %v1324 = vadd.f32 %v677, %v1323
        %v1325 = vpop.f32.mrf.mxu0
        %v1326 = vadd.f32 %v681, %v1325
        %v1327 = vpop.f32.mrf.mxu0
        %v1328 = vadd.f32 %v677, %v1327
        %v1329 = vpop.f32.mrf.mxu0
        %v1330 = vadd.f32 %v681, %v1329
        %1331 = vmatprep.mubr.bf16.mxu0 %v589
        %1332 = vmatmul.mubr.bf16.gmra.mxu0 %v588
        %v1333 = vpop.f32.mrf.mxu0
        %v1334 = vadd.f32 %v677, %v1333
        %v1335 = vpop.f32.mrf.mxu0
        %v1336 = vadd.f32 %v681, %v1335
        %v1337 = vpop.f32.mrf.mxu0
        %v1338 = vadd.f32 %v677, %v1337
        %v1339 = vpop.f32.mrf.mxu0
        %v1340 = vadd.f32 %v681, %v1339
        %1341 = vmatprep.mubr.bf16.mxu0 %v591
        %1342 = vmatmul.mubr.bf16.gmra.mxu0 %v590
        %v1343 = vpop.f32.mrf.mxu0
        %v1344 = vadd.f32 %v677, %v1343
        %v1345 = vpop.f32.mrf.mxu0
        %v1346 = vadd.f32 %v681, %v1345
        %v1347 = vpop.f32.mrf.mxu0
        %v1348 = vadd.f32 %v677, %v1347
        %v1349 = vpop.f32.mrf.mxu0
        %v1350 = vadd.f32 %v681, %v1349
        %1351 = vmatprep.mubr.bf16.mxu0 %v593
        %1352 = vmatmul.mubr.bf16.gmra.mxu0 %v592
        %v1353 = vpop.f32.mrf.mxu0
        %v1354 = vadd.f32 %v677, %v1353
        %v1355 = vpop.f32.mrf.mxu0
        %v1356 = vadd.f32 %v681, %v1355
        %v1357 = vpop.f32.mrf.mxu0
        %v1358 = vadd.f32 %v677, %v1357
        %v1359 = vpop.f32.mrf.mxu0
        %v1360 = vadd.f32 %v681, %v1359
        %1361 = vmatprep.mubr.bf16.mxu0 %v595
        %1362 = vmatmul.mubr.bf16.gmra.mxu0 %v594
        %v1363 = vpop.f32.mrf.mxu0
        %v1364 = vadd.f32 %v677, %v1363
        %v1365 = vpop.f32.mrf.mxu0
        %v1366 = vadd.f32 %v681, %v1365
        %v1367 = vpop.f32.mrf.mxu0
        %v1368 = vadd.f32 %v677, %v1367
        %v1369 = vpop.f32.mrf.mxu0
        %v1370 = vadd.f32 %v681, %v1369
        %1371 = vmatprep.mubr.bf16.mxu0 %v597
        %1372 = vmatmul.mubr.bf16.gmra.mxu0 %v596
        %v1373 = vpop.f32.mrf.mxu0
        %v1374 = vadd.f32 %v677, %v1373
        %v1375 = vpop.f32.mrf.mxu0
        %v1376 = vadd.f32 %v681, %v1375
        %v1377 = vpop.f32.mrf.mxu0
        %v1378 = vadd.f32 %v677, %v1377
        %v1379 = vpop.f32.mrf.mxu0
        %v1380 = vadd.f32 %v681, %v1379
        %1381 = vmatprep.mubr.bf16.mxu0 %v599
        %1382 = vmatmul.mubr.bf16.gmra.mxu0 %v598
        %v1383 = vpop.f32.mrf.mxu0
        %v1384 = vadd.f32 %v677, %v1383
        %v1385 = vpop.f32.mrf.mxu0
        %v1386 = vadd.f32 %v681, %v1385
        %v1387 = vpop.f32.mrf.mxu0
        %v1388 = vadd.f32 %v677, %v1387
        %v1389 = vpop.f32.mrf.mxu0
        %v1390 = vadd.f32 %v681, %v1389
        %1391 = vdwg.mxu0
        %v1392 = vmax.f32 %v1041, 0.0
        %v1393 = vmax.f32 %v1043, 0.0
        %v1394 = vmax.f32 %v1234, 0.0
        %v1395 = vmax.f32 %v1236, 0.0
        %v1396 = vmax.f32 %v1045, 0.0
        %v1397 = vmax.f32 %v1047, 0.0
        %v1398 = vmax.f32 %v1238, 0.0
        %v1399 = vmax.f32 %v1240, 0.0
        %v1400 = vmax.f32 %v1051, 0.0
        %v1401 = vmax.f32 %v1053, 0.0
        %v1402 = vmax.f32 %v1244, 0.0
        %v1403 = vmax.f32 %v1246, 0.0
        %v1404 = vmax.f32 %v1055, 0.0
        %v1405 = vmax.f32 %v1057, 0.0
        %v1406 = vmax.f32 %v1248, 0.0
        %v1407 = vmax.f32 %v1250, 0.0
        %v1408 = vmax.f32 %v1061, 0.0
        %v1409 = vmax.f32 %v1063, 0.0
        %v1410 = vmax.f32 %v1254, 0.0
        %v1411 = vmax.f32 %v1256, 0.0
        %v1412 = vmax.f32 %v1065, 0.0
        %v1413 = vmax.f32 %v1067, 0.0
        %v1414 = vmax.f32 %v1258, 0.0
        %v1415 = vmax.f32 %v1260, 0.0
        %v1416 = vmax.f32 %v1071, 0.0
        %v1417 = vmax.f32 %v1073, 0.0
        %v1418 = vmax.f32 %v1264, 0.0
        %v1419 = vmax.f32 %v1266, 0.0
        %v1420 = vmax.f32 %v1075, 0.0
        %v1421 = vmax.f32 %v1077, 0.0
        %v1422 = vmax.f32 %v1268, 0.0
        %v1423 = vmax.f32 %v1270, 0.0
        %v1424 = vmax.f32 %v1081, 0.0
        %v1425 = vmax.f32 %v1083, 0.0
        %v1426 = vmax.f32 %v1274, 0.0
        %v1427 = vmax.f32 %v1276, 0.0
        %v1428 = vmax.f32 %v1085, 0.0
        %v1429 = vmax.f32 %v1087, 0.0
        %v1430 = vmax.f32 %v1278, 0.0
        %v1431 = vmax.f32 %v1280, 0.0
        %v1432 = vmax.f32 %v1091, 0.0
        %v1433 = vmax.f32 %v1093, 0.0
        %v1434 = vmax.f32 %v1284, 0.0
        %v1435 = vmax.f32 %v1286, 0.0
        %v1436 = vmax.f32 %v1095, 0.0
        %v1437 = vmax.f32 %v1097, 0.0
        %v1438 = vmax.f32 %v1288, 0.0
        %v1439 = vmax.f32 %v1290, 0.0
        %v1440 = vmax.f32 %v1101, 0.0
        %v1441 = vmax.f32 %v1103, 0.0
        %v1442 = vmax.f32 %v1294, 0.0
        %v1443 = vmax.f32 %v1296, 0.0
        %v1444 = vmax.f32 %v1105, 0.0
        %v1445 = vmax.f32 %v1107, 0.0
        %v1446 = vmax.f32 %v1298, 0.0
        %v1447 = vmax.f32 %v1300, 0.0
        %v1448 = vmax.f32 %v1111, 0.0
        %v1449 = vmax.f32 %v1113, 0.0
        %v1450 = vmax.f32 %v1304, 0.0
        %v1451 = vmax.f32 %v1306, 0.0
        %v1452 = vmax.f32 %v1115, 0.0
        %v1453 = vmax.f32 %v1117, 0.0
        %v1454 = vmax.f32 %v1308, 0.0
        %v1455 = vmax.f32 %v1310, 0.0
        %v1456 = vmax.f32 %v1121, 0.0
        %v1457 = vmax.f32 %v1123, 0.0
        %v1458 = vmax.f32 %v1314, 0.0
        %v1459 = vmax.f32 %v1316, 0.0
        %v1460 = vmax.f32 %v1125, 0.0
        %v1461 = vmax.f32 %v1127, 0.0
        %v1462 = vmax.f32 %v1318, 0.0
        %v1463 = vmax.f32 %v1320, 0.0
        %v1464 = vmax.f32 %v1131, 0.0
        %v1465 = vmax.f32 %v1133, 0.0
        %v1466 = vmax.f32 %v1324, 0.0
        %v1467 = vmax.f32 %v1326, 0.0
        %v1468 = vmax.f32 %v1135, 0.0
        %v1469 = vmax.f32 %v1137, 0.0
        %v1470 = vmax.f32 %v1328, 0.0
        %v1471 = vmax.f32 %v1330, 0.0
        %v1472 = vmax.f32 %v1141, 0.0
        %v1473 = vmax.f32 %v1143, 0.0
        %v1474 = vmax.f32 %v1334, 0.0
        %v1475 = vmax.f32 %v1336, 0.0
        %v1476 = vmax.f32 %v1145, 0.0
        %v1477 = vmax.f32 %v1147, 0.0
        %v1478 = vmax.f32 %v1338, 0.0
        %v1479 = vmax.f32 %v1340, 0.0
        %v1480 = vmax.f32 %v1151, 0.0
        %v1481 = vmax.f32 %v1153, 0.0
        %v1482 = vmax.f32 %v1344, 0.0
        %v1483 = vmax.f32 %v1346, 0.0
        %v1484 = vmax.f32 %v1155, 0.0
        %v1485 = vmax.f32 %v1157, 0.0
        %v1486 = vmax.f32 %v1348, 0.0
        %v1487 = vmax.f32 %v1350, 0.0
        %v1488 = vmax.f32 %v1161, 0.0
        %v1489 = vmax.f32 %v1163, 0.0
        %v1490 = vmax.f32 %v1354, 0.0
        %v1491 = vmax.f32 %v1356, 0.0
        %v1492 = vmax.f32 %v1165, 0.0
        %v1493 = vmax.f32 %v1167, 0.0
        %v1494 = vmax.f32 %v1358, 0.0
        %v1495 = vmax.f32 %v1360, 0.0
        %v1496 = vmax.f32 %v1171, 0.0
        %v1497 = vmax.f32 %v1173, 0.0
        %v1498 = vmax.f32 %v1364, 0.0
        %v1499 = vmax.f32 %v1366, 0.0
        %v1500 = vmax.f32 %v1175, 0.0
        %v1501 = vmax.f32 %v1177, 0.0
        %v1502 = vmax.f32 %v1368, 0.0
        %v1503 = vmax.f32 %v1370, 0.0
        %v1504 = vmax.f32 %v1181, 0.0
        %v1505 = vmax.f32 %v1183, 0.0
        %v1506 = vmax.f32 %v1374, 0.0
        %v1507 = vmax.f32 %v1376, 0.0
        %v1508 = vmax.f32 %v1185, 0.0
        %v1509 = vmax.f32 %v1187, 0.0
        %v1510 = vmax.f32 %v1378, 0.0
        %v1511 = vmax.f32 %v1380, 0.0
        %v1512 = vmax.f32 %v1191, 0.0
        %v1513 = vmax.f32 %v1193, 0.0
        %v1514 = vmax.f32 %v1384, 0.0
        %v1515 = vmax.f32 %v1386, 0.0
        %v1516 = vmax.f32 %v1195, 0.0
        %v1517 = vmax.f32 %v1197, 0.0
        %v1518 = vmax.f32 %v1388, 0.0
        %v1519 = vmax.f32 %v1390, 0.0
        %v1520 = vlaneseq
        %v1521 = vshrl.u32 %v1520, 7
        %v1522 = vadd.s32 %v1521, 8
        %v1523 = vadd.s32 %v1521, 16
        %v1524 = vadd.s32 %v1521, 24
        %v1525 = vadd.s32 %v1521, 32
        %v1526 = vadd.s32 %v1521, 40
        %v1527 = vadd.s32 %v1521, 48
        %v1528 = vadd.s32 %v1521, 56
        %v1529 = vadd.s32 %v1521, 64
        %v1530 = vadd.s32 %v1521, 72
        %v1531 = vadd.s32 %v1521, 80
        %v1532 = vadd.s32 %v1521, 88
        %v1533 = vadd.s32 %v1521, 96
        %v1534 = vadd.s32 %v1521, 104
        %v1535 = vadd.s32 %v1521, 112
        %v1536 = vadd.s32 %v1521, 120
        %v1537 = vadd.s32 %v1521, 128
        %v1538 = vadd.s32 %v1521, 136
        %v1539 = vadd.s32 %v1521, 144
        %v1540 = vadd.s32 %v1521, 152
        %v1541 = vadd.s32 %v1521, 160
        %v1542 = vadd.s32 %v1521, 168
        %v1543 = vadd.s32 %v1521, 176
        %v1544 = vadd.s32 %v1521, 184
        %v1545 = vadd.s32 %v1521, 192
        %v1546 = vadd.s32 %v1521, 200
        %v1547 = vadd.s32 %v1521, 208
        %v1548 = vadd.s32 %v1521, 216
        %v1549 = vadd.s32 %v1521, 224
        %v1550 = vadd.s32 %v1521, 232
        %v1551 = vadd.s32 %v1521, 240
        %v1552 = vadd.s32 %v1521, 248
        %s1553 = smul.u32 %s35, 2
        %s1554 = sadd.s32 %s1553, %s36
        %s1555 = smul.u32 %s1554, 256
        %v1556 = vstv %s1555
        %v1557 = vadd.s32 %v1521, %v1556
        %v1558 = vadd.s32 %v1522, %v1556
        %v1559 = vadd.s32 %v1523, %v1556
        %v1560 = vadd.s32 %v1524, %v1556
        %v1561 = vadd.s32 %v1525, %v1556
        %v1562 = vadd.s32 %v1526, %v1556
        %v1563 = vadd.s32 %v1527, %v1556
        %v1564 = vadd.s32 %v1528, %v1556
        %v1565 = vadd.s32 %v1529, %v1556
        %v1566 = vadd.s32 %v1530, %v1556
        %v1567 = vadd.s32 %v1531, %v1556
        %v1568 = vadd.s32 %v1532, %v1556
        %v1569 = vadd.s32 %v1533, %v1556
        %v1570 = vadd.s32 %v1534, %v1556
        %v1571 = vadd.s32 %v1535, %v1556
        %v1572 = vadd.s32 %v1536, %v1556
        %v1573 = vadd.s32 %v1537, %v1556
        %v1574 = vadd.s32 %v1538, %v1556
        %v1575 = vadd.s32 %v1539, %v1556
        %v1576 = vadd.s32 %v1540, %v1556
        %v1577 = vadd.s32 %v1541, %v1556
        %v1578 = vadd.s32 %v1542, %v1556
        %v1579 = vadd.s32 %v1543, %v1556
        %v1580 = vadd.s32 %v1544, %v1556
        %v1581 = vadd.s32 %v1545, %v1556
        %v1582 = vadd.s32 %v1546, %v1556
        %v1583 = vadd.s32 %v1547, %v1556
        %v1584 = vadd.s32 %v1548, %v1556
        %v1585 = vadd.s32 %v1549, %v1556
        %v1586 = vadd.s32 %v1550, %v1556
        %v1587 = vadd.s32 %v1551, %v1556
        %v1588 = vadd.s32 %v1552, %v1556
        %vm1589 = vcmp.lt.s32.totalorder %v1557, 700
        %vm1590 = vcmp.lt.s32.totalorder %v1558, 700
        %vm1591 = vcmp.lt.s32.totalorder %v1559, 700
        %vm1592 = vcmp.lt.s32.totalorder %v1560, 700
        %vm1593 = vcmp.lt.s32.totalorder %v1561, 700
        %vm1594 = vcmp.lt.s32.totalorder %v1562, 700
        %vm1595 = vcmp.lt.s32.totalorder %v1563, 700
        %vm1596 = vcmp.lt.s32.totalorder %v1564, 700
        %vm1597 = vcmp.lt.s32.totalorder %v1565, 700
        %vm1598 = vcmp.lt.s32.totalorder %v1566, 700
        %vm1599 = vcmp.lt.s32.totalorder %v1567, 700
        %vm1600 = vcmp.lt.s32.totalorder %v1568, 700
        %vm1601 = vcmp.lt.s32.totalorder %v1569, 700
        %vm1602 = vcmp.lt.s32.totalorder %v1570, 700
        %vm1603 = vcmp.lt.s32.totalorder %v1571, 700
        %vm1604 = vcmp.lt.s32.totalorder %v1572, 700
        %vm1605 = vcmp.lt.s32.totalorder %v1573, 700
        %vm1606 = vcmp.lt.s32.totalorder %v1574, 700
        %vm1607 = vcmp.lt.s32.totalorder %v1575, 700
        %vm1608 = vcmp.lt.s32.totalorder %v1576, 700
        %vm1609 = vcmp.lt.s32.totalorder %v1577, 700
        %vm1610 = vcmp.lt.s32.totalorder %v1578, 700
        %vm1611 = vcmp.lt.s32.totalorder %v1579, 700
        %vm1612 = vcmp.lt.s32.totalorder %v1580, 700
        %vm1613 = vcmp.lt.s32.totalorder %v1581, 700
        %vm1614 = vcmp.lt.s32.totalorder %v1582, 700
        %vm1615 = vcmp.lt.s32.totalorder %v1583, 700
        %vm1616 = vcmp.lt.s32.totalorder %v1584, 700
        %vm1617 = vcmp.lt.s32.totalorder %v1585, 700
        %vm1618 = vcmp.lt.s32.totalorder %v1586, 700
        %vm1619 = vcmp.lt.s32.totalorder %v1587, 700
        %vm1620 = vcmp.lt.s32.totalorder %v1588, 700
        %v1621 = vsel %vm1589, 1, 0
        %v1622 = vsel %vm1590, 1, 0
        %v1623 = vsel %vm1591, 1, 0
        %v1624 = vsel %vm1592, 1, 0
        %v1625 = vsel %vm1593, 1, 0
        %v1626 = vsel %vm1594, 1, 0
        %v1627 = vsel %vm1595, 1, 0
        %v1628 = vsel %vm1596, 1, 0
        %v1629 = vsel %vm1597, 1, 0
        %v1630 = vsel %vm1598, 1, 0
        %v1631 = vsel %vm1599, 1, 0
        %v1632 = vsel %vm1600, 1, 0
        %v1633 = vsel %vm1601, 1, 0
        %v1634 = vsel %vm1602, 1, 0
        %v1635 = vsel %vm1603, 1, 0
        %v1636 = vsel %vm1604, 1, 0
        %v1637 = vsel %vm1605, 1, 0
        %v1638 = vsel %vm1606, 1, 0
        %v1639 = vsel %vm1607, 1, 0
        %v1640 = vsel %vm1608, 1, 0
        %v1641 = vsel %vm1609, 1, 0
        %v1642 = vsel %vm1610, 1, 0
        %v1643 = vsel %vm1611, 1, 0
        %v1644 = vsel %vm1612, 1, 0
        %v1645 = vsel %vm1613, 1, 0
        %v1646 = vsel %vm1614, 1, 0
        %v1647 = vsel %vm1615, 1, 0
        %v1648 = vsel %vm1616, 1, 0
        %v1649 = vsel %vm1617, 1, 0
        %v1650 = vsel %vm1618, 1, 0
        %v1651 = vsel %vm1619, 1, 0
        %v1652 = vsel %vm1620, 1, 0
        %vm1653 = vcmp.eq.s32.totalorder %v1621, 1
        %vm1654 = vcmp.eq.s32.totalorder %v1622, 1
        %vm1655 = vcmp.eq.s32.totalorder %v1623, 1
        %vm1656 = vcmp.eq.s32.totalorder %v1624, 1
        %vm1657 = vcmp.eq.s32.totalorder %v1625, 1
        %vm1658 = vcmp.eq.s32.totalorder %v1626, 1
        %vm1659 = vcmp.eq.s32.totalorder %v1627, 1
        %vm1660 = vcmp.eq.s32.totalorder %v1628, 1
        %vm1661 = vcmp.eq.s32.totalorder %v1629, 1
        %vm1662 = vcmp.eq.s32.totalorder %v1630, 1
        %vm1663 = vcmp.eq.s32.totalorder %v1631, 1
        %vm1664 = vcmp.eq.s32.totalorder %v1632, 1
        %vm1665 = vcmp.eq.s32.totalorder %v1633, 1
        %vm1666 = vcmp.eq.s32.totalorder %v1634, 1
        %vm1667 = vcmp.eq.s32.totalorder %v1635, 1
        %vm1668 = vcmp.eq.s32.totalorder %v1636, 1
        %vm1669 = vcmp.eq.s32.totalorder %v1637, 1
        %vm1670 = vcmp.eq.s32.totalorder %v1638, 1
        %vm1671 = vcmp.eq.s32.totalorder %v1639, 1
        %vm1672 = vcmp.eq.s32.totalorder %v1640, 1
        %vm1673 = vcmp.eq.s32.totalorder %v1641, 1
        %vm1674 = vcmp.eq.s32.totalorder %v1642, 1
        %vm1675 = vcmp.eq.s32.totalorder %v1643, 1
        %vm1676 = vcmp.eq.s32.totalorder %v1644, 1
        %vm1677 = vcmp.eq.s32.totalorder %v1645, 1
        %vm1678 = vcmp.eq.s32.totalorder %v1646, 1
        %vm1679 = vcmp.eq.s32.totalorder %v1647, 1
        %vm1680 = vcmp.eq.s32.totalorder %v1648, 1
        %vm1681 = vcmp.eq.s32.totalorder %v1649, 1
        %vm1682 = vcmp.eq.s32.totalorder %v1650, 1
        %vm1683 = vcmp.eq.s32.totalorder %v1651, 1
        %vm1684 = vcmp.eq.s32.totalorder %v1652, 1
        %v1685 = vsel %vm1653, %v1392, 0.0
        %v1686 = vsel %vm1653, %v1393, 0.0
        %v1687 = vsel %vm1653, %v1394, 0.0
        %v1688 = vsel %vm1653, %v1395, 0.0
        %v1689 = vsel %vm1654, %v1396, 0.0
        %v1690 = vsel %vm1654, %v1397, 0.0
        %v1691 = vsel %vm1654, %v1398, 0.0
        %v1692 = vsel %vm1654, %v1399, 0.0
        %v1693 = vsel %vm1655, %v1400, 0.0
        %v1694 = vsel %vm1655, %v1401, 0.0
        %v1695 = vsel %vm1655, %v1402, 0.0
        %v1696 = vsel %vm1655, %v1403, 0.0
        %v1697 = vsel %vm1656, %v1404, 0.0
        %v1698 = vsel %vm1656, %v1405, 0.0
        %v1699 = vsel %vm1656, %v1406, 0.0
        %v1700 = vsel %vm1656, %v1407, 0.0
        %v1701 = vsel %vm1657, %v1408, 0.0
        %v1702 = vsel %vm1657, %v1409, 0.0
        %v1703 = vsel %vm1657, %v1410, 0.0
        %v1704 = vsel %vm1657, %v1411, 0.0
        %v1705 = vsel %vm1658, %v1412, 0.0
        %v1706 = vsel %vm1658, %v1413, 0.0
        %v1707 = vsel %vm1658, %v1414, 0.0
        %v1708 = vsel %vm1658, %v1415, 0.0
        %v1709 = vsel %vm1659, %v1416, 0.0
        %v1710 = vsel %vm1659, %v1417, 0.0
        %v1711 = vsel %vm1659, %v1418, 0.0
        %v1712 = vsel %vm1659, %v1419, 0.0
        %v1713 = vsel %vm1660, %v1420, 0.0
        %v1714 = vsel %vm1660, %v1421, 0.0
        %v1715 = vsel %vm1660, %v1422, 0.0
        %v1716 = vsel %vm1660, %v1423, 0.0
        %v1717 = vsel %vm1661, %v1424, 0.0
        %v1718 = vsel %vm1661, %v1425, 0.0
        %v1719 = vsel %vm1661, %v1426, 0.0
        %v1720 = vsel %vm1661, %v1427, 0.0
        %v1721 = vsel %vm1662, %v1428, 0.0
        %v1722 = vsel %vm1662, %v1429, 0.0
        %v1723 = vsel %vm1662, %v1430, 0.0
        %v1724 = vsel %vm1662, %v1431, 0.0
        %v1725 = vsel %vm1663, %v1432, 0.0
        %v1726 = vsel %vm1663, %v1433, 0.0
        %v1727 = vsel %vm1663, %v1434, 0.0
        %v1728 = vsel %vm1663, %v1435, 0.0
        %v1729 = vsel %vm1664, %v1436, 0.0
        %v1730 = vsel %vm1664, %v1437, 0.0
        %v1731 = vsel %vm1664, %v1438, 0.0
        %v1732 = vsel %vm1664, %v1439, 0.0
        %v1733 = vsel %vm1665, %v1440, 0.0
        %v1734 = vsel %vm1665, %v1441, 0.0
        %v1735 = vsel %vm1665, %v1442, 0.0
        %v1736 = vsel %vm1665, %v1443, 0.0
        %v1737 = vsel %vm1666, %v1444, 0.0
        %v1738 = vsel %vm1666, %v1445, 0.0
        %v1739 = vsel %vm1666, %v1446, 0.0
        %v1740 = vsel %vm1666, %v1447, 0.0
        %v1741 = vsel %vm1667, %v1448, 0.0
        %v1742 = vsel %vm1667, %v1449, 0.0
        %v1743 = vsel %vm1667, %v1450, 0.0
        %v1744 = vsel %vm1667, %v1451, 0.0
        %v1745 = vsel %vm1668, %v1452, 0.0
        %v1746 = vsel %vm1668, %v1453, 0.0
        %v1747 = vsel %vm1668, %v1454, 0.0
        %v1748 = vsel %vm1668, %v1455, 0.0
        %v1749 = vsel %vm1669, %v1456, 0.0
        %v1750 = vsel %vm1669, %v1457, 0.0
        %v1751 = vsel %vm1669, %v1458, 0.0
        %v1752 = vsel %vm1669, %v1459, 0.0
        %v1753 = vsel %vm1670, %v1460, 0.0
        %v1754 = vsel %vm1670, %v1461, 0.0
        %v1755 = vsel %vm1670, %v1462, 0.0
        %v1756 = vsel %vm1670, %v1463, 0.0
        %v1757 = vsel %vm1671, %v1464, 0.0
        %v1758 = vsel %vm1671, %v1465, 0.0
        %v1759 = vsel %vm1671, %v1466, 0.0
        %v1760 = vsel %vm1671, %v1467, 0.0
        %v1761 = vsel %vm1672, %v1468, 0.0
        %v1762 = vsel %vm1672, %v1469, 0.0
        %v1763 = vsel %vm1672, %v1470, 0.0
        %v1764 = vsel %vm1672, %v1471, 0.0
        %v1765 = vsel %vm1673, %v1472, 0.0
        %v1766 = vsel %vm1673, %v1473, 0.0
        %v1767 = vsel %vm1673, %v1474, 0.0
        %v1768 = vsel %vm1673, %v1475, 0.0
        %v1769 = vsel %vm1674, %v1476, 0.0
        %v1770 = vsel %vm1674, %v1477, 0.0
        %v1771 = vsel %vm1674, %v1478, 0.0
        %v1772 = vsel %vm1674, %v1479, 0.0
        %v1773 = vsel %vm1675, %v1480, 0.0
        %v1774 = vsel %vm1675, %v1481, 0.0
        %v1775 = vsel %vm1675, %v1482, 0.0
        %v1776 = vsel %vm1675, %v1483, 0.0
        %v1777 = vsel %vm1676, %v1484, 0.0
        %v1778 = vsel %vm1676, %v1485, 0.0
        %v1779 = vsel %vm1676, %v1486, 0.0
        %v1780 = vsel %vm1676, %v1487, 0.0
        %v1781 = vsel %vm1677, %v1488, 0.0
        %v1782 = vsel %vm1677, %v1489, 0.0
        %v1783 = vsel %vm1677, %v1490, 0.0
        %v1784 = vsel %vm1677, %v1491, 0.0
        %v1785 = vsel %vm1678, %v1492, 0.0
        %v1786 = vsel %vm1678, %v1493, 0.0
        %v1787 = vsel %vm1678, %v1494, 0.0
        %v1788 = vsel %vm1678, %v1495, 0.0
        %v1789 = vsel %vm1679, %v1496, 0.0
        %v1790 = vsel %vm1679, %v1497, 0.0
        %v1791 = vsel %vm1679, %v1498, 0.0
        %v1792 = vsel %vm1679, %v1499, 0.0
        %v1793 = vsel %vm1680, %v1500, 0.0
        %v1794 = vsel %vm1680, %v1501, 0.0
        %v1795 = vsel %vm1680, %v1502, 0.0
        %v1796 = vsel %vm1680, %v1503, 0.0
        %v1797 = vsel %vm1681, %v1504, 0.0
        %v1798 = vsel %vm1681, %v1505, 0.0
        %v1799 = vsel %vm1681, %v1506, 0.0
        %v1800 = vsel %vm1681, %v1507, 0.0
        %v1801 = vsel %vm1682, %v1508, 0.0
        %v1802 = vsel %vm1682, %v1509, 0.0
        %v1803 = vsel %vm1682, %v1510, 0.0
        %v1804 = vsel %vm1682, %v1511, 0.0
        %v1805 = vsel %vm1683, %v1512, 0.0
        %v1806 = vsel %vm1683, %v1513, 0.0
        %v1807 = vsel %vm1683, %v1514, 0.0
        %v1808 = vsel %vm1683, %v1515, 0.0
        %v1809 = vsel %vm1684, %v1516, 0.0
        %v1810 = vsel %vm1684, %v1517, 0.0
        %v1811 = vsel %vm1684, %v1518, 0.0
        %v1812 = vsel %vm1684, %v1519, 0.0
        %v1813 = vpack.c.bf16 %v1689, %v1685
        %v1814 = vpack.c.bf16 %v1690, %v1686
        %v1815 = vpack.c.bf16 %v1691, %v1687
        %v1816 = vpack.c.bf16 %v1692, %v1688
        %v1817 = vpack.c.bf16 %v1697, %v1693
        %v1818 = vpack.c.bf16 %v1698, %v1694
        %v1819 = vpack.c.bf16 %v1699, %v1695
        %v1820 = vpack.c.bf16 %v1700, %v1696
        %v1821 = vpack.c.bf16 %v1705, %v1701
        %v1822 = vpack.c.bf16 %v1706, %v1702
        %v1823 = vpack.c.bf16 %v1707, %v1703
        %v1824 = vpack.c.bf16 %v1708, %v1704
        %v1825 = vpack.c.bf16 %v1713, %v1709
        %v1826 = vpack.c.bf16 %v1714, %v1710
        %v1827 = vpack.c.bf16 %v1715, %v1711
        %v1828 = vpack.c.bf16 %v1716, %v1712
        %v1829 = vpack.c.bf16 %v1721, %v1717
        %v1830 = vpack.c.bf16 %v1722, %v1718
        %v1831 = vpack.c.bf16 %v1723, %v1719
        %v1832 = vpack.c.bf16 %v1724, %v1720
        %v1833 = vpack.c.bf16 %v1729, %v1725
        %v1834 = vpack.c.bf16 %v1730, %v1726
        %v1835 = vpack.c.bf16 %v1731, %v1727
        %v1836 = vpack.c.bf16 %v1732, %v1728
        %v1837 = vpack.c.bf16 %v1737, %v1733
        %v1838 = vpack.c.bf16 %v1738, %v1734
        %v1839 = vpack.c.bf16 %v1739, %v1735
        %v1840 = vpack.c.bf16 %v1740, %v1736
        %v1841 = vpack.c.bf16 %v1745, %v1741
        %v1842 = vpack.c.bf16 %v1746, %v1742
        %v1843 = vpack.c.bf16 %v1747, %v1743
        %v1844 = vpack.c.bf16 %v1748, %v1744
        %v1845 = vpack.c.bf16 %v1753, %v1749
        %v1846 = vpack.c.bf16 %v1754, %v1750
        %v1847 = vpack.c.bf16 %v1755, %v1751
        %v1848 = vpack.c.bf16 %v1756, %v1752
        %v1849 = vpack.c.bf16 %v1761, %v1757
        %v1850 = vpack.c.bf16 %v1762, %v1758
        %v1851 = vpack.c.bf16 %v1763, %v1759
        %v1852 = vpack.c.bf16 %v1764, %v1760
        %v1853 = vpack.c.bf16 %v1769, %v1765
        %v1854 = vpack.c.bf16 %v1770, %v1766
        %v1855 = vpack.c.bf16 %v1771, %v1767
        %v1856 = vpack.c.bf16 %v1772, %v1768
        %v1857 = vpack.c.bf16 %v1777, %v1773
        %v1858 = vpack.c.bf16 %v1778, %v1774
        %v1859 = vpack.c.bf16 %v1779, %v1775
        %v1860 = vpack.c.bf16 %v1780, %v1776
        %v1861 = vpack.c.bf16 %v1785, %v1781
        %v1862 = vpack.c.bf16 %v1786, %v1782
        %v1863 = vpack.c.bf16 %v1787, %v1783
        %v1864 = vpack.c.bf16 %v1788, %v1784
        %v1865 = vpack.c.bf16 %v1793, %v1789
        %v1866 = vpack.c.bf16 %v1794, %v1790
        %v1867 = vpack.c.bf16 %v1795, %v1791
        %v1868 = vpack.c.bf16 %v1796, %v1792
        %v1869 = vpack.c.bf16 %v1801, %v1797
        %v1870 = vpack.c.bf16 %v1802, %v1798
        %v1871 = vpack.c.bf16 %v1803, %v1799
        %v1872 = vpack.c.bf16 %v1804, %v1800
        %v1873 = vpack.c.bf16 %v1809, %v1805
        %v1874 = vpack.c.bf16 %v1810, %v1806
        %v1875 = vpack.c.bf16 %v1811, %v1807
        %v1876 = vpack.c.bf16 %v1812, %v1808
        %v1877 = vld [vmem:[#allocation8] sm:$0xff]
        %v1878 = vld [vmem:[#allocation8 + $0x8] sm:$0xff]
        %v1879 = vld [vmem:[#allocation8 + $0x10] sm:$0xff]
        %v1880 = vld [vmem:[#allocation8 + $0x18] sm:$0xff]
        %v1881 = vld [vmem:[#allocation8 + $0x20] sm:$0xff]
        %v1882 = vld [vmem:[#allocation8 + $0x28] sm:$0xff]
        %v1883 = vld [vmem:[#allocation8 + $0x30] sm:$0xff]
        %v1884 = vld [vmem:[#allocation8 + $0x38] sm:$0xff]
        %v1885 = vld [vmem:[#allocation8 + $0x40] sm:$0xff]
        %v1886 = vld [vmem:[#allocation8 + $0x48] sm:$0xff]
        %v1887 = vld [vmem:[#allocation8 + $0x50] sm:$0xff]
        %v1888 = vld [vmem:[#allocation8 + $0x58] sm:$0xff]
        %v1889 = vld [vmem:[#allocation8 + $0x60] sm:$0xff]
        %v1890 = vld [vmem:[#allocation8 + $0x68] sm:$0xff]
        %v1891 = vld [vmem:[#allocation8 + $0x70] sm:$0xff]
        %v1892 = vld [vmem:[#allocation8 + $0x78] sm:$0xff]
        %v1893 = vld [vmem:[#allocation8 + $0x80] sm:$0xff]
        %v1894 = vld [vmem:[#allocation8 + $0x88] sm:$0xff]
        %v1895 = vld [vmem:[#allocation8 + $0x90] sm:$0xff]
        %v1896 = vld [vmem:[#allocation8 + $0x98] sm:$0xff]
        %v1897 = vld [vmem:[#allocation8 + $0xa0] sm:$0xff]
        %v1898 = vld [vmem:[#allocation8 + $0xa8] sm:$0xff]
        %v1899 = vld [vmem:[#allocation8 + $0xb0] sm:$0xff]
        %v1900 = vld [vmem:[#allocation8 + $0xb8] sm:$0xff]
        %v1901 = vld [vmem:[#allocation8 + $0xc0] sm:$0xff]
        %v1902 = vld [vmem:[#allocation8 + $0xc8] sm:$0xff]
        %v1903 = vld [vmem:[#allocation8 + $0xd0] sm:$0xff]
        %v1904 = vld [vmem:[#allocation8 + $0xd8] sm:$0xff]
        %v1905 = vld [vmem:[#allocation8 + $0xe0] sm:$0xff]
        %v1906 = vld [vmem:[#allocation8 + $0xe8] sm:$0xff]
        %v1907 = vld [vmem:[#allocation8 + $0xf0] sm:$0xff]
        %v1908 = vld [vmem:[#allocation8 + $0xf8] sm:$0xff]
        %v1909 = vld [vmem:[#allocation8 + $0x100] sm:$0xff]
        %v1910 = vld [vmem:[#allocation8 + $0x108] sm:$0xff]
        %v1911 = vld [vmem:[#allocation8 + $0x110] sm:$0xff]
        %v1912 = vld [vmem:[#allocation8 + $0x118] sm:$0xff]
        %v1913 = vld [vmem:[#allocation8 + $0x120] sm:$0xff]
        %v1914 = vld [vmem:[#allocation8 + $0x128] sm:$0xff]
        %v1915 = vld [vmem:[#allocation8 + $0x130] sm:$0xff]
        %v1916 = vld [vmem:[#allocation8 + $0x138] sm:$0xff]
        %v1917 = vld [vmem:[#allocation8 + $0x140] sm:$0xff]
        %v1918 = vld [vmem:[#allocation8 + $0x148] sm:$0xff]
        %v1919 = vld [vmem:[#allocation8 + $0x150] sm:$0xff]
        %v1920 = vld [vmem:[#allocation8 + $0x158] sm:$0xff]
        %v1921 = vld [vmem:[#allocation8 + $0x160] sm:$0xff]
        %v1922 = vld [vmem:[#allocation8 + $0x168] sm:$0xff]
        %v1923 = vld [vmem:[#allocation8 + $0x170] sm:$0xff]
        %v1924 = vld [vmem:[#allocation8 + $0x178] sm:$0xff]
        %v1925 = vld [vmem:[#allocation8 + $0x180] sm:$0xff]
        %v1926 = vld [vmem:[#allocation8 + $0x188] sm:$0xff]
        %v1927 = vld [vmem:[#allocation8 + $0x190] sm:$0xff]
        %v1928 = vld [vmem:[#allocation8 + $0x198] sm:$0xff]
        %v1929 = vld [vmem:[#allocation8 + $0x1a0] sm:$0xff]
        %v1930 = vld [vmem:[#allocation8 + $0x1a8] sm:$0xff]
        %v1931 = vld [vmem:[#allocation8 + $0x1b0] sm:$0xff]
        %v1932 = vld [vmem:[#allocation8 + $0x1b8] sm:$0xff]
        %v1933 = vld [vmem:[#allocation8 + $0x1c0] sm:$0xff]
        %v1934 = vld [vmem:[#allocation8 + $0x1c8] sm:$0xff]
        %v1935 = vld [vmem:[#allocation8 + $0x1d0] sm:$0xff]
        %v1936 = vld [vmem:[#allocation8 + $0x1d8] sm:$0xff]
        %v1937 = vld [vmem:[#allocation8 + $0x1e0] sm:$0xff]
        %v1938 = vld [vmem:[#allocation8 + $0x1e8] sm:$0xff]
        %v1939 = vld [vmem:[#allocation8 + $0x1f0] sm:$0xff]
        %v1940 = vld [vmem:[#allocation8 + $0x1f8] sm:$0xff]
        %v1941 = vld [vmem:[#allocation8 + $0x200] sm:$0xff]
        %v1942 = vld [vmem:[#allocation8 + $0x208] sm:$0xff]
        %v1943 = vld [vmem:[#allocation8 + $0x210] sm:$0xff]
        %v1944 = vld [vmem:[#allocation8 + $0x218] sm:$0xff]
        %v1945 = vld [vmem:[#allocation8 + $0x220] sm:$0xff]
        %v1946 = vld [vmem:[#allocation8 + $0x228] sm:$0xff]
        %v1947 = vld [vmem:[#allocation8 + $0x230] sm:$0xff]
        %v1948 = vld [vmem:[#allocation8 + $0x238] sm:$0xff]
        %v1949 = vld [vmem:[#allocation8 + $0x240] sm:$0xff]
        %v1950 = vld [vmem:[#allocation8 + $0x248] sm:$0xff]
        %v1951 = vld [vmem:[#allocation8 + $0x250] sm:$0xff]
        %v1952 = vld [vmem:[#allocation8 + $0x258] sm:$0xff]
        %v1953 = vld [vmem:[#allocation8 + $0x260] sm:$0xff]
        %v1954 = vld [vmem:[#allocation8 + $0x268] sm:$0xff]
        %v1955 = vld [vmem:[#allocation8 + $0x270] sm:$0xff]
        %v1956 = vld [vmem:[#allocation8 + $0x278] sm:$0xff]
        %v1957 = vld [vmem:[#allocation8 + $0x280] sm:$0xff]
        %v1958 = vld [vmem:[#allocation8 + $0x288] sm:$0xff]
        %v1959 = vld [vmem:[#allocation8 + $0x290] sm:$0xff]
        %v1960 = vld [vmem:[#allocation8 + $0x298] sm:$0xff]
        %v1961 = vld [vmem:[#allocation8 + $0x2a0] sm:$0xff]
        %v1962 = vld [vmem:[#allocation8 + $0x2a8] sm:$0xff]
        %v1963 = vld [vmem:[#allocation8 + $0x2b0] sm:$0xff]
        %v1964 = vld [vmem:[#allocation8 + $0x2b8] sm:$0xff]
        %v1965 = vld [vmem:[#allocation8 + $0x2c0] sm:$0xff]
        %v1966 = vld [vmem:[#allocation8 + $0x2c8] sm:$0xff]
        %v1967 = vld [vmem:[#allocation8 + $0x2d0] sm:$0xff]
        %v1968 = vld [vmem:[#allocation8 + $0x2d8] sm:$0xff]
        %v1969 = vld [vmem:[#allocation8 + $0x2e0] sm:$0xff]
        %v1970 = vld [vmem:[#allocation8 + $0x2e8] sm:$0xff]
        %v1971 = vld [vmem:[#allocation8 + $0x2f0] sm:$0xff]
        %v1972 = vld [vmem:[#allocation8 + $0x2f8] sm:$0xff]
        %v1973 = vld [vmem:[#allocation8 + $0x300] sm:$0xff]
        %v1974 = vld [vmem:[#allocation8 + $0x308] sm:$0xff]
        %v1975 = vld [vmem:[#allocation8 + $0x310] sm:$0xff]
        %v1976 = vld [vmem:[#allocation8 + $0x318] sm:$0xff]
        %v1977 = vld [vmem:[#allocation8 + $0x320] sm:$0xff]
        %v1978 = vld [vmem:[#allocation8 + $0x328] sm:$0xff]
        %v1979 = vld [vmem:[#allocation8 + $0x330] sm:$0xff]
        %v1980 = vld [vmem:[#allocation8 + $0x338] sm:$0xff]
        %v1981 = vld [vmem:[#allocation8 + $0x340] sm:$0xff]
        %v1982 = vld [vmem:[#allocation8 + $0x348] sm:$0xff]
        %v1983 = vld [vmem:[#allocation8 + $0x350] sm:$0xff]
        %v1984 = vld [vmem:[#allocation8 + $0x358] sm:$0xff]
        %v1985 = vld [vmem:[#allocation8 + $0x360] sm:$0xff]
        %v1986 = vld [vmem:[#allocation8 + $0x368] sm:$0xff]
        %v1987 = vld [vmem:[#allocation8 + $0x370] sm:$0xff]
        %v1988 = vld [vmem:[#allocation8 + $0x378] sm:$0xff]
        %v1989 = vld [vmem:[#allocation8 + $0x380] sm:$0xff]
        %v1990 = vld [vmem:[#allocation8 + $0x388] sm:$0xff]
        %v1991 = vld [vmem:[#allocation8 + $0x390] sm:$0xff]
        %v1992 = vld [vmem:[#allocation8 + $0x398] sm:$0xff]
        %v1993 = vld [vmem:[#allocation8 + $0x3a0] sm:$0xff]
        %v1994 = vld [vmem:[#allocation8 + $0x3a8] sm:$0xff]
        %v1995 = vld [vmem:[#allocation8 + $0x3b0] sm:$0xff]
        %v1996 = vld [vmem:[#allocation8 + $0x3b8] sm:$0xff]
        %v1997 = vld [vmem:[#allocation8 + $0x3c0] sm:$0xff]
        %v1998 = vld [vmem:[#allocation8 + $0x3c8] sm:$0xff]
        %v1999 = vld [vmem:[#allocation8 + $0x3d0] sm:$0xff]
        %v2000 = vld [vmem:[#allocation8 + $0x3d8] sm:$0xff]
        %v2001 = vld [vmem:[#allocation8 + $0x3e0] sm:$0xff]
        %v2002 = vld [vmem:[#allocation8 + $0x3e8] sm:$0xff]
        %v2003 = vld [vmem:[#allocation8 + $0x3f0] sm:$0xff]
        %v2004 = vld [vmem:[#allocation8 + $0x3f8] sm:$0xff]
        %v2005 = vld [vmem:[%s4] sm:$0xf]
        %v2007 = vlaneseq
        %v2008 = vshrl.u32 %v2007, 7
        %v2009 = vsub.s32 0, %v2008
        %v2010 = vrot.slane %v2005, %v2009
        %v2011 = vlaneseq
        %v2012 = vshrl.u32 %v2011, 7
        %v2013 = vsub.s32 1, %v2012
        %v2014 = vrot.slane %v2005, %v2013
        %v2015 = vlaneseq
        %v2016 = vshrl.u32 %v2015, 7
        %v2017 = vsub.s32 2, %v2016
        %v2018 = vrot.slane %v2005, %v2017
        %v2019 = vlaneseq
        %v2020 = vshrl.u32 %v2019, 7
        %v2021 = vsub.s32 3, %v2020
        %v2022 = vrot.slane %v2005, %v2021
        %v2155 = vunpack.c.l.b16 %v1877
        %v2156 = vunpack.c.h.b16 %v1877
        %v2157 = vunpack.c.l.b16 %v1878
        %v2158 = vunpack.c.h.b16 %v1878
        %v2159 = vunpack.c.l.b16 %v1879
        %v2160 = vunpack.c.h.b16 %v1879
        %v2161 = vunpack.c.l.b16 %v1880
        %v2162 = vunpack.c.h.b16 %v1880
        %v2163 = vunpack.c.l.b16 %v1881
        %v2164 = vunpack.c.h.b16 %v1881
        %v2165 = vunpack.c.l.b16 %v1882
        %v2166 = vunpack.c.h.b16 %v1882
        %v2167 = vunpack.c.l.b16 %v1883
        %v2168 = vunpack.c.h.b16 %v1883
        %v2169 = vunpack.c.l.b16 %v1884
        %v2170 = vunpack.c.h.b16 %v1884
        %v2171 = vunpack.c.l.b16 %v1885
        %v2172 = vunpack.c.h.b16 %v1885
        %v2173 = vunpack.c.l.b16 %v1886
        %v2174 = vunpack.c.h.b16 %v1886
        %v2175 = vunpack.c.l.b16 %v1887
        %v2176 = vunpack.c.h.b16 %v1887
        %v2177 = vunpack.c.l.b16 %v1888
        %v2178 = vunpack.c.h.b16 %v1888
        %v2179 = vunpack.c.l.b16 %v1889
        %v2180 = vunpack.c.h.b16 %v1889
        %v2181 = vunpack.c.l.b16 %v1890
        %v2182 = vunpack.c.h.b16 %v1890
        %v2183 = vunpack.c.l.b16 %v1891
        %v2184 = vunpack.c.h.b16 %v1891
        %v2185 = vunpack.c.l.b16 %v1892
        %v2186 = vunpack.c.h.b16 %v1892
        %v2187 = vunpack.c.l.b16 %v1893
        %v2188 = vunpack.c.h.b16 %v1893
        %v2189 = vunpack.c.l.b16 %v1894
        %v2190 = vunpack.c.h.b16 %v1894
        %v2191 = vunpack.c.l.b16 %v1895
        %v2192 = vunpack.c.h.b16 %v1895
        %v2193 = vunpack.c.l.b16 %v1896
        %v2194 = vunpack.c.h.b16 %v1896
        %v2195 = vunpack.c.l.b16 %v1897
        %v2196 = vunpack.c.h.b16 %v1897
        %v2197 = vunpack.c.l.b16 %v1898
        %v2198 = vunpack.c.h.b16 %v1898
        %v2199 = vunpack.c.l.b16 %v1899
        %v2200 = vunpack.c.h.b16 %v1899
        %v2201 = vunpack.c.l.b16 %v1900
        %v2202 = vunpack.c.h.b16 %v1900
        %v2203 = vunpack.c.l.b16 %v1901
        %v2204 = vunpack.c.h.b16 %v1901
        %v2205 = vunpack.c.l.b16 %v1902
        %v2206 = vunpack.c.h.b16 %v1902
        %v2207 = vunpack.c.l.b16 %v1903
        %v2208 = vunpack.c.h.b16 %v1903
        %v2209 = vunpack.c.l.b16 %v1904
        %v2210 = vunpack.c.h.b16 %v1904
        %v2211 = vunpack.c.l.b16 %v1905
        %v2212 = vunpack.c.h.b16 %v1905
        %v2213 = vunpack.c.l.b16 %v1906
        %v2214 = vunpack.c.h.b16 %v1906
        %v2215 = vunpack.c.l.b16 %v1907
        %v2216 = vunpack.c.h.b16 %v1907
        %v2217 = vunpack.c.l.b16 %v1908
        %v2218 = vunpack.c.h.b16 %v1908
        %v2219 = vunpack.c.l.b16 %v1909
        %v2220 = vunpack.c.h.b16 %v1909
        %v2221 = vunpack.c.l.b16 %v1910
        %v2222 = vunpack.c.h.b16 %v1910
        %v2223 = vunpack.c.l.b16 %v1911
        %v2224 = vunpack.c.h.b16 %v1911
        %v2225 = vunpack.c.l.b16 %v1912
        %v2226 = vunpack.c.h.b16 %v1912
        %v2227 = vunpack.c.l.b16 %v1913
        %v2228 = vunpack.c.h.b16 %v1913
        %v2229 = vunpack.c.l.b16 %v1914
        %v2230 = vunpack.c.h.b16 %v1914
        %v2231 = vunpack.c.l.b16 %v1915
        %v2232 = vunpack.c.h.b16 %v1915
        %v2233 = vunpack.c.l.b16 %v1916
        %v2234 = vunpack.c.h.b16 %v1916
        %v2235 = vunpack.c.l.b16 %v1917
        %v2236 = vunpack.c.h.b16 %v1917
        %v2237 = vunpack.c.l.b16 %v1918
        %v2238 = vunpack.c.h.b16 %v1918
        %v2239 = vunpack.c.l.b16 %v1919
        %v2240 = vunpack.c.h.b16 %v1919
        %v2241 = vunpack.c.l.b16 %v1920
        %v2242 = vunpack.c.h.b16 %v1920
        %v2243 = vunpack.c.l.b16 %v1921
        %v2244 = vunpack.c.h.b16 %v1921
        %v2245 = vunpack.c.l.b16 %v1922
        %v2246 = vunpack.c.h.b16 %v1922
        %v2247 = vunpack.c.l.b16 %v1923
        %v2248 = vunpack.c.h.b16 %v1923
        %v2249 = vunpack.c.l.b16 %v1924
        %v2250 = vunpack.c.h.b16 %v1924
        %v2251 = vunpack.c.l.b16 %v1925
        %v2252 = vunpack.c.h.b16 %v1925
        %v2253 = vunpack.c.l.b16 %v1926
        %v2254 = vunpack.c.h.b16 %v1926
        %v2255 = vunpack.c.l.b16 %v1927
        %v2256 = vunpack.c.h.b16 %v1927
        %v2257 = vunpack.c.l.b16 %v1928
        %v2258 = vunpack.c.h.b16 %v1928
        %v2259 = vunpack.c.l.b16 %v1929
        %v2260 = vunpack.c.h.b16 %v1929
        %v2261 = vunpack.c.l.b16 %v1930
        %v2262 = vunpack.c.h.b16 %v1930
        %v2263 = vunpack.c.l.b16 %v1931
        %v2264 = vunpack.c.h.b16 %v1931
        %v2265 = vunpack.c.l.b16 %v1932
        %v2266 = vunpack.c.h.b16 %v1932
        %v2267 = vunpack.c.l.b16 %v1933
        %v2268 = vunpack.c.h.b16 %v1933
        %v2269 = vunpack.c.l.b16 %v1934
        %v2270 = vunpack.c.h.b16 %v1934
        %v2271 = vunpack.c.l.b16 %v1935
        %v2272 = vunpack.c.h.b16 %v1935
        %v2273 = vunpack.c.l.b16 %v1936
        %v2274 = vunpack.c.h.b16 %v1936
        %v2275 = vunpack.c.l.b16 %v1937
        %v2276 = vunpack.c.h.b16 %v1937
        %v2277 = vunpack.c.l.b16 %v1938
        %v2278 = vunpack.c.h.b16 %v1938
        %v2279 = vunpack.c.l.b16 %v1939
        %v2280 = vunpack.c.h.b16 %v1939
        %v2281 = vunpack.c.l.b16 %v1940
        %v2282 = vunpack.c.h.b16 %v1940
        %v2283 = vunpack.c.l.b16 %v1941
        %v2284 = vunpack.c.h.b16 %v1941
        %v2285 = vunpack.c.l.b16 %v1942
        %v2286 = vunpack.c.h.b16 %v1942
        %v2287 = vunpack.c.l.b16 %v1943
        %v2288 = vunpack.c.h.b16 %v1943
        %v2289 = vunpack.c.l.b16 %v1944
        %v2290 = vunpack.c.h.b16 %v1944
        %v2291 = vunpack.c.l.b16 %v1945
        %v2292 = vunpack.c.h.b16 %v1945
        %v2293 = vunpack.c.l.b16 %v1946
        %v2294 = vunpack.c.h.b16 %v1946
        %v2295 = vunpack.c.l.b16 %v1947
        %v2296 = vunpack.c.h.b16 %v1947
        %v2297 = vunpack.c.l.b16 %v1948
        %v2298 = vunpack.c.h.b16 %v1948
        %v2299 = vunpack.c.l.b16 %v1949
        %v2300 = vunpack.c.h.b16 %v1949
        %v2301 = vunpack.c.l.b16 %v1950
        %v2302 = vunpack.c.h.b16 %v1950
        %v2303 = vunpack.c.l.b16 %v1951
        %v2304 = vunpack.c.h.b16 %v1951
        %v2305 = vunpack.c.l.b16 %v1952
        %v2306 = vunpack.c.h.b16 %v1952
        %v2307 = vunpack.c.l.b16 %v1953
        %v2308 = vunpack.c.h.b16 %v1953
        %v2309 = vunpack.c.l.b16 %v1954
        %v2310 = vunpack.c.h.b16 %v1954
        %v2311 = vunpack.c.l.b16 %v1955
        %v2312 = vunpack.c.h.b16 %v1955
        %v2313 = vunpack.c.l.b16 %v1956
        %v2314 = vunpack.c.h.b16 %v1956
        %v2315 = vunpack.c.l.b16 %v1957
        %v2316 = vunpack.c.h.b16 %v1957
        %v2317 = vunpack.c.l.b16 %v1958
        %v2318 = vunpack.c.h.b16 %v1958
        %v2319 = vunpack.c.l.b16 %v1959
        %v2320 = vunpack.c.h.b16 %v1959
        %v2321 = vunpack.c.l.b16 %v1960
        %v2322 = vunpack.c.h.b16 %v1960
        %v2323 = vunpack.c.l.b16 %v1961
        %v2324 = vunpack.c.h.b16 %v1961
        %v2325 = vunpack.c.l.b16 %v1962
        %v2326 = vunpack.c.h.b16 %v1962
        %v2327 = vunpack.c.l.b16 %v1963
        %v2328 = vunpack.c.h.b16 %v1963
        %v2329 = vunpack.c.l.b16 %v1964
        %v2330 = vunpack.c.h.b16 %v1964
        %v2331 = vunpack.c.l.b16 %v1965
        %v2332 = vunpack.c.h.b16 %v1965
        %v2333 = vunpack.c.l.b16 %v1966
        %v2334 = vunpack.c.h.b16 %v1966
        %v2335 = vunpack.c.l.b16 %v1967
        %v2336 = vunpack.c.h.b16 %v1967
        %v2337 = vunpack.c.l.b16 %v1968
        %v2338 = vunpack.c.h.b16 %v1968
        %v2339 = vunpack.c.l.b16 %v1969
        %v2340 = vunpack.c.h.b16 %v1969
        %v2341 = vunpack.c.l.b16 %v1970
        %v2342 = vunpack.c.h.b16 %v1970
        %v2343 = vunpack.c.l.b16 %v1971
        %v2344 = vunpack.c.h.b16 %v1971
        %v2345 = vunpack.c.l.b16 %v1972
        %v2346 = vunpack.c.h.b16 %v1972
        %v2347 = vunpack.c.l.b16 %v1973
        %v2348 = vunpack.c.h.b16 %v1973
        %v2349 = vunpack.c.l.b16 %v1974
        %v2350 = vunpack.c.h.b16 %v1974
        %v2351 = vunpack.c.l.b16 %v1975
        %v2352 = vunpack.c.h.b16 %v1975
        %v2353 = vunpack.c.l.b16 %v1976
        %v2354 = vunpack.c.h.b16 %v1976
        %v2355 = vunpack.c.l.b16 %v1977
        %v2356 = vunpack.c.h.b16 %v1977
        %v2357 = vunpack.c.l.b16 %v1978
        %v2358 = vunpack.c.h.b16 %v1978
        %v2359 = vunpack.c.l.b16 %v1979
        %v2360 = vunpack.c.h.b16 %v1979
        %v2361 = vunpack.c.l.b16 %v1980
        %v2362 = vunpack.c.h.b16 %v1980
        %v2363 = vunpack.c.l.b16 %v1981
        %v2364 = vunpack.c.h.b16 %v1981
        %v2365 = vunpack.c.l.b16 %v1982
        %v2366 = vunpack.c.h.b16 %v1982
        %v2367 = vunpack.c.l.b16 %v1983
        %v2368 = vunpack.c.h.b16 %v1983
        %v2369 = vunpack.c.l.b16 %v1984
        %v2370 = vunpack.c.h.b16 %v1984
        %v2371 = vunpack.c.l.b16 %v1985
        %v2372 = vunpack.c.h.b16 %v1985
        %v2373 = vunpack.c.l.b16 %v1986
        %v2374 = vunpack.c.h.b16 %v1986
        %v2375 = vunpack.c.l.b16 %v1987
        %v2376 = vunpack.c.h.b16 %v1987
        %v2377 = vunpack.c.l.b16 %v1988
        %v2378 = vunpack.c.h.b16 %v1988
        %v2379 = vunpack.c.l.b16 %v1989
        %v2380 = vunpack.c.h.b16 %v1989
        %v2381 = vunpack.c.l.b16 %v1990
        %v2382 = vunpack.c.h.b16 %v1990
        %v2383 = vunpack.c.l.b16 %v1991
        %v2384 = vunpack.c.h.b16 %v1991
        %v2385 = vunpack.c.l.b16 %v1992
        %v2386 = vunpack.c.h.b16 %v1992
        %v2387 = vunpack.c.l.b16 %v1993
        %v2388 = vunpack.c.h.b16 %v1993
        %v2389 = vunpack.c.l.b16 %v1994
        %v2390 = vunpack.c.h.b16 %v1994
        %v2391 = vunpack.c.l.b16 %v1995
        %v2392 = vunpack.c.h.b16 %v1995
        %v2393 = vunpack.c.l.b16 %v1996
        %v2394 = vunpack.c.h.b16 %v1996
        %v2395 = vunpack.c.l.b16 %v1997
        %v2396 = vunpack.c.h.b16 %v1997
        %v2397 = vunpack.c.l.b16 %v1998
        %v2398 = vunpack.c.h.b16 %v1998
        %v2399 = vunpack.c.l.b16 %v1999
        %v2400 = vunpack.c.h.b16 %v1999
        %v2401 = vunpack.c.l.b16 %v2000
        %v2402 = vunpack.c.h.b16 %v2000
        %v2403 = vunpack.c.l.b16 %v2001
        %v2404 = vunpack.c.h.b16 %v2001
        %v2405 = vunpack.c.l.b16 %v2002
        %v2406 = vunpack.c.h.b16 %v2002
        %v2407 = vunpack.c.l.b16 %v2003
        %v2408 = vunpack.c.h.b16 %v2003
        %v2409 = vunpack.c.l.b16 %v2004
        %v2410 = vunpack.c.h.b16 %v2004
        %v2411 = vpack.c.b16 %v2159, %v2155
        %v2412 = vpack.c.b16 %v2160, %v2156
        %v2413 = vpack.c.b16 %v2161, %v2157
        %v2414 = vpack.c.b16 %v2162, %v2158
        %v2415 = vpack.c.b16 %v2167, %v2163
        %v2416 = vpack.c.b16 %v2168, %v2164
        %v2417 = vpack.c.b16 %v2169, %v2165
        %v2418 = vpack.c.b16 %v2170, %v2166
        %v2419 = vpack.c.b16 %v2175, %v2171
        %v2420 = vpack.c.b16 %v2176, %v2172
        %v2421 = vpack.c.b16 %v2177, %v2173
        %v2422 = vpack.c.b16 %v2178, %v2174
        %v2423 = vpack.c.b16 %v2183, %v2179
        %v2424 = vpack.c.b16 %v2184, %v2180
        %v2425 = vpack.c.b16 %v2185, %v2181
        %v2426 = vpack.c.b16 %v2186, %v2182
        %v2427 = vpack.c.b16 %v2191, %v2187
        %v2428 = vpack.c.b16 %v2192, %v2188
        %v2429 = vpack.c.b16 %v2193, %v2189
        %v2430 = vpack.c.b16 %v2194, %v2190
        %v2431 = vpack.c.b16 %v2199, %v2195
        %v2432 = vpack.c.b16 %v2200, %v2196
        %v2433 = vpack.c.b16 %v2201, %v2197
        %v2434 = vpack.c.b16 %v2202, %v2198
        %v2435 = vpack.c.b16 %v2207, %v2203
        %v2436 = vpack.c.b16 %v2208, %v2204
        %v2437 = vpack.c.b16 %v2209, %v2205
        %v2438 = vpack.c.b16 %v2210, %v2206
        %v2439 = vpack.c.b16 %v2215, %v2211
        %v2440 = vpack.c.b16 %v2216, %v2212
        %v2441 = vpack.c.b16 %v2217, %v2213
        %v2442 = vpack.c.b16 %v2218, %v2214
        %v2443 = vpack.c.b16 %v2223, %v2219
        %v2444 = vpack.c.b16 %v2224, %v2220
        %v2445 = vpack.c.b16 %v2225, %v2221
        %v2446 = vpack.c.b16 %v2226, %v2222
        %v2447 = vpack.c.b16 %v2231, %v2227
        %v2448 = vpack.c.b16 %v2232, %v2228
        %v2449 = vpack.c.b16 %v2233, %v2229
        %v2450 = vpack.c.b16 %v2234, %v2230
        %v2451 = vpack.c.b16 %v2239, %v2235
        %v2452 = vpack.c.b16 %v2240, %v2236
        %v2453 = vpack.c.b16 %v2241, %v2237
        %v2454 = vpack.c.b16 %v2242, %v2238
        %v2455 = vpack.c.b16 %v2247, %v2243
        %v2456 = vpack.c.b16 %v2248, %v2244
        %v2457 = vpack.c.b16 %v2249, %v2245
        %v2458 = vpack.c.b16 %v2250, %v2246
        %v2459 = vpack.c.b16 %v2255, %v2251
        %v2460 = vpack.c.b16 %v2256, %v2252
        %v2461 = vpack.c.b16 %v2257, %v2253
        %v2462 = vpack.c.b16 %v2258, %v2254
        %v2463 = vpack.c.b16 %v2263, %v2259
        %v2464 = vpack.c.b16 %v2264, %v2260
        %v2465 = vpack.c.b16 %v2265, %v2261
        %v2466 = vpack.c.b16 %v2266, %v2262
        %v2467 = vpack.c.b16 %v2271, %v2267
        %v2468 = vpack.c.b16 %v2272, %v2268
        %v2469 = vpack.c.b16 %v2273, %v2269
        %v2470 = vpack.c.b16 %v2274, %v2270
        %v2471 = vpack.c.b16 %v2279, %v2275
        %v2472 = vpack.c.b16 %v2280, %v2276
        %v2473 = vpack.c.b16 %v2281, %v2277
        %v2474 = vpack.c.b16 %v2282, %v2278
        %v2475 = vpack.c.b16 %v2287, %v2283
        %v2476 = vpack.c.b16 %v2288, %v2284
        %v2477 = vpack.c.b16 %v2289, %v2285
        %v2478 = vpack.c.b16 %v2290, %v2286
        %v2479 = vpack.c.b16 %v2295, %v2291
        %v2480 = vpack.c.b16 %v2296, %v2292
        %v2481 = vpack.c.b16 %v2297, %v2293
        %v2482 = vpack.c.b16 %v2298, %v2294
        %v2483 = vpack.c.b16 %v2303, %v2299
        %v2484 = vpack.c.b16 %v2304, %v2300
        %v2485 = vpack.c.b16 %v2305, %v2301
        %v2486 = vpack.c.b16 %v2306, %v2302
        %v2487 = vpack.c.b16 %v2311, %v2307
        %v2488 = vpack.c.b16 %v2312, %v2308
        %v2489 = vpack.c.b16 %v2313, %v2309
        %v2490 = vpack.c.b16 %v2314, %v2310
        %v2491 = vpack.c.b16 %v2319, %v2315
        %v2492 = vpack.c.b16 %v2320, %v2316
        %v2493 = vpack.c.b16 %v2321, %v2317
        %v2494 = vpack.c.b16 %v2322, %v2318
        %v2495 = vpack.c.b16 %v2327, %v2323
        %v2496 = vpack.c.b16 %v2328, %v2324
        %v2497 = vpack.c.b16 %v2329, %v2325
        %v2498 = vpack.c.b16 %v2330, %v2326
        %v2499 = vpack.c.b16 %v2335, %v2331
        %v2500 = vpack.c.b16 %v2336, %v2332
        %v2501 = vpack.c.b16 %v2337, %v2333
        %v2502 = vpack.c.b16 %v2338, %v2334
        %v2503 = vpack.c.b16 %v2343, %v2339
        %v2504 = vpack.c.b16 %v2344, %v2340
        %v2505 = vpack.c.b16 %v2345, %v2341
        %v2506 = vpack.c.b16 %v2346, %v2342
        %v2507 = vpack.c.b16 %v2351, %v2347
        %v2508 = vpack.c.b16 %v2352, %v2348
        %v2509 = vpack.c.b16 %v2353, %v2349
        %v2510 = vpack.c.b16 %v2354, %v2350
        %v2511 = vpack.c.b16 %v2359, %v2355
        %v2512 = vpack.c.b16 %v2360, %v2356
        %v2513 = vpack.c.b16 %v2361, %v2357
        %v2514 = vpack.c.b16 %v2362, %v2358
        %v2515 = vpack.c.b16 %v2367, %v2363
        %v2516 = vpack.c.b16 %v2368, %v2364
        %v2517 = vpack.c.b16 %v2369, %v2365
        %v2518 = vpack.c.b16 %v2370, %v2366
        %v2519 = vpack.c.b16 %v2375, %v2371
        %v2520 = vpack.c.b16 %v2376, %v2372
        %v2521 = vpack.c.b16 %v2377, %v2373
        %v2522 = vpack.c.b16 %v2378, %v2374
        %v2523 = vpack.c.b16 %v2383, %v2379
        %v2524 = vpack.c.b16 %v2384, %v2380
        %v2525 = vpack.c.b16 %v2385, %v2381
        %v2526 = vpack.c.b16 %v2386, %v2382
        %v2527 = vpack.c.b16 %v2391, %v2387
        %v2528 = vpack.c.b16 %v2392, %v2388
        %v2529 = vpack.c.b16 %v2393, %v2389
        %v2530 = vpack.c.b16 %v2394, %v2390
        %v2531 = vpack.c.b16 %v2399, %v2395
        %v2532 = vpack.c.b16 %v2400, %v2396
        %v2533 = vpack.c.b16 %v2401, %v2397
        %v2534 = vpack.c.b16 %v2402, %v2398
        %v2535 = vpack.c.b16 %v2407, %v2403
        %v2536 = vpack.c.b16 %v2408, %v2404
        %v2537 = vpack.c.b16 %v2409, %v2405
        %v2538 = vpack.c.b16 %v2410, %v2406
        %2667 = vmatprep.subr.bf16.mxu0 %v2440
        %2668 = vmatpush1.bf16.msra.mxu0 %v2439
        %2669 = vmatprep.subr.bf16.mxu0 %v2436
        %2670 = vmatpush1.bf16.msra.mxu0 %v2435
        %2671 = vmatprep.subr.bf16.mxu0 %v2432
        %2672 = vmatpush1.bf16.msra.mxu0 %v2431
        %2673 = vmatprep.subr.bf16.mxu0 %v2428
        %2674 = vmatpush1.bf16.msra.mxu0 %v2427
        %2675 = vmatprep.subr.bf16.mxu0 %v2424
        %2676 = vmatpush1.bf16.msra.mxu0 %v2423
        %2677 = vmatprep.subr.bf16.mxu0 %v2420
        %2678 = vmatpush1.bf16.msra.mxu0 %v2419
        %2679 = vmatprep.subr.bf16.mxu0 %v2416
        %2680 = vmatpush1.bf16.msra.mxu0 %v2415
        %2681 = vmatprep.subr.bf16.mxu0 %v2412
        %2682 = vmatpush1.bf16.msra.mxu0 %v2411
        %2683 = vmatprep.subr.bf16.mxu0 %v2472
        %2684 = vmatpush2.bf16.msra.mxu0 %v2471
        %2685 = vmatprep.subr.bf16.mxu0 %v2468
        %2686 = vmatpush2.bf16.msra.mxu0 %v2467
        %2687 = vmatprep.subr.bf16.mxu0 %v2464
        %2688 = vmatpush2.bf16.msra.mxu0 %v2463
        %2689 = vmatprep.subr.bf16.mxu0 %v2460
        %2690 = vmatpush2.bf16.msra.mxu0 %v2459
        %2691 = vmatprep.subr.bf16.mxu0 %v2456
        %2692 = vmatpush2.bf16.msra.mxu0 %v2455
        %2693 = vmatprep.subr.bf16.mxu0 %v2452
        %2694 = vmatpush2.bf16.msra.mxu0 %v2451
        %2695 = vmatprep.subr.bf16.mxu0 %v2448
        %2696 = vmatpush2.bf16.msra.mxu0 %v2447
        %2697 = vmatprep.subr.bf16.mxu0 %v2444
        %2698 = vmatpush2.bf16.msra.mxu0 %v2443
        %2699 = vmatprep.mubr.bf16.mxu0 %v1814
        %2700 = vmatmul.mubr.bf16.gmra.mxu0 %v1813
        %v2701 = vpop.f32.mrf.mxu0
        %v2702 = vadd.f32 %v2010, %v2701
        %v2703 = vpop.f32.mrf.mxu0
        %v2704 = vadd.f32 %v2014, %v2703
        %v2705 = vpop.f32.mrf.mxu0
        %v2706 = vadd.f32 %v2010, %v2705
        %v2707 = vpop.f32.mrf.mxu0
        %v2708 = vadd.f32 %v2014, %v2707
        %2709 = vmatprep.mubr.bf16.mxu0 %v1818
        %2710 = vmatmul.mubr.bf16.gmra.mxu0 %v1817
        %v2711 = vpop.f32.mrf.mxu0
        %v2712 = vadd.f32 %v2010, %v2711
        %v2713 = vpop.f32.mrf.mxu0
        %v2714 = vadd.f32 %v2014, %v2713
        %v2715 = vpop.f32.mrf.mxu0
        %v2716 = vadd.f32 %v2010, %v2715
        %v2717 = vpop.f32.mrf.mxu0
        %v2718 = vadd.f32 %v2014, %v2717
        %2719 = vmatprep.mubr.bf16.mxu0 %v1822
        %2720 = vmatmul.mubr.bf16.gmra.mxu0 %v1821
        %v2721 = vpop.f32.mrf.mxu0
        %v2722 = vadd.f32 %v2010, %v2721
        %v2723 = vpop.f32.mrf.mxu0
        %v2724 = vadd.f32 %v2014, %v2723
        %v2725 = vpop.f32.mrf.mxu0
        %v2726 = vadd.f32 %v2010, %v2725
        %v2727 = vpop.f32.mrf.mxu0
        %v2728 = vadd.f32 %v2014, %v2727
        %2729 = vmatprep.mubr.bf16.mxu0 %v1826
        %2730 = vmatmul.mubr.bf16.gmra.mxu0 %v1825
        %v2731 = vpop.f32.mrf.mxu0
        %v2732 = vadd.f32 %v2010, %v2731
        %v2733 = vpop.f32.mrf.mxu0
        %v2734 = vadd.f32 %v2014, %v2733
        %v2735 = vpop.f32.mrf.mxu0
        %v2736 = vadd.f32 %v2010, %v2735
        %v2737 = vpop.f32.mrf.mxu0
        %v2738 = vadd.f32 %v2014, %v2737
        %2739 = vmatprep.mubr.bf16.mxu0 %v1830
        %2740 = vmatmul.mubr.bf16.gmra.mxu0 %v1829
        %v2741 = vpop.f32.mrf.mxu0
        %v2742 = vadd.f32 %v2010, %v2741
        %v2743 = vpop.f32.mrf.mxu0
        %v2744 = vadd.f32 %v2014, %v2743
        %v2745 = vpop.f32.mrf.mxu0
        %v2746 = vadd.f32 %v2010, %v2745
        %v2747 = vpop.f32.mrf.mxu0
        %v2748 = vadd.f32 %v2014, %v2747
        %2749 = vmatprep.mubr.bf16.mxu0 %v1834
        %2750 = vmatmul.mubr.bf16.gmra.mxu0 %v1833
        %v2751 = vpop.f32.mrf.mxu0
        %v2752 = vadd.f32 %v2010, %v2751
        %v2753 = vpop.f32.mrf.mxu0
        %v2754 = vadd.f32 %v2014, %v2753
        %v2755 = vpop.f32.mrf.mxu0
        %v2756 = vadd.f32 %v2010, %v2755
        %v2757 = vpop.f32.mrf.mxu0
        %v2758 = vadd.f32 %v2014, %v2757
        %2759 = vmatprep.mubr.bf16.mxu0 %v1838
        %2760 = vmatmul.mubr.bf16.gmra.mxu0 %v1837
        %v2761 = vpop.f32.mrf.mxu0
        %v2762 = vadd.f32 %v2010, %v2761
        %v2763 = vpop.f32.mrf.mxu0
        %v2764 = vadd.f32 %v2014, %v2763
        %v2765 = vpop.f32.mrf.mxu0
        %v2766 = vadd.f32 %v2010, %v2765
        %v2767 = vpop.f32.mrf.mxu0
        %v2768 = vadd.f32 %v2014, %v2767
        %2769 = vmatprep.mubr.bf16.mxu0 %v1842
        %2770 = vmatmul.mubr.bf16.gmra.mxu0 %v1841
        %v2771 = vpop.f32.mrf.mxu0
        %v2772 = vadd.f32 %v2010, %v2771
        %v2773 = vpop.f32.mrf.mxu0
        %v2774 = vadd.f32 %v2014, %v2773
        %v2775 = vpop.f32.mrf.mxu0
        %v2776 = vadd.f32 %v2010, %v2775
        %v2777 = vpop.f32.mrf.mxu0
        %v2778 = vadd.f32 %v2014, %v2777
        %2779 = vmatprep.mubr.bf16.mxu0 %v1846
        %2780 = vmatmul.mubr.bf16.gmra.mxu0 %v1845
        %v2781 = vpop.f32.mrf.mxu0
        %v2782 = vadd.f32 %v2010, %v2781
        %v2783 = vpop.f32.mrf.mxu0
        %v2784 = vadd.f32 %v2014, %v2783
        %v2785 = vpop.f32.mrf.mxu0
        %v2786 = vadd.f32 %v2010, %v2785
        %v2787 = vpop.f32.mrf.mxu0
        %v2788 = vadd.f32 %v2014, %v2787
        %2789 = vmatprep.mubr.bf16.mxu0 %v1850
        %2790 = vmatmul.mubr.bf16.gmra.mxu0 %v1849
        %v2791 = vpop.f32.mrf.mxu0
        %v2792 = vadd.f32 %v2010, %v2791
        %v2793 = vpop.f32.mrf.mxu0
        %v2794 = vadd.f32 %v2014, %v2793
        %v2795 = vpop.f32.mrf.mxu0
        %v2796 = vadd.f32 %v2010, %v2795
        %v2797 = vpop.f32.mrf.mxu0
        %v2798 = vadd.f32 %v2014, %v2797
        %2799 = vmatprep.mubr.bf16.mxu0 %v1854
        %2800 = vmatmul.mubr.bf16.gmra.mxu0 %v1853
        %v2801 = vpop.f32.mrf.mxu0
        %v2802 = vadd.f32 %v2010, %v2801
        %v2803 = vpop.f32.mrf.mxu0
        %v2804 = vadd.f32 %v2014, %v2803
        %v2805 = vpop.f32.mrf.mxu0
        %v2806 = vadd.f32 %v2010, %v2805
        %v2807 = vpop.f32.mrf.mxu0
        %v2808 = vadd.f32 %v2014, %v2807
        %2809 = vmatprep.mubr.bf16.mxu0 %v1858
        %2810 = vmatmul.mubr.bf16.gmra.mxu0 %v1857
        %v2811 = vpop.f32.mrf.mxu0
        %v2812 = vadd.f32 %v2010, %v2811
        %v2813 = vpop.f32.mrf.mxu0
        %v2814 = vadd.f32 %v2014, %v2813
        %v2815 = vpop.f32.mrf.mxu0
        %v2816 = vadd.f32 %v2010, %v2815
        %v2817 = vpop.f32.mrf.mxu0
        %v2818 = vadd.f32 %v2014, %v2817
        %2819 = vmatprep.mubr.bf16.mxu0 %v1862
        %2820 = vmatmul.mubr.bf16.gmra.mxu0 %v1861
        %v2821 = vpop.f32.mrf.mxu0
        %v2822 = vadd.f32 %v2010, %v2821
        %v2823 = vpop.f32.mrf.mxu0
        %v2824 = vadd.f32 %v2014, %v2823
        %v2825 = vpop.f32.mrf.mxu0
        %v2826 = vadd.f32 %v2010, %v2825
        %v2827 = vpop.f32.mrf.mxu0
        %v2828 = vadd.f32 %v2014, %v2827
        %2829 = vmatprep.mubr.bf16.mxu0 %v1866
        %2830 = vmatmul.mubr.bf16.gmra.mxu0 %v1865
        %v2831 = vpop.f32.mrf.mxu0
        %v2832 = vadd.f32 %v2010, %v2831
        %v2833 = vpop.f32.mrf.mxu0
        %v2834 = vadd.f32 %v2014, %v2833
        %v2835 = vpop.f32.mrf.mxu0
        %v2836 = vadd.f32 %v2010, %v2835
        %v2837 = vpop.f32.mrf.mxu0
        %v2838 = vadd.f32 %v2014, %v2837
        %2839 = vmatprep.mubr.bf16.mxu0 %v1870
        %2840 = vmatmul.mubr.bf16.gmra.mxu0 %v1869
        %v2841 = vpop.f32.mrf.mxu0
        %v2842 = vadd.f32 %v2010, %v2841
        %v2843 = vpop.f32.mrf.mxu0
        %v2844 = vadd.f32 %v2014, %v2843
        %v2845 = vpop.f32.mrf.mxu0
        %v2846 = vadd.f32 %v2010, %v2845
        %v2847 = vpop.f32.mrf.mxu0
        %v2848 = vadd.f32 %v2014, %v2847
        %2849 = vmatprep.mubr.bf16.mxu0 %v1874
        %2850 = vmatmul.mubr.bf16.gmra.mxu0 %v1873
        %v2851 = vpop.f32.mrf.mxu0
        %v2852 = vadd.f32 %v2010, %v2851
        %v2853 = vpop.f32.mrf.mxu0
        %v2854 = vadd.f32 %v2014, %v2853
        %v2855 = vpop.f32.mrf.mxu0
        %v2856 = vadd.f32 %v2010, %v2855
        %v2857 = vpop.f32.mrf.mxu0
        %v2858 = vadd.f32 %v2014, %v2857
        %2859 = vdwg.mxu0
        %2860 = vmatprep.subr.bf16.mxu0 %v2504
        %2861 = vmatpush1.bf16.msra.mxu0 %v2503
        %2862 = vmatprep.subr.bf16.mxu0 %v2500
        %2863 = vmatpush1.bf16.msra.mxu0 %v2499
        %2864 = vmatprep.subr.bf16.mxu0 %v2496
        %2865 = vmatpush1.bf16.msra.mxu0 %v2495
        %2866 = vmatprep.subr.bf16.mxu0 %v2492
        %2867 = vmatpush1.bf16.msra.mxu0 %v2491
        %2868 = vmatprep.subr.bf16.mxu0 %v2488
        %2869 = vmatpush1.bf16.msra.mxu0 %v2487
        %2870 = vmatprep.subr.bf16.mxu0 %v2484
        %2871 = vmatpush1.bf16.msra.mxu0 %v2483
        %2872 = vmatprep.subr.bf16.mxu0 %v2480
        %2873 = vmatpush1.bf16.msra.mxu0 %v2479
        %2874 = vmatprep.subr.bf16.mxu0 %v2476
        %2875 = vmatpush1.bf16.msra.mxu0 %v2475
        %2876 = vmatprep.subr.bf16.mxu0 %v2536
        %2877 = vmatpush2.bf16.msra.mxu0 %v2535
        %2878 = vmatprep.subr.bf16.mxu0 %v2532
        %2879 = vmatpush2.bf16.msra.mxu0 %v2531
        %2880 = vmatprep.subr.bf16.mxu0 %v2528
        %2881 = vmatpush2.bf16.msra.mxu0 %v2527
        %2882 = vmatprep.subr.bf16.mxu0 %v2524
        %2883 = vmatpush2.bf16.msra.mxu0 %v2523
        %2884 = vmatprep.subr.bf16.mxu0 %v2520
        %2885 = vmatpush2.bf16.msra.mxu0 %v2519
        %2886 = vmatprep.subr.bf16.mxu0 %v2516
        %2887 = vmatpush2.bf16.msra.mxu0 %v2515
        %2888 = vmatprep.subr.bf16.mxu0 %v2512
        %2889 = vmatpush2.bf16.msra.mxu0 %v2511
        %2890 = vmatprep.subr.bf16.mxu0 %v2508
        %2891 = vmatpush2.bf16.msra.mxu0 %v2507
        %2892 = vmatprep.mubr.bf16.mxu0 %v1816
        %2893 = vmatmul.mubr.bf16.gmra.mxu0 %v1815
        %v2894 = vpop.f32.mrf.mxu0
        %v2895 = vadd.f32 %v2702, %v2894
        %v2896 = vpop.f32.mrf.mxu0
        %v2897 = vadd.f32 %v2704, %v2896
        %v2898 = vpop.f32.mrf.mxu0
        %v2899 = vadd.f32 %v2706, %v2898
        %v2900 = vpop.f32.mrf.mxu0
        %v2901 = vadd.f32 %v2708, %v2900
        %2902 = vmatprep.mubr.bf16.mxu0 %v1820
        %2903 = vmatmul.mubr.bf16.gmra.mxu0 %v1819
        %v2904 = vpop.f32.mrf.mxu0
        %v2905 = vadd.f32 %v2712, %v2904
        %v2906 = vpop.f32.mrf.mxu0
        %v2907 = vadd.f32 %v2714, %v2906
        %v2908 = vpop.f32.mrf.mxu0
        %v2909 = vadd.f32 %v2716, %v2908
        %v2910 = vpop.f32.mrf.mxu0
        %v2911 = vadd.f32 %v2718, %v2910
        %2912 = vmatprep.mubr.bf16.mxu0 %v1824
        %2913 = vmatmul.mubr.bf16.gmra.mxu0 %v1823
        %v2914 = vpop.f32.mrf.mxu0
        %v2915 = vadd.f32 %v2722, %v2914
        %v2916 = vpop.f32.mrf.mxu0
        %v2917 = vadd.f32 %v2724, %v2916
        %v2918 = vpop.f32.mrf.mxu0
        %v2919 = vadd.f32 %v2726, %v2918
        %v2920 = vpop.f32.mrf.mxu0
        %v2921 = vadd.f32 %v2728, %v2920
        %2922 = vmatprep.mubr.bf16.mxu0 %v1828
        %2923 = vmatmul.mubr.bf16.gmra.mxu0 %v1827
        %v2924 = vpop.f32.mrf.mxu0
        %v2925 = vadd.f32 %v2732, %v2924
        %v2926 = vpop.f32.mrf.mxu0
        %v2927 = vadd.f32 %v2734, %v2926
        %v2928 = vpop.f32.mrf.mxu0
        %v2929 = vadd.f32 %v2736, %v2928
        %v2930 = vpop.f32.mrf.mxu0
        %v2931 = vadd.f32 %v2738, %v2930
        %2932 = vmatprep.mubr.bf16.mxu0 %v1832
        %2933 = vmatmul.mubr.bf16.gmra.mxu0 %v1831
        %v2934 = vpop.f32.mrf.mxu0
        %v2935 = vadd.f32 %v2742, %v2934
        %v2936 = vpop.f32.mrf.mxu0
        %v2937 = vadd.f32 %v2744, %v2936
        %v2938 = vpop.f32.mrf.mxu0
        %v2939 = vadd.f32 %v2746, %v2938
        %v2940 = vpop.f32.mrf.mxu0
        %v2941 = vadd.f32 %v2748, %v2940
        %2942 = vmatprep.mubr.bf16.mxu0 %v1836
        %2943 = vmatmul.mubr.bf16.gmra.mxu0 %v1835
        %v2944 = vpop.f32.mrf.mxu0
        %v2945 = vadd.f32 %v2752, %v2944
        %v2946 = vpop.f32.mrf.mxu0
        %v2947 = vadd.f32 %v2754, %v2946
        %v2948 = vpop.f32.mrf.mxu0
        %v2949 = vadd.f32 %v2756, %v2948
        %v2950 = vpop.f32.mrf.mxu0
        %v2951 = vadd.f32 %v2758, %v2950
        %2952 = vmatprep.mubr.bf16.mxu0 %v1840
        %2953 = vmatmul.mubr.bf16.gmra.mxu0 %v1839
        %v2954 = vpop.f32.mrf.mxu0
        %v2955 = vadd.f32 %v2762, %v2954
        %v2956 = vpop.f32.mrf.mxu0
        %v2957 = vadd.f32 %v2764, %v2956
        %v2958 = vpop.f32.mrf.mxu0
        %v2959 = vadd.f32 %v2766, %v2958
        %v2960 = vpop.f32.mrf.mxu0
        %v2961 = vadd.f32 %v2768, %v2960
        %2962 = vmatprep.mubr.bf16.mxu0 %v1844
        %2963 = vmatmul.mubr.bf16.gmra.mxu0 %v1843
        %v2964 = vpop.f32.mrf.mxu0
        %v2965 = vadd.f32 %v2772, %v2964
        %v2966 = vpop.f32.mrf.mxu0
        %v2967 = vadd.f32 %v2774, %v2966
        %v2968 = vpop.f32.mrf.mxu0
        %v2969 = vadd.f32 %v2776, %v2968
        %v2970 = vpop.f32.mrf.mxu0
        %v2971 = vadd.f32 %v2778, %v2970
        %2972 = vmatprep.mubr.bf16.mxu0 %v1848
        %2973 = vmatmul.mubr.bf16.gmra.mxu0 %v1847
        %v2974 = vpop.f32.mrf.mxu0
        %v2975 = vadd.f32 %v2782, %v2974
        %v2976 = vpop.f32.mrf.mxu0
        %v2977 = vadd.f32 %v2784, %v2976
        %v2978 = vpop.f32.mrf.mxu0
        %v2979 = vadd.f32 %v2786, %v2978
        %v2980 = vpop.f32.mrf.mxu0
        %v2981 = vadd.f32 %v2788, %v2980
        %2982 = vmatprep.mubr.bf16.mxu0 %v1852
        %2983 = vmatmul.mubr.bf16.gmra.mxu0 %v1851
        %v2984 = vpop.f32.mrf.mxu0
        %v2985 = vadd.f32 %v2792, %v2984
        %v2986 = vpop.f32.mrf.mxu0
        %v2987 = vadd.f32 %v2794, %v2986
        %v2988 = vpop.f32.mrf.mxu0
        %v2989 = vadd.f32 %v2796, %v2988
        %v2990 = vpop.f32.mrf.mxu0
        %v2991 = vadd.f32 %v2798, %v2990
        %2992 = vmatprep.mubr.bf16.mxu0 %v1856
        %2993 = vmatmul.mubr.bf16.gmra.mxu0 %v1855
        %v2994 = vpop.f32.mrf.mxu0
        %v2995 = vadd.f32 %v2802, %v2994
        %v2996 = vpop.f32.mrf.mxu0
        %v2997 = vadd.f32 %v2804, %v2996
        %v2998 = vpop.f32.mrf.mxu0
        %v2999 = vadd.f32 %v2806, %v2998
        %v3000 = vpop.f32.mrf.mxu0
        %v3001 = vadd.f32 %v2808, %v3000
        %3002 = vmatprep.mubr.bf16.mxu0 %v1860
        %3003 = vmatmul.mubr.bf16.gmra.mxu0 %v1859
        %v3004 = vpop.f32.mrf.mxu0
        %v3005 = vadd.f32 %v2812, %v3004
        %v3006 = vpop.f32.mrf.mxu0
        %v3007 = vadd.f32 %v2814, %v3006
        %v3008 = vpop.f32.mrf.mxu0
        %v3009 = vadd.f32 %v2816, %v3008
        %v3010 = vpop.f32.mrf.mxu0
        %v3011 = vadd.f32 %v2818, %v3010
        %3012 = vmatprep.mubr.bf16.mxu0 %v1864
        %3013 = vmatmul.mubr.bf16.gmra.mxu0 %v1863
        %v3014 = vpop.f32.mrf.mxu0
        %v3015 = vadd.f32 %v2822, %v3014
        %v3016 = vpop.f32.mrf.mxu0
        %v3017 = vadd.f32 %v2824, %v3016
        %v3018 = vpop.f32.mrf.mxu0
        %v3019 = vadd.f32 %v2826, %v3018
        %v3020 = vpop.f32.mrf.mxu0
        %v3021 = vadd.f32 %v2828, %v3020
        %3022 = vmatprep.mubr.bf16.mxu0 %v1868
        %3023 = vmatmul.mubr.bf16.gmra.mxu0 %v1867
        %v3024 = vpop.f32.mrf.mxu0
        %v3025 = vadd.f32 %v2832, %v3024
        %v3026 = vpop.f32.mrf.mxu0
        %v3027 = vadd.f32 %v2834, %v3026
        %v3028 = vpop.f32.mrf.mxu0
        %v3029 = vadd.f32 %v2836, %v3028
        %v3030 = vpop.f32.mrf.mxu0
        %v3031 = vadd.f32 %v2838, %v3030
        %3032 = vmatprep.mubr.bf16.mxu0 %v1872
        %3033 = vmatmul.mubr.bf16.gmra.mxu0 %v1871
        %v3034 = vpop.f32.mrf.mxu0
        %v3035 = vadd.f32 %v2842, %v3034
        %v3036 = vpop.f32.mrf.mxu0
        %v3037 = vadd.f32 %v2844, %v3036
        %v3038 = vpop.f32.mrf.mxu0
        %v3039 = vadd.f32 %v2846, %v3038
        %v3040 = vpop.f32.mrf.mxu0
        %v3041 = vadd.f32 %v2848, %v3040
        %3042 = vmatprep.mubr.bf16.mxu0 %v1876
        %3043 = vmatmul.mubr.bf16.gmra.mxu0 %v1875
        %v3044 = vpop.f32.mrf.mxu0
        %v3045 = vadd.f32 %v2852, %v3044
        %v3046 = vpop.f32.mrf.mxu0
        %v3047 = vadd.f32 %v2854, %v3046
        %v3048 = vpop.f32.mrf.mxu0
        %v3049 = vadd.f32 %v2856, %v3048
        %v3050 = vpop.f32.mrf.mxu0
        %v3051 = vadd.f32 %v2858, %v3050
        %3052 = vdwg.mxu0
        %3053 = vmatprep.subr.bf16.mxu0 %v2442
        %3054 = vmatpush1.bf16.msra.mxu0 %v2441
        %3055 = vmatprep.subr.bf16.mxu0 %v2438
        %3056 = vmatpush1.bf16.msra.mxu0 %v2437
        %3057 = vmatprep.subr.bf16.mxu0 %v2434
        %3058 = vmatpush1.bf16.msra.mxu0 %v2433
        %3059 = vmatprep.subr.bf16.mxu0 %v2430
        %3060 = vmatpush1.bf16.msra.mxu0 %v2429
        %3061 = vmatprep.subr.bf16.mxu0 %v2426
        %3062 = vmatpush1.bf16.msra.mxu0 %v2425
        %3063 = vmatprep.subr.bf16.mxu0 %v2422
        %3064 = vmatpush1.bf16.msra.mxu0 %v2421
        %3065 = vmatprep.subr.bf16.mxu0 %v2418
        %3066 = vmatpush1.bf16.msra.mxu0 %v2417
        %3067 = vmatprep.subr.bf16.mxu0 %v2414
        %3068 = vmatpush1.bf16.msra.mxu0 %v2413
        %3069 = vmatprep.subr.bf16.mxu0 %v2474
        %3070 = vmatpush2.bf16.msra.mxu0 %v2473
        %3071 = vmatprep.subr.bf16.mxu0 %v2470
        %3072 = vmatpush2.bf16.msra.mxu0 %v2469
        %3073 = vmatprep.subr.bf16.mxu0 %v2466
        %3074 = vmatpush2.bf16.msra.mxu0 %v2465
        %3075 = vmatprep.subr.bf16.mxu0 %v2462
        %3076 = vmatpush2.bf16.msra.mxu0 %v2461
        %3077 = vmatprep.subr.bf16.mxu0 %v2458
        %3078 = vmatpush2.bf16.msra.mxu0 %v2457
        %3079 = vmatprep.subr.bf16.mxu0 %v2454
        %3080 = vmatpush2.bf16.msra.mxu0 %v2453
        %3081 = vmatprep.subr.bf16.mxu0 %v2450
        %3082 = vmatpush2.bf16.msra.mxu0 %v2449
        %3083 = vmatprep.subr.bf16.mxu0 %v2446
        %3084 = vmatpush2.bf16.msra.mxu0 %v2445
        %3085 = vmatprep.mubr.bf16.mxu0 %v1814
        %3086 = vmatmul.mubr.bf16.gmra.mxu0 %v1813
        %v3087 = vpop.f32.mrf.mxu0
        %v3088 = vadd.f32 %v2018, %v3087
        %v3089 = vpop.f32.mrf.mxu0
        %v3090 = vadd.f32 %v2022, %v3089
        %v3091 = vpop.f32.mrf.mxu0
        %v3092 = vadd.f32 %v2018, %v3091
        %v3093 = vpop.f32.mrf.mxu0
        %v3094 = vadd.f32 %v2022, %v3093
        %3095 = vmatprep.mubr.bf16.mxu0 %v1818
        %3096 = vmatmul.mubr.bf16.gmra.mxu0 %v1817
        %v3097 = vpop.f32.mrf.mxu0
        %v3098 = vadd.f32 %v2018, %v3097
        %v3099 = vpop.f32.mrf.mxu0
        %v3100 = vadd.f32 %v2022, %v3099
        %v3101 = vpop.f32.mrf.mxu0
        %v3102 = vadd.f32 %v2018, %v3101
        %v3103 = vpop.f32.mrf.mxu0
        %v3104 = vadd.f32 %v2022, %v3103
        %3105 = vmatprep.mubr.bf16.mxu0 %v1822
        %3106 = vmatmul.mubr.bf16.gmra.mxu0 %v1821
        %v3107 = vpop.f32.mrf.mxu0
        %v3108 = vadd.f32 %v2018, %v3107
        %v3109 = vpop.f32.mrf.mxu0
        %v3110 = vadd.f32 %v2022, %v3109
        %v3111 = vpop.f32.mrf.mxu0
        %v3112 = vadd.f32 %v2018, %v3111
        %v3113 = vpop.f32.mrf.mxu0
        %v3114 = vadd.f32 %v2022, %v3113
        %3115 = vmatprep.mubr.bf16.mxu0 %v1826
        %3116 = vmatmul.mubr.bf16.gmra.mxu0 %v1825
        %v3117 = vpop.f32.mrf.mxu0
        %v3118 = vadd.f32 %v2018, %v3117
        %v3119 = vpop.f32.mrf.mxu0
        %v3120 = vadd.f32 %v2022, %v3119
        %v3121 = vpop.f32.mrf.mxu0
        %v3122 = vadd.f32 %v2018, %v3121
        %v3123 = vpop.f32.mrf.mxu0
        %v3124 = vadd.f32 %v2022, %v3123
        %3125 = vmatprep.mubr.bf16.mxu0 %v1830
        %3126 = vmatmul.mubr.bf16.gmra.mxu0 %v1829
        %v3127 = vpop.f32.mrf.mxu0
        %v3128 = vadd.f32 %v2018, %v3127
        %v3129 = vpop.f32.mrf.mxu0
        %v3130 = vadd.f32 %v2022, %v3129
        %v3131 = vpop.f32.mrf.mxu0
        %v3132 = vadd.f32 %v2018, %v3131
        %v3133 = vpop.f32.mrf.mxu0
        %v3134 = vadd.f32 %v2022, %v3133
        %3135 = vmatprep.mubr.bf16.mxu0 %v1834
        %3136 = vmatmul.mubr.bf16.gmra.mxu0 %v1833
        %v3137 = vpop.f32.mrf.mxu0
        %v3138 = vadd.f32 %v2018, %v3137
        %v3139 = vpop.f32.mrf.mxu0
        %v3140 = vadd.f32 %v2022, %v3139
        %v3141 = vpop.f32.mrf.mxu0
        %v3142 = vadd.f32 %v2018, %v3141
        %v3143 = vpop.f32.mrf.mxu0
        %v3144 = vadd.f32 %v2022, %v3143
        %3145 = vmatprep.mubr.bf16.mxu0 %v1838
        %3146 = vmatmul.mubr.bf16.gmra.mxu0 %v1837
        %v3147 = vpop.f32.mrf.mxu0
        %v3148 = vadd.f32 %v2018, %v3147
        %v3149 = vpop.f32.mrf.mxu0
        %v3150 = vadd.f32 %v2022, %v3149
        %v3151 = vpop.f32.mrf.mxu0
        %v3152 = vadd.f32 %v2018, %v3151
        %v3153 = vpop.f32.mrf.mxu0
        %v3154 = vadd.f32 %v2022, %v3153
        %3155 = vmatprep.mubr.bf16.mxu0 %v1842
        %3156 = vmatmul.mubr.bf16.gmra.mxu0 %v1841
        %v3157 = vpop.f32.mrf.mxu0
        %v3158 = vadd.f32 %v2018, %v3157
        %v3159 = vpop.f32.mrf.mxu0
        %v3160 = vadd.f32 %v2022, %v3159
        %v3161 = vpop.f32.mrf.mxu0
        %v3162 = vadd.f32 %v2018, %v3161
        %v3163 = vpop.f32.mrf.mxu0
        %v3164 = vadd.f32 %v2022, %v3163
        %3165 = vmatprep.mubr.bf16.mxu0 %v1846
        %3166 = vmatmul.mubr.bf16.gmra.mxu0 %v1845
        %v3167 = vpop.f32.mrf.mxu0
        %v3168 = vadd.f32 %v2018, %v3167
        %v3169 = vpop.f32.mrf.mxu0
        %v3170 = vadd.f32 %v2022, %v3169
        %v3171 = vpop.f32.mrf.mxu0
        %v3172 = vadd.f32 %v2018, %v3171
        %v3173 = vpop.f32.mrf.mxu0
        %v3174 = vadd.f32 %v2022, %v3173
        %3175 = vmatprep.mubr.bf16.mxu0 %v1850
        %3176 = vmatmul.mubr.bf16.gmra.mxu0 %v1849
        %v3177 = vpop.f32.mrf.mxu0
        %v3178 = vadd.f32 %v2018, %v3177
        %v3179 = vpop.f32.mrf.mxu0
        %v3180 = vadd.f32 %v2022, %v3179
        %v3181 = vpop.f32.mrf.mxu0
        %v3182 = vadd.f32 %v2018, %v3181
        %v3183 = vpop.f32.mrf.mxu0
        %v3184 = vadd.f32 %v2022, %v3183
        %3185 = vmatprep.mubr.bf16.mxu0 %v1854
        %3186 = vmatmul.mubr.bf16.gmra.mxu0 %v1853
        %v3187 = vpop.f32.mrf.mxu0
        %v3188 = vadd.f32 %v2018, %v3187
        %v3189 = vpop.f32.mrf.mxu0
        %v3190 = vadd.f32 %v2022, %v3189
        %v3191 = vpop.f32.mrf.mxu0
        %v3192 = vadd.f32 %v2018, %v3191
        %v3193 = vpop.f32.mrf.mxu0
        %v3194 = vadd.f32 %v2022, %v3193
        %3195 = vmatprep.mubr.bf16.mxu0 %v1858
        %3196 = vmatmul.mubr.bf16.gmra.mxu0 %v1857
        %v3197 = vpop.f32.mrf.mxu0
        %v3198 = vadd.f32 %v2018, %v3197
        %v3199 = vpop.f32.mrf.mxu0
        %v3200 = vadd.f32 %v2022, %v3199
        %v3201 = vpop.f32.mrf.mxu0
        %v3202 = vadd.f32 %v2018, %v3201
        %v3203 = vpop.f32.mrf.mxu0
        %v3204 = vadd.f32 %v2022, %v3203
        %3205 = vmatprep.mubr.bf16.mxu0 %v1862
        %3206 = vmatmul.mubr.bf16.gmra.mxu0 %v1861
        %v3207 = vpop.f32.mrf.mxu0
        %v3208 = vadd.f32 %v2018, %v3207
        %v3209 = vpop.f32.mrf.mxu0
        %v3210 = vadd.f32 %v2022, %v3209
        %v3211 = vpop.f32.mrf.mxu0
        %v3212 = vadd.f32 %v2018, %v3211
        %v3213 = vpop.f32.mrf.mxu0
        %v3214 = vadd.f32 %v2022, %v3213
        %3215 = vmatprep.mubr.bf16.mxu0 %v1866
        %3216 = vmatmul.mubr.bf16.gmra.mxu0 %v1865
        %v3217 = vpop.f32.mrf.mxu0
        %v3218 = vadd.f32 %v2018, %v3217
        %v3219 = vpop.f32.mrf.mxu0
        %v3220 = vadd.f32 %v2022, %v3219
        %v3221 = vpop.f32.mrf.mxu0
        %v3222 = vadd.f32 %v2018, %v3221
        %v3223 = vpop.f32.mrf.mxu0
        %v3224 = vadd.f32 %v2022, %v3223
        %3225 = vmatprep.mubr.bf16.mxu0 %v1870
        %3226 = vmatmul.mubr.bf16.gmra.mxu0 %v1869
        %v3227 = vpop.f32.mrf.mxu0
        %v3228 = vadd.f32 %v2018, %v3227
        %v3229 = vpop.f32.mrf.mxu0
        %v3230 = vadd.f32 %v2022, %v3229
        %v3231 = vpop.f32.mrf.mxu0
        %v3232 = vadd.f32 %v2018, %v3231
        %v3233 = vpop.f32.mrf.mxu0
        %v3234 = vadd.f32 %v2022, %v3233
        %3235 = vmatprep.mubr.bf16.mxu0 %v1874
        %3236 = vmatmul.mubr.bf16.gmra.mxu0 %v1873
        %v3237 = vpop.f32.mrf.mxu0
        %v3238 = vadd.f32 %v2018, %v3237
        %v3239 = vpop.f32.mrf.mxu0
        %v3240 = vadd.f32 %v2022, %v3239
        %v3241 = vpop.f32.mrf.mxu0
        %v3242 = vadd.f32 %v2018, %v3241
        %v3243 = vpop.f32.mrf.mxu0
        %v3244 = vadd.f32 %v2022, %v3243
        %3245 = vdwg.mxu0
        %3246 = vmatprep.subr.bf16.mxu0 %v2506
        %3247 = vmatpush1.bf16.msra.mxu0 %v2505
        %3248 = vmatprep.subr.bf16.mxu0 %v2502
        %3249 = vmatpush1.bf16.msra.mxu0 %v2501
        %3250 = vmatprep.subr.bf16.mxu0 %v2498
        %3251 = vmatpush1.bf16.msra.mxu0 %v2497
        %3252 = vmatprep.subr.bf16.mxu0 %v2494
        %3253 = vmatpush1.bf16.msra.mxu0 %v2493
        %3254 = vmatprep.subr.bf16.mxu0 %v2490
        %3255 = vmatpush1.bf16.msra.mxu0 %v2489
        %3256 = vmatprep.subr.bf16.mxu0 %v2486
        %3257 = vmatpush1.bf16.msra.mxu0 %v2485
        %3258 = vmatprep.subr.bf16.mxu0 %v2482
        %3259 = vmatpush1.bf16.msra.mxu0 %v2481
        %3260 = vmatprep.subr.bf16.mxu0 %v2478
        %3261 = vmatpush1.bf16.msra.mxu0 %v2477
        %3262 = vmatprep.subr.bf16.mxu0 %v2538
        %3263 = vmatpush2.bf16.msra.mxu0 %v2537
        %3264 = vmatprep.subr.bf16.mxu0 %v2534
        %3265 = vmatpush2.bf16.msra.mxu0 %v2533
        %3266 = vmatprep.subr.bf16.mxu0 %v2530
        %3267 = vmatpush2.bf16.msra.mxu0 %v2529
        %3268 = vmatprep.subr.bf16.mxu0 %v2526
        %3269 = vmatpush2.bf16.msra.mxu0 %v2525
        %3270 = vmatprep.subr.bf16.mxu0 %v2522
        %3271 = vmatpush2.bf16.msra.mxu0 %v2521
        %3272 = vmatprep.subr.bf16.mxu0 %v2518
        %3273 = vmatpush2.bf16.msra.mxu0 %v2517
        %3274 = vmatprep.subr.bf16.mxu0 %v2514
        %3275 = vmatpush2.bf16.msra.mxu0 %v2513
        %3276 = vmatprep.subr.bf16.mxu0 %v2510
        %3277 = vmatpush2.bf16.msra.mxu0 %v2509
        %3278 = vmatprep.mubr.bf16.mxu0 %v1816
        %3279 = vmatmul.mubr.bf16.gmra.mxu0 %v1815
        %v3280 = vpop.f32.mrf.mxu0
        %v3281 = vadd.f32 %v3088, %v3280
        %v3282 = vpop.f32.mrf.mxu0
        %v3283 = vadd.f32 %v3090, %v3282
        %v3284 = vpop.f32.mrf.mxu0
        %v3285 = vadd.f32 %v3092, %v3284
        %v3286 = vpop.f32.mrf.mxu0
        %v3287 = vadd.f32 %v3094, %v3286
        %3288 = vmatprep.mubr.bf16.mxu0 %v1820
        %3289 = vmatmul.mubr.bf16.gmra.mxu0 %v1819
        %v3290 = vpop.f32.mrf.mxu0
        %v3291 = vadd.f32 %v3098, %v3290
        %v3292 = vpop.f32.mrf.mxu0
        %v3293 = vadd.f32 %v3100, %v3292
        %v3294 = vpop.f32.mrf.mxu0
        %v3295 = vadd.f32 %v3102, %v3294
        %v3296 = vpop.f32.mrf.mxu0
        %v3297 = vadd.f32 %v3104, %v3296
        %3298 = vmatprep.mubr.bf16.mxu0 %v1824
        %3299 = vmatmul.mubr.bf16.gmra.mxu0 %v1823
        %v3300 = vpop.f32.mrf.mxu0
        %v3301 = vadd.f32 %v3108, %v3300
        %v3302 = vpop.f32.mrf.mxu0
        %v3303 = vadd.f32 %v3110, %v3302
        %v3304 = vpop.f32.mrf.mxu0
        %v3305 = vadd.f32 %v3112, %v3304
        %v3306 = vpop.f32.mrf.mxu0
        %v3307 = vadd.f32 %v3114, %v3306
        %3308 = vmatprep.mubr.bf16.mxu0 %v1828
        %3309 = vmatmul.mubr.bf16.gmra.mxu0 %v1827
        %v3310 = vpop.f32.mrf.mxu0
        %v3311 = vadd.f32 %v3118, %v3310
        %v3312 = vpop.f32.mrf.mxu0
        %v3313 = vadd.f32 %v3120, %v3312
        %v3314 = vpop.f32.mrf.mxu0
        %v3315 = vadd.f32 %v3122, %v3314
        %v3316 = vpop.f32.mrf.mxu0
        %v3317 = vadd.f32 %v3124, %v3316
        %3318 = vmatprep.mubr.bf16.mxu0 %v1832
        %3319 = vmatmul.mubr.bf16.gmra.mxu0 %v1831
        %v3320 = vpop.f32.mrf.mxu0
        %v3321 = vadd.f32 %v3128, %v3320
        %v3322 = vpop.f32.mrf.mxu0
        %v3323 = vadd.f32 %v3130, %v3322
        %v3324 = vpop.f32.mrf.mxu0
        %v3325 = vadd.f32 %v3132, %v3324
        %v3326 = vpop.f32.mrf.mxu0
        %v3327 = vadd.f32 %v3134, %v3326
        %3328 = vmatprep.mubr.bf16.mxu0 %v1836
        %3329 = vmatmul.mubr.bf16.gmra.mxu0 %v1835
        %v3330 = vpop.f32.mrf.mxu0
        %v3331 = vadd.f32 %v3138, %v3330
        %v3332 = vpop.f32.mrf.mxu0
        %v3333 = vadd.f32 %v3140, %v3332
        %v3334 = vpop.f32.mrf.mxu0
        %v3335 = vadd.f32 %v3142, %v3334
        %v3336 = vpop.f32.mrf.mxu0
        %v3337 = vadd.f32 %v3144, %v3336
        %3338 = vmatprep.mubr.bf16.mxu0 %v1840
        %3339 = vmatmul.mubr.bf16.gmra.mxu0 %v1839
        %v3340 = vpop.f32.mrf.mxu0
        %v3341 = vadd.f32 %v3148, %v3340
        %v3342 = vpop.f32.mrf.mxu0
        %v3343 = vadd.f32 %v3150, %v3342
        %v3344 = vpop.f32.mrf.mxu0
        %v3345 = vadd.f32 %v3152, %v3344
        %v3346 = vpop.f32.mrf.mxu0
        %v3347 = vadd.f32 %v3154, %v3346
        %3348 = vmatprep.mubr.bf16.mxu0 %v1844
        %3349 = vmatmul.mubr.bf16.gmra.mxu0 %v1843
        %v3350 = vpop.f32.mrf.mxu0
        %v3351 = vadd.f32 %v3158, %v3350
        %v3352 = vpop.f32.mrf.mxu0
        %v3353 = vadd.f32 %v3160, %v3352
        %v3354 = vpop.f32.mrf.mxu0
        %v3355 = vadd.f32 %v3162, %v3354
        %v3356 = vpop.f32.mrf.mxu0
        %v3357 = vadd.f32 %v3164, %v3356
        %3358 = vmatprep.mubr.bf16.mxu0 %v1848
        %3359 = vmatmul.mubr.bf16.gmra.mxu0 %v1847
        %v3360 = vpop.f32.mrf.mxu0
        %v3361 = vadd.f32 %v3168, %v3360
        %v3362 = vpop.f32.mrf.mxu0
        %v3363 = vadd.f32 %v3170, %v3362
        %v3364 = vpop.f32.mrf.mxu0
        %v3365 = vadd.f32 %v3172, %v3364
        %v3366 = vpop.f32.mrf.mxu0
        %v3367 = vadd.f32 %v3174, %v3366
        %3368 = vmatprep.mubr.bf16.mxu0 %v1852
        %3369 = vmatmul.mubr.bf16.gmra.mxu0 %v1851
        %v3370 = vpop.f32.mrf.mxu0
        %v3371 = vadd.f32 %v3178, %v3370
        %v3372 = vpop.f32.mrf.mxu0
        %v3373 = vadd.f32 %v3180, %v3372
        %v3374 = vpop.f32.mrf.mxu0
        %v3375 = vadd.f32 %v3182, %v3374
        %v3376 = vpop.f32.mrf.mxu0
        %v3377 = vadd.f32 %v3184, %v3376
        %3378 = vmatprep.mubr.bf16.mxu0 %v1856
        %3379 = vmatmul.mubr.bf16.gmra.mxu0 %v1855
        %v3380 = vpop.f32.mrf.mxu0
        %v3381 = vadd.f32 %v3188, %v3380
        %v3382 = vpop.f32.mrf.mxu0
        %v3383 = vadd.f32 %v3190, %v3382
        %v3384 = vpop.f32.mrf.mxu0
        %v3385 = vadd.f32 %v3192, %v3384
        %v3386 = vpop.f32.mrf.mxu0
        %v3387 = vadd.f32 %v3194, %v3386
        %3388 = vmatprep.mubr.bf16.mxu0 %v1860
        %3389 = vmatmul.mubr.bf16.gmra.mxu0 %v1859
        %v3390 = vpop.f32.mrf.mxu0
        %v3391 = vadd.f32 %v3198, %v3390
        %v3392 = vpop.f32.mrf.mxu0
        %v3393 = vadd.f32 %v3200, %v3392
        %v3394 = vpop.f32.mrf.mxu0
        %v3395 = vadd.f32 %v3202, %v3394
        %v3396 = vpop.f32.mrf.mxu0
        %v3397 = vadd.f32 %v3204, %v3396
        %3398 = vmatprep.mubr.bf16.mxu0 %v1864
        %3399 = vmatmul.mubr.bf16.gmra.mxu0 %v1863
        %v3400 = vpop.f32.mrf.mxu0
        %v3401 = vadd.f32 %v3208, %v3400
        %v3402 = vpop.f32.mrf.mxu0
        %v3403 = vadd.f32 %v3210, %v3402
        %v3404 = vpop.f32.mrf.mxu0
        %v3405 = vadd.f32 %v3212, %v3404
        %v3406 = vpop.f32.mrf.mxu0
        %v3407 = vadd.f32 %v3214, %v3406
        %3408 = vmatprep.mubr.bf16.mxu0 %v1868
        %3409 = vmatmul.mubr.bf16.gmra.mxu0 %v1867
        %v3410 = vpop.f32.mrf.mxu0
        %v3411 = vadd.f32 %v3218, %v3410
        %v3412 = vpop.f32.mrf.mxu0
        %v3413 = vadd.f32 %v3220, %v3412
        %v3414 = vpop.f32.mrf.mxu0
        %v3415 = vadd.f32 %v3222, %v3414
        %v3416 = vpop.f32.mrf.mxu0
        %v3417 = vadd.f32 %v3224, %v3416
        %3418 = vmatprep.mubr.bf16.mxu0 %v1872
        %3419 = vmatmul.mubr.bf16.gmra.mxu0 %v1871
        %v3420 = vpop.f32.mrf.mxu0
        %v3421 = vadd.f32 %v3228, %v3420
        %v3422 = vpop.f32.mrf.mxu0
        %v3423 = vadd.f32 %v3230, %v3422
        %v3424 = vpop.f32.mrf.mxu0
        %v3425 = vadd.f32 %v3232, %v3424
        %v3426 = vpop.f32.mrf.mxu0
        %v3427 = vadd.f32 %v3234, %v3426
        %3428 = vmatprep.mubr.bf16.mxu0 %v1876
        %3429 = vmatmul.mubr.bf16.gmra.mxu0 %v1875
        %v3430 = vpop.f32.mrf.mxu0
        %v3431 = vadd.f32 %v3238, %v3430
        %v3432 = vpop.f32.mrf.mxu0
        %v3433 = vadd.f32 %v3240, %v3432
        %v3434 = vpop.f32.mrf.mxu0
        %v3435 = vadd.f32 %v3242, %v3434
        %v3436 = vpop.f32.mrf.mxu0
        %v3437 = vadd.f32 %v3244, %v3436
        %3438 = vdwg.mxu0
        %v3439 = vtanh.pop %v2895
        %v3440 = vtanh.pop %v2897
        %v3441 = vtanh.pop %v2899
        %v3442 = vtanh.pop %v2901
        %v3443 = vtanh.pop %v2905
        %v3444 = vtanh.pop %v2907
        %v3445 = vtanh.pop %v2909
        %v3446 = vtanh.pop %v2911
        %v3447 = vtanh.pop %v2915
        %v3448 = vtanh.pop %v2917
        %v3449 = vtanh.pop %v2919
        %v3450 = vtanh.pop %v2921
        %v3451 = vtanh.pop %v2925
        %v3452 = vtanh.pop %v2927
        %v3453 = vtanh.pop %v2929
        %v3454 = vtanh.pop %v2931
        %v3455 = vtanh.pop %v2935
        %v3456 = vtanh.pop %v2937
        %v3457 = vtanh.pop %v2939
        %v3458 = vtanh.pop %v2941
        %v3459 = vtanh.pop %v2945
        %v3460 = vtanh.pop %v2947
        %v3461 = vtanh.pop %v2949
        %v3462 = vtanh.pop %v2951
        %v3463 = vtanh.pop %v2955
        %v3464 = vtanh.pop %v2957
        %v3465 = vtanh.pop %v2959
        %v3466 = vtanh.pop %v2961
        %v3467 = vtanh.pop %v2965
        %v3468 = vtanh.pop %v2967
        %v3469 = vtanh.pop %v2969
        %v3470 = vtanh.pop %v2971
        %v3471 = vtanh.pop %v2975
        %v3472 = vtanh.pop %v2977
        %v3473 = vtanh.pop %v2979
        %v3474 = vtanh.pop %v2981
        %v3475 = vtanh.pop %v2985
        %v3476 = vtanh.pop %v2987
        %v3477 = vtanh.pop %v2989
        %v3478 = vtanh.pop %v2991
        %v3479 = vtanh.pop %v2995
        %v3480 = vtanh.pop %v2997
        %v3481 = vtanh.pop %v2999
        %v3482 = vtanh.pop %v3001
        %v3483 = vtanh.pop %v3005
        %v3484 = vtanh.pop %v3007
        %v3485 = vtanh.pop %v3009
        %v3486 = vtanh.pop %v3011
        %v3487 = vtanh.pop %v3015
        %v3488 = vtanh.pop %v3017
        %v3489 = vtanh.pop %v3019
        %v3490 = vtanh.pop %v3021
        %v3491 = vtanh.pop %v3025
        %v3492 = vtanh.pop %v3027
        %v3493 = vtanh.pop %v3029
        %v3494 = vtanh.pop %v3031
        %v3495 = vtanh.pop %v3035
        %v3496 = vtanh.pop %v3037
        %v3497 = vtanh.pop %v3039
        %v3498 = vtanh.pop %v3041
        %v3499 = vtanh.pop %v3045
        %v3500 = vtanh.pop %v3047
        %v3501 = vtanh.pop %v3049
        %v3502 = vtanh.pop %v3051
        %v3503 = vxor.u32 %v3281, 2147483648
        %v3504 = vxor.u32 %v3283, 2147483648
        %v3505 = vxor.u32 %v3285, 2147483648
        %v3506 = vxor.u32 %v3287, 2147483648
        %v3507 = vxor.u32 %v3291, 2147483648
        %v3508 = vxor.u32 %v3293, 2147483648
        %v3509 = vxor.u32 %v3295, 2147483648
        %v3510 = vxor.u32 %v3297, 2147483648
        %v3511 = vxor.u32 %v3301, 2147483648
        %v3512 = vxor.u32 %v3303, 2147483648
        %v3513 = vxor.u32 %v3305, 2147483648
        %v3514 = vxor.u32 %v3307, 2147483648
        %v3515 = vxor.u32 %v3311, 2147483648
        %v3516 = vxor.u32 %v3313, 2147483648
        %v3517 = vxor.u32 %v3315, 2147483648
        %v3518 = vxor.u32 %v3317, 2147483648
        %v3519 = vxor.u32 %v3321, 2147483648
        %v3520 = vxor.u32 %v3323, 2147483648
        %v3521 = vxor.u32 %v3325, 2147483648
        %v3522 = vxor.u32 %v3327, 2147483648
        %v3523 = vxor.u32 %v3331, 2147483648
        %v3524 = vxor.u32 %v3333, 2147483648
        %v3525 = vxor.u32 %v3335, 2147483648
        %v3526 = vxor.u32 %v3337, 2147483648
        %v3527 = vxor.u32 %v3341, 2147483648
        %v3528 = vxor.u32 %v3343, 2147483648
        %v3529 = vxor.u32 %v3345, 2147483648
        %v3530 = vxor.u32 %v3347, 2147483648
        %v3531 = vxor.u32 %v3351, 2147483648
        %v3532 = vxor.u32 %v3353, 2147483648
        %v3533 = vxor.u32 %v3355, 2147483648
        %v3534 = vxor.u32 %v3357, 2147483648
        %v3535 = vxor.u32 %v3361, 2147483648
        %v3536 = vxor.u32 %v3363, 2147483648
        %v3537 = vxor.u32 %v3365, 2147483648
        %v3538 = vxor.u32 %v3367, 2147483648
        %v3539 = vxor.u32 %v3371, 2147483648
        %v3540 = vxor.u32 %v3373, 2147483648
        %v3541 = vxor.u32 %v3375, 2147483648
        %v3542 = vxor.u32 %v3377, 2147483648
        %v3543 = vxor.u32 %v3381, 2147483648
        %v3544 = vxor.u32 %v3383, 2147483648
        %v3545 = vxor.u32 %v3385, 2147483648
        %v3546 = vxor.u32 %v3387, 2147483648
        %v3547 = vxor.u32 %v3391, 2147483648
        %v3548 = vxor.u32 %v3393, 2147483648
        %v3549 = vxor.u32 %v3395, 2147483648
        %v3550 = vxor.u32 %v3397, 2147483648
        %v3551 = vxor.u32 %v3401, 2147483648
        %v3552 = vxor.u32 %v3403, 2147483648
        %v3553 = vxor.u32 %v3405, 2147483648
        %v3554 = vxor.u32 %v3407, 2147483648
        %v3555 = vxor.u32 %v3411, 2147483648
        %v3556 = vxor.u32 %v3413, 2147483648
        %v3557 = vxor.u32 %v3415, 2147483648
        %v3558 = vxor.u32 %v3417, 2147483648
        %v3559 = vxor.u32 %v3421, 2147483648
        %v3560 = vxor.u32 %v3423, 2147483648
        %v3561 = vxor.u32 %v3425, 2147483648
        %v3562 = vxor.u32 %v3427, 2147483648
        %v3563 = vxor.u32 %v3431, 2147483648
        %v3564 = vxor.u32 %v3433, 2147483648
        %v3565 = vxor.u32 %v3435, 2147483648
        %v3566 = vxor.u32 %v3437, 2147483648
        %v3567 = vmul.f32 %v3503, 1.442695
        %v3568 = vpow.pop %v3567
        %v3569 = vmul.f32 %v3504, 1.442695
        %v3570 = vpow.pop %v3569
        %v3571 = vmul.f32 %v3505, 1.442695
        %v3572 = vpow.pop %v3571
        %v3573 = vmul.f32 %v3506, 1.442695
        %v3574 = vpow.pop %v3573
        %v3575 = vmul.f32 %v3507, 1.442695
        %v3576 = vpow.pop %v3575
        %v3577 = vmul.f32 %v3508, 1.442695
        %v3578 = vpow.pop %v3577
        %v3579 = vmul.f32 %v3509, 1.442695
        %v3580 = vpow.pop %v3579
        %v3581 = vmul.f32 %v3510, 1.442695
        %v3582 = vpow.pop %v3581
        %v3583 = vmul.f32 %v3511, 1.442695
        %v3584 = vpow.pop %v3583
        %v3585 = vmul.f32 %v3512, 1.442695
        %v3586 = vpow.pop %v3585
        %v3587 = vmul.f32 %v3513, 1.442695
        %v3588 = vpow.pop %v3587
        %v3589 = vmul.f32 %v3514, 1.442695
        %v3590 = vpow.pop %v3589
        %v3591 = vmul.f32 %v3515, 1.442695
        %v3592 = vpow.pop %v3591
        %v3593 = vmul.f32 %v3516, 1.442695
        %v3594 = vpow.pop %v3593
        %v3595 = vmul.f32 %v3517, 1.442695
        %v3596 = vpow.pop %v3595
        %v3597 = vmul.f32 %v3518, 1.442695
        %v3598 = vpow.pop %v3597
        %v3599 = vmul.f32 %v3519, 1.442695
        %v3600 = vpow.pop %v3599
        %v3601 = vmul.f32 %v3520, 1.442695
        %v3602 = vpow.pop %v3601
        %v3603 = vmul.f32 %v3521, 1.442695
        %v3604 = vpow.pop %v3603
        %v3605 = vmul.f32 %v3522, 1.442695
        %v3606 = vpow.pop %v3605
        %v3607 = vmul.f32 %v3523, 1.442695
        %v3608 = vpow.pop %v3607
        %v3609 = vmul.f32 %v3524, 1.442695
        %v3610 = vpow.pop %v3609
        %v3611 = vmul.f32 %v3525, 1.442695
        %v3612 = vpow.pop %v3611
        %v3613 = vmul.f32 %v3526, 1.442695
        %v3614 = vpow.pop %v3613
        %v3615 = vmul.f32 %v3527, 1.442695
        %v3616 = vpow.pop %v3615
        %v3617 = vmul.f32 %v3528, 1.442695
        %v3618 = vpow.pop %v3617
        %v3619 = vmul.f32 %v3529, 1.442695
        %v3620 = vpow.pop %v3619
        %v3621 = vmul.f32 %v3530, 1.442695
        %v3622 = vpow.pop %v3621
        %v3623 = vmul.f32 %v3531, 1.442695
        %v3624 = vpow.pop %v3623
        %v3625 = vmul.f32 %v3532, 1.442695
        %v3626 = vpow.pop %v3625
        %v3627 = vmul.f32 %v3533, 1.442695
        %v3628 = vpow.pop %v3627
        %v3629 = vmul.f32 %v3534, 1.442695
        %v3630 = vpow.pop %v3629
        %v3631 = vmul.f32 %v3535, 1.442695
        %v3632 = vpow.pop %v3631
        %v3633 = vmul.f32 %v3536, 1.442695
        %v3634 = vpow.pop %v3633
        %v3635 = vmul.f32 %v3537, 1.442695
        %v3636 = vpow.pop %v3635
        %v3637 = vmul.f32 %v3538, 1.442695
        %v3638 = vpow.pop %v3637
        %v3639 = vmul.f32 %v3539, 1.442695
        %v3640 = vpow.pop %v3639
        %v3641 = vmul.f32 %v3540, 1.442695
        %v3642 = vpow.pop %v3641
        %v3643 = vmul.f32 %v3541, 1.442695
        %v3644 = vpow.pop %v3643
        %v3645 = vmul.f32 %v3542, 1.442695
        %v3646 = vpow.pop %v3645
        %v3647 = vmul.f32 %v3543, 1.442695
        %v3648 = vpow.pop %v3647
        %v3649 = vmul.f32 %v3544, 1.442695
        %v3650 = vpow.pop %v3649
        %v3651 = vmul.f32 %v3545, 1.442695
        %v3652 = vpow.pop %v3651
        %v3653 = vmul.f32 %v3546, 1.442695
        %v3654 = vpow.pop %v3653
        %v3655 = vmul.f32 %v3547, 1.442695
        %v3656 = vpow.pop %v3655
        %v3657 = vmul.f32 %v3548, 1.442695
        %v3658 = vpow.pop %v3657
        %v3659 = vmul.f32 %v3549, 1.442695
        %v3660 = vpow.pop %v3659
        %v3661 = vmul.f32 %v3550, 1.442695
        %v3662 = vpow.pop %v3661
        %v3663 = vmul.f32 %v3551, 1.442695
        %v3664 = vpow.pop %v3663
        %v3665 = vmul.f32 %v3552, 1.442695
        %v3666 = vpow.pop %v3665
        %v3667 = vmul.f32 %v3553, 1.442695
        %v3668 = vpow.pop %v3667
        %v3669 = vmul.f32 %v3554, 1.442695
        %v3670 = vpow.pop %v3669
        %v3671 = vmul.f32 %v3555, 1.442695
        %v3672 = vpow.pop %v3671
        %v3673 = vmul.f32 %v3556, 1.442695
        %v3674 = vpow.pop %v3673
        %v3675 = vmul.f32 %v3557, 1.442695
        %v3676 = vpow.pop %v3675
        %v3677 = vmul.f32 %v3558, 1.442695
        %v3678 = vpow.pop %v3677
        %v3679 = vmul.f32 %v3559, 1.442695
        %v3680 = vpow.pop %v3679
        %v3681 = vmul.f32 %v3560, 1.442695
        %v3682 = vpow.pop %v3681
        %v3683 = vmul.f32 %v3561, 1.442695
        %v3684 = vpow.pop %v3683
        %v3685 = vmul.f32 %v3562, 1.442695
        %v3686 = vpow.pop %v3685
        %v3687 = vmul.f32 %v3563, 1.442695
        %v3688 = vpow.pop %v3687
        %v3689 = vmul.f32 %v3564, 1.442695
        %v3690 = vpow.pop %v3689
        %v3691 = vmul.f32 %v3565, 1.442695
        %v3692 = vpow.pop %v3691
        %v3693 = vmul.f32 %v3566, 1.442695
        %v3694 = vpow.pop %v3693
        %v3695 = vadd.f32 %v3568, 1.0
        %v3696 = vadd.f32 %v3570, 1.0
        %v3697 = vadd.f32 %v3572, 1.0
        %v3698 = vadd.f32 %v3574, 1.0
        %v3699 = vadd.f32 %v3576, 1.0
        %v3700 = vadd.f32 %v3578, 1.0
        %v3701 = vadd.f32 %v3580, 1.0
        %v3702 = vadd.f32 %v3582, 1.0
        %v3703 = vadd.f32 %v3584, 1.0
        %v3704 = vadd.f32 %v3586, 1.0
        %v3705 = vadd.f32 %v3588, 1.0
        %v3706 = vadd.f32 %v3590, 1.0
        %v3707 = vadd.f32 %v3592, 1.0
        %v3708 = vadd.f32 %v3594, 1.0
        %v3709 = vadd.f32 %v3596, 1.0
        %v3710 = vadd.f32 %v3598, 1.0
        %v3711 = vadd.f32 %v3600, 1.0
        %v3712 = vadd.f32 %v3602, 1.0
        %v3713 = vadd.f32 %v3604, 1.0
        %v3714 = vadd.f32 %v3606, 1.0
        %v3715 = vadd.f32 %v3608, 1.0
        %v3716 = vadd.f32 %v3610, 1.0
        %v3717 = vadd.f32 %v3612, 1.0
        %v3718 = vadd.f32 %v3614, 1.0
        %v3719 = vadd.f32 %v3616, 1.0
        %v3720 = vadd.f32 %v3618, 1.0
        %v3721 = vadd.f32 %v3620, 1.0
        %v3722 = vadd.f32 %v3622, 1.0
        %v3723 = vadd.f32 %v3624, 1.0
        %v3724 = vadd.f32 %v3626, 1.0
        %v3725 = vadd.f32 %v3628, 1.0
        %v3726 = vadd.f32 %v3630, 1.0
        %v3727 = vadd.f32 %v3632, 1.0
        %v3728 = vadd.f32 %v3634, 1.0
        %v3729 = vadd.f32 %v3636, 1.0
        %v3730 = vadd.f32 %v3638, 1.0
        %v3731 = vadd.f32 %v3640, 1.0
        %v3732 = vadd.f32 %v3642, 1.0
        %v3733 = vadd.f32 %v3644, 1.0
        %v3734 = vadd.f32 %v3646, 1.0
        %v3735 = vadd.f32 %v3648, 1.0
        %v3736 = vadd.f32 %v3650, 1.0
        %v3737 = vadd.f32 %v3652, 1.0
        %v3738 = vadd.f32 %v3654, 1.0
        %v3739 = vadd.f32 %v3656, 1.0
        %v3740 = vadd.f32 %v3658, 1.0
        %v3741 = vadd.f32 %v3660, 1.0
        %v3742 = vadd.f32 %v3662, 1.0
        %v3743 = vadd.f32 %v3664, 1.0
        %v3744 = vadd.f32 %v3666, 1.0
        %v3745 = vadd.f32 %v3668, 1.0
        %v3746 = vadd.f32 %v3670, 1.0
        %v3747 = vadd.f32 %v3672, 1.0
        %v3748 = vadd.f32 %v3674, 1.0
        %v3749 = vadd.f32 %v3676, 1.0
        %v3750 = vadd.f32 %v3678, 1.0
        %v3751 = vadd.f32 %v3680, 1.0
        %v3752 = vadd.f32 %v3682, 1.0
        %v3753 = vadd.f32 %v3684, 1.0
        %v3754 = vadd.f32 %v3686, 1.0
        %v3755 = vadd.f32 %v3688, 1.0
        %v3756 = vadd.f32 %v3690, 1.0
        %v3757 = vadd.f32 %v3692, 1.0
        %v3758 = vadd.f32 %v3694, 1.0
        %v3759 = vrcp.pop %v3695
        %v3760 = vmul.f32 1.0, %v3759
        %v3761 = vrcp.pop %v3696
        %v3762 = vmul.f32 1.0, %v3761
        %v3763 = vrcp.pop %v3697
        %v3764 = vmul.f32 1.0, %v3763
        %v3765 = vrcp.pop %v3698
        %v3766 = vmul.f32 1.0, %v3765
        %v3767 = vrcp.pop %v3699
        %v3768 = vmul.f32 1.0, %v3767
        %v3769 = vrcp.pop %v3700
        %v3770 = vmul.f32 1.0, %v3769
        %v3771 = vrcp.pop %v3701
        %v3772 = vmul.f32 1.0, %v3771
        %v3773 = vrcp.pop %v3702
        %v3774 = vmul.f32 1.0, %v3773
        %v3775 = vrcp.pop %v3703
        %v3776 = vmul.f32 1.0, %v3775
        %v3777 = vrcp.pop %v3704
        %v3778 = vmul.f32 1.0, %v3777
        %v3779 = vrcp.pop %v3705
        %v3780 = vmul.f32 1.0, %v3779
        %v3781 = vrcp.pop %v3706
        %v3782 = vmul.f32 1.0, %v3781
        %v3783 = vrcp.pop %v3707
        %v3784 = vmul.f32 1.0, %v3783
        %v3785 = vrcp.pop %v3708
        %v3786 = vmul.f32 1.0, %v3785
        %v3787 = vrcp.pop %v3709
        %v3788 = vmul.f32 1.0, %v3787
        %v3789 = vrcp.pop %v3710
        %v3790 = vmul.f32 1.0, %v3789
        %v3791 = vrcp.pop %v3711
        %v3792 = vmul.f32 1.0, %v3791
        %v3793 = vrcp.pop %v3712
        %v3794 = vmul.f32 1.0, %v3793
        %v3795 = vrcp.pop %v3713
        %v3796 = vmul.f32 1.0, %v3795
        %v3797 = vrcp.pop %v3714
        %v3798 = vmul.f32 1.0, %v3797
        %v3799 = vrcp.pop %v3715
        %v3800 = vmul.f32 1.0, %v3799
        %v3801 = vrcp.pop %v3716
        %v3802 = vmul.f32 1.0, %v3801
        %v3803 = vrcp.pop %v3717
        %v3804 = vmul.f32 1.0, %v3803
        %v3805 = vrcp.pop %v3718
        %v3806 = vmul.f32 1.0, %v3805
        %v3807 = vrcp.pop %v3719
        %v3808 = vmul.f32 1.0, %v3807
        %v3809 = vrcp.pop %v3720
        %v3810 = vmul.f32 1.0, %v3809
        %v3811 = vrcp.pop %v3721
        %v3812 = vmul.f32 1.0, %v3811
        %v3813 = vrcp.pop %v3722
        %v3814 = vmul.f32 1.0, %v3813
        %v3815 = vrcp.pop %v3723
        %v3816 = vmul.f32 1.0, %v3815
        %v3817 = vrcp.pop %v3724
        %v3818 = vmul.f32 1.0, %v3817
        %v3819 = vrcp.pop %v3725
        %v3820 = vmul.f32 1.0, %v3819
        %v3821 = vrcp.pop %v3726
        %v3822 = vmul.f32 1.0, %v3821
        %v3823 = vrcp.pop %v3727
        %v3824 = vmul.f32 1.0, %v3823
        %v3825 = vrcp.pop %v3728
        %v3826 = vmul.f32 1.0, %v3825
        %v3827 = vrcp.pop %v3729
        %v3828 = vmul.f32 1.0, %v3827
        %v3829 = vrcp.pop %v3730
        %v3830 = vmul.f32 1.0, %v3829
        %v3831 = vrcp.pop %v3731
        %v3832 = vmul.f32 1.0, %v3831
        %v3833 = vrcp.pop %v3732
        %v3834 = vmul.f32 1.0, %v3833
        %v3835 = vrcp.pop %v3733
        %v3836 = vmul.f32 1.0, %v3835
        %v3837 = vrcp.pop %v3734
        %v3838 = vmul.f32 1.0, %v3837
        %v3839 = vrcp.pop %v3735
        %v3840 = vmul.f32 1.0, %v3839
        %v3841 = vrcp.pop %v3736
        %v3842 = vmul.f32 1.0, %v3841
        %v3843 = vrcp.pop %v3737
        %v3844 = vmul.f32 1.0, %v3843
        %v3845 = vrcp.pop %v3738
        %v3846 = vmul.f32 1.0, %v3845
        %v3847 = vrcp.pop %v3739
        %v3848 = vmul.f32 1.0, %v3847
        %v3849 = vrcp.pop %v3740
        %v3850 = vmul.f32 1.0, %v3849
        %v3851 = vrcp.pop %v3741
        %v3852 = vmul.f32 1.0, %v3851
        %v3853 = vrcp.pop %v3742
        %v3854 = vmul.f32 1.0, %v3853
        %v3855 = vrcp.pop %v3743
        %v3856 = vmul.f32 1.0, %v3855
        %v3857 = vrcp.pop %v3744
        %v3858 = vmul.f32 1.0, %v3857
        %v3859 = vrcp.pop %v3745
        %v3860 = vmul.f32 1.0, %v3859
        %v3861 = vrcp.pop %v3746
        %v3862 = vmul.f32 1.0, %v3861
        %v3863 = vrcp.pop %v3747
        %v3864 = vmul.f32 1.0, %v3863
        %v3865 = vrcp.pop %v3748
        %v3866 = vmul.f32 1.0, %v3865
        %v3867 = vrcp.pop %v3749
        %v3868 = vmul.f32 1.0, %v3867
        %v3869 = vrcp.pop %v3750
        %v3870 = vmul.f32 1.0, %v3869
        %v3871 = vrcp.pop %v3751
        %v3872 = vmul.f32 1.0, %v3871
        %v3873 = vrcp.pop %v3752
        %v3874 = vmul.f32 1.0, %v3873
        %v3875 = vrcp.pop %v3753
        %v3876 = vmul.f32 1.0, %v3875
        %v3877 = vrcp.pop %v3754
        %v3878 = vmul.f32 1.0, %v3877
        %v3879 = vrcp.pop %v3755
        %v3880 = vmul.f32 1.0, %v3879
        %v3881 = vrcp.pop %v3756
        %v3882 = vmul.f32 1.0, %v3881
        %v3883 = vrcp.pop %v3757
        %v3884 = vmul.f32 1.0, %v3883
        %v3885 = vrcp.pop %v3758
        %v3886 = vmul.f32 1.0, %v3885
        %v3887 = vmul.f32 %v3439, %v3760
        %v3888 = vmul.f32 %v3440, %v3762
        %v3889 = vmul.f32 %v3441, %v3764
        %v3890 = vmul.f32 %v3442, %v3766
        %v3891 = vmul.f32 %v3443, %v3768
        %v3892 = vmul.f32 %v3444, %v3770
        %v3893 = vmul.f32 %v3445, %v3772
        %v3894 = vmul.f32 %v3446, %v3774
        %v3895 = vmul.f32 %v3447, %v3776
        %v3896 = vmul.f32 %v3448, %v3778
        %v3897 = vmul.f32 %v3449, %v3780
        %v3898 = vmul.f32 %v3450, %v3782
        %v3899 = vmul.f32 %v3451, %v3784
        %v3900 = vmul.f32 %v3452, %v3786
        %v3901 = vmul.f32 %v3453, %v3788
        %v3902 = vmul.f32 %v3454, %v3790
        %v3903 = vmul.f32 %v3455, %v3792
        %v3904 = vmul.f32 %v3456, %v3794
        %v3905 = vmul.f32 %v3457, %v3796
        %v3906 = vmul.f32 %v3458, %v3798
        %v3907 = vmul.f32 %v3459, %v3800
        %v3908 = vmul.f32 %v3460, %v3802
        %v3909 = vmul.f32 %v3461, %v3804
        %v3910 = vmul.f32 %v3462, %v3806
        %v3911 = vmul.f32 %v3463, %v3808
        %v3912 = vmul.f32 %v3464, %v3810
        %v3913 = vmul.f32 %v3465, %v3812
        %v3914 = vmul.f32 %v3466, %v3814
        %v3915 = vmul.f32 %v3467, %v3816
        %v3916 = vmul.f32 %v3468, %v3818
        %v3917 = vmul.f32 %v3469, %v3820
        %v3918 = vmul.f32 %v3470, %v3822
        %v3919 = vmul.f32 %v3471, %v3824
        %v3920 = vmul.f32 %v3472, %v3826
        %v3921 = vmul.f32 %v3473, %v3828
        %v3922 = vmul.f32 %v3474, %v3830
        %v3923 = vmul.f32 %v3475, %v3832
        %v3924 = vmul.f32 %v3476, %v3834
        %v3925 = vmul.f32 %v3477, %v3836
        %v3926 = vmul.f32 %v3478, %v3838
        %v3927 = vmul.f32 %v3479, %v3840
        %v3928 = vmul.f32 %v3480, %v3842
        %v3929 = vmul.f32 %v3481, %v3844
        %v3930 = vmul.f32 %v3482, %v3846
        %v3931 = vmul.f32 %v3483, %v3848
        %v3932 = vmul.f32 %v3484, %v3850
        %v3933 = vmul.f32 %v3485, %v3852
        %v3934 = vmul.f32 %v3486, %v3854
        %v3935 = vmul.f32 %v3487, %v3856
        %v3936 = vmul.f32 %v3488, %v3858
        %v3937 = vmul.f32 %v3489, %v3860
        %v3938 = vmul.f32 %v3490, %v3862
        %v3939 = vmul.f32 %v3491, %v3864
        %v3940 = vmul.f32 %v3492, %v3866
        %v3941 = vmul.f32 %v3493, %v3868
        %v3942 = vmul.f32 %v3494, %v3870
        %v3943 = vmul.f32 %v3495, %v3872
        %v3944 = vmul.f32 %v3496, %v3874
        %v3945 = vmul.f32 %v3497, %v3876
        %v3946 = vmul.f32 %v3498, %v3878
        %v3947 = vmul.f32 %v3499, %v3880
        %v3948 = vmul.f32 %v3500, %v3882
        %v3949 = vmul.f32 %v3501, %v3884
        %v3950 = vmul.f32 %v3502, %v3886
        %v3951 = vpack.c.bf16 %v3889, %v3887
        %v3952 = vpack.c.bf16 %v3890, %v3888
        %v3953 = vpack.c.bf16 %v3893, %v3891
        %v3954 = vpack.c.bf16 %v3894, %v3892
        %v3955 = vpack.c.bf16 %v3897, %v3895
        %v3956 = vpack.c.bf16 %v3898, %v3896
        %v3957 = vpack.c.bf16 %v3901, %v3899
        %v3958 = vpack.c.bf16 %v3902, %v3900
        %v3959 = vpack.c.bf16 %v3905, %v3903
        %v3960 = vpack.c.bf16 %v3906, %v3904
        %v3961 = vpack.c.bf16 %v3909, %v3907
        %v3962 = vpack.c.bf16 %v3910, %v3908
        %v3963 = vpack.c.bf16 %v3913, %v3911
        %v3964 = vpack.c.bf16 %v3914, %v3912
        %v3965 = vpack.c.bf16 %v3917, %v3915
        %v3966 = vpack.c.bf16 %v3918, %v3916
        %v3967 = vpack.c.bf16 %v3921, %v3919
        %v3968 = vpack.c.bf16 %v3922, %v3920
        %v3969 = vpack.c.bf16 %v3925, %v3923
        %v3970 = vpack.c.bf16 %v3926, %v3924
        %v3971 = vpack.c.bf16 %v3929, %v3927
        %v3972 = vpack.c.bf16 %v3930, %v3928
        %v3973 = vpack.c.bf16 %v3933, %v3931
        %v3974 = vpack.c.bf16 %v3934, %v3932
        %v3975 = vpack.c.bf16 %v3937, %v3935
        %v3976 = vpack.c.bf16 %v3938, %v3936
        %v3977 = vpack.c.bf16 %v3941, %v3939
        %v3978 = vpack.c.bf16 %v3942, %v3940
        %v3979 = vpack.c.bf16 %v3945, %v3943
        %v3980 = vpack.c.bf16 %v3946, %v3944
        %v3981 = vpack.c.bf16 %v3949, %v3947
        %v3982 = vpack.c.bf16 %v3950, %v3948
        %v3983 = vld [vmem:[%s5] sm:$0xf]
        %v3984 = vld [vmem:[%s5 + $0x4] sm:$0xf]
        %v3985 = vld [vmem:[%s5 + $0x8] sm:$0xf]
        %v3986 = vld [vmem:[%s5 + $0xc] sm:$0xf]
        %v3987 = vld [vmem:[%s5 + $0x10] sm:$0xf]
        %v3988 = vld [vmem:[%s5 + $0x14] sm:$0xf]
        %v3989 = vld [vmem:[%s5 + $0x18] sm:$0xf]
        %v3990 = vld [vmem:[%s5 + $0x1c] sm:$0xf]
        %v3991 = vld [vmem:[%s5 + $0x20] sm:$0xf]
        %v3992 = vld [vmem:[%s5 + $0x24] sm:$0xf]
        %v3993 = vld [vmem:[%s5 + $0x28] sm:$0xf]
        %v3994 = vld [vmem:[%s5 + $0x2c] sm:$0xf]
        %v3995 = vld [vmem:[%s5 + $0x30] sm:$0xf]
        %v3996 = vld [vmem:[%s5 + $0x34] sm:$0xf]
        %v3997 = vld [vmem:[%s5 + $0x38] sm:$0xf]
        %v3998 = vld [vmem:[%s5 + $0x3c] sm:$0xf]
        %v3999 = vld [vmem:[%s5 + $0x40] sm:$0xf]
        %v4000 = vld [vmem:[%s5 + $0x44] sm:$0xf]
        %v4001 = vld [vmem:[%s5 + $0x48] sm:$0xf]
        %v4002 = vld [vmem:[%s5 + $0x4c] sm:$0xf]
        %v4003 = vld [vmem:[%s5 + $0x50] sm:$0xf]
        %v4004 = vld [vmem:[%s5 + $0x54] sm:$0xf]
        %v4005 = vld [vmem:[%s5 + $0x58] sm:$0xf]
        %v4006 = vld [vmem:[%s5 + $0x5c] sm:$0xf]
        %v4007 = vld [vmem:[%s5 + $0x60] sm:$0xf]
        %v4008 = vld [vmem:[%s5 + $0x64] sm:$0xf]
        %v4009 = vld [vmem:[%s5 + $0x68] sm:$0xf]
        %v4010 = vld [vmem:[%s5 + $0x6c] sm:$0xf]
        %v4011 = vld [vmem:[%s5 + $0x70] sm:$0xf]
        %v4012 = vld [vmem:[%s5 + $0x74] sm:$0xf]
        %v4013 = vld [vmem:[%s5 + $0x78] sm:$0xf]
        %v4014 = vld [vmem:[%s5 + $0x7c] sm:$0xf]
        %v4015 = vld [vmem:[#allocation2] sm:$0x1]
        %v4017 = vlaneseq
        %v4018 = vshrl.u32 %v4017, 7
        %v4019 = vsub.s32 0, %v4018
        %v4020 = vrot.slane %v4015, %v4019
        %v4054 = vunpack.c.l.b16 %v3983
        %v4055 = vunpack.c.l.b16 %v3984
        %v4056 = vunpack.c.l.b16 %v3985
        %v4057 = vunpack.c.l.b16 %v3986
        %v4058 = vunpack.c.l.b16 %v3987
        %v4059 = vunpack.c.l.b16 %v3988
        %v4060 = vunpack.c.l.b16 %v3989
        %v4061 = vunpack.c.l.b16 %v3990
        %v4062 = vunpack.c.l.b16 %v3991
        %v4063 = vunpack.c.l.b16 %v3992
        %v4064 = vunpack.c.l.b16 %v3993
        %v4065 = vunpack.c.l.b16 %v3994
        %v4066 = vunpack.c.l.b16 %v3995
        %v4067 = vunpack.c.l.b16 %v3996
        %v4068 = vunpack.c.l.b16 %v3997
        %v4069 = vunpack.c.l.b16 %v3998
        %v4070 = vunpack.c.l.b16 %v3999
        %v4071 = vunpack.c.l.b16 %v4000
        %v4072 = vunpack.c.l.b16 %v4001
        %v4073 = vunpack.c.l.b16 %v4002
        %v4074 = vunpack.c.l.b16 %v4003
        %v4075 = vunpack.c.l.b16 %v4004
        %v4076 = vunpack.c.l.b16 %v4005
        %v4077 = vunpack.c.l.b16 %v4006
        %v4078 = vunpack.c.l.b16 %v4007
        %v4079 = vunpack.c.l.b16 %v4008
        %v4080 = vunpack.c.l.b16 %v4009
        %v4081 = vunpack.c.l.b16 %v4010
        %v4082 = vunpack.c.l.b16 %v4011
        %v4083 = vunpack.c.l.b16 %v4012
        %v4084 = vunpack.c.l.b16 %v4013
        %v4085 = vunpack.c.l.b16 %v4014
        %v4086 = vpack.c.b16 %v4055, %v4054
        %v4087 = vpack.c.b16 %v4057, %v4056
        %v4088 = vpack.c.b16 %v4059, %v4058
        %v4089 = vpack.c.b16 %v4061, %v4060
        %v4090 = vpack.c.b16 %v4063, %v4062
        %v4091 = vpack.c.b16 %v4065, %v4064
        %v4092 = vpack.c.b16 %v4067, %v4066
        %v4093 = vpack.c.b16 %v4069, %v4068
        %v4094 = vpack.c.b16 %v4071, %v4070
        %v4095 = vpack.c.b16 %v4073, %v4072
        %v4096 = vpack.c.b16 %v4075, %v4074
        %v4097 = vpack.c.b16 %v4077, %v4076
        %v4098 = vpack.c.b16 %v4079, %v4078
        %v4099 = vpack.c.b16 %v4081, %v4080
        %v4100 = vpack.c.b16 %v4083, %v4082
        %v4101 = vpack.c.b16 %v4085, %v4084
        %4118 = vmatprep.subr.bf16.mxu0 0
        %4119 = vmatpush1.bf16.msra.mxu0 %v4093
        %4120 = vmatprep.subr.bf16.mxu0 0
        %4121 = vmatpush1.bf16.msra.mxu0 %v4092
        %4122 = vmatprep.subr.bf16.mxu0 0
        %4123 = vmatpush1.bf16.msra.mxu0 %v4091
        %4124 = vmatprep.subr.bf16.mxu0 0
        %4125 = vmatpush1.bf16.msra.mxu0 %v4090
        %4126 = vmatprep.subr.bf16.mxu0 0
        %4127 = vmatpush1.bf16.msra.mxu0 %v4089
        %4128 = vmatprep.subr.bf16.mxu0 0
        %4129 = vmatpush1.bf16.msra.mxu0 %v4088
        %4130 = vmatprep.subr.bf16.mxu0 0
        %4131 = vmatpush1.bf16.msra.mxu0 %v4087
        %4132 = vmatprep.subr.bf16.mxu0 0
        %4133 = vmatpush1.bf16.msra.mxu0 %v4086
        %4134 = vmatprep.subr.bf16.mxu0 0
        %4135 = vmatpush2.bf16.msra.mxu0 %v4101
        %4136 = vmatprep.subr.bf16.mxu0 0
        %4137 = vmatpush2.bf16.msra.mxu0 %v4100
        %4138 = vmatprep.subr.bf16.mxu0 0
        %4139 = vmatpush2.bf16.msra.mxu0 %v4099
        %4140 = vmatprep.subr.bf16.mxu0 0
        %4141 = vmatpush2.bf16.msra.mxu0 %v4098
        %4142 = vmatprep.subr.bf16.mxu0 0
        %4143 = vmatpush2.bf16.msra.mxu0 %v4097
        %4144 = vmatprep.subr.bf16.mxu0 0
        %4145 = vmatpush2.bf16.msra.mxu0 %v4096
        %4146 = vmatprep.subr.bf16.mxu0 0
        %4147 = vmatpush2.bf16.msra.mxu0 %v4095
        %4148 = vmatprep.subr.bf16.mxu0 0
        %4149 = vmatpush2.bf16.msra.mxu0 %v4094
        %4150 = vmatprep.mubr.bf16.mxu0 %v3952
        %4151 = vmatmul.mubr.bf16.gmra.mxu0 %v3951
        %v4152 = vpop.f32.mrf.mxu0
        %v4153 = vadd.f32 %v4020, %v4152
        %v4154 = vpop.f32.mrf.mxu0
        %v4155 = vpop.f32.mrf.mxu0
        %v4156 = vadd.f32 %v4020, %v4155
        %v4157 = vpop.f32.mrf.mxu0
        %4158 = vmatprep.mubr.bf16.mxu0 %v3954
        %4159 = vmatmul.mubr.bf16.gmra.mxu0 %v3953
        %v4160 = vpop.f32.mrf.mxu0
        %v4161 = vadd.f32 %v4020, %v4160
        %v4162 = vpop.f32.mrf.mxu0
        %v4163 = vpop.f32.mrf.mxu0
        %v4164 = vadd.f32 %v4020, %v4163
        %v4165 = vpop.f32.mrf.mxu0
        %4166 = vmatprep.mubr.bf16.mxu0 %v3956
        %4167 = vmatmul.mubr.bf16.gmra.mxu0 %v3955
        %v4168 = vpop.f32.mrf.mxu0
        %v4169 = vadd.f32 %v4020, %v4168
        %v4170 = vpop.f32.mrf.mxu0
        %v4171 = vpop.f32.mrf.mxu0
        %v4172 = vadd.f32 %v4020, %v4171
        %v4173 = vpop.f32.mrf.mxu0
        %4174 = vmatprep.mubr.bf16.mxu0 %v3958
        %4175 = vmatmul.mubr.bf16.gmra.mxu0 %v3957
        %v4176 = vpop.f32.mrf.mxu0
        %v4177 = vadd.f32 %v4020, %v4176
        %v4178 = vpop.f32.mrf.mxu0
        %v4179 = vpop.f32.mrf.mxu0
        %v4180 = vadd.f32 %v4020, %v4179
        %v4181 = vpop.f32.mrf.mxu0
        %4182 = vmatprep.mubr.bf16.mxu0 %v3960
        %4183 = vmatmul.mubr.bf16.gmra.mxu0 %v3959
        %v4184 = vpop.f32.mrf.mxu0
        %v4185 = vadd.f32 %v4020, %v4184
        %v4186 = vpop.f32.mrf.mxu0
        %v4187 = vpop.f32.mrf.mxu0
        %v4188 = vadd.f32 %v4020, %v4187
        %v4189 = vpop.f32.mrf.mxu0
        %4190 = vmatprep.mubr.bf16.mxu0 %v3962
        %4191 = vmatmul.mubr.bf16.gmra.mxu0 %v3961
        %v4192 = vpop.f32.mrf.mxu0
        %v4193 = vadd.f32 %v4020, %v4192
        %v4194 = vpop.f32.mrf.mxu0
        %v4195 = vpop.f32.mrf.mxu0
        %v4196 = vadd.f32 %v4020, %v4195
        %v4197 = vpop.f32.mrf.mxu0
        %4198 = vmatprep.mubr.bf16.mxu0 %v3964
        %4199 = vmatmul.mubr.bf16.gmra.mxu0 %v3963
        %v4200 = vpop.f32.mrf.mxu0
        %v4201 = vadd.f32 %v4020, %v4200
        %v4202 = vpop.f32.mrf.mxu0
        %v4203 = vpop.f32.mrf.mxu0
        %v4204 = vadd.f32 %v4020, %v4203
        %v4205 = vpop.f32.mrf.mxu0
        %4206 = vmatprep.mubr.bf16.mxu0 %v3966
        %4207 = vmatmul.mubr.bf16.gmra.mxu0 %v3965
        %v4208 = vpop.f32.mrf.mxu0
        %v4209 = vadd.f32 %v4020, %v4208
        %v4210 = vpop.f32.mrf.mxu0
        %v4211 = vpop.f32.mrf.mxu0
        %v4212 = vadd.f32 %v4020, %v4211
        %v4213 = vpop.f32.mrf.mxu0
        %4214 = vmatprep.mubr.bf16.mxu0 %v3968
        %4215 = vmatmul.mubr.bf16.gmra.mxu0 %v3967
        %v4216 = vpop.f32.mrf.mxu0
        %v4217 = vadd.f32 %v4020, %v4216
        %v4218 = vpop.f32.mrf.mxu0
        %v4219 = vpop.f32.mrf.mxu0
        %v4220 = vadd.f32 %v4020, %v4219
        %v4221 = vpop.f32.mrf.mxu0
        %4222 = vmatprep.mubr.bf16.mxu0 %v3970
        %4223 = vmatmul.mubr.bf16.gmra.mxu0 %v3969
        %v4224 = vpop.f32.mrf.mxu0
        %v4225 = vadd.f32 %v4020, %v4224
        %v4226 = vpop.f32.mrf.mxu0
        %v4227 = vpop.f32.mrf.mxu0
        %v4228 = vadd.f32 %v4020, %v4227
        %v4229 = vpop.f32.mrf.mxu0
        %4230 = vmatprep.mubr.bf16.mxu0 %v3972
        %4231 = vmatmul.mubr.bf16.gmra.mxu0 %v3971
        %v4232 = vpop.f32.mrf.mxu0
        %v4233 = vadd.f32 %v4020, %v4232
        %v4234 = vpop.f32.mrf.mxu0
        %v4235 = vpop.f32.mrf.mxu0
        %v4236 = vadd.f32 %v4020, %v4235
        %v4237 = vpop.f32.mrf.mxu0
        %4238 = vmatprep.mubr.bf16.mxu0 %v3974
        %4239 = vmatmul.mubr.bf16.gmra.mxu0 %v3973
        %v4240 = vpop.f32.mrf.mxu0
        %v4241 = vadd.f32 %v4020, %v4240
        %v4242 = vpop.f32.mrf.mxu0
        %v4243 = vpop.f32.mrf.mxu0
        %v4244 = vadd.f32 %v4020, %v4243
        %v4245 = vpop.f32.mrf.mxu0
        %4246 = vmatprep.mubr.bf16.mxu0 %v3976
        %4247 = vmatmul.mubr.bf16.gmra.mxu0 %v3975
        %v4248 = vpop.f32.mrf.mxu0
        %v4249 = vadd.f32 %v4020, %v4248
        %v4250 = vpop.f32.mrf.mxu0
        %v4251 = vpop.f32.mrf.mxu0
        %v4252 = vadd.f32 %v4020, %v4251
        %v4253 = vpop.f32.mrf.mxu0
        %4254 = vmatprep.mubr.bf16.mxu0 %v3978
        %4255 = vmatmul.mubr.bf16.gmra.mxu0 %v3977
        %v4256 = vpop.f32.mrf.mxu0
        %v4257 = vadd.f32 %v4020, %v4256
        %v4258 = vpop.f32.mrf.mxu0
        %v4259 = vpop.f32.mrf.mxu0
        %v4260 = vadd.f32 %v4020, %v4259
        %v4261 = vpop.f32.mrf.mxu0
        %4262 = vmatprep.mubr.bf16.mxu0 %v3980
        %4263 = vmatmul.mubr.bf16.gmra.mxu0 %v3979
        %v4264 = vpop.f32.mrf.mxu0
        %v4265 = vadd.f32 %v4020, %v4264
        %v4266 = vpop.f32.mrf.mxu0
        %v4267 = vpop.f32.mrf.mxu0
        %v4268 = vadd.f32 %v4020, %v4267
        %v4269 = vpop.f32.mrf.mxu0
        %4270 = vmatprep.mubr.bf16.mxu0 %v3982
        %4271 = vmatmul.mubr.bf16.gmra.mxu0 %v3981
        %v4272 = vpop.f32.mrf.mxu0
        %v4273 = vadd.f32 %v4020, %v4272
        %v4274 = vpop.f32.mrf.mxu0
        %v4275 = vpop.f32.mrf.mxu0
        %v4276 = vadd.f32 %v4020, %v4275
        %v4277 = vpop.f32.mrf.mxu0
        %4278 = vdwg.mxu0
        %vm4279 = vcmask 7168
        %4280 = vst.msk [vmem:[%s481] sm:$0xff] %vm4279, %v4153
        %4281 = vst.msk [vmem:[%s481 + $0x8] sm:$0xff] %vm4279, %v4156
        %4282 = vst.msk [vmem:[%s481 + $0x10] sm:$0xff] %vm4279, %v4161
        %4283 = vst.msk [vmem:[%s481 + $0x18] sm:$0xff] %vm4279, %v4164
        %4284 = vst.msk [vmem:[%s481 + $0x20] sm:$0xff] %vm4279, %v4169
        %4285 = vst.msk [vmem:[%s481 + $0x28] sm:$0xff] %vm4279, %v4172
        %4286 = vst.msk [vmem:[%s481 + $0x30] sm:$0xff] %vm4279, %v4177
        %4287 = vst.msk [vmem:[%s481 + $0x38] sm:$0xff] %vm4279, %v4180
        %4288 = vst.msk [vmem:[%s481 + $0x40] sm:$0xff] %vm4279, %v4185
        %4289 = vst.msk [vmem:[%s481 + $0x48] sm:$0xff] %vm4279, %v4188
        %4290 = vst.msk [vmem:[%s481 + $0x50] sm:$0xff] %vm4279, %v4193
        %4291 = vst.msk [vmem:[%s481 + $0x58] sm:$0xff] %vm4279, %v4196
        %4292 = vst.msk [vmem:[%s481 + $0x60] sm:$0xff] %vm4279, %v4201
        %4293 = vst.msk [vmem:[%s481 + $0x68] sm:$0xff] %vm4279, %v4204
        %4294 = vst.msk [vmem:[%s481 + $0x70] sm:$0xff] %vm4279, %v4209
        %4295 = vst.msk [vmem:[%s481 + $0x78] sm:$0xff] %vm4279, %v4212
        %4296 = vst.msk [vmem:[%s481 + $0x80] sm:$0xff] %vm4279, %v4217
        %4297 = vst.msk [vmem:[%s481 + $0x88] sm:$0xff] %vm4279, %v4220
        %4298 = vst.msk [vmem:[%s481 + $0x90] sm:$0xff] %vm4279, %v4225
        %4299 = vst.msk [vmem:[%s481 + $0x98] sm:$0xff] %vm4279, %v4228
        %4300 = vst.msk [vmem:[%s481 + $0xa0] sm:$0xff] %vm4279, %v4233
        %4301 = vst.msk [vmem:[%s481 + $0xa8] sm:$0xff] %vm4279, %v4236
        %4302 = vst.msk [vmem:[%s481 + $0xb0] sm:$0xff] %vm4279, %v4241
        %4303 = vst.msk [vmem:[%s481 + $0xb8] sm:$0xff] %vm4279, %v4244
        %4304 = vst.msk [vmem:[%s481 + $0xc0] sm:$0xff] %vm4279, %v4249
        %4305 = vst.msk [vmem:[%s481 + $0xc8] sm:$0xff] %vm4279, %v4252
        %4306 = vst.msk [vmem:[%s481 + $0xd0] sm:$0xff] %vm4279, %v4257
        %4307 = vst.msk [vmem:[%s481 + $0xd8] sm:$0xff] %vm4279, %v4260
        %4308 = vst.msk [vmem:[%s481 + $0xe0] sm:$0xff] %vm4279, %v4265
        %4309 = vst.msk [vmem:[%s481 + $0xe8] sm:$0xff] %vm4279, %v4268
        %4310 = vst.msk [vmem:[%s481 + $0xf0] sm:$0xff] %vm4279, %v4273
        %4311 = vst.msk [vmem:[%s481 + $0xf8] sm:$0xff] %vm4279, %v4276
        %v4312 = vsel %vm1589, %v4153, -1e+30
        %v4313 = vsel %vm1590, %v4156, -1e+30
        %v4314 = vsel %vm1591, %v4161, -1e+30
        %v4315 = vsel %vm1592, %v4164, -1e+30
        %v4316 = vsel %vm1593, %v4169, -1e+30
        %v4317 = vsel %vm1594, %v4172, -1e+30
        %v4318 = vsel %vm1595, %v4177, -1e+30
        %v4319 = vsel %vm1596, %v4180, -1e+30
        %v4320 = vsel %vm1597, %v4185, -1e+30
        %v4321 = vsel %vm1598, %v4188, -1e+30
        %v4322 = vsel %vm1599, %v4193, -1e+30
        %v4323 = vsel %vm1600, %v4196, -1e+30
        %v4324 = vsel %vm1601, %v4201, -1e+30
        %v4325 = vsel %vm1602, %v4204, -1e+30
        %v4326 = vsel %vm1603, %v4209, -1e+30
        %v4327 = vsel %vm1604, %v4212, -1e+30
        %v4328 = vsel %vm1605, %v4217, -1e+30
        %v4329 = vsel %vm1606, %v4220, -1e+30
        %v4330 = vsel %vm1607, %v4225, -1e+30
        %v4331 = vsel %vm1608, %v4228, -1e+30
        %v4332 = vsel %vm1609, %v4233, -1e+30
        %v4333 = vsel %vm1610, %v4236, -1e+30
        %v4334 = vsel %vm1611, %v4241, -1e+30
        %v4335 = vsel %vm1612, %v4244, -1e+30
        %v4336 = vsel %vm1613, %v4249, -1e+30
        %v4337 = vsel %vm1614, %v4252, -1e+30
        %v4338 = vsel %vm1615, %v4257, -1e+30
        %v4339 = vsel %vm1616, %v4260, -1e+30
        %v4340 = vsel %vm1617, %v4265, -1e+30
        %v4341 = vsel %vm1618, %v4268, -1e+30
        %v4342 = vsel %vm1619, %v4273, -1e+30
        %v4343 = vsel %vm1620, %v4276, -1e+30
        %v4344 = vld [vmem:[%s487] sm:$0x1]
        %v4345 = vsel %vm4279, %v4312, -inf
        %v4346 = vsel %vm4279, %v4313, -inf
        %v4347 = vsel %vm4279, %v4314, -inf
        %v4348 = vsel %vm4279, %v4315, -inf
        %v4349 = vsel %vm4279, %v4316, -inf
        %v4350 = vmax.f32 %v4345, %v4349
        %v4351 = vsel %vm4279, %v4317, -inf
        %v4352 = vmax.f32 %v4346, %v4351
        %v4353 = vsel %vm4279, %v4318, -inf
        %v4354 = vmax.f32 %v4347, %v4353
        %v4355 = vsel %vm4279, %v4319, -inf
        %v4356 = vmax.f32 %v4348, %v4355
        %v4357 = vsel %vm4279, %v4320, -inf
        %v4358 = vmax.f32 %v4350, %v4357
        %v4359 = vsel %vm4279, %v4321, -inf
        %v4360 = vmax.f32 %v4352, %v4359
        %v4361 = vsel %vm4279, %v4322, -inf
        %v4362 = vmax.f32 %v4354, %v4361
        %v4363 = vsel %vm4279, %v4323, -inf
        %v4364 = vmax.f32 %v4356, %v4363
        %v4365 = vsel %vm4279, %v4324, -inf
        %v4366 = vmax.f32 %v4358, %v4365
        %v4367 = vsel %vm4279, %v4325, -inf
        %v4368 = vmax.f32 %v4360, %v4367
        %v4369 = vsel %vm4279, %v4326, -inf
        %v4370 = vmax.f32 %v4362, %v4369
        %v4371 = vsel %vm4279, %v4327, -inf
        %v4372 = vmax.f32 %v4364, %v4371
        %v4373 = vsel %vm4279, %v4328, -inf
        %v4374 = vmax.f32 %v4366, %v4373
        %v4375 = vsel %vm4279, %v4329, -inf
        %v4376 = vmax.f32 %v4368, %v4375
        %v4377 = vsel %vm4279, %v4330, -inf
        %v4378 = vmax.f32 %v4370, %v4377
        %v4379 = vsel %vm4279, %v4331, -inf
        %v4380 = vmax.f32 %v4372, %v4379
        %v4381 = vsel %vm4279, %v4332, -inf
        %v4382 = vmax.f32 %v4374, %v4381
        %v4383 = vsel %vm4279, %v4333, -inf
        %v4384 = vmax.f32 %v4376, %v4383
        %v4385 = vsel %vm4279, %v4334, -inf
        %v4386 = vmax.f32 %v4378, %v4385
        %v4387 = vsel %vm4279, %v4335, -inf
        %v4388 = vmax.f32 %v4380, %v4387
        %v4389 = vsel %vm4279, %v4336, -inf
        %v4390 = vmax.f32 %v4382, %v4389
        %v4391 = vsel %vm4279, %v4337, -inf
        %v4392 = vmax.f32 %v4384, %v4391
        %v4393 = vsel %vm4279, %v4338, -inf
        %v4394 = vmax.f32 %v4386, %v4393
        %v4395 = vsel %vm4279, %v4339, -inf
        %v4396 = vmax.f32 %v4388, %v4395
        %v4397 = vsel %vm4279, %v4340, -inf
        %v4398 = vmax.f32 %v4390, %v4397
        %v4399 = vsel %vm4279, %v4341, -inf
        %v4400 = vmax.f32 %v4392, %v4399
        %v4401 = vsel %vm4279, %v4342, -inf
        %v4402 = vmax.f32 %v4394, %v4401
        %v4403 = vsel %vm4279, %v4343, -inf
        %v4404 = vmax.f32 %v4396, %v4403
        %v4405 = vmax.f32 %v4398, %v4400
        %v4406 = vmax.f32 %v4402, %v4404
        %v4407 = vmax.f32 %v4405, %v4406
        %v4408 = vrot.slane %v4407, 4
        %v4409 = vmax.f32 %v4407, %v4408
        %v4410 = vrot.slane %v4409, 2
        %v4411 = vmax.f32 %v4409, %v4410
        %v4412 = vrot.slane %v4411, 1
        %v4413 = vmax.f32 %v4411, %v4412
        %v4414 = vmax.f32 %v4344, %v4413
        %v4415 = vsub.f32 %v4344, %v4414
        %v4416 = vmul.f32 %v4415, 1.442695
        %v4417 = vpow.pop %v4416
        %v4419 = vlaneseq
        %v4420 = vshrl.u32 %v4419, 7
        %v4421 = vsub.s32 0, %v4420
        %v4422 = vrot.slane %v4414, %v4421
        %v4424 = vsub.f32 %v4312, %v4422
        %v4425 = vsub.f32 %v4313, %v4422
        %v4426 = vsub.f32 %v4314, %v4422
        %v4427 = vsub.f32 %v4315, %v4422
        %v4428 = vsub.f32 %v4316, %v4422
        %v4429 = vsub.f32 %v4317, %v4422
        %v4430 = vsub.f32 %v4318, %v4422
        %v4431 = vsub.f32 %v4319, %v4422
        %v4432 = vsub.f32 %v4320, %v4422
        %v4433 = vsub.f32 %v4321, %v4422
        %v4434 = vsub.f32 %v4322, %v4422
        %v4435 = vsub.f32 %v4323, %v4422
        %v4436 = vsub.f32 %v4324, %v4422
        %v4437 = vsub.f32 %v4325, %v4422
        %v4438 = vsub.f32 %v4326, %v4422
        %v4439 = vsub.f32 %v4327, %v4422
        %v4440 = vsub.f32 %v4328, %v4422
        %v4441 = vsub.f32 %v4329, %v4422
        %v4442 = vsub.f32 %v4330, %v4422
        %v4443 = vsub.f32 %v4331, %v4422
        %v4444 = vsub.f32 %v4332, %v4422
        %v4445 = vsub.f32 %v4333, %v4422
        %v4446 = vsub.f32 %v4334, %v4422
        %v4447 = vsub.f32 %v4335, %v4422
        %v4448 = vsub.f32 %v4336, %v4422
        %v4449 = vsub.f32 %v4337, %v4422
        %v4450 = vsub.f32 %v4338, %v4422
        %v4451 = vsub.f32 %v4339, %v4422
        %v4452 = vsub.f32 %v4340, %v4422
        %v4453 = vsub.f32 %v4341, %v4422
        %v4454 = vsub.f32 %v4342, %v4422
        %v4455 = vsub.f32 %v4343, %v4422
        %v4456 = vmul.f32 %v4424, 1.442695
        %v4457 = vpow.pop %v4456
        %v4458 = vmul.f32 %v4425, 1.442695
        %v4459 = vpow.pop %v4458
        %v4460 = vmul.f32 %v4426, 1.442695
        %v4461 = vpow.pop %v4460
        %v4462 = vmul.f32 %v4427, 1.442695
        %v4463 = vpow.pop %v4462
        %v4464 = vmul.f32 %v4428, 1.442695
        %v4465 = vpow.pop %v4464
        %v4466 = vmul.f32 %v4429, 1.442695
        %v4467 = vpow.pop %v4466
        %v4468 = vmul.f32 %v4430, 1.442695
        %v4469 = vpow.pop %v4468
        %v4470 = vmul.f32 %v4431, 1.442695
        %v4471 = vpow.pop %v4470
        %v4472 = vmul.f32 %v4432, 1.442695
        %v4473 = vpow.pop %v4472
        %v4474 = vmul.f32 %v4433, 1.442695
        %v4475 = vpow.pop %v4474
        %v4476 = vmul.f32 %v4434, 1.442695
        %v4477 = vpow.pop %v4476
        %v4478 = vmul.f32 %v4435, 1.442695
        %v4479 = vpow.pop %v4478
        %v4480 = vmul.f32 %v4436, 1.442695
        %v4481 = vpow.pop %v4480
        %v4482 = vmul.f32 %v4437, 1.442695
        %v4483 = vpow.pop %v4482
        %v4484 = vmul.f32 %v4438, 1.442695
        %v4485 = vpow.pop %v4484
        %v4486 = vmul.f32 %v4439, 1.442695
        %v4487 = vpow.pop %v4486
        %v4488 = vmul.f32 %v4440, 1.442695
        %v4489 = vpow.pop %v4488
        %v4490 = vmul.f32 %v4441, 1.442695
        %v4491 = vpow.pop %v4490
        %v4492 = vmul.f32 %v4442, 1.442695
        %v4493 = vpow.pop %v4492
        %v4494 = vmul.f32 %v4443, 1.442695
        %v4495 = vpow.pop %v4494
        %v4496 = vmul.f32 %v4444, 1.442695
        %v4497 = vpow.pop %v4496
        %v4498 = vmul.f32 %v4445, 1.442695
        %v4499 = vpow.pop %v4498
        %v4500 = vmul.f32 %v4446, 1.442695
        %v4501 = vpow.pop %v4500
        %v4502 = vmul.f32 %v4447, 1.442695
        %v4503 = vpow.pop %v4502
        %v4504 = vmul.f32 %v4448, 1.442695
        %v4505 = vpow.pop %v4504
        %v4506 = vmul.f32 %v4449, 1.442695
        %v4507 = vpow.pop %v4506
        %v4508 = vmul.f32 %v4450, 1.442695
        %v4509 = vpow.pop %v4508
        %v4510 = vmul.f32 %v4451, 1.442695
        %v4511 = vpow.pop %v4510
        %v4512 = vmul.f32 %v4452, 1.442695
        %v4513 = vpow.pop %v4512
        %v4514 = vmul.f32 %v4453, 1.442695
        %v4515 = vpow.pop %v4514
        %v4516 = vmul.f32 %v4454, 1.442695
        %v4517 = vpow.pop %v4516
        %v4518 = vmul.f32 %v4455, 1.442695
        %v4519 = vpow.pop %v4518
        %v4520 = vld [vmem:[%s490] sm:$0x1]
        %v4521 = vmul.f32 %v4417, %v4520
        %v4522 = vsel %vm4279, %v4457, 0.0
        %v4523 = vsel %vm4279, %v4459, 0.0
        %v4524 = vadd.f32 %v4522, %v4523
        %v4525 = vsel %vm4279, %v4461, 0.0
        %v4526 = vadd.f32 %v4524, %v4525
        %v4527 = vsel %vm4279, %v4463, 0.0
        %v4528 = vadd.f32 %v4526, %v4527
        %v4529 = vsel %vm4279, %v4465, 0.0
        %v4530 = vadd.f32 %v4528, %v4529
        %v4531 = vsel %vm4279, %v4467, 0.0
        %v4532 = vadd.f32 %v4530, %v4531
        %v4533 = vsel %vm4279, %v4469, 0.0
        %v4534 = vadd.f32 %v4532, %v4533
        %v4535 = vsel %vm4279, %v4471, 0.0
        %v4536 = vadd.f32 %v4534, %v4535
        %v4537 = vsel %vm4279, %v4473, 0.0
        %v4538 = vadd.f32 %v4536, %v4537
        %v4539 = vsel %vm4279, %v4475, 0.0
        %v4540 = vadd.f32 %v4538, %v4539
        %v4541 = vsel %vm4279, %v4477, 0.0
        %v4542 = vadd.f32 %v4540, %v4541
        %v4543 = vsel %vm4279, %v4479, 0.0
        %v4544 = vadd.f32 %v4542, %v4543
        %v4545 = vsel %vm4279, %v4481, 0.0
        %v4546 = vadd.f32 %v4544, %v4545
        %v4547 = vsel %vm4279, %v4483, 0.0
        %v4548 = vadd.f32 %v4546, %v4547
        %v4549 = vsel %vm4279, %v4485, 0.0
        %v4550 = vadd.f32 %v4548, %v4549
        %v4551 = vsel %vm4279, %v4487, 0.0
        %v4552 = vadd.f32 %v4550, %v4551
        %v4553 = vsel %vm4279, %v4489, 0.0
        %v4554 = vadd.f32 %v4552, %v4553
        %v4555 = vsel %vm4279, %v4491, 0.0
        %v4556 = vadd.f32 %v4554, %v4555
        %v4557 = vsel %vm4279, %v4493, 0.0
        %v4558 = vadd.f32 %v4556, %v4557
        %v4559 = vsel %vm4279, %v4495, 0.0
        %v4560 = vadd.f32 %v4558, %v4559
        %v4561 = vsel %vm4279, %v4497, 0.0
        %v4562 = vadd.f32 %v4560, %v4561
        %v4563 = vsel %vm4279, %v4499, 0.0
        %v4564 = vadd.f32 %v4562, %v4563
        %v4565 = vsel %vm4279, %v4501, 0.0
        %v4566 = vadd.f32 %v4564, %v4565
        %v4567 = vsel %vm4279, %v4503, 0.0
        %v4568 = vadd.f32 %v4566, %v4567
        %v4569 = vsel %vm4279, %v4505, 0.0
        %v4570 = vadd.f32 %v4568, %v4569
        %v4571 = vsel %vm4279, %v4507, 0.0
        %v4572 = vadd.f32 %v4570, %v4571
        %v4573 = vsel %vm4279, %v4509, 0.0
        %v4574 = vadd.f32 %v4572, %v4573
        %v4575 = vsel %vm4279, %v4511, 0.0
        %v4576 = vadd.f32 %v4574, %v4575
        %v4577 = vsel %vm4279, %v4513, 0.0
        %v4578 = vadd.f32 %v4576, %v4577
        %v4579 = vsel %vm4279, %v4515, 0.0
        %v4580 = vadd.f32 %v4578, %v4579
        %v4581 = vsel %vm4279, %v4517, 0.0
        %v4582 = vadd.f32 %v4580, %v4581
        %v4583 = vsel %vm4279, %v4519, 0.0
        %v4584 = vadd.f32 %v4582, %v4583
        %v4585 = vrot.slane %v4584, 4
        %v4586 = vadd.f32 %v4584, %v4585
        %v4587 = vrot.slane %v4586, 2
        %v4588 = vadd.f32 %v4586, %v4587
        %v4589 = vrot.slane %v4588, 1
        %v4590 = vadd.f32 %v4588, %v4589
        %v4591 = vadd.f32 %v4521, %v4590
        %vm4592 = vcmask 0
        %4593 = vst.msk [vmem:[%s490] sm:$0x1] %vm4592, %v4591
        %v4594 = vld [vmem:[%s464] sm:$0xf]
        %4596 = vset.pattern.permute.xlu0 0
        %4597 = vperm.xlu0 %4596, %v4417
        %v4598 = vpop.permute.xlu0 %4597
        %v4600 = vlaneseq
        %v4601 = vshrl.u32 %v4600, 7
        %v4602 = vsub.s32 0, %v4601
        %v4603 = vrot.slane %v4598, %v4602
        %v4604 = vmul.f32 %v4603, %v4594
        %4605 = vxpose.xlu0.b32.start [1/16] %v4457, 128
        %4606 = vxpose.xlu0.b32.cont [2/16] %v4459, 128
        %4607 = vxpose.xlu0.b32.cont [3/16] %v4461, 128
        %4608 = vxpose.xlu0.b32.cont [4/16] %v4463, 128
        %4609 = vxpose.xlu0.b32.cont [5/16] %v4465, 128
        %4610 = vxpose.xlu0.b32.cont [6/16] %v4467, 128
        %4611 = vxpose.xlu0.b32.cont [7/16] %v4469, 128
        %4612 = vxpose.xlu0.b32.cont [8/16] %v4471, 128
        %4613 = vxpose.xlu0.b32.cont [9/16] %v4473, 128
        %4614 = vxpose.xlu0.b32.cont [10/16] %v4475, 128
        %4615 = vxpose.xlu0.b32.cont [11/16] %v4477, 128
        %4616 = vxpose.xlu0.b32.cont [12/16] %v4479, 128
        %4617 = vxpose.xlu0.b32.cont [13/16] %v4481, 128
        %4618 = vxpose.xlu0.b32.cont [14/16] %v4483, 128
        %4619 = vxpose.xlu0.b32.cont [15/16] %v4485, 128
        %4620 = vxpose.xlu0.b32.end [16/16] %v4487, 128
        %v4621 = vpop.trf.xlu0
        %v4622 = vpop.trf.xlu0
        %v4623 = vpop.trf.xlu0
        %v4624 = vpop.trf.xlu0
        %v4625 = vpop.trf.xlu0
        %v4626 = vpop.trf.xlu0
        %v4627 = vpop.trf.xlu0
        %v4628 = vpop.trf.xlu0
        %v4629 = vpop.trf.xlu0
        %v4630 = vpop.trf.xlu0
        %v4631 = vpop.trf.xlu0
        %v4632 = vpop.trf.xlu0
        %v4633 = vpop.trf.xlu0
        %v4634 = vpop.trf.xlu0
        %v4635 = vpop.trf.xlu0
        %v4636 = vpop.trf.xlu0
        %4637 = vxpose.xlu0.b32.start [1/16] %v4489, 128
        %4638 = vxpose.xlu0.b32.cont [2/16] %v4491, 128
        %4639 = vxpose.xlu0.b32.cont [3/16] %v4493, 128
        %4640 = vxpose.xlu0.b32.cont [4/16] %v4495, 128
        %4641 = vxpose.xlu0.b32.cont [5/16] %v4497, 128
        %4642 = vxpose.xlu0.b32.cont [6/16] %v4499, 128
        %4643 = vxpose.xlu0.b32.cont [7/16] %v4501, 128
        %4644 = vxpose.xlu0.b32.cont [8/16] %v4503, 128
        %4645 = vxpose.xlu0.b32.cont [9/16] %v4505, 128
        %4646 = vxpose.xlu0.b32.cont [10/16] %v4507, 128
        %4647 = vxpose.xlu0.b32.cont [11/16] %v4509, 128
        %4648 = vxpose.xlu0.b32.cont [12/16] %v4511, 128
        %4649 = vxpose.xlu0.b32.cont [13/16] %v4513, 128
        %4650 = vxpose.xlu0.b32.cont [14/16] %v4515, 128
        %4651 = vxpose.xlu0.b32.cont [15/16] %v4517, 128
        %4652 = vxpose.xlu0.b32.end [16/16] %v4519, 128
        %v4653 = vpop.trf.xlu0
        %v4654 = vpop.trf.xlu0
        %v4655 = vpop.trf.xlu0
        %v4656 = vpop.trf.xlu0
        %v4657 = vpop.trf.xlu0
        %v4658 = vpop.trf.xlu0
        %v4659 = vpop.trf.xlu0
        %v4660 = vpop.trf.xlu0
        %v4661 = vpop.trf.xlu0
        %v4662 = vpop.trf.xlu0
        %v4663 = vpop.trf.xlu0
        %v4664 = vpop.trf.xlu0
        %v4665 = vpop.trf.xlu0
        %v4666 = vpop.trf.xlu0
        %v4667 = vpop.trf.xlu0
        %v4668 = vpop.trf.xlu0
        %4669 = vmatprep.subr.mxu0 %v1746
        %4670 = vmatpush1.msra.mxu0 %v1745
        %4671 = vmatprep.subr.mxu0 %v1742
        %4672 = vmatpush1.msra.mxu0 %v1741
        %4673 = vmatprep.subr.mxu0 %v1738
        %4674 = vmatpush1.msra.mxu0 %v1737
        %4675 = vmatprep.subr.mxu0 %v1734
        %4676 = vmatpush1.msra.mxu0 %v1733
        %4677 = vmatprep.subr.mxu0 %v1730
        %4678 = vmatpush1.msra.mxu0 %v1729
        %4679 = vmatprep.subr.mxu0 %v1726
        %4680 = vmatpush1.msra.mxu0 %v1725
        %4681 = vmatprep.subr.mxu0 %v1722
        %4682 = vmatpush1.msra.mxu0 %v1721
        %4683 = vmatprep.subr.mxu0 %v1718
        %4684 = vmatpush1.msra.mxu0 %v1717
        %4685 = vmatprep.subr.mxu0 %v1714
        %4686 = vmatpush1.msra.mxu0 %v1713
        %4687 = vmatprep.subr.mxu0 %v1710
        %4688 = vmatpush1.msra.mxu0 %v1709
        %4689 = vmatprep.subr.mxu0 %v1706
        %4690 = vmatpush1.msra.mxu0 %v1705
        %4691 = vmatprep.subr.mxu0 %v1702
        %4692 = vmatpush1.msra.mxu0 %v1701
        %4693 = vmatprep.subr.mxu0 %v1698
        %4694 = vmatpush1.msra.mxu0 %v1697
        %4695 = vmatprep.subr.mxu0 %v1694
        %4696 = vmatpush1.msra.mxu0 %v1693
        %4697 = vmatprep.subr.mxu0 %v1690
        %4698 = vmatpush1.msra.mxu0 %v1689
        %4699 = vmatprep.subr.mxu0 %v1686
        %4700 = vmatpush1.msra.mxu0 %v1685
        %4701 = vmatprep.subr.mxu0 %v1810
        %4702 = vmatpush2.msra.mxu0 %v1809
        %4703 = vmatprep.subr.mxu0 %v1806
        %4704 = vmatpush2.msra.mxu0 %v1805
        %4705 = vmatprep.subr.mxu0 %v1802
        %4706 = vmatpush2.msra.mxu0 %v1801
        %4707 = vmatprep.subr.mxu0 %v1798
        %4708 = vmatpush2.msra.mxu0 %v1797
        %4709 = vmatprep.subr.mxu0 %v1794
        %4710 = vmatpush2.msra.mxu0 %v1793
        %4711 = vmatprep.subr.mxu0 %v1790
        %4712 = vmatpush2.msra.mxu0 %v1789
        %4713 = vmatprep.subr.mxu0 %v1786
        %4714 = vmatpush2.msra.mxu0 %v1785
        %4715 = vmatprep.subr.mxu0 %v1782
        %4716 = vmatpush2.msra.mxu0 %v1781
        %4717 = vmatprep.subr.mxu0 %v1778
        %4718 = vmatpush2.msra.mxu0 %v1777
        %4719 = vmatprep.subr.mxu0 %v1774
        %4720 = vmatpush2.msra.mxu0 %v1773
        %4721 = vmatprep.subr.mxu0 %v1770
        %4722 = vmatpush2.msra.mxu0 %v1769
        %4723 = vmatprep.subr.mxu0 %v1766
        %4724 = vmatpush2.msra.mxu0 %v1765
        %4725 = vmatprep.subr.mxu0 %v1762
        %4726 = vmatpush2.msra.mxu0 %v1761
        %4727 = vmatprep.subr.mxu0 %v1758
        %4728 = vmatpush2.msra.mxu0 %v1757
        %4729 = vmatprep.subr.mxu0 %v1754
        %4730 = vmatpush2.msra.mxu0 %v1753
        %4731 = vmatprep.subr.mxu0 %v1750
        %4732 = vmatpush2.msra.mxu0 %v1749
        %4733 = vmatprep.mubr.f32.mxu0 %v4653
        %4734 = vmatmul.mubr.f32.gmra.mxu0 %v4621
        %v4735 = vpop.f32.mrf.mxu0
        %v4736 = vadd.f32 0.0, %v4735
        %v4737 = vpop.f32.mrf.mxu0
        %v4738 = vadd.f32 0.0, %v4737
        %4739 = vdwg.mxu0
        %4740 = vmatprep.subr.mxu0 %v1748
        %4741 = vmatpush1.msra.mxu0 %v1747
        %4742 = vmatprep.subr.mxu0 %v1744
        %4743 = vmatpush1.msra.mxu0 %v1743
        %4744 = vmatprep.subr.mxu0 %v1740
        %4745 = vmatpush1.msra.mxu0 %v1739
        %4746 = vmatprep.subr.mxu0 %v1736
        %4747 = vmatpush1.msra.mxu0 %v1735
        %4748 = vmatprep.subr.mxu0 %v1732
        %4749 = vmatpush1.msra.mxu0 %v1731
        %4750 = vmatprep.subr.mxu0 %v1728
        %4751 = vmatpush1.msra.mxu0 %v1727
        %4752 = vmatprep.subr.mxu0 %v1724
        %4753 = vmatpush1.msra.mxu0 %v1723
        %4754 = vmatprep.subr.mxu0 %v1720
        %4755 = vmatpush1.msra.mxu0 %v1719
        %4756 = vmatprep.subr.mxu0 %v1716
        %4757 = vmatpush1.msra.mxu0 %v1715
        %4758 = vmatprep.subr.mxu0 %v1712
        %4759 = vmatpush1.msra.mxu0 %v1711
        %4760 = vmatprep.subr.mxu0 %v1708
        %4761 = vmatpush1.msra.mxu0 %v1707
        %4762 = vmatprep.subr.mxu0 %v1704
        %4763 = vmatpush1.msra.mxu0 %v1703
        %4764 = vmatprep.subr.mxu0 %v1700
        %4765 = vmatpush1.msra.mxu0 %v1699
        %4766 = vmatprep.subr.mxu0 %v1696
        %4767 = vmatpush1.msra.mxu0 %v1695
        %4768 = vmatprep.subr.mxu0 %v1692
        %4769 = vmatpush1.msra.mxu0 %v1691
        %4770 = vmatprep.subr.mxu0 %v1688
        %4771 = vmatpush1.msra.mxu0 %v1687
        %4772 = vmatprep.subr.mxu0 %v1812
        %4773 = vmatpush2.msra.mxu0 %v1811
        %4774 = vmatprep.subr.mxu0 %v1808
        %4775 = vmatpush2.msra.mxu0 %v1807
        %4776 = vmatprep.subr.mxu0 %v1804
        %4777 = vmatpush2.msra.mxu0 %v1803
        %4778 = vmatprep.subr.mxu0 %v1800
        %4779 = vmatpush2.msra.mxu0 %v1799
        %4780 = vmatprep.subr.mxu0 %v1796
        %4781 = vmatpush2.msra.mxu0 %v1795
        %4782 = vmatprep.subr.mxu0 %v1792
        %4783 = vmatpush2.msra.mxu0 %v1791
        %4784 = vmatprep.subr.mxu0 %v1788
        %4785 = vmatpush2.msra.mxu0 %v1787
        %4786 = vmatprep.subr.mxu0 %v1784
        %4787 = vmatpush2.msra.mxu0 %v1783
        %4788 = vmatprep.subr.mxu0 %v1780
        %4789 = vmatpush2.msra.mxu0 %v1779
        %4790 = vmatprep.subr.mxu0 %v1776
        %4791 = vmatpush2.msra.mxu0 %v1775
        %4792 = vmatprep.subr.mxu0 %v1772
        %4793 = vmatpush2.msra.mxu0 %v1771
        %4794 = vmatprep.subr.mxu0 %v1768
        %4795 = vmatpush2.msra.mxu0 %v1767
        %4796 = vmatprep.subr.mxu0 %v1764
        %4797 = vmatpush2.msra.mxu0 %v1763
        %4798 = vmatprep.subr.mxu0 %v1760
        %4799 = vmatpush2.msra.mxu0 %v1759
        %4800 = vmatprep.subr.mxu0 %v1756
        %4801 = vmatpush2.msra.mxu0 %v1755
        %4802 = vmatprep.subr.mxu0 %v1752
        %4803 = vmatpush2.msra.mxu0 %v1751
        %4804 = vmatprep.mubr.f32.mxu0 %v4653
        %4805 = vmatmul.mubr.f32.gmra.mxu0 %v4621
        %v4806 = vpop.f32.mrf.mxu0
        %v4807 = vadd.f32 0.0, %v4806
        %v4808 = vpop.f32.mrf.mxu0
        %v4809 = vadd.f32 0.0, %v4808
        %4810 = vdwg.mxu0
        %v4815 = vcombine.low %v4736, %v4738
        %v4816 = vcombine.low %v4807, %v4809
        %v4818 = vunpack.c.l.s4 1966171168
        %v4819 = vunpack.c.0.s8 %v4818
        %v4820 = vlaneseq
        %v4821 = vshrl.u32 %v4820, 7
        %v4822 = vsub.s32 %v4819, %v4821
        %v4823 = vrot.slane %v4815, %v4822
        %v4825 = vunpack.c.l.s4 1966171168
        %v4826 = vunpack.c.0.s8 %v4825
        %v4827 = vlaneseq
        %v4828 = vshrl.u32 %v4827, 7
        %v4829 = vsub.s32 %v4826, %v4828
        %v4830 = vrot.slane %v4816, %v4829
        %v4831 = vcombine.low %v4823, %v4830
        %v4833 = vunpack.c.l.s4 1966171168
        %v4834 = vunpack.c.0.s8 %v4833
        %v4835 = vlaneseq
        %v4836 = vshrl.u32 %v4835, 7
        %v4837 = vsub.s32 %v4834, %v4836
        %v4838 = vrot.slane %v4831, %v4837
        %v4840 = vadd.f32 %v4604, %v4838
        %v4841 = vlaneseq
        %vm4842 = vcmp.ge.s32.totalorder %v4841, 0
        %vm4843 = vcmp.lt.s32.totalorder %v4841, 512
        %vm4844 = vmand %vm4842, %vm4843
        %4845 = vst.msk [vmem:[%s464] sm:$0xf] %vm4844, %v4840
        %4846 = vst.msk [vmem:[%s487] sm:$0x1] %vm4592, %v4414
        %s4847 = smul.u32 %s35, 2
        %s4848 = sadd.s32 %s4847, %s36
        %s4849 = smul.u32 32, %s4848
        %p4850 = scmp.lt.s32.totalorder %s4849, 127
        %s4851 = scalar_select %p4850, %s4849, 127
        %s4852 = smul.addr %s4851, 8
        %s4853 = scalar_lea.vmem %s7, %s4852
        %p4854 = scmp.lt.s32.totalorder %s35, 1
        %s4855 = scalar_select %p4854, %s35, 1
        %s4856 = scalar_lea.vmem %s8, %s4855
        %p4857 = scmp.lt.s32.totalorder %s35, 1
        %s4858 = scalar_select %p4857, %s35, 1
        %s4859 = scalar_lea.vmem %s9, %s4858
        %s4860 = sand.u32 %s293, 1
        %s4861 = scalar_lea.sflag [#allocation5], %s4860
        %s4862 = sand.u32 %s293, 1
        %s4863 = smul.addr %s4862, 4
        %s4864 = scalar_lea.vmem [#allocation9], %s4863
        // Predicated region
        $region65: #{tpu_custom_call.1} parent=47 // pred_check
          %p4865 = pneg %p225
        $region66: #{tpu_custom_call.1} parent=47 // pred_check_branch
          %4867 = sbr.rel (%p4865) target = $region68
        $region67: #{tpu_custom_call.1} parent=47 // pred_region
          %s4868 = smul.u32 %s35, 2
          %s4869 = sadd.s32 %s4868, %s36
          %s4870 = smul.u32 32, %s4869
        $region68: #{tpu_custom_call.1} parent=47 // pred_fallthru
          _
        // Predicated region
        $region69: #{tpu_custom_call.1} parent=47 // pred_check
          %p4871 = pneg %p251
        $region70: #{tpu_custom_call.1} parent=47 // pred_check_branch
          %4873 = sbr.rel (%p4871) target = $region72
        $region71: #{tpu_custom_call.1} parent=47 // pred_region
          _
        $region72: #{tpu_custom_call.1} parent=47 // pred_fallthru
          _
        // Predicated region
        $region73: #{tpu_custom_call.1} parent=47 // pred_check
          %p4874 = pneg %p277
        $region74: #{tpu_custom_call.1} parent=47 // pred_check_branch
          %4876 = sbr.rel (%p4874) target = $region76
        $region75: #{tpu_custom_call.1} parent=47 // pred_region
          _
        $region76: #{tpu_custom_call.1} parent=47 // pred_fallthru
          _
        // Predicated region
        $region77: #{tpu_custom_call.1} parent=47 // pred_check
          %p4877 = pneg %p303
        $region78: #{tpu_custom_call.1} parent=47 // pred_check_branch
          %4879 = sbr.rel (%p4877) target = $region80
        $region79: #{tpu_custom_call.1} parent=47 // pred_region
          %s4881 = ssub.s32 64, 64
          %4882 = vsyncadd %s4861, %s4881
          %s4883 = smul.addr %s35, 4
          %s4884 = smul.addr %s4883, 16
          %s4885 = scalar_lea.hbm %s10, %s4884
          %s4887 = sshll.u32 %s4864, 4
          %s4888 = int_to_ptr.vmem [resolvable:$true] %s4887
          %4890 = dma.vmem_to_hbm [thread:$0]  %s4888, 64, %s4885, %s4861
        $region80: #{tpu_custom_call.1} parent=47 // pred_fallthru
          _
      $region48: #{tpu_custom_call.1} parent=5 // pred_fallthru
        _
      %p4891 = scmp.le.s32.totalorder 2, %s26
      // Predicated region
      $region81: #{tpu_custom_call.1} parent=5 // pred_check
        %p4892 = pneg %p4891
      $region82: #{tpu_custom_call.1} parent=5 // pred_check_branch
        %4894 = sbr.rel (%p4892) target = $region84
      $region83: #{tpu_custom_call.1} parent=5 // pred_region
        %s4895 = ssub.s32 %s26, 2
        // Predicated region
        $region85: #{tpu_custom_call.1} parent=83 // pred_check
          %p4896 = pneg %p231
        $region86: #{tpu_custom_call.1} parent=83 // pred_check_branch
          %4898 = sbr.rel (%p4896) target = $region88
        $region87: #{tpu_custom_call.1} parent=83 // pred_region
          %s4899 = smul.u32 %s37, 2
          %s4900 = sadd.s32 %s4899, %s38
          %s4901 = smul.u32 32, %s4900
          %p4902 = scmp.lt.s32.totalorder %s4901, 127
          %s4903 = scalar_select %p4902, %s4901, 127
          %s4904 = smul.addr %s4903, 8
          %s4905 = scalar_lea.vmem %s7, %s4904
        $region88: #{tpu_custom_call.1} parent=83 // pred_fallthru
          _
        // Predicated region
        $region89: #{tpu_custom_call.1} parent=83 // pred_check
          %p4906 = pneg %p257
        $region90: #{tpu_custom_call.1} parent=83 // pred_check_branch
          %4908 = sbr.rel (%p4906) target = $region92
        $region91: #{tpu_custom_call.1} parent=83 // pred_region
          %p4909 = scmp.lt.s32.totalorder %s37, 1
          %s4910 = scalar_select %p4909, %s37, 1
          %s4911 = scalar_lea.vmem %s8, %s4910
        $region92: #{tpu_custom_call.1} parent=83 // pred_fallthru
          _
        // Predicated region
        $region93: #{tpu_custom_call.1} parent=83 // pred_check
          %p4912 = pneg %p283
        $region94: #{tpu_custom_call.1} parent=83 // pred_check_branch
          %4914 = sbr.rel (%p4912) target = $region96
        $region95: #{tpu_custom_call.1} parent=83 // pred_region
          %p4915 = scmp.lt.s32.totalorder %s37, 1
          %s4916 = scalar_select %p4915, %s37, 1
          %s4917 = scalar_lea.vmem %s9, %s4916
        $region96: #{tpu_custom_call.1} parent=83 // pred_fallthru
          _
        // Predicated region
        $region97: #{tpu_custom_call.1} parent=83 // pred_check
          %p4918 = pneg %p309
        $region98: #{tpu_custom_call.1} parent=83 // pred_check_branch
          %4920 = sbr.rel (%p4918) target = $region100
        $region99: #{tpu_custom_call.1} parent=83 // pred_region
          %s4921 = sand.u32 %s294, 1
          %s4922 = scalar_lea.sflag [#allocation5], %s4921
          %s4923 = sand.u32 %s294, 1
          %s4924 = smul.addr %s4923, 4
          %s4925 = scalar_lea.vmem [#allocation9], %s4924
          %4926 = dma.done %s4922, 64
        $region100: #{tpu_custom_call.1} parent=83 // pred_fallthru
          _
      $region84: #{tpu_custom_call.1} parent=5 // pred_fallthru
        _
    $region6: #{tpu_custom_call.1} parent=1 // loop_footer
      %s30 = sadd.s32 1, %s26
    $region7: #{tpu_custom_call.1} parent=1 // loop_footer_branch
      %25 = sbr.rel target = $region3
    $region8: #{tpu_custom_call.1} parent=1 // loop_exit
      _
    %4927 = vsyncpa [#allocation4], 1
    %s4928 = scalar_lea.sflag [#allocation4], 1
    %4929 = vsyncpa %s4928, 1
    %4930 = vsyncpa [#allocation7], 1
    %4931 = vsyncpa [#allocation5], 1
    %s4932 = scalar_lea.sflag [#allocation5], 1
    %4933 = vsyncpa %s4932, 1

// kernel: tpu_custom_call.1
$region0: #{tpu_custom_call.1}
  #allocation0 [shape = 'u32[]', space=smem, size = 0x4, offset = 0x4, fixed_abs, tag = 'smem constant byte address 0x4 - core index']
  #allocation1 [shape = 'u32[144,128]{1,0:T(1,128)}', space=vmem, size = 0x12000, scoped, tag = 'internal scratch']
  #allocation2 [shape = 'f32[1,1]{1,0:T(1,128)S(1)}', space=vmem, size = 0x200, scoped, tag = 'scoped memory for tpu_custom_call.1']
  %s0 = inlined_call_operand.hbm [shape: f32[700,256], index: 0, kind: input, shape index: {}]
  %s1 = inlined_call_operand.hbm [shape: bf16[256,512], index: 1, kind: input, shape index: {}]
  %s2 = inlined_call_operand.vmem [shape: f32[1,512], index: 2, kind: input, shape index: {}]
  %s3 = inlined_call_operand.hbm [shape: bf16[512,512], index: 3, kind: input, shape index: {}]
  %s4 = inlined_call_operand.vmem [shape: f32[1,512], index: 4, kind: input, shape index: {}]
  %s5 = inlined_call_operand.vmem [shape: bf16[256,1], index: 5, kind: input, shape index: {}]
  %s6 = inlined_call_operand.<no memory space> [shape: f32[1,1], index: 6, kind: input, shape index: {}]
  %s7 = inlined_call_operand.vmem [shape: f32[1024,1], index: 7, kind: output, shape index: {0}]
  %s8 = inlined_call_operand.vmem [shape: f32[2,1,1], index: 8, kind: output, shape index: {1}]
  %s9 = inlined_call_operand.vmem [shape: f32[2,1,1], index: 9, kind: output, shape index: {2}]
  %s10 = inlined_call_operand.hbm [shape: f32[2,1,512], index: 10, kind: output, shape index: {3}]
  %11 = xla_tuple %s7, %s8, %s9, %s10
  %s12 = sld [smem:[#allocation0]]
  $region101: #{tpu_custom_call.1} parent=0
    _
  %s14 = ssub.s32 1, %s12
  %s15 = scalar_select 0, %s14, %s12
  %v16 = vstv %s6
  %17 = vst [vmem:[#allocation2] sm:$0x1] %v16
  $region1: #{tpu_custom_call.1} parent=0
    #allocation3 [shape = 'u8[524288]{0}', space=vmem, size = 0x80000, scoped, tag = 'input window, operand 0']
    #allocation4 [shape = 's32[2]{0}', space=sflag, size = 0x8, scoped, tag = 'scoped memory for tpu_custom_call.1']
    #allocation5 [shape = 's32[2]{0}', space=sflag, size = 0x8, scoped, tag = 'scoped memory for tpu_custom_call.1']
    #allocation6 [shape = 'u8[262144]{0}', space=vmem, size = 0x40000, scoped, tag = 'input window, operand 1, single buffered']
    #allocation7 [shape = 's32[1]{0}', space=sflag, size = 0x4, scoped, tag = 'scoped memory for tpu_custom_call.1']
    #allocation8 [shape = 'u8[524288]{0}', space=vmem, size = 0x80000, scoped, tag = 'input window, operand 3, single buffered']
    #allocation9 [shape = 'u8[4096]{0}', space=vmem, size = 0x1000, scoped, tag = 'output window, operand 3']
    %18 = vsyncpa [#allocation4], 0
    %s19 = scalar_lea.sflag [#allocation4], 1
    %20 = vsyncpa %s19, 0
    %21 = vsyncpa [#allocation7], 0
    %22 = vsyncpa [#allocation5], 0
    %s23 = scalar_lea.sflag [#allocation5], 1
    %24 = vsyncpa %s23, 0
    loop: start=0, step=1, limit=6
    $region2: #{tpu_custom_call.1} parent=1 // loop_pre_header
      _
    $region3: #{tpu_custom_call.1} parent=1 // loop_header
      %s26 = sphi 0, %s30
      %p27 = scmp.ge.s32.totalorder %s26, 6
      %s33 = sphi 0, %s45
      %s34 = sphi 0, %s41
      %s35 = sphi 0, %s33
      %s36 = sphi 0, %s34
      %s37 = sphi 0, %s35
      %s38 = sphi 0, %s36
      %s56 = sphi 0, %s58
      %s59 = sphi 0, %s56
      %s60 = sphi 0, %s59
      %s76 = sphi 0, %s60
      %s80 = sphi 0, %s80
      %s82 = sphi 0, %s80
      %s83 = sphi 0, %s82
      %s97 = sphi 0, %s83
      %s101 = sphi 0, %s101
      %s103 = sphi 0, %s101
      %s104 = sphi 0, %s103
      %s118 = sphi 0, %s104
      %s122 = sphi 0, %s122
      %s124 = sphi 0, %s122
      %s125 = sphi 0, %s124
      %s139 = sphi 0, %s125
      %s143 = sphi 0, %s143
      %s145 = sphi 0, %s143
      %s146 = sphi 0, %s145
      %s160 = sphi 0, %s146
      %s164 = sphi 0, %s164
      %s166 = sphi 0, %s164
      %s167 = sphi 0, %s166
      %s181 = sphi 0, %s167
      %s185 = sphi 0, %s185
      %s187 = sphi 0, %s185
      %s188 = sphi 0, %s187
      %s202 = sphi 0, %s188
      %s212 = sphi 0, %s214
      %s215 = sphi 0, %s212
      %s216 = sphi 0, %s215
      %s232 = sphi 0, %s216
      %s238 = sphi 0, %s240
      %s241 = sphi 0, %s238
      %s242 = sphi 0, %s241
      %s258 = sphi 0, %s242
      %s264 = sphi 0, %s266
      %s267 = sphi 0, %s264
      %s268 = sphi 0, %s267
      %s284 = sphi 0, %s268
      %s290 = sphi 0, %s292
      %s293 = sphi 0, %s290
      %s294 = sphi 0, %s293
      %s310 = sphi 0, %s294
    $region4: #{tpu_custom_call.1} parent=1 // loop_header_branch
      %29 = sbr.rel (%p27) target = $region8
    $region5: #{tpu_custom_call.1} parent=1 // loop_body
      %s31 = ssub.s32 %s26, 1
      %s32 = ssub.s32 %s26, 2
      %s39 = sadd.s32 1, %s34
      %p40 = scmp.ge.s32.totalorder %s39, 2
      %s41 = scalar_select %p40, 0, %s39
      %s42 = sadd.s32 1, %s33
      %s43 = scalar_select %p40, %s42, %s33
      %p44 = scmp.ge.s32.totalorder %s43, 2
      %s45 = scalar_select %p44, 0, %s43
      %s46 = smul.u32 %s33, 2
      %s47 = sadd.s32 %s46, %s34
      %p48 = scmp.lt.s32.totalorder %s47, 2
      %s49 = scalar_select %p48, %s47, 2
      %s50 = smul.u32 %s45, 2
      %s51 = sadd.s32 %s50, %s41
      %p52 = scmp.lt.s32.totalorder %s51, 2
      %s53 = scalar_select %p52, %s51, 2
      %s54 = ssub.s32 %s49, %s53
      %p55 = scmp.eq.s32.totalorder %s54, 0
      %s57 = sadd.s32 %s56, 1
      %s58 = scalar_select %p55, %s56, %s57
      %p61 = pneg %p55
      %p62 = scmp.eq.s32.totalorder %s26, 3
      %p63 = por %p61, %p62
      %p64 = scmp.ne.s32.totalorder %s56, %s59
      %p65 = scmp.eq.s32.totalorder %s26, 0
      %p66 = por %p64, %p65
      %p67 = scmp.ne.s32.totalorder %s56, %s59
      %p68 = scmp.eq.s32.totalorder %s31, 3
      %p69 = por %p67, %p68
      %p70 = scmp.ne.s32.totalorder %s59, %s60
      %p71 = scmp.eq.s32.totalorder %s31, 0
      %p72 = por %p70, %p71
      %p73 = scmp.ne.s32.totalorder %s59, %s60
      %p74 = scmp.eq.s32.totalorder %s32, 3
      %p75 = por %p73, %p74
      %p77 = scmp.ne.s32.totalorder %s60, %s76
      %p78 = scmp.eq.s32.totalorder %s32, 0
      %p79 = por %p77, %p78
      %s81 = sadd.s32 %s80, 1
      %p84 = scmp.eq.s32.totalorder %s26, 3
      %p85 = scmp.ne.s32.totalorder %s80, %s82
      %p86 = scmp.eq.s32.totalorder %s26, 0
      %p87 = por %p85, %p86
      %p88 = scmp.ne.s32.totalorder %s80, %s82
      %p89 = scmp.eq.s32.totalorder %s31, 3
      %p90 = por %p88, %p89
      %p91 = scmp.ne.s32.totalorder %s82, %s83
      %p92 = scmp.eq.s32.totalorder %s31, 0
      %p93 = por %p91, %p92
      %p94 = scmp.ne.s32.totalorder %s82, %s83
      %p95 = scmp.eq.s32.totalorder %s32, 3
      %p96 = por %p94, %p95
      %p98 = scmp.ne.s32.totalorder %s83, %s97
      %p99 = scmp.eq.s32.totalorder %s32, 0
      %p100 = por %p98, %p99
      %s102 = sadd.s32 %s101, 1
      %p105 = scmp.eq.s32.totalorder %s26, 3
      %p106 = scmp.ne.s32.totalorder %s101, %s103
      %p107 = scmp.eq.s32.totalorder %s26, 0
      %p108 = por %p106, %p107
      %p109 = scmp.ne.s32.totalorder %s101, %s103
      %p110 = scmp.eq.s32.totalorder %s31, 3
      %p111 = por %p109, %p110
      %p112 = scmp.ne.s32.totalorder %s103, %s104
      %p113 = scmp.eq.s32.totalorder %s31, 0
      %p114 = por %p112, %p113
      %p115 = scmp.ne.s32.totalorder %s103, %s104
      %p116 = scmp.eq.s32.totalorder %s32, 3
      %p117 = por %p115, %p116
      %p119 = scmp.ne.s32.totalorder %s104, %s118
      %p120 = scmp.eq.s32.totalorder %s32, 0
      %p121 = por %p119, %p120
      %s123 = sadd.s32 %s122, 1
      %p126 = scmp.eq.s32.totalorder %s26, 3
      %p127 = scmp.ne.s32.totalorder %s122, %s124
      %p128 = scmp.eq.s32.totalorder %s26, 0
      %p129 = por %p127, %p128
      %p130 = scmp.ne.s32.totalorder %s122, %s124
      %p131 = scmp.eq.s32.totalorder %s31, 3
      %p132 = por %p130, %p131
      %p133 = scmp.ne.s32.totalorder %s124, %s125
      %p134 = scmp.eq.s32.totalorder %s31, 0
      %p135 = por %p133, %p134
      %p136 = scmp.ne.s32.totalorder %s124, %s125
      %p137 = scmp.eq.s32.totalorder %s32, 3
      %p138 = por %p136, %p137
      %p140 = scmp.ne.s32.totalorder %s125, %s139
      %p141 = scmp.eq.s32.totalorder %s32, 0
      %p142 = por %p140, %p141
      %s144 = sadd.s32 %s143, 1
      %p147 = scmp.eq.s32.totalorder %s26, 3
      %p148 = scmp.ne.s32.totalorder %s143, %s145
      %p149 = scmp.eq.s32.totalorder %s26, 0
      %p150 = por %p148, %p149
      %p151 = scmp.ne.s32.totalorder %s143, %s145
      %p152 = scmp.eq.s32.totalorder %s31, 3
      %p153 = por %p151, %p152
      %p154 = scmp.ne.s32.totalorder %s145, %s146
      %p155 = scmp.eq.s32.totalorder %s31, 0
      %p156 = por %p154, %p155
      %p157 = scmp.ne.s32.totalorder %s145, %s146
      %p158 = scmp.eq.s32.totalorder %s32, 3
      %p159 = por %p157, %p158
      %p161 = scmp.ne.s32.totalorder %s146, %s160
      %p162 = scmp.eq.s32.totalorder %s32, 0
      %p163 = por %p161, %p162
      %s165 = sadd.s32 %s164, 1
      %p168 = scmp.eq.s32.totalorder %s26, 3
      %p169 = scmp.ne.s32.totalorder %s164, %s166
      %p170 = scmp.eq.s32.totalorder %s26, 0
      %p171 = por %p169, %p170
      %p172 = scmp.ne.s32.totalorder %s164, %s166
      %p173 = scmp.eq.s32.totalorder %s31, 3
      %p174 = por %p172, %p173
      %p175 = scmp.ne.s32.totalorder %s166, %s167
      %p176 = scmp.eq.s32.totalorder %s31, 0
      %p177 = por %p175, %p176
      %p178 = scmp.ne.s32.totalorder %s166, %s167
      %p179 = scmp.eq.s32.totalorder %s32, 3
      %p180 = por %p178, %p179
      %p182 = scmp.ne.s32.totalorder %s167, %s181
      %p183 = scmp.eq.s32.totalorder %s32, 0
      %p184 = por %p182, %p183
      %s186 = sadd.s32 %s185, 1
      %p189 = scmp.eq.s32.totalorder %s26, 3
      %p190 = scmp.ne.s32.totalorder %s185, %s187
      %p191 = scmp.eq.s32.totalorder %s26, 0
      %p192 = por %p190, %p191
      %p193 = scmp.ne.s32.totalorder %s185, %s187
      %p194 = scmp.eq.s32.totalorder %s31, 3
      %p195 = por %p193, %p194
      %p196 = scmp.ne.s32.totalorder %s187, %s188
      %p197 = scmp.eq.s32.totalorder %s31, 0
      %p198 = por %p196, %p197
      %p199 = scmp.ne.s32.totalorder %s187, %s188
      %p200 = scmp.eq.s32.totalorder %s32, 3
      %p201 = por %p199, %p200
      %p203 = scmp.ne.s32.totalorder %s188, %s202
      %p204 = scmp.eq.s32.totalorder %s32, 0
      %p205 = por %p203, %p204
      %s206 = smul.u32 %s33, 2
      %s207 = sadd.s32 %s206, %s34
      %s208 = smul.u32 %s45, 2
      %s209 = sadd.s32 %s208, %s41
      %s210 = ssub.s32 %s207, %s209
      %p211 = scmp.eq.s32.totalorder %s210, 0
      %s213 = sadd.s32 %s212, 1
      %s214 = scalar_select %p211, %s212, %s213
      %p217 = pneg %p211
      %p218 = scmp.eq.s32.totalorder %s26, 3
      %p219 = por %p217, %p218
      %p220 = scmp.ne.s32.totalorder %s212, %s215
      %p221 = scmp.eq.s32.totalorder %s26, 0
      %p222 = por %p220, %p221
      %p223 = scmp.ne.s32.totalorder %s212, %s215
      %p224 = scmp.eq.s32.totalorder %s31, 3
      %p225 = por %p223, %p224
      %p226 = scmp.ne.s32.totalorder %s215, %s216
      %p227 = scmp.eq.s32.totalorder %s31, 0
      %p228 = por %p226, %p227
      %p229 = scmp.ne.s32.totalorder %s215, %s216
      %p230 = scmp.eq.s32.totalorder %s32, 3
      %p231 = por %p229, %p230
      %p233 = scmp.ne.s32.totalorder %s216, %s232
      %p234 = scmp.eq.s32.totalorder %s32, 0
      %p235 = por %p233, %p234
      %s236 = ssub.s32 %s33, %s45
      %p237 = scmp.eq.s32.totalorder %s236, 0
      %s239 = sadd.s32 %s238, 1
      %s240 = scalar_select %p237, %s238, %s239
      %p243 = pneg %p237
      %p244 = scmp.eq.s32.totalorder %s26, 3
      %p245 = por %p243, %p244
      %p246 = scmp.ne.s32.totalorder %s238, %s241
      %p247 = scmp.eq.s32.totalorder %s26, 0
      %p248 = por %p246, %p247
      %p249 = scmp.ne.s32.totalorder %s238, %s241
      %p250 = scmp.eq.s32.totalorder %s31, 3
      %p251 = por %p249, %p250
      %p252 = scmp.ne.s32.totalorder %s241, %s242
      %p253 = scmp.eq.s32.totalorder %s31, 0
      %p254 = por %p252, %p253
      %p255 = scmp.ne.s32.totalorder %s241, %s242
      %p256 = scmp.eq.s32.totalorder %s32, 3
      %p257 = por %p255, %p256
      %p259 = scmp.ne.s32.totalorder %s242, %s258
      %p260 = scmp.eq.s32.totalorder %s32, 0
      %p261 = por %p259, %p260
      %s262 = ssub.s32 %s33, %s45
      %p263 = scmp.eq.s32.totalorder %s262, 0
      %s265 = sadd.s32 %s264, 1
      %s266 = scalar_select %p263, %s264, %s265
      %p269 = pneg %p263
      %p270 = scmp.eq.s32.totalorder %s26, 3
      %p271 = por %p269, %p270
      %p272 = scmp.ne.s32.totalorder %s264, %s267
      %p273 = scmp.eq.s32.totalorder %s26, 0
      %p274 = por %p272, %p273
      %p275 = scmp.ne.s32.totalorder %s264, %s267
      %p276 = scmp.eq.s32.totalorder %s31, 3
      %p277 = por %p275, %p276
      %p278 = scmp.ne.s32.totalorder %s267, %s268
      %p279 = scmp.eq.s32.totalorder %s31, 0
      %p280 = por %p278, %p279
      %p281 = scmp.ne.s32.totalorder %s267, %s268
      %p282 = scmp.eq.s32.totalorder %s32, 3
      %p283 = por %p281, %p282
      %p285 = scmp.ne.s32.totalorder %s268, %s284
      %p286 = scmp.eq.s32.totalorder %s32, 0
      %p287 = por %p285, %p286
      %s288 = ssub.s32 %s33, %s45
      %p289 = scmp.eq.s32.totalorder %s288, 0
      %s291 = sadd.s32 %s290, 1
      %s292 = scalar_select %p289, %s290, %s291
      %p295 = pneg %p289
      %p296 = scmp.eq.s32.totalorder %s26, 3
      %p297 = por %p295, %p296
      %p298 = scmp.ne.s32.totalorder %s290, %s293
      %p299 = scmp.eq.s32.totalorder %s26, 0
      %p300 = por %p298, %p299
      %p301 = scmp.ne.s32.totalorder %s290, %s293
      %p302 = scmp.eq.s32.totalorder %s31, 3
      %p303 = por %p301, %p302
      %p304 = scmp.ne.s32.totalorder %s293, %s294
      %p305 = scmp.eq.s32.totalorder %s31, 0
      %p306 = por %p304, %p305
      %p307 = scmp.ne.s32.totalorder %s293, %s294
      %p308 = scmp.eq.s32.totalorder %s32, 3
      %p309 = por %p307, %p308
      %p311 = scmp.ne.s32.totalorder %s294, %s310
      %p312 = scmp.eq.s32.totalorder %s32, 0
      %p313 = por %p311, %p312
      %p314 = scmp.le.s32.totalorder 1, %s26
      %p315 = scmp.lt.s32.totalorder %s26, 5
      %p316 = pnand %p314, %p315
      %p317 = pneg %p316
      // Predicated region
      $region9: #{tpu_custom_call.1} parent=5 // pred_check
        _
      $region10: #{tpu_custom_call.1} parent=5 // pred_check_branch
        %319 = sbr.rel (%p316) target = $region12
      $region11: #{tpu_custom_call.1} parent=5 // pred_region
        %s320 = ssub.s32 %s26, 1
        // Predicated region
        $region13: #{tpu_custom_call.1} parent=11 // pred_check
          %p321 = pneg %p93
        $region14: #{tpu_custom_call.1} parent=11 // pred_check_branch
          %323 = sbr.rel (%p321) target = $region16
        $region15: #{tpu_custom_call.1} parent=11 // pred_region
          %s325 = ssub.s32 8192, 8192
          %326 = vsyncadd [#allocation7], %s325
          %s327 = sshll.u32 [#allocation6], 4
          %s328 = int_to_ptr.vmem [resolvable:$true] %s327
          %333 = dma.hbm_to_vmem [thread:$0]  %s1, 8192, %s328, [#allocation7], 256, 256, 16
        $region16: #{tpu_custom_call.1} parent=11 // pred_fallthru
          _
        // Predicated region
        $region17: #{tpu_custom_call.1} parent=11 // pred_check
          %p334 = pneg %p114
        $region18: #{tpu_custom_call.1} parent=11 // pred_check_branch
          %336 = sbr.rel (%p334) target = $region20
        $region19: #{tpu_custom_call.1} parent=11 // pred_region
          _
        $region20: #{tpu_custom_call.1} parent=11 // pred_fallthru
          _
        // Predicated region
        $region21: #{tpu_custom_call.1} parent=11 // pred_check
          %p337 = pneg %p135
        $region22: #{tpu_custom_call.1} parent=11 // pred_check_branch
          %339 = sbr.rel (%p337) target = $region24
        $region23: #{tpu_custom_call.1} parent=11 // pred_region
          %s341 = ssub.s32 16384, 16384
          %342 = vsyncadd [#allocation7], %s341
          %s343 = sshll.u32 [#allocation8], 4
          %s344 = int_to_ptr.vmem [resolvable:$true] %s343
          %349 = dma.hbm_to_vmem [thread:$0]  %s3, 16384, %s344, [#allocation7], 256, 256, 16
        $region24: #{tpu_custom_call.1} parent=11 // pred_fallthru
          _
        // Predicated region
        $region25: #{tpu_custom_call.1} parent=11 // pred_check
          %p350 = pneg %p156
        $region26: #{tpu_custom_call.1} parent=11 // pred_check_branch
          %352 = sbr.rel (%p350) target = $region28
        $region27: #{tpu_custom_call.1} parent=11 // pred_region
          _
        $region28: #{tpu_custom_call.1} parent=11 // pred_fallthru
          _
        // Predicated region
        $region29: #{tpu_custom_call.1} parent=11 // pred_check
          %p353 = pneg %p177
        $region30: #{tpu_custom_call.1} parent=11 // pred_check_branch
          %355 = sbr.rel (%p353) target = $region32
        $region31: #{tpu_custom_call.1} parent=11 // pred_region
          _
        $region32: #{tpu_custom_call.1} parent=11 // pred_fallthru
          _
        // Predicated region
        $region33: #{tpu_custom_call.1} parent=11 // pred_check
          %p356 = pneg %p198
        $region34: #{tpu_custom_call.1} parent=11 // pred_check_branch
          %358 = sbr.rel (%p356) target = $region36
        $region35: #{tpu_custom_call.1} parent=11 // pred_region
          _
        $region36: #{tpu_custom_call.1} parent=11 // pred_fallthru
          _
      $region12: #{tpu_custom_call.1} parent=5 // pred_fallthru
        _
      %p359 = scmp.lt.s32.totalorder %s26, 4
      // Predicated region
      $region37: #{tpu_custom_call.1} parent=5 // pred_check
        %p360 = pneg %p359
      $region38: #{tpu_custom_call.1} parent=5 // pred_check_branch
        %362 = sbr.rel (%p360) target = $region40
      $region39: #{tpu_custom_call.1} parent=5 // pred_region
        // Predicated region
        $region41: #{tpu_custom_call.1} parent=39 // pred_check
          %p363 = pneg %p66
        $region42: #{tpu_custom_call.1} parent=39 // pred_check_branch
          %365 = sbr.rel (%p363) target = $region44
        $region43: #{tpu_custom_call.1} parent=39 // pred_region
          %s366 = sand.u32 %s56, 1
          %s367 = scalar_lea.sflag [#allocation4], %s366
          %s368 = sand.u32 %s56, 1
          %s369 = smul.addr %s368, 512
          %s370 = scalar_lea.vmem [#allocation3], %s369
          %s371 = smul.u32 %s33, 2
          %s372 = sadd.s32 %s371, %s34
          %p373 = scmp.lt.s32.totalorder %s372, 2
          %s374 = scalar_select %p373, %s372, 2
          %s375 = smul.u32 32, %s374
          %s376 = ssub.s32 88, %s375
          %p377 = scmp.lt.s32.totalorder %s376, 32
          %s378 = scalar_select %p377, %s376, 32
          %s379 = smul.u32 128, %s378
          %s380 = smul.u32 %s379, 2
          %s382 = ssub.s32 8192, %s380
          %383 = vsyncadd %s367, %s382
          %p384 = scmp.ne.s32.totalorder 0, %s380
          %s385 = smul.addr %s375, 2
          %s386 = smul.addr %s385, 128
          %s387 = scalar_lea.hbm %s0, %s386
          %s388 = smul.u32 16, %s378
          %s389 = sshll.u32 %s370, 4
          %s390 = int_to_ptr.vmem [resolvable:$true] %s389
          %s391 = sshll.u32 %s388, 4
          %395 = dma.hbm_to_vmem [thread:$0]  (%p384), %s387, %s391, %s390, %s367, 256, 256, 16
        $region44: #{tpu_custom_call.1} parent=39 // pred_fallthru
          _
      $region40: #{tpu_custom_call.1} parent=5 // pred_fallthru
        _
      %p396 = scmp.le.s32.totalorder 1, %s26
      %p397 = scmp.lt.s32.totalorder %s26, 5
      %p398 = pnand %p396, %p397
      %p399 = pneg %p398
      // Predicated region
      $region45: #{tpu_custom_call.1} parent=5 // pred_check
        _
      $region46: #{tpu_custom_call.1} parent=5 // pred_check_branch
        %401 = sbr.rel (%p398) target = $region48
      $region47: #{tpu_custom_call.1} parent=5 // pred_region
        %s402 = ssub.s32 %s26, 1
        %s403 = sand.u32 %s59, 1
        %s404 = scalar_lea.sflag [#allocation4], %s403
        %s405 = sand.u32 %s59, 1
        %s406 = smul.addr %s405, 512
        %s407 = scalar_lea.vmem [#allocation3], %s406
        // Predicated region
        $region49: #{tpu_custom_call.1} parent=47 // pred_check
          %p408 = pneg %p72
        $region50: #{tpu_custom_call.1} parent=47 // pred_check_branch
          %410 = sbr.rel (%p408) target = $region52
        $region51: #{tpu_custom_call.1} parent=47 // pred_region
          %411 = dma.done %s404, 8192
        $region52: #{tpu_custom_call.1} parent=47 // pred_fallthru
          _
        // Predicated region
        $region53: #{tpu_custom_call.1} parent=47 // pred_check
          %p412 = pneg %p93
        $region54: #{tpu_custom_call.1} parent=47 // pred_check_branch
          %414 = sbr.rel (%p412) target = $region56
        $region55: #{tpu_custom_call.1} parent=47 // pred_region
          %415 = dma.done [#allocation7], 8192
        $region56: #{tpu_custom_call.1} parent=47 // pred_fallthru
          _
        // Predicated region
        $region57: #{tpu_custom_call.1} parent=47 // pred_check
          %p416 = pneg %p135
        $region58: #{tpu_custom_call.1} parent=47 // pred_check_branch
          %418 = sbr.rel (%p416) target = $region60
        $region59: #{tpu_custom_call.1} parent=47 // pred_region
          %419 = dma.done [#allocation7], 16384
        $region60: #{tpu_custom_call.1} parent=47 // pred_fallthru
          _
        %s420 = sand.u32 %s59, 1
        %s421 = scalar_lea.sflag [#allocation4], %s420
        %s422 = sand.u32 %s59, 1
        %s423 = smul.addr %s422, 512
        %s424 = scalar_lea.vmem [#allocation3], %s423
        %p425 = pneg %p72
        %p426 = pneg %p69
        %p427 = pneg %p93
        %p428 = pneg %p90
        %p429 = pneg %p114
        %p430 = pneg %p111
        %p431 = pneg %p135
        %p432 = pneg %p132
        %p433 = pneg %p156
        %p434 = pneg %p153
        %p435 = pneg %p177
        %p436 = pneg %p174
        %p437 = pneg %p198
        %p438 = pneg %p195
        %p439 = pneg %p228
        %p440 = pneg %p225
        %s441 = smul.u32 %s35, 2
        %s442 = sadd.s32 %s441, %s36
        %s443 = smul.u32 32, %s442
        %p444 = scmp.lt.s32.totalorder %s443, 127
        %s445 = scalar_select %p444, %s443, 127
        %s446 = smul.addr %s445, 8
        %s447 = scalar_lea.vmem %s7, %s446
        %p448 = pneg %p254
        %p449 = pneg %p251
        %p450 = scmp.lt.s32.totalorder %s35, 1
        %s451 = scalar_select %p450, %s35, 1
        %s452 = scalar_lea.vmem %s8, %s451
        %p453 = pneg %p280
        %p454 = pneg %p277
        %p455 = scmp.lt.s32.totalorder %s35, 1
        %s456 = scalar_select %p455, %s35, 1
        %s457 = scalar_lea.vmem %s9, %s456
        %p458 = pneg %p306
        %p459 = pneg %p303
        %s460 = sand.u32 %s293, 1
        %s461 = scalar_lea.sflag [#allocation5], %s460
        %s462 = sand.u32 %s293, 1
        %s463 = smul.addr %s462, 4
        %s464 = scalar_lea.vmem [#allocation9], %s463
        %s465 = smul.u32 %s35, 2
        %s466 = sadd.s32 %s465, %s36
        %p467 = scmp.lt.s32.totalorder %s466, 2
        %s468 = scalar_select %p467, %s466, 2
        %s469 = smul.u32 32, %s468
        %s470 = ssub.s32 88, %s469
        %p471 = scmp.lt.s32.totalorder %s470, 32
        %s472 = scalar_select %p471, %s470, 32
        %s473 = smul.u32 128, %s472
        %s474 = smul.u32 %s473, 2
        %s475 = smul.u32 %s35, 2
        %s476 = sadd.s32 %s475, %s36
        %s477 = smul.u32 32, %s476
        %p478 = scmp.lt.s32.totalorder %s477, 127
        %s479 = scalar_select %p478, %s477, 127
        %s480 = smul.addr %s479, 8
        %s481 = scalar_lea.vmem %s7, %s480
        %s482 = smul.u32 %s35, 2
        %s483 = sadd.s32 %s482, %s36
        %s484 = smul.u32 32, %s483
        %p485 = scmp.lt.s32.totalorder %s35, 1
        %s486 = scalar_select %p485, %s35, 1
        %s487 = scalar_lea.vmem %s8, %s486
        %p488 = scmp.lt.s32.totalorder %s35, 1
        %s489 = scalar_select %p488, %s35, 1
        %s490 = scalar_lea.vmem %s9, %s489
        %p492 = scmp.eq.s32.totalorder %s36, 0
        // Predicated region
        $region61: #{tpu_custom_call.1} parent=47 // pred_check
          %p493 = pneg %p492
        $region62: #{tpu_custom_call.1} parent=47 // pred_check_branch
          %495 = sbr.rel (%p493) target = $region64
        $region63: #{tpu_custom_call.1} parent=47 // pred_region
          %vm496 = vcmask 0
          %497 = vst.msk [vmem:[%s487] sm:$0x1] %vm496, -1e+30
          %498 = vst.msk [vmem:[%s490] sm:$0x1] %vm496, 0.0
          %v499 = vlaneseq
          %vm500 = vcmp.ge.s32.totalorder %v499, 0
          %vm501 = vcmp.lt.s32.totalorder %v499, 512
          %vm502 = vmand %vm500, %vm501
          %503 = vst.msk [vmem:[%s464] sm:$0xf] %vm502, 0.0
        $region64: #{tpu_custom_call.1} parent=47 // pred_fallthru
          _
        %v504 = vld [vmem:[%s407] sm:$0xff]
        %v505 = vld [vmem:[%s407 + $0x8] sm:$0xff]
        %v506 = vld [vmem:[%s407 + $0x10] sm:$0xff]
        %v507 = vld [vmem:[%s407 + $0x18] sm:$0xff]
        %v508 = vld [vmem:[%s407 + $0x20] sm:$0xff]
        %v509 = vld [vmem:[%s407 + $0x28] sm:$0xff]
        %v510 = vld [vmem:[%s407 + $0x30] sm:$0xff]
        %v511 = vld [vmem:[%s407 + $0x38] sm:$0xff]
        %v512 = vld [vmem:[%s407 + $0x40] sm:$0xff]
        %v513 = vld [vmem:[%s407 + $0x48] sm:$0xff]
        %v514 = vld [vmem:[%s407 + $0x50] sm:$0xff]
        %v515 = vld [vmem:[%s407 + $0x58] sm:$0xff]
        %v516 = vld [vmem:[%s407 + $0x60] sm:$0xff]
        %v517 = vld [vmem:[%s407 + $0x68] sm:$0xff]
        %v518 = vld [vmem:[%s407 + $0x70] sm:$0xff]
        %v519 = vld [vmem:[%s407 + $0x78] sm:$0xff]
        %v520 = vld [vmem:[%s407 + $0x80] sm:$0xff]
        %v521 = vld [vmem:[%s407 + $0x88] sm:$0xff]
        %v522 = vld [vmem:[%s407 + $0x90] sm:$0xff]
        %v523 = vld [vmem:[%s407 + $0x98] sm:$0xff]
        %v524 = vld [vmem:[%s407 + $0xa0] sm:$0xff]
        %v525 = vld [vmem:[%s407 + $0xa8] sm:$0xff]
        %v526 = vld [vmem:[%s407 + $0xb0] sm:$0xff]
        %v527 = vld [vmem:[%s407 + $0xb8] sm:$0xff]
        %v528 = vld [vmem:[%s407 + $0xc0] sm:$0xff]
        %v529 = vld [vmem:[%s407 + $0xc8] sm:$0xff]
        %v530 = vld [vmem:[%s407 + $0xd0] sm:$0xff]
        %v531 = vld [vmem:[%s407 + $0xd8] sm:$0xff]
        %v532 = vld [vmem:[%s407 + $0xe0] sm:$0xff]
        %v533 = vld [vmem:[%s407 + $0xe8] sm:$0xff]
        %v534 = vld [vmem:[%s407 + $0xf0] sm:$0xff]
        %v535 = vld [vmem:[%s407 + $0xf8] sm:$0xff]
        %v536 = vld [vmem:[%s407 + $0x100] sm:$0xff]
        %v537 = vld [vmem:[%s407 + $0x108] sm:$0xff]
        %v538 = vld [vmem:[%s407 + $0x110] sm:$0xff]
        %v539 = vld [vmem:[%s407 + $0x118] sm:$0xff]
        %v540 = vld [vmem:[%s407 + $0x120] sm:$0xff]
        %v541 = vld [vmem:[%s407 + $0x128] sm:$0xff]
        %v542 = vld [vmem:[%s407 + $0x130] sm:$0xff]
        %v543 = vld [vmem:[%s407 + $0x138] sm:$0xff]
        %v544 = vld [vmem:[%s407 + $0x140] sm:$0xff]
        %v545 = vld [vmem:[%s407 + $0x148] sm:$0xff]
        %v546 = vld [vmem:[%s407 + $0x150] sm:$0xff]
        %v547 = vld [vmem:[%s407 + $0x158] sm:$0xff]
        %v548 = vld [vmem:[%s407 + $0x160] sm:$0xff]
        %v549 = vld [vmem:[%s407 + $0x168] sm:$0xff]
        %v550 = vld [vmem:[%s407 + $0x170] sm:$0xff]
        %v551 = vld [vmem:[%s407 + $0x178] sm:$0xff]
        %v552 = vld [vmem:[%s407 + $0x180] sm:$0xff]
        %v553 = vld [vmem:[%s407 + $0x188] sm:$0xff]
        %v554 = vld [vmem:[%s407 + $0x190] sm:$0xff]
        %v555 = vld [vmem:[%s407 + $0x198] sm:$0xff]
        %v556 = vld [vmem:[%s407 + $0x1a0] sm:$0xff]
        %v557 = vld [vmem:[%s407 + $0x1a8] sm:$0xff]
        %v558 = vld [vmem:[%s407 + $0x1b0] sm:$0xff]
        %v559 = vld [vmem:[%s407 + $0x1b8] sm:$0xff]
        %v560 = vld [vmem:[%s407 + $0x1c0] sm:$0xff]
        %v561 = vld [vmem:[%s407 + $0x1c8] sm:$0xff]
        %v562 = vld [vmem:[%s407 + $0x1d0] sm:$0xff]
        %v563 = vld [vmem:[%s407 + $0x1d8] sm:$0xff]
        %v564 = vld [vmem:[%s407 + $0x1e0] sm:$0xff]
        %v565 = vld [vmem:[%s407 + $0x1e8] sm:$0xff]
        %v566 = vld [vmem:[%s407 + $0x1f0] sm:$0xff]
        %v567 = vld [vmem:[%s407 + $0x1f8] sm:$0xff]
        %v568 = vpack.c.bf16 %v506, %v504
        %v569 = vpack.c.bf16 %v507, %v505
        %v570 = vpack.c.bf16 %v510, %v508
        %v571 = vpack.c.bf16 %v511, %v509
        %v572 = vpack.c.bf16 %v514, %v512
        %v573 = vpack.c.bf16 %v515, %v513
        %v574 = vpack.c.bf16 %v518, %v516
        %v575 = vpack.c.bf16 %v519, %v517
        %v576 = vpack.c.bf16 %v522, %v520
        %v577 = vpack.c.bf16 %v523, %v521
        %v578 = vpack.c.bf16 %v526, %v524
        %v579 = vpack.c.bf16 %v527, %v525
        %v580 = vpack.c.bf16 %v530, %v528
        %v581 = vpack.c.bf16 %v531, %v529
        %v582 = vpack.c.bf16 %v534, %v532
        %v583 = vpack.c.bf16 %v535, %v533
        %v584 = vpack.c.bf16 %v538, %v536
        %v585 = vpack.c.bf16 %v539, %v537
        %v586 = vpack.c.bf16 %v542, %v540
        %v587 = vpack.c.bf16 %v543, %v541
        %v588 = vpack.c.bf16 %v546, %v544
        %v589 = vpack.c.bf16 %v547, %v545
        %v590 = vpack.c.bf16 %v550, %v548
        %v591 = vpack.c.bf16 %v551, %v549
        %v592 = vpack.c.bf16 %v554, %v552
        %v593 = vpack.c.bf16 %v555, %v553
        %v594 = vpack.c.bf16 %v558, %v556
        %v595 = vpack.c.bf16 %v559, %v557
        %v596 = vpack.c.bf16 %v562, %v560
        %v597 = vpack.c.bf16 %v563, %v561
        %v598 = vpack.c.bf16 %v566, %v564
        %v599 = vpack.c.bf16 %v567, %v565
        %v600 = vld [vmem:[#allocation6] sm:$0xff]
        %v601 = vld [vmem:[#allocation6 + $0x8] sm:$0xff]
        %v602 = vld [vmem:[#allocation6 + $0x10] sm:$0xff]
        %v603 = vld [vmem:[#allocation6 + $0x18] sm:$0xff]
        %v604 = vld [vmem:[#allocation6 + $0x20] sm:$0xff]
        %v605 = vld [vmem:[#allocation6 + $0x28] sm:$0xff]
        %v606 = vld [vmem:[#allocation6 + $0x30] sm:$0xff]
        %v607 = vld [vmem:[#allocation6 + $0x38] sm:$0xff]
        %v608 = vld [vmem:[#allocation6 + $0x40] sm:$0xff]
        %v609 = vld [vmem:[#allocation6 + $0x48] sm:$0xff]
        %v610 = vld [vmem:[#allocation6 + $0x50] sm:$0xff]
        %v611 = vld [vmem:[#allocation6 + $0x58] sm:$0xff]
        %v612 = vld [vmem:[#allocation6 + $0x60] sm:$0xff]
        %v613 = vld [vmem:[#allocation6 + $0x68] sm:$0xff]
        %v614 = vld [vmem:[#allocation6 + $0x70] sm:$0xff]
        %v615 = vld [vmem:[#allocation6 + $0x78] sm:$0xff]
        %v616 = vld [vmem:[#allocation6 + $0x80] sm:$0xff]
        %v617 = vld [vmem:[#allocation6 + $0x88] sm:$0xff]
        %v618 = vld [vmem:[#allocation6 + $0x90] sm:$0xff]
        %v619 = vld [vmem:[#allocation6 + $0x98] sm:$0xff]
        %v620 = vld [vmem:[#allocation6 + $0xa0] sm:$0xff]
        %v621 = vld [vmem:[#allocation6 + $0xa8] sm:$0xff]
        %v622 = vld [vmem:[#allocation6 + $0xb0] sm:$0xff]
        %v623 = vld [vmem:[#allocation6 + $0xb8] sm:$0xff]
        %v624 = vld [vmem:[#allocation6 + $0xc0] sm:$0xff]
        %v625 = vld [vmem:[#allocation6 + $0xc8] sm:$0xff]
        %v626 = vld [vmem:[#allocation6 + $0xd0] sm:$0xff]
        %v627 = vld [vmem:[#allocation6 + $0xd8] sm:$0xff]
        %v628 = vld [vmem:[#allocation6 + $0xe0] sm:$0xff]
        %v629 = vld [vmem:[#allocation6 + $0xe8] sm:$0xff]
        %v630 = vld [vmem:[#allocation6 + $0xf0] sm:$0xff]
        %v631 = vld [vmem:[#allocation6 + $0xf8] sm:$0xff]
        %v632 = vld [vmem:[#allocation6 + $0x100] sm:$0xff]
        %v633 = vld [vmem:[#allocation6 + $0x108] sm:$0xff]
        %v634 = vld [vmem:[#allocation6 + $0x110] sm:$0xff]
        %v635 = vld [vmem:[#allocation6 + $0x118] sm:$0xff]
        %v636 = vld [vmem:[#allocation6 + $0x120] sm:$0xff]
        %v637 = vld [vmem:[#allocation6 + $0x128] sm:$0xff]
        %v638 = vld [vmem:[#allocation6 + $0x130] sm:$0xff]
        %v639 = vld [vmem:[#allocation6 + $0x138] sm:$0xff]
        %v640 = vld [vmem:[#allocation6 + $0x140] sm:$0xff]
        %v641 = vld [vmem:[#allocation6 + $0x148] sm:$0xff]
        %v642 = vld [vmem:[#allocation6 + $0x150] sm:$0xff]
        %v643 = vld [vmem:[#allocation6 + $0x158] sm:$0xff]
        %v644 = vld [vmem:[#allocation6 + $0x160] sm:$0xff]
        %v645 = vld [vmem:[#allocation6 + $0x168] sm:$0xff]
        %v646 = vld [vmem:[#allocation6 + $0x170] sm:$0xff]
        %v647 = vld [vmem:[#allocation6 + $0x178] sm:$0xff]
        %v648 = vld [vmem:[#allocation6 + $0x180] sm:$0xff]
        %v649 = vld [vmem:[#allocation6 + $0x188] sm:$0xff]
        %v650 = vld [vmem:[#allocation6 + $0x190] sm:$0xff]
        %v651 = vld [vmem:[#allocation6 + $0x198] sm:$0xff]
        %v652 = vld [vmem:[#allocation6 + $0x1a0] sm:$0xff]
        %v653 = vld [vmem:[#allocation6 + $0x1a8] sm:$0xff]
        %v654 = vld [vmem:[#allocation6 + $0x1b0] sm:$0xff]
        %v655 = vld [vmem:[#allocation6 + $0x1b8] sm:$0xff]
        %v656 = vld [vmem:[#allocation6 + $0x1c0] sm:$0xff]
        %v657 = vld [vmem:[#allocation6 + $0x1c8] sm:$0xff]
        %v658 = vld [vmem:[#allocation6 + $0x1d0] sm:$0xff]
        %v659 = vld [vmem:[#allocation6 + $0x1d8] sm:$0xff]
        %v660 = vld [vmem:[#allocation6 + $0x1e0] sm:$0xff]
        %v661 = vld [vmem:[#allocation6 + $0x1e8] sm:$0xff]
        %v662 = vld [vmem:[#allocation6 + $0x1f0] sm:$0xff]
        %v663 = vld [vmem:[#allocation6 + $0x1f8] sm:$0xff]
        %v664 = vld [vmem:[%s2] sm:$0xf]
        %v666 = vlaneseq
        %v667 = vshrl.u32 %v666, 7
        %v668 = vsub.s32 0, %v667
        %v669 = vrot.slane %v664, %v668
        %v670 = vlaneseq
        %v671 = vshrl.u32 %v670, 7
        %v672 = vsub.s32 1, %v671
        %v673 = vrot.slane %v664, %v672
        %v674 = vlaneseq
        %v675 = vshrl.u32 %v674, 7
        %v676 = vsub.s32 2, %v675
        %v677 = vrot.slane %v664, %v676
        %v678 = vlaneseq
        %v679 = vshrl.u32 %v678, 7
        %v680 = vsub.s32 3, %v679
        %v681 = vrot.slane %v664, %v680
        %v750 = vunpack.c.l.b16 %v600
        %v751 = vunpack.c.h.b16 %v600
        %v752 = vunpack.c.l.b16 %v601
        %v753 = vunpack.c.h.b16 %v601
        %v754 = vunpack.c.l.b16 %v602
        %v755 = vunpack.c.h.b16 %v602
        %v756 = vunpack.c.l.b16 %v603
        %v757 = vunpack.c.h.b16 %v603
        %v758 = vunpack.c.l.b16 %v604
        %v759 = vunpack.c.h.b16 %v604
        %v760 = vunpack.c.l.b16 %v605
        %v761 = vunpack.c.h.b16 %v605
        %v762 = vunpack.c.l.b16 %v606
        %v763 = vunpack.c.h.b16 %v606
        %v764 = vunpack.c.l.b16 %v607
        %v765 = vunpack.c.h.b16 %v607
        %v766 = vunpack.c.l.b16 %v608
        %v767 = vunpack.c.h.b16 %v608
        %v768 = vunpack.c.l.b16 %v609
        %v769 = vunpack.c.h.b16 %v609
        %v770 = vunpack.c.l.b16 %v610
        %v771 = vunpack.c.h.b16 %v610
        %v772 = vunpack.c.l.b16 %v611
        %v773 = vunpack.c.h.b16 %v611
        %v774 = vunpack.c.l.b16 %v612
        %v775 = vunpack.c.h.b16 %v612
        %v776 = vunpack.c.l.b16 %v613
        %v777 = vunpack.c.h.b16 %v613
        %v778 = vunpack.c.l.b16 %v614
        %v779 = vunpack.c.h.b16 %v614
        %v780 = vunpack.c.l.b16 %v615
        %v781 = vunpack.c.h.b16 %v615
        %v782 = vunpack.c.l.b16 %v616
        %v783 = vunpack.c.h.b16 %v616
        %v784 = vunpack.c.l.b16 %v617
        %v785 = vunpack.c.h.b16 %v617
        %v786 = vunpack.c.l.b16 %v618
        %v787 = vunpack.c.h.b16 %v618
        %v788 = vunpack.c.l.b16 %v619
        %v789 = vunpack.c.h.b16 %v619
        %v790 = vunpack.c.l.b16 %v620
        %v791 = vunpack.c.h.b16 %v620
        %v792 = vunpack.c.l.b16 %v621
        %v793 = vunpack.c.h.b16 %v621
        %v794 = vunpack.c.l.b16 %v622
        %v795 = vunpack.c.h.b16 %v622
        %v796 = vunpack.c.l.b16 %v623
        %v797 = vunpack.c.h.b16 %v623
        %v798 = vunpack.c.l.b16 %v624
        %v799 = vunpack.c.h.b16 %v624
        %v800 = vunpack.c.l.b16 %v625
        %v801 = vunpack.c.h.b16 %v625
        %v802 = vunpack.c.l.b16 %v626
        %v803 = vunpack.c.h.b16 %v626
        %v804 = vunpack.c.l.b16 %v627
        %v805 = vunpack.c.h.b16 %v627
        %v806 = vunpack.c.l.b16 %v628
        %v807 = vunpack.c.h.b16 %v628
        %v808 = vunpack.c.l.b16 %v629
        %v809 = vunpack.c.h.b16 %v629
        %v810 = vunpack.c.l.b16 %v630
        %v811 = vunpack.c.h.b16 %v630
        %v812 = vunpack.c.l.b16 %v631
        %v813 = vunpack.c.h.b16 %v631
        %v814 = vunpack.c.l.b16 %v632
        %v815 = vunpack.c.h.b16 %v632
        %v816 = vunpack.c.l.b16 %v633
        %v817 = vunpack.c.h.b16 %v633
        %v818 = vunpack.c.l.b16 %v634
        %v819 = vunpack.c.h.b16 %v634
        %v820 = vunpack.c.l.b16 %v635
        %v821 = vunpack.c.h.b16 %v635
        %v822 = vunpack.c.l.b16 %v636
        %v823 = vunpack.c.h.b16 %v636
        %v824 = vunpack.c.l.b16 %v637
        %v825 = vunpack.c.h.b16 %v637
        %v826 = vunpack.c.l.b16 %v638
        %v827 = vunpack.c.h.b16 %v638
        %v828 = vunpack.c.l.b16 %v639
        %v829 = vunpack.c.h.b16 %v639
        %v830 = vunpack.c.l.b16 %v640
        %v831 = vunpack.c.h.b16 %v640
        %v832 = vunpack.c.l.b16 %v641
        %v833 = vunpack.c.h.b16 %v641
        %v834 = vunpack.c.l.b16 %v642
        %v835 = vunpack.c.h.b16 %v642
        %v836 = vunpack.c.l.b16 %v643
        %v837 = vunpack.c.h.b16 %v643
        %v838 = vunpack.c.l.b16 %v644
        %v839 = vunpack.c.h.b16 %v644
        %v840 = vunpack.c.l.b16 %v645
        %v841 = vunpack.c.h.b16 %v645
        %v842 = vunpack.c.l.b16 %v646
        %v843 = vunpack.c.h.b16 %v646
        %v844 = vunpack.c.l.b16 %v647
        %v845 = vunpack.c.h.b16 %v647
        %v846 = vunpack.c.l.b16 %v648
        %v847 = vunpack.c.h.b16 %v648
        %v848 = vunpack.c.l.b16 %v649
        %v849 = vunpack.c.h.b16 %v649
        %v850 = vunpack.c.l.b16 %v650
        %v851 = vunpack.c.h.b16 %v650
        %v852 = vunpack.c.l.b16 %v651
        %v853 = vunpack.c.h.b16 %v651
        %v854 = vunpack.c.l.b16 %v652
        %v855 = vunpack.c.h.b16 %v652
        %v856 = vunpack.c.l.b16 %v653
        %v857 = vunpack.c.h.b16 %v653
        %v858 = vunpack.c.l.b16 %v654
        %v859 = vunpack.c.h.b16 %v654
        %v860 = vunpack.c.l.b16 %v655
        %v861 = vunpack.c.h.b16 %v655
        %v862 = vunpack.c.l.b16 %v656
        %v863 = vunpack.c.h.b16 %v656
        %v864 = vunpack.c.l.b16 %v657
        %v865 = vunpack.c.h.b16 %v657
        %v866 = vunpack.c.l.b16 %v658
        %v867 = vunpack.c.h.b16 %v658
        %v868 = vunpack.c.l.b16 %v659
        %v869 = vunpack.c.h.b16 %v659
        %v870 = vunpack.c.l.b16 %v660
        %v871 = vunpack.c.h.b16 %v660
        %v872 = vunpack.c.l.b16 %v661
        %v873 = vunpack.c.h.b16 %v661
        %v874 = vunpack.c.l.b16 %v662
        %v875 = vunpack.c.h.b16 %v662
        %v876 = vunpack.c.l.b16 %v663
        %v877 = vunpack.c.h.b16 %v663
        %v878 = vpack.c.b16 %v754, %v750
        %v879 = vpack.c.b16 %v755, %v751
        %v880 = vpack.c.b16 %v756, %v752
        %v881 = vpack.c.b16 %v757, %v753
        %v882 = vpack.c.b16 %v762, %v758
        %v883 = vpack.c.b16 %v763, %v759
        %v884 = vpack.c.b16 %v764, %v760
        %v885 = vpack.c.b16 %v765, %v761
        %v886 = vpack.c.b16 %v770, %v766
        %v887 = vpack.c.b16 %v771, %v767
        %v888 = vpack.c.b16 %v772, %v768
        %v889 = vpack.c.b16 %v773, %v769
        %v890 = vpack.c.b16 %v778, %v774
        %v891 = vpack.c.b16 %v779, %v775
        %v892 = vpack.c.b16 %v780, %v776
        %v893 = vpack.c.b16 %v781, %v777
        %v894 = vpack.c.b16 %v786, %v782
        %v895 = vpack.c.b16 %v787, %v783
        %v896 = vpack.c.b16 %v788, %v784
        %v897 = vpack.c.b16 %v789, %v785
        %v898 = vpack.c.b16 %v794, %v790
        %v899 = vpack.c.b16 %v795, %v791
        %v900 = vpack.c.b16 %v796, %v792
        %v901 = vpack.c.b16 %v797, %v793
        %v902 = vpack.c.b16 %v802, %v798
        %v903 = vpack.c.b16 %v803, %v799
        %v904 = vpack.c.b16 %v804, %v800
        %v905 = vpack.c.b16 %v805, %v801
        %v906 = vpack.c.b16 %v810, %v806
        %v907 = vpack.c.b16 %v811, %v807
        %v908 = vpack.c.b16 %v812, %v808
        %v909 = vpack.c.b16 %v813, %v809
        %v910 = vpack.c.b16 %v818, %v814
        %v911 = vpack.c.b16 %v819, %v815
        %v912 = vpack.c.b16 %v820, %v816
        %v913 = vpack.c.b16 %v821, %v817
        %v914 = vpack.c.b16 %v826, %v822
        %v915 = vpack.c.b16 %v827, %v823
        %v916 = vpack.c.b16 %v828, %v824
        %v917 = vpack.c.b16 %v829, %v825
        %v918 = vpack.c.b16 %v834, %v830
        %v919 = vpack.c.b16 %v835, %v831
        %v920 = vpack.c.b16 %v836, %v832
        %v921 = vpack.c.b16 %v837, %v833
        %v922 = vpack.c.b16 %v842, %v838
        %v923 = vpack.c.b16 %v843, %v839
        %v924 = vpack.c.b16 %v844, %v840
        %v925 = vpack.c.b16 %v845, %v841
        %v926 = vpack.c.b16 %v850, %v846
        %v927 = vpack.c.b16 %v851, %v847
        %v928 = vpack.c.b16 %v852, %v848
        %v929 = vpack.c.b16 %v853, %v849
        %v930 = vpack.c.b16 %v858, %v854
        %v931 = vpack.c.b16 %v859, %v855
        %v932 = vpack.c.b16 %v860, %v856
        %v933 = vpack.c.b16 %v861, %v857
        %v934 = vpack.c.b16 %v866, %v862
        %v935 = vpack.c.b16 %v867, %v863
        %v936 = vpack.c.b16 %v868, %v864
        %v937 = vpack.c.b16 %v869, %v865
        %v938 = vpack.c.b16 %v874, %v870
        %v939 = vpack.c.b16 %v875, %v871
        %v940 = vpack.c.b16 %v876, %v872
        %v941 = vpack.c.b16 %v877, %v873
        %1006 = vmatprep.subr.bf16.mxu0 %v907
        %1007 = vmatpush1.bf16.msra.mxu0 %v906
        %1008 = vmatprep.subr.bf16.mxu0 %v903
        %1009 = vmatpush1.bf16.msra.mxu0 %v902
        %1010 = vmatprep.subr.bf16.mxu0 %v899
        %1011 = vmatpush1.bf16.msra.mxu0 %v898
        %1012 = vmatprep.subr.bf16.mxu0 %v895
        %1013 = vmatpush1.bf16.msra.mxu0 %v894
        %1014 = vmatprep.subr.bf16.mxu0 %v891
        %1015 = vmatpush1.bf16.msra.mxu0 %v890
        %1016 = vmatprep.subr.bf16.mxu0 %v887
        %1017 = vmatpush1.bf16.msra.mxu0 %v886
        %1018 = vmatprep.subr.bf16.mxu0 %v883
        %1019 = vmatpush1.bf16.msra.mxu0 %v882
        %1020 = vmatprep.subr.bf16.mxu0 %v879
        %1021 = vmatpush1.bf16.msra.mxu0 %v878
        %1022 = vmatprep.subr.bf16.mxu0 %v939
        %1023 = vmatpush2.bf16.msra.mxu0 %v938
        %1024 = vmatprep.subr.bf16.mxu0 %v935
        %1025 = vmatpush2.bf16.msra.mxu0 %v934
        %1026 = vmatprep.subr.bf16.mxu0 %v931
        %1027 = vmatpush2.bf16.msra.mxu0 %v930
        %1028 = vmatprep.subr.bf16.mxu0 %v927
        %1029 = vmatpush2.bf16.msra.mxu0 %v926
        %1030 = vmatprep.subr.bf16.mxu0 %v923
        %1031 = vmatpush2.bf16.msra.mxu0 %v922
        %1032 = vmatprep.subr.bf16.mxu0 %v919
        %1033 = vmatpush2.bf16.msra.mxu0 %v918
        %1034 = vmatprep.subr.bf16.mxu0 %v915
        %1035 = vmatpush2.bf16.msra.mxu0 %v914
        %1036 = vmatprep.subr.bf16.mxu0 %v911
        %1037 = vmatpush2.bf16.msra.mxu0 %v910
        %1038 = vmatprep.mubr.bf16.mxu0 %v569
        %1039 = vmatmul.mubr.bf16.gmra.mxu0 %v568
        %v1040 = vpop.f32.mrf.mxu0
        %v1041 = vadd.f32 %v669, %v1040
        %v1042 = vpop.f32.mrf.mxu0
        %v1043 = vadd.f32 %v673, %v1042
        %v1044 = vpop.f32.mrf.mxu0
        %v1045 = vadd.f32 %v669, %v1044
        %v1046 = vpop.f32.mrf.mxu0
        %v1047 = vadd.f32 %v673, %v1046
        %1048 = vmatprep.mubr.bf16.mxu0 %v571
        %1049 = vmatmul.mubr.bf16.gmra.mxu0 %v570
        %v1050 = vpop.f32.mrf.mxu0
        %v1051 = vadd.f32 %v669, %v1050
        %v1052 = vpop.f32.mrf.mxu0
        %v1053 = vadd.f32 %v673, %v1052
        %v1054 = vpop.f32.mrf.mxu0
        %v1055 = vadd.f32 %v669, %v1054
        %v1056 = vpop.f32.mrf.mxu0
        %v1057 = vadd.f32 %v673, %v1056
        %1058 = vmatprep.mubr.bf16.mxu0 %v573
        %1059 = vmatmul.mubr.bf16.gmra.mxu0 %v572
        %v1060 = vpop.f32.mrf.mxu0
        %v1061 = vadd.f32 %v669, %v1060
        %v1062 = vpop.f32.mrf.mxu0
        %v1063 = vadd.f32 %v673, %v1062
        %v1064 = vpop.f32.mrf.mxu0
        %v1065 = vadd.f32 %v669, %v1064
        %v1066 = vpop.f32.mrf.mxu0
        %v1067 = vadd.f32 %v673, %v1066
        %1068 = vmatprep.mubr.bf16.mxu0 %v575
        %1069 = vmatmul.mubr.bf16.gmra.mxu0 %v574
        %v1070 = vpop.f32.mrf.mxu0
        %v1071 = vadd.f32 %v669, %v1070
        %v1072 = vpop.f32.mrf.mxu0
        %v1073 = vadd.f32 %v673, %v1072
        %v1074 = vpop.f32.mrf.mxu0
        %v1075 = vadd.f32 %v669, %v1074
        %v1076 = vpop.f32.mrf.mxu0
        %v1077 = vadd.f32 %v673, %v1076
        %1078 = vmatprep.mubr.bf16.mxu0 %v577
        %1079 = vmatmul.mubr.bf16.gmra.mxu0 %v576
        %v1080 = vpop.f32.mrf.mxu0
        %v1081 = vadd.f32 %v669, %v1080
        %v1082 = vpop.f32.mrf.mxu0
        %v1083 = vadd.f32 %v673, %v1082
        %v1084 = vpop.f32.mrf.mxu0
        %v1085 = vadd.f32 %v669, %v1084
        %v1086 = vpop.f32.mrf.mxu0
        %v1087 = vadd.f32 %v673, %v1086
        %1088 = vmatprep.mubr.bf16.mxu0 %v579
        %1089 = vmatmul.mubr.bf16.gmra.mxu0 %v578
        %v1090 = vpop.f32.mrf.mxu0
        %v1091 = vadd.f32 %v669, %v1090
        %v1092 = vpop.f32.mrf.mxu0
        %v1093 = vadd.f32 %v673, %v1092
        %v1094 = vpop.f32.mrf.mxu0
        %v1095 = vadd.f32 %v669, %v1094
        %v1096 = vpop.f32.mrf.mxu0
        %v1097 = vadd.f32 %v673, %v1096
        %1098 = vmatprep.mubr.bf16.mxu0 %v581
        %1099 = vmatmul.mubr.bf16.gmra.mxu0 %v580
        %v1100 = vpop.f32.mrf.mxu0
        %v1101 = vadd.f32 %v669, %v1100
        %v1102 = vpop.f32.mrf.mxu0
        %v1103 = vadd.f32 %v673, %v1102
        %v1104 = vpop.f32.mrf.mxu0
        %v1105 = vadd.f32 %v669, %v1104
        %v1106 = vpop.f32.mrf.mxu0
        %v1107 = vadd.f32 %v673, %v1106
        %1108 = vmatprep.mubr.bf16.mxu0 %v583
        %1109 = vmatmul.mubr.bf16.gmra.mxu0 %v582
        %v1110 = vpop.f32.mrf.mxu0
        %v1111 = vadd.f32 %v669, %v1110
        %v1112 = vpop.f32.mrf.mxu0
        %v1113 = vadd.f32 %v673, %v1112
        %v1114 = vpop.f32.mrf.mxu0
        %v1115 = vadd.f32 %v669, %v1114
        %v1116 = vpop.f32.mrf.mxu0
        %v1117 = vadd.f32 %v673, %v1116
        %1118 = vmatprep.mubr.bf16.mxu0 %v585
        %1119 = vmatmul.mubr.bf16.gmra.mxu0 %v584
        %v1120 = vpop.f32.mrf.mxu0
        %v1121 = vadd.f32 %v669, %v1120
        %v1122 = vpop.f32.mrf.mxu0
        %v1123 = vadd.f32 %v673, %v1122
        %v1124 = vpop.f32.mrf.mxu0
        %v1125 = vadd.f32 %v669, %v1124
        %v1126 = vpop.f32.mrf.mxu0
        %v1127 = vadd.f32 %v673, %v1126
        %1128 = vmatprep.mubr.bf16.mxu0 %v587
        %1129 = vmatmul.mubr.bf16.gmra.mxu0 %v586
        %v1130 = vpop.f32.mrf.mxu0
        %v1131 = vadd.f32 %v669, %v1130
        %v1132 = vpop.f32.mrf.mxu0
        %v1133 = vadd.f32 %v673, %v1132
        %v1134 = vpop.f32.mrf.mxu0
        %v1135 = vadd.f32 %v669, %v1134
        %v1136 = vpop.f32.mrf.mxu0
        %v1137 = vadd.f32 %v673, %v1136
        %1138 = vmatprep.mubr.bf16.mxu0 %v589
        %1139 = vmatmul.mubr.bf16.gmra.mxu0 %v588
        %v1140 = vpop.f32.mrf.mxu0
        %v1141 = vadd.f32 %v669, %v1140
        %v1142 = vpop.f32.mrf.mxu0
        %v1143 = vadd.f32 %v673, %v1142
        %v1144 = vpop.f32.mrf.mxu0
        %v1145 = vadd.f32 %v669, %v1144
        %v1146 = vpop.f32.mrf.mxu0
        %v1147 = vadd.f32 %v673, %v1146
        %1148 = vmatprep.mubr.bf16.mxu0 %v591
        %1149 = vmatmul.mubr.bf16.gmra.mxu0 %v590
        %v1150 = vpop.f32.mrf.mxu0
        %v1151 = vadd.f32 %v669, %v1150
        %v1152 = vpop.f32.mrf.mxu0
        %v1153 = vadd.f32 %v673, %v1152
        %v1154 = vpop.f32.mrf.mxu0
        %v1155 = vadd.f32 %v669, %v1154
        %v1156 = vpop.f32.mrf.mxu0
        %v1157 = vadd.f32 %v673, %v1156
        %1158 = vmatprep.mubr.bf16.mxu0 %v593
        %1159 = vmatmul.mubr.bf16.gmra.mxu0 %v592
        %v1160 = vpop.f32.mrf.mxu0
        %v1161 = vadd.f32 %v669, %v1160
        %v1162 = vpop.f32.mrf.mxu0
        %v1163 = vadd.f32 %v673, %v1162
        %v1164 = vpop.f32.mrf.mxu0
        %v1165 = vadd.f32 %v669, %v1164
        %v1166 = vpop.f32.mrf.mxu0
        %v1167 = vadd.f32 %v673, %v1166
        %1168 = vmatprep.mubr.bf16.mxu0 %v595
        %1169 = vmatmul.mubr.bf16.gmra.mxu0 %v594
        %v1170 = vpop.f32.mrf.mxu0
        %v1171 = vadd.f32 %v669, %v1170
        %v1172 = vpop.f32.mrf.mxu0
        %v1173 = vadd.f32 %v673, %v1172
        %v1174 = vpop.f32.mrf.mxu0
        %v1175 = vadd.f32 %v669, %v1174
        %v1176 = vpop.f32.mrf.mxu0
        %v1177 = vadd.f32 %v673, %v1176
        %1178 = vmatprep.mubr.bf16.mxu0 %v597
        %1179 = vmatmul.mubr.bf16.gmra.mxu0 %v596
        %v1180 = vpop.f32.mrf.mxu0
        %v1181 = vadd.f32 %v669, %v1180
        %v1182 = vpop.f32.mrf.mxu0
        %v1183 = vadd.f32 %v673, %v1182
        %v1184 = vpop.f32.mrf.mxu0
        %v1185 = vadd.f32 %v669, %v1184
        %v1186 = vpop.f32.mrf.mxu0
        %v1187 = vadd.f32 %v673, %v1186
        %1188 = vmatprep.mubr.bf16.mxu0 %v599
        %1189 = vmatmul.mubr.bf16.gmra.mxu0 %v598
        %v1190 = vpop.f32.mrf.mxu0
        %v1191 = vadd.f32 %v669, %v1190
        %v1192 = vpop.f32.mrf.mxu0
        %v1193 = vadd.f32 %v673, %v1192
        %v1194 = vpop.f32.mrf.mxu0
        %v1195 = vadd.f32 %v669, %v1194
        %v1196 = vpop.f32.mrf.mxu0
        %v1197 = vadd.f32 %v673, %v1196
        %1198 = vdwg.mxu0
        %1199 = vmatprep.subr.bf16.mxu0 %v909
        %1200 = vmatpush1.bf16.msra.mxu0 %v908
        %1201 = vmatprep.subr.bf16.mxu0 %v905
        %1202 = vmatpush1.bf16.msra.mxu0 %v904
        %1203 = vmatprep.subr.bf16.mxu0 %v901
        %1204 = vmatpush1.bf16.msra.mxu0 %v900
        %1205 = vmatprep.subr.bf16.mxu0 %v897
        %1206 = vmatpush1.bf16.msra.mxu0 %v896
        %1207 = vmatprep.subr.bf16.mxu0 %v893
        %1208 = vmatpush1.bf16.msra.mxu0 %v892
        %1209 = vmatprep.subr.bf16.mxu0 %v889
        %1210 = vmatpush1.bf16.msra.mxu0 %v888
        %1211 = vmatprep.subr.bf16.mxu0 %v885
        %1212 = vmatpush1.bf16.msra.mxu0 %v884
        %1213 = vmatprep.subr.bf16.mxu0 %v881
        %1214 = vmatpush1.bf16.msra.mxu0 %v880
        %1215 = vmatprep.subr.bf16.mxu0 %v941
        %1216 = vmatpush2.bf16.msra.mxu0 %v940
        %1217 = vmatprep.subr.bf16.mxu0 %v937
        %1218 = vmatpush2.bf16.msra.mxu0 %v936
        %1219 = vmatprep.subr.bf16.mxu0 %v933
        %1220 = vmatpush2.bf16.msra.mxu0 %v932
        %1221 = vmatprep.subr.bf16.mxu0 %v929
        %1222 = vmatpush2.bf16.msra.mxu0 %v928
        %1223 = vmatprep.subr.bf16.mxu0 %v925
        %1224 = vmatpush2.bf16.msra.mxu0 %v924
        %1225 = vmatprep.subr.bf16.mxu0 %v921
        %1226 = vmatpush2.bf16.msra.mxu0 %v920
        %1227 = vmatprep.subr.bf16.mxu0 %v917
        %1228 = vmatpush2.bf16.msra.mxu0 %v916
        %1229 = vmatprep.subr.bf16.mxu0 %v913
        %1230 = vmatpush2.bf16.msra.mxu0 %v912
        %1231 = vmatprep.mubr.bf16.mxu0 %v569
        %1232 = vmatmul.mubr.bf16.gmra.mxu0 %v568
        %v1233 = vpop.f32.mrf.mxu0
        %v1234 = vadd.f32 %v677, %v1233
        %v1235 = vpop.f32.mrf.mxu0
        %v1236 = vadd.f32 %v681, %v1235
        %v1237 = vpop.f32.mrf.mxu0
        %v1238 = vadd.f32 %v677, %v1237
        %v1239 = vpop.f32.mrf.mxu0
        %v1240 = vadd.f32 %v681, %v1239
        %1241 = vmatprep.mubr.bf16.mxu0 %v571
        %1242 = vmatmul.mubr.bf16.gmra.mxu0 %v570
        %v1243 = vpop.f32.mrf.mxu0
        %v1244 = vadd.f32 %v677, %v1243
        %v1245 = vpop.f32.mrf.mxu0
        %v1246 = vadd.f32 %v681, %v1245
        %v1247 = vpop.f32.mrf.mxu0
        %v1248 = vadd.f32 %v677, %v1247
        %v1249 = vpop.f32.mrf.mxu0
        %v1250 = vadd.f32 %v681, %v1249
        %1251 = vmatprep.mubr.bf16.mxu0 %v573
        %1252 = vmatmul.mubr.bf16.gmra.mxu0 %v572
        %v1253 = vpop.f32.mrf.mxu0
        %v1254 = vadd.f32 %v677, %v1253
        %v1255 = vpop.f32.mrf.mxu0
        %v1256 = vadd.f32 %v681, %v1255
        %v1257 = vpop.f32.mrf.mxu0
        %v1258 = vadd.f32 %v677, %v1257
        %v1259 = vpop.f32.mrf.mxu0
        %v1260 = vadd.f32 %v681, %v1259
        %1261 = vmatprep.mubr.bf16.mxu0 %v575
        %1262 = vmatmul.mubr.bf16.gmra.mxu0 %v574
        %v1263 = vpop.f32.mrf.mxu0
        %v1264 = vadd.f32 %v677, %v1263
        %v1265 = vpop.f32.mrf.mxu0
        %v1266 = vadd.f32 %v681, %v1265
        %v1267 = vpop.f32.mrf.mxu0
        %v1268 = vadd.f32 %v677, %v1267
        %v1269 = vpop.f32.mrf.mxu0
        %v1270 = vadd.f32 %v681, %v1269
        %1271 = vmatprep.mubr.bf16.mxu0 %v577
        %1272 = vmatmul.mubr.bf16.gmra.mxu0 %v576
        %v1273 = vpop.f32.mrf.mxu0
        %v1274 = vadd.f32 %v677, %v1273
        %v1275 = vpop.f32.mrf.mxu0
        %v1276 = vadd.f32 %v681, %v1275
        %v1277 = vpop.f32.mrf.mxu0
        %v1278 = vadd.f32 %v677, %v1277
        %v1279 = vpop.f32.mrf.mxu0
        %v1280 = vadd.f32 %v681, %v1279
        %1281 = vmatprep.mubr.bf16.mxu0 %v579
        %1282 = vmatmul.mubr.bf16.gmra.mxu0 %v578
        %v1283 = vpop.f32.mrf.mxu0
        %v1284 = vadd.f32 %v677, %v1283
        %v1285 = vpop.f32.mrf.mxu0
        %v1286 = vadd.f32 %v681, %v1285
        %v1287 = vpop.f32.mrf.mxu0
        %v1288 = vadd.f32 %v677, %v1287
        %v1289 = vpop.f32.mrf.mxu0
        %v1290 = vadd.f32 %v681, %v1289
        %1291 = vmatprep.mubr.bf16.mxu0 %v581
        %1292 = vmatmul.mubr.bf16.gmra.mxu0 %v580
        %v1293 = vpop.f32.mrf.mxu0
        %v1294 = vadd.f32 %v677, %v1293
        %v1295 = vpop.f32.mrf.mxu0
        %v1296 = vadd.f32 %v681, %v1295
        %v1297 = vpop.f32.mrf.mxu0
        %v1298 = vadd.f32 %v677, %v1297
        %v1299 = vpop.f32.mrf.mxu0
        %v1300 = vadd.f32 %v681, %v1299
        %1301 = vmatprep.mubr.bf16.mxu0 %v583
        %1302 = vmatmul.mubr.bf16.gmra.mxu0 %v582
        %v1303 = vpop.f32.mrf.mxu0
        %v1304 = vadd.f32 %v677, %v1303
        %v1305 = vpop.f32.mrf.mxu0
        %v1306 = vadd.f32 %v681, %v1305
        %v1307 = vpop.f32.mrf.mxu0
        %v1308 = vadd.f32 %v677, %v1307
        %v1309 = vpop.f32.mrf.mxu0
        %v1310 = vadd.f32 %v681, %v1309
        %1311 = vmatprep.mubr.bf16.mxu0 %v585
        %1312 = vmatmul.mubr.bf16.gmra.mxu0 %v584
        %v1313 = vpop.f32.mrf.mxu0
        %v1314 = vadd.f32 %v677, %v1313
        %v1315 = vpop.f32.mrf.mxu0
        %v1316 = vadd.f32 %v681, %v1315
        %v1317 = vpop.f32.mrf.mxu0
        %v1318 = vadd.f32 %v677, %v1317
        %v1319 = vpop.f32.mrf.mxu0
        %v1320 = vadd.f32 %v681, %v1319
        %1321 = vmatprep.mubr.bf16.mxu0 %v587
        %1322 = vmatmul.mubr.bf16.gmra.mxu0 %v586
        %v1323 = vpop.f32.mrf.mxu0
        %v1324 = vadd.f32 %v677, %v1323
        %v1325 = vpop.f32.mrf.mxu0
        %v1326 = vadd.f32 %v681, %v1325
        %v1327 = vpop.f32.mrf.mxu0
        %v1328 = vadd.f32 %v677, %v1327
        %v1329 = vpop.f32.mrf.mxu0
        %v1330 = vadd.f32 %v681, %v1329
        %1331 = vmatprep.mubr.bf16.mxu0 %v589
        %1332 = vmatmul.mubr.bf16.gmra.mxu0 %v588
        %v1333 = vpop.f32.mrf.mxu0
        %v1334 = vadd.f32 %v677, %v1333
        %v1335 = vpop.f32.mrf.mxu0
        %v1336 = vadd.f32 %v681, %v1335
        %v1337 = vpop.f32.mrf.mxu0
        %v1338 = vadd.f32 %v677, %v1337
        %v1339 = vpop.f32.mrf.mxu0
        %v1340 = vadd.f32 %v681, %v1339
        %1341 = vmatprep.mubr.bf16.mxu0 %v591
        %1342 = vmatmul.mubr.bf16.gmra.mxu0 %v590
        %v1343 = vpop.f32.mrf.mxu0
        %v1344 = vadd.f32 %v677, %v1343
        %v1345 = vpop.f32.mrf.mxu0
        %v1346 = vadd.f32 %v681, %v1345
        %v1347 = vpop.f32.mrf.mxu0
        %v1348 = vadd.f32 %v677, %v1347
        %v1349 = vpop.f32.mrf.mxu0
        %v1350 = vadd.f32 %v681, %v1349
        %1351 = vmatprep.mubr.bf16.mxu0 %v593
        %1352 = vmatmul.mubr.bf16.gmra.mxu0 %v592
        %v1353 = vpop.f32.mrf.mxu0
        %v1354 = vadd.f32 %v677, %v1353
        %v1355 = vpop.f32.mrf.mxu0
        %v1356 = vadd.f32 %v681, %v1355
        %v1357 = vpop.f32.mrf.mxu0
        %v1358 = vadd.f32 %v677, %v1357
        %v1359 = vpop.f32.mrf.mxu0
        %v1360 = vadd.f32 %v681, %v1359
        %1361 = vmatprep.mubr.bf16.mxu0 %v595
        %1362 = vmatmul.mubr.bf16.gmra.mxu0 %v594
        %v1363 = vpop.f32.mrf.mxu0
        %v1364 = vadd.f32 %v677, %v1363
        %v1365 = vpop.f32.mrf.mxu0
        %v1366 = vadd.f32 %v681, %v1365
        %v1367 = vpop.f32.mrf.mxu0
        %v1368 = vadd.f32 %v677, %v1367
        %v1369 = vpop.f32.mrf.mxu0
        %v1370 = vadd.f32 %v681, %v1369
        %1371 = vmatprep.mubr.bf16.mxu0 %v597
        %1372 = vmatmul.mubr.bf16.gmra.mxu0 %v596
        %v1373 = vpop.f32.mrf.mxu0
        %v1374 = vadd.f32 %v677, %v1373
        %v1375 = vpop.f32.mrf.mxu0
        %v1376 = vadd.f32 %v681, %v1375
        %v1377 = vpop.f32.mrf.mxu0
        %v1378 = vadd.f32 %v677, %v1377
        %v1379 = vpop.f32.mrf.mxu0
        %v1380 = vadd.f32 %v681, %v1379
        %1381 = vmatprep.mubr.bf16.mxu0 %v599
        %1382 = vmatmul.mubr.bf16.gmra.mxu0 %v598
        %v1383 = vpop.f32.mrf.mxu0
        %v1384 = vadd.f32 %v677, %v1383
        %v1385 = vpop.f32.mrf.mxu0
        %v1386 = vadd.f32 %v681, %v1385
        %v1387 = vpop.f32.mrf.mxu0
        %v1388 = vadd.f32 %v677, %v1387
        %v1389 = vpop.f32.mrf.mxu0
        %v1390 = vadd.f32 %v681, %v1389
        %1391 = vdwg.mxu0
        %v1392 = vmax.f32 %v1041, 0.0
        %v1393 = vmax.f32 %v1043, 0.0
        %v1394 = vmax.f32 %v1234, 0.0
        %v1395 = vmax.f32 %v1236, 0.0
        %v1396 = vmax.f32 %v1045, 0.0
        %v1397 = vmax.f32 %v1047, 0.0
        %v1398 = vmax.f32 %v1238, 0.0
        %v1399 = vmax.f32 %v1240, 0.0
        %v1400 = vmax.f32 %v1051, 0.0
        %v1401 = vmax.f32 %v1053, 0.0
        %v1402 = vmax.f32 %v1244, 0.0
        %v1403 = vmax.f32 %v1246, 0.0
        %v1404 = vmax.f32 %v1055, 0.0
        %v1405 = vmax.f32 %v1057, 0.0
        %v1406 = vmax.f32 %v1248, 0.0
        %v1407 = vmax.f32 %v1250, 0.0
        %v1408 = vmax.f32 %v1061, 0.0
        %v1409 = vmax.f32 %v1063, 0.0
        %v1410 = vmax.f32 %v1254, 0.0
        %v1411 = vmax.f32 %v1256, 0.0
        %v1412 = vmax.f32 %v1065, 0.0
        %v1413 = vmax.f32 %v1067, 0.0
        %v1414 = vmax.f32 %v1258, 0.0
        %v1415 = vmax.f32 %v1260, 0.0
        %v1416 = vmax.f32 %v1071, 0.0
        %v1417 = vmax.f32 %v1073, 0.0
        %v1418 = vmax.f32 %v1264, 0.0
        %v1419 = vmax.f32 %v1266, 0.0
        %v1420 = vmax.f32 %v1075, 0.0
        %v1421 = vmax.f32 %v1077, 0.0
        %v1422 = vmax.f32 %v1268, 0.0
        %v1423 = vmax.f32 %v1270, 0.0
        %v1424 = vmax.f32 %v1081, 0.0
        %v1425 = vmax.f32 %v1083, 0.0
        %v1426 = vmax.f32 %v1274, 0.0
        %v1427 = vmax.f32 %v1276, 0.0
        %v1428 = vmax.f32 %v1085, 0.0
        %v1429 = vmax.f32 %v1087, 0.0
        %v1430 = vmax.f32 %v1278, 0.0
        %v1431 = vmax.f32 %v1280, 0.0
        %v1432 = vmax.f32 %v1091, 0.0
        %v1433 = vmax.f32 %v1093, 0.0
        %v1434 = vmax.f32 %v1284, 0.0
        %v1435 = vmax.f32 %v1286, 0.0
        %v1436 = vmax.f32 %v1095, 0.0
        %v1437 = vmax.f32 %v1097, 0.0
        %v1438 = vmax.f32 %v1288, 0.0
        %v1439 = vmax.f32 %v1290, 0.0
        %v1440 = vmax.f32 %v1101, 0.0
        %v1441 = vmax.f32 %v1103, 0.0
        %v1442 = vmax.f32 %v1294, 0.0
        %v1443 = vmax.f32 %v1296, 0.0
        %v1444 = vmax.f32 %v1105, 0.0
        %v1445 = vmax.f32 %v1107, 0.0
        %v1446 = vmax.f32 %v1298, 0.0
        %v1447 = vmax.f32 %v1300, 0.0
        %v1448 = vmax.f32 %v1111, 0.0
        %v1449 = vmax.f32 %v1113, 0.0
        %v1450 = vmax.f32 %v1304, 0.0
        %v1451 = vmax.f32 %v1306, 0.0
        %v1452 = vmax.f32 %v1115, 0.0
        %v1453 = vmax.f32 %v1117, 0.0
        %v1454 = vmax.f32 %v1308, 0.0
        %v1455 = vmax.f32 %v1310, 0.0
        %v1456 = vmax.f32 %v1121, 0.0
        %v1457 = vmax.f32 %v1123, 0.0
        %v1458 = vmax.f32 %v1314, 0.0
        %v1459 = vmax.f32 %v1316, 0.0
        %v1460 = vmax.f32 %v1125, 0.0
        %v1461 = vmax.f32 %v1127, 0.0
        %v1462 = vmax.f32 %v1318, 0.0
        %v1463 = vmax.f32 %v1320, 0.0
        %v1464 = vmax.f32 %v1131, 0.0
        %v1465 = vmax.f32 %v1133, 0.0
        %v1466 = vmax.f32 %v1324, 0.0
        %v1467 = vmax.f32 %v1326, 0.0
        %v1468 = vmax.f32 %v1135, 0.0
        %v1469 = vmax.f32 %v1137, 0.0
        %v1470 = vmax.f32 %v1328, 0.0
        %v1471 = vmax.f32 %v1330, 0.0
        %v1472 = vmax.f32 %v1141, 0.0
        %v1473 = vmax.f32 %v1143, 0.0
        %v1474 = vmax.f32 %v1334, 0.0
        %v1475 = vmax.f32 %v1336, 0.0
        %v1476 = vmax.f32 %v1145, 0.0
        %v1477 = vmax.f32 %v1147, 0.0
        %v1478 = vmax.f32 %v1338, 0.0
        %v1479 = vmax.f32 %v1340, 0.0
        %v1480 = vmax.f32 %v1151, 0.0
        %v1481 = vmax.f32 %v1153, 0.0
        %v1482 = vmax.f32 %v1344, 0.0
        %v1483 = vmax.f32 %v1346, 0.0
        %v1484 = vmax.f32 %v1155, 0.0
        %v1485 = vmax.f32 %v1157, 0.0
        %v1486 = vmax.f32 %v1348, 0.0
        %v1487 = vmax.f32 %v1350, 0.0
        %v1488 = vmax.f32 %v1161, 0.0
        %v1489 = vmax.f32 %v1163, 0.0
        %v1490 = vmax.f32 %v1354, 0.0
        %v1491 = vmax.f32 %v1356, 0.0
        %v1492 = vmax.f32 %v1165, 0.0
        %v1493 = vmax.f32 %v1167, 0.0
        %v1494 = vmax.f32 %v1358, 0.0
        %v1495 = vmax.f32 %v1360, 0.0
        %v1496 = vmax.f32 %v1171, 0.0
        %v1497 = vmax.f32 %v1173, 0.0
        %v1498 = vmax.f32 %v1364, 0.0
        %v1499 = vmax.f32 %v1366, 0.0
        %v1500 = vmax.f32 %v1175, 0.0
        %v1501 = vmax.f32 %v1177, 0.0
        %v1502 = vmax.f32 %v1368, 0.0
        %v1503 = vmax.f32 %v1370, 0.0
        %v1504 = vmax.f32 %v1181, 0.0
        %v1505 = vmax.f32 %v1183, 0.0
        %v1506 = vmax.f32 %v1374, 0.0
        %v1507 = vmax.f32 %v1376, 0.0
        %v1508 = vmax.f32 %v1185, 0.0
        %v1509 = vmax.f32 %v1187, 0.0
        %v1510 = vmax.f32 %v1378, 0.0
        %v1511 = vmax.f32 %v1380, 0.0
        %v1512 = vmax.f32 %v1191, 0.0
        %v1513 = vmax.f32 %v1193, 0.0
        %v1514 = vmax.f32 %v1384, 0.0
        %v1515 = vmax.f32 %v1386, 0.0
        %v1516 = vmax.f32 %v1195, 0.0
        %v1517 = vmax.f32 %v1197, 0.0
        %v1518 = vmax.f32 %v1388, 0.0
        %v1519 = vmax.f32 %v1390, 0.0
        %v1520 = vlaneseq
        %v1521 = vshrl.u32 %v1520, 7
        %v1522 = vadd.s32 %v1521, 8
        %v1523 = vadd.s32 %v1521, 16
        %v1524 = vadd.s32 %v1521, 24
        %v1525 = vadd.s32 %v1521, 32
        %v1526 = vadd.s32 %v1521, 40
        %v1527 = vadd.s32 %v1521, 48
        %v1528 = vadd.s32 %v1521, 56
        %v1529 = vadd.s32 %v1521, 64
        %v1530 = vadd.s32 %v1521, 72
        %v1531 = vadd.s32 %v1521, 80
        %v1532 = vadd.s32 %v1521, 88
        %v1533 = vadd.s32 %v1521, 96
        %v1534 = vadd.s32 %v1521, 104
        %v1535 = vadd.s32 %v1521, 112
        %v1536 = vadd.s32 %v1521, 120
        %v1537 = vadd.s32 %v1521, 128
        %v1538 = vadd.s32 %v1521, 136
        %v1539 = vadd.s32 %v1521, 144
        %v1540 = vadd.s32 %v1521, 152
        %v1541 = vadd.s32 %v1521, 160
        %v1542 = vadd.s32 %v1521, 168
        %v1543 = vadd.s32 %v1521, 176
        %v1544 = vadd.s32 %v1521, 184
        %v1545 = vadd.s32 %v1521, 192
        %v1546 = vadd.s32 %v1521, 200
        %v1547 = vadd.s32 %v1521, 208
        %v1548 = vadd.s32 %v1521, 216
        %v1549 = vadd.s32 %v1521, 224
        %v1550 = vadd.s32 %v1521, 232
        %v1551 = vadd.s32 %v1521, 240
        %v1552 = vadd.s32 %v1521, 248
        %s1553 = smul.u32 %s35, 2
        %s1554 = sadd.s32 %s1553, %s36
        %s1555 = smul.u32 %s1554, 256
        %v1556 = vstv %s1555
        %v1557 = vadd.s32 %v1521, %v1556
        %v1558 = vadd.s32 %v1522, %v1556
        %v1559 = vadd.s32 %v1523, %v1556
        %v1560 = vadd.s32 %v1524, %v1556
        %v1561 = vadd.s32 %v1525, %v1556
        %v1562 = vadd.s32 %v1526, %v1556
        %v1563 = vadd.s32 %v1527, %v1556
        %v1564 = vadd.s32 %v1528, %v1556
        %v1565 = vadd.s32 %v1529, %v1556
        %v1566 = vadd.s32 %v1530, %v1556
        %v1567 = vadd.s32 %v1531, %v1556
        %v1568 = vadd.s32 %v1532, %v1556
        %v1569 = vadd.s32 %v1533, %v1556
        %v1570 = vadd.s32 %v1534, %v1556
        %v1571 = vadd.s32 %v1535, %v1556
        %v1572 = vadd.s32 %v1536, %v1556
        %v1573 = vadd.s32 %v1537, %v1556
        %v1574 = vadd.s32 %v1538, %v1556
        %v1575 = vadd.s32 %v1539, %v1556
        %v1576 = vadd.s32 %v1540, %v1556
        %v1577 = vadd.s32 %v1541, %v1556
        %v1578 = vadd.s32 %v1542, %v1556
        %v1579 = vadd.s32 %v1543, %v1556
        %v1580 = vadd.s32 %v1544, %v1556
        %v1581 = vadd.s32 %v1545, %v1556
        %v1582 = vadd.s32 %v1546, %v1556
        %v1583 = vadd.s32 %v1547, %v1556
        %v1584 = vadd.s32 %v1548, %v1556
        %v1585 = vadd.s32 %v1549, %v1556
        %v1586 = vadd.s32 %v1550, %v1556
        %v1587 = vadd.s32 %v1551, %v1556
        %v1588 = vadd.s32 %v1552, %v1556
        %vm1589 = vcmp.lt.s32.totalorder %v1557, 700
        %vm1590 = vcmp.lt.s32.totalorder %v1558, 700
        %vm1591 = vcmp.lt.s32.totalorder %v1559, 700
        %vm1592 = vcmp.lt.s32.totalorder %v1560, 700
        %vm1593 = vcmp.lt.s32.totalorder %v1561, 700
        %vm1594 = vcmp.lt.s32.totalorder %v1562, 700
        %vm1595 = vcmp.lt.s32.totalorder %v1563, 700
        %vm1596 = vcmp.lt.s32.totalorder %v1564, 700
        %vm1597 = vcmp.lt.s32.totalorder %v1565, 700
        %vm1598 = vcmp.lt.s32.totalorder %v1566, 700
        %vm1599 = vcmp.lt.s32.totalorder %v1567, 700
        %vm1600 = vcmp.lt.s32.totalorder %v1568, 700
        %vm1601 = vcmp.lt.s32.totalorder %v1569, 700
        %vm1602 = vcmp.lt.s32.totalorder %v1570, 700
        %vm1603 = vcmp.lt.s32.totalorder %v1571, 700
        %vm1604 = vcmp.lt.s32.totalorder %v1572, 700
        %vm1605 = vcmp.lt.s32.totalorder %v1573, 700
        %vm1606 = vcmp.lt.s32.totalorder %v1574, 700
        %vm1607 = vcmp.lt.s32.totalorder %v1575, 700
        %vm1608 = vcmp.lt.s32.totalorder %v1576, 700
        %vm1609 = vcmp.lt.s32.totalorder %v1577, 700
        %vm1610 = vcmp.lt.s32.totalorder %v1578, 700
        %vm1611 = vcmp.lt.s32.totalorder %v1579, 700
        %vm1612 = vcmp.lt.s32.totalorder %v1580, 700
        %vm1613 = vcmp.lt.s32.totalorder %v1581, 700
        %vm1614 = vcmp.lt.s32.totalorder %v1582, 700
        %vm1615 = vcmp.lt.s32.totalorder %v1583, 700
        %vm1616 = vcmp.lt.s32.totalorder %v1584, 700
        %vm1617 = vcmp.lt.s32.totalorder %v1585, 700
        %vm1618 = vcmp.lt.s32.totalorder %v1586, 700
        %vm1619 = vcmp.lt.s32.totalorder %v1587, 700
        %vm1620 = vcmp.lt.s32.totalorder %v1588, 700
        %v1621 = vsel %vm1589, 1, 0
        %v1622 = vsel %vm1590, 1, 0
        %v1623 = vsel %vm1591, 1, 0
        %v1624 = vsel %vm1592, 1, 0
        %v1625 = vsel %vm1593, 1, 0
        %v1626 = vsel %vm1594, 1, 0
        %v1627 = vsel %vm1595, 1, 0
        %v1628 = vsel %vm1596, 1, 0
        %v1629 = vsel %vm1597, 1, 0
        %v1630 = vsel %vm1598, 1, 0
        %v1631 = vsel %vm1599, 1, 0
        %v1632 = vsel %vm1600, 1, 0
        %v1633 = vsel %vm1601, 1, 0
        %v1634 = vsel %vm1602, 1, 0
        %v1635 = vsel %vm1603, 1, 0
        %v1636 = vsel %vm1604, 1, 0
        %v1637 = vsel %vm1605, 1, 0
        %v1638 = vsel %vm1606, 1, 0
        %v1639 = vsel %vm1607, 1, 0
        %v1640 = vsel %vm1608, 1, 0
        %v1641 = vsel %vm1609, 1, 0
        %v1642 = vsel %vm1610, 1, 0
        %v1643 = vsel %vm1611, 1, 0
        %v1644 = vsel %vm1612, 1, 0
        %v1645 = vsel %vm1613, 1, 0
        %v1646 = vsel %vm1614, 1, 0
        %v1647 = vsel %vm1615, 1, 0
        %v1648 = vsel %vm1616, 1, 0
        %v1649 = vsel %vm1617, 1, 0
        %v1650 = vsel %vm1618, 1, 0
        %v1651 = vsel %vm1619, 1, 0
        %v1652 = vsel %vm1620, 1, 0
        %vm1653 = vcmp.eq.s32.totalorder %v1621, 1
        %vm1654 = vcmp.eq.s32.totalorder %v1622, 1
        %vm1655 = vcmp.eq.s32.totalorder %v1623, 1
        %vm1656 = vcmp.eq.s32.totalorder %v1624, 1
        %vm1657 = vcmp.eq.s32.totalorder %v1625, 1
        %vm1658 = vcmp.eq.s32.totalorder %v1626, 1
        %vm1659 = vcmp.eq.s32.totalorder %v1627, 1
        %vm1660 = vcmp.eq.s32.totalorder %v1628, 1
        %vm1661 = vcmp.eq.s32.totalorder %v1629, 1
        %vm1662 = vcmp.eq.s32.totalorder %v1630, 1
        %vm1663 = vcmp.eq.s32.totalorder %v1631, 1
        %vm1664 = vcmp.eq.s32.totalorder %v1632, 1
        %vm1665 = vcmp.eq.s32.totalorder %v1633, 1
        %vm1666 = vcmp.eq.s32.totalorder %v1634, 1
        %vm1667 = vcmp.eq.s32.totalorder %v1635, 1
        %vm1668 = vcmp.eq.s32.totalorder %v1636, 1
        %vm1669 = vcmp.eq.s32.totalorder %v1637, 1
        %vm1670 = vcmp.eq.s32.totalorder %v1638, 1
        %vm1671 = vcmp.eq.s32.totalorder %v1639, 1
        %vm1672 = vcmp.eq.s32.totalorder %v1640, 1
        %vm1673 = vcmp.eq.s32.totalorder %v1641, 1
        %vm1674 = vcmp.eq.s32.totalorder %v1642, 1
        %vm1675 = vcmp.eq.s32.totalorder %v1643, 1
        %vm1676 = vcmp.eq.s32.totalorder %v1644, 1
        %vm1677 = vcmp.eq.s32.totalorder %v1645, 1
        %vm1678 = vcmp.eq.s32.totalorder %v1646, 1
        %vm1679 = vcmp.eq.s32.totalorder %v1647, 1
        %vm1680 = vcmp.eq.s32.totalorder %v1648, 1
        %vm1681 = vcmp.eq.s32.totalorder %v1649, 1
        %vm1682 = vcmp.eq.s32.totalorder %v1650, 1
        %vm1683 = vcmp.eq.s32.totalorder %v1651, 1
        %vm1684 = vcmp.eq.s32.totalorder %v1652, 1
        %v1685 = vsel %vm1653, %v1392, 0.0
        %v1686 = vsel %vm1653, %v1393, 0.0
        %v1687 = vsel %vm1653, %v1394, 0.0
        %v1688 = vsel %vm1653, %v1395, 0.0
        %v1689 = vsel %vm1654, %v1396, 0.0
        %v1690 = vsel %vm1654, %v1397, 0.0
        %v1691 = vsel %vm1654, %v1398, 0.0
        %v1692 = vsel %vm1654, %v1399, 0.0
        %v1693 = vsel %vm1655, %v1400, 0.0
        %v1694 = vsel %vm1655, %v1401, 0.0
        %v1695 = vsel %vm1655, %v1402, 0.0
        %v1696 = vsel %vm1655, %v1403, 0.0
        %v1697 = vsel %vm1656, %v1404, 0.0
        %v1698 = vsel %vm1656, %v1405, 0.0
        %v1699 = vsel %vm1656, %v1406, 0.0
        %v1700 = vsel %vm1656, %v1407, 0.0
        %v1701 = vsel %vm1657, %v1408, 0.0
        %v1702 = vsel %vm1657, %v1409, 0.0
        %v1703 = vsel %vm1657, %v1410, 0.0
        %v1704 = vsel %vm1657, %v1411, 0.0
        %v1705 = vsel %vm1658, %v1412, 0.0
        %v1706 = vsel %vm1658, %v1413, 0.0
        %v1707 = vsel %vm1658, %v1414, 0.0
        %v1708 = vsel %vm1658, %v1415, 0.0
        %v1709 = vsel %vm1659, %v1416, 0.0
        %v1710 = vsel %vm1659, %v1417, 0.0
        %v1711 = vsel %vm1659, %v1418, 0.0
        %v1712 = vsel %vm1659, %v1419, 0.0
        %v1713 = vsel %vm1660, %v1420, 0.0
        %v1714 = vsel %vm1660, %v1421, 0.0
        %v1715 = vsel %vm1660, %v1422, 0.0
        %v1716 = vsel %vm1660, %v1423, 0.0
        %v1717 = vsel %vm1661, %v1424, 0.0
        %v1718 = vsel %vm1661, %v1425, 0.0
        %v1719 = vsel %vm1661, %v1426, 0.0
        %v1720 = vsel %vm1661, %v1427, 0.0
        %v1721 = vsel %vm1662, %v1428, 0.0
        %v1722 = vsel %vm1662, %v1429, 0.0
        %v1723 = vsel %vm1662, %v1430, 0.0
        %v1724 = vsel %vm1662, %v1431, 0.0
        %v1725 = vsel %vm1663, %v1432, 0.0
        %v1726 = vsel %vm1663, %v1433, 0.0
        %v1727 = vsel %vm1663, %v1434, 0.0
        %v1728 = vsel %vm1663, %v1435, 0.0
        %v1729 = vsel %vm1664, %v1436, 0.0
        %v1730 = vsel %vm1664, %v1437, 0.0
        %v1731 = vsel %vm1664, %v1438, 0.0
        %v1732 = vsel %vm1664, %v1439, 0.0
        %v1733 = vsel %vm1665, %v1440, 0.0
        %v1734 = vsel %vm1665, %v1441, 0.0
        %v1735 = vsel %vm1665, %v1442, 0.0
        %v1736 = vsel %vm1665, %v1443, 0.0
        %v1737 = vsel %vm1666, %v1444, 0.0
        %v1738 = vsel %vm1666, %v1445, 0.0
        %v1739 = vsel %vm1666, %v1446, 0.0
        %v1740 = vsel %vm1666, %v1447, 0.0
        %v1741 = vsel %vm1667, %v1448, 0.0
        %v1742 = vsel %vm1667, %v1449, 0.0
        %v1743 = vsel %vm1667, %v1450, 0.0
        %v1744 = vsel %vm1667, %v1451, 0.0
        %v1745 = vsel %vm1668, %v1452, 0.0
        %v1746 = vsel %vm1668, %v1453, 0.0
        %v1747 = vsel %vm1668, %v1454, 0.0
        %v1748 = vsel %vm1668, %v1455, 0.0
        %v1749 = vsel %vm1669, %v1456, 0.0
        %v1750 = vsel %vm1669, %v1457, 0.0
        %v1751 = vsel %vm1669, %v1458, 0.0
        %v1752 = vsel %vm1669, %v1459, 0.0
        %v1753 = vsel %vm1670, %v1460, 0.0
        %v1754 = vsel %vm1670, %v1461, 0.0
        %v1755 = vsel %vm1670, %v1462, 0.0
        %v1756 = vsel %vm1670, %v1463, 0.0
        %v1757 = vsel %vm1671, %v1464, 0.0
        %v1758 = vsel %vm1671, %v1465, 0.0
        %v1759 = vsel %vm1671, %v1466, 0.0
        %v1760 = vsel %vm1671, %v1467, 0.0
        %v1761 = vsel %vm1672, %v1468, 0.0
        %v1762 = vsel %vm1672, %v1469, 0.0
        %v1763 = vsel %vm1672, %v1470, 0.0
        %v1764 = vsel %vm1672, %v1471, 0.0
        %v1765 = vsel %vm1673, %v1472, 0.0
        %v1766 = vsel %vm1673, %v1473, 0.0
        %v1767 = vsel %vm1673, %v1474, 0.0
        %v1768 = vsel %vm1673, %v1475, 0.0
        %v1769 = vsel %vm1674, %v1476, 0.0
        %v1770 = vsel %vm1674, %v1477, 0.0
        %v1771 = vsel %vm1674, %v1478, 0.0
        %v1772 = vsel %vm1674, %v1479, 0.0
        %v1773 = vsel %vm1675, %v1480, 0.0
        %v1774 = vsel %vm1675, %v1481, 0.0
        %v1775 = vsel %vm1675, %v1482, 0.0
        %v1776 = vsel %vm1675, %v1483, 0.0
        %v1777 = vsel %vm1676, %v1484, 0.0
        %v1778 = vsel %vm1676, %v1485, 0.0
        %v1779 = vsel %vm1676, %v1486, 0.0
        %v1780 = vsel %vm1676, %v1487, 0.0
        %v1781 = vsel %vm1677, %v1488, 0.0
        %v1782 = vsel %vm1677, %v1489, 0.0
        %v1783 = vsel %vm1677, %v1490, 0.0
        %v1784 = vsel %vm1677, %v1491, 0.0
        %v1785 = vsel %vm1678, %v1492, 0.0
        %v1786 = vsel %vm1678, %v1493, 0.0
        %v1787 = vsel %vm1678, %v1494, 0.0
        %v1788 = vsel %vm1678, %v1495, 0.0
        %v1789 = vsel %vm1679, %v1496, 0.0
        %v1790 = vsel %vm1679, %v1497, 0.0
        %v1791 = vsel %vm1679, %v1498, 0.0
        %v1792 = vsel %vm1679, %v1499, 0.0
        %v1793 = vsel %vm1680, %v1500, 0.0
        %v1794 = vsel %vm1680, %v1501, 0.0
        %v1795 = vsel %vm1680, %v1502, 0.0
        %v1796 = vsel %vm1680, %v1503, 0.0
        %v1797 = vsel %vm1681, %v1504, 0.0
        %v1798 = vsel %vm1681, %v1505, 0.0
        %v1799 = vsel %vm1681, %v1506, 0.0
        %v1800 = vsel %vm1681, %v1507, 0.0
        %v1801 = vsel %vm1682, %v1508, 0.0
        %v1802 = vsel %vm1682, %v1509, 0.0
        %v1803 = vsel %vm1682, %v1510, 0.0
        %v1804 = vsel %vm1682, %v1511, 0.0
        %v1805 = vsel %vm1683, %v1512, 0.0
        %v1806 = vsel %vm1683, %v1513, 0.0
        %v1807 = vsel %vm1683, %v1514, 0.0
        %v1808 = vsel %vm1683, %v1515, 0.0
        %v1809 = vsel %vm1684, %v1516, 0.0
        %v1810 = vsel %vm1684, %v1517, 0.0
        %v1811 = vsel %vm1684, %v1518, 0.0
        %v1812 = vsel %vm1684, %v1519, 0.0
        %v1813 = vpack.c.bf16 %v1689, %v1685
        %v1814 = vpack.c.bf16 %v1690, %v1686
        %v1815 = vpack.c.bf16 %v1691, %v1687
        %v1816 = vpack.c.bf16 %v1692, %v1688
        %v1817 = vpack.c.bf16 %v1697, %v1693
        %v1818 = vpack.c.bf16 %v1698, %v1694
        %v1819 = vpack.c.bf16 %v1699, %v1695
        %v1820 = vpack.c.bf16 %v1700, %v1696
        %v1821 = vpack.c.bf16 %v1705, %v1701
        %v1822 = vpack.c.bf16 %v1706, %v1702
        %v1823 = vpack.c.bf16 %v1707, %v1703
        %v1824 = vpack.c.bf16 %v1708, %v1704
        %v1825 = vpack.c.bf16 %v1713, %v1709
        %v1826 = vpack.c.bf16 %v1714, %v1710
        %v1827 = vpack.c.bf16 %v1715, %v1711
        %v1828 = vpack.c.bf16 %v1716, %v1712
        %v1829 = vpack.c.bf16 %v1721, %v1717
        %v1830 = vpack.c.bf16 %v1722, %v1718
        %v1831 = vpack.c.bf16 %v1723, %v1719
        %v1832 = vpack.c.bf16 %v1724, %v1720
        %v1833 = vpack.c.bf16 %v1729, %v1725
        %v1834 = vpack.c.bf16 %v1730, %v1726
        %v1835 = vpack.c.bf16 %v1731, %v1727
        %v1836 = vpack.c.bf16 %v1732, %v1728
        %v1837 = vpack.c.bf16 %v1737, %v1733
        %v1838 = vpack.c.bf16 %v1738, %v1734
        %v1839 = vpack.c.bf16 %v1739, %v1735
        %v1840 = vpack.c.bf16 %v1740, %v1736
        %v1841 = vpack.c.bf16 %v1745, %v1741
        %v1842 = vpack.c.bf16 %v1746, %v1742
        %v1843 = vpack.c.bf16 %v1747, %v1743
        %v1844 = vpack.c.bf16 %v1748, %v1744
        %v1845 = vpack.c.bf16 %v1753, %v1749
        %v1846 = vpack.c.bf16 %v1754, %v1750
        %v1847 = vpack.c.bf16 %v1755, %v1751
        %v1848 = vpack.c.bf16 %v1756, %v1752
        %v1849 = vpack.c.bf16 %v1761, %v1757
        %v1850 = vpack.c.bf16 %v1762, %v1758
        %v1851 = vpack.c.bf16 %v1763, %v1759
        %v1852 = vpack.c.bf16 %v1764, %v1760
        %v1853 = vpack.c.bf16 %v1769, %v1765
        %v1854 = vpack.c.bf16 %v1770, %v1766
        %v1855 = vpack.c.bf16 %v1771, %v1767
        %v1856 = vpack.c.bf16 %v1772, %v1768
        %v1857 = vpack.c.bf16 %v1777, %v1773
        %v1858 = vpack.c.bf16 %v1778, %v1774
        %v1859 = vpack.c.bf16 %v1779, %v1775
        %v1860 = vpack.c.bf16 %v1780, %v1776
        %v1861 = vpack.c.bf16 %v1785, %v1781
        %v1862 = vpack.c.bf16 %v1786, %v1782
        %v1863 = vpack.c.bf16 %v1787, %v1783
        %v1864 = vpack.c.bf16 %v1788, %v1784
        %v1865 = vpack.c.bf16 %v1793, %v1789
        %v1866 = vpack.c.bf16 %v1794, %v1790
        %v1867 = vpack.c.bf16 %v1795, %v1791
        %v1868 = vpack.c.bf16 %v1796, %v1792
        %v1869 = vpack.c.bf16 %v1801, %v1797
        %v1870 = vpack.c.bf16 %v1802, %v1798
        %v1871 = vpack.c.bf16 %v1803, %v1799
        %v1872 = vpack.c.bf16 %v1804, %v1800
        %v1873 = vpack.c.bf16 %v1809, %v1805
        %v1874 = vpack.c.bf16 %v1810, %v1806
        %v1875 = vpack.c.bf16 %v1811, %v1807
        %v1876 = vpack.c.bf16 %v1812, %v1808
        %v1877 = vld [vmem:[#allocation8] sm:$0xff]
        %v1878 = vld [vmem:[#allocation8 + $0x8] sm:$0xff]
        %v1879 = vld [vmem:[#allocation8 + $0x10] sm:$0xff]
        %v1880 = vld [vmem:[#allocation8 + $0x18] sm:$0xff]
        %v1881 = vld [vmem:[#allocation8 + $0x20] sm:$0xff]
        %v1882 = vld [vmem:[#allocation8 + $0x28] sm:$0xff]
        %v1883 = vld [vmem:[#allocation8 + $0x30] sm:$0xff]
        %v1884 = vld [vmem:[#allocation8 + $0x38] sm:$0xff]
        %v1885 = vld [vmem:[#allocation8 + $0x40] sm:$0xff]
        %v1886 = vld [vmem:[#allocation8 + $0x48] sm:$0xff]
        %v1887 = vld [vmem:[#allocation8 + $0x50] sm:$0xff]
        %v1888 = vld [vmem:[#allocation8 + $0x58] sm:$0xff]
        %v1889 = vld [vmem:[#allocation8 + $0x60] sm:$0xff]
        %v1890 = vld [vmem:[#allocation8 + $0x68] sm:$0xff]
        %v1891 = vld [vmem:[#allocation8 + $0x70] sm:$0xff]
        %v1892 = vld [vmem:[#allocation8 + $0x78] sm:$0xff]
        %v1893 = vld [vmem:[#allocation8 + $0x80] sm:$0xff]
        %v1894 = vld [vmem:[#allocation8 + $0x88] sm:$0xff]
        %v1895 = vld [vmem:[#allocation8 + $0x90] sm:$0xff]
        %v1896 = vld [vmem:[#allocation8 + $0x98] sm:$0xff]
        %v1897 = vld [vmem:[#allocation8 + $0xa0] sm:$0xff]
        %v1898 = vld [vmem:[#allocation8 + $0xa8] sm:$0xff]
        %v1899 = vld [vmem:[#allocation8 + $0xb0] sm:$0xff]
        %v1900 = vld [vmem:[#allocation8 + $0xb8] sm:$0xff]
        %v1901 = vld [vmem:[#allocation8 + $0xc0] sm:$0xff]
        %v1902 = vld [vmem:[#allocation8 + $0xc8] sm:$0xff]
        %v1903 = vld [vmem:[#allocation8 + $0xd0] sm:$0xff]
        %v1904 = vld [vmem:[#allocation8 + $0xd8] sm:$0xff]
        %v1905 = vld [vmem:[#allocation8 + $0xe0] sm:$0xff]
        %v1906 = vld [vmem:[#allocation8 + $0xe8] sm:$0xff]
        %v1907 = vld [vmem:[#allocation8 + $0xf0] sm:$0xff]
        %v1908 = vld [vmem:[#allocation8 + $0xf8] sm:$0xff]
        %v1909 = vld [vmem:[#allocation8 + $0x100] sm:$0xff]
        %v1910 = vld [vmem:[#allocation8 + $0x108] sm:$0xff]
        %v1911 = vld [vmem:[#allocation8 + $0x110] sm:$0xff]
        %v1912 = vld [vmem:[#allocation8 + $0x118] sm:$0xff]
        %v1913 = vld [vmem:[#allocation8 + $0x120] sm:$0xff]
        %v1914 = vld [vmem:[#allocation8 + $0x128] sm:$0xff]
        %v1915 = vld [vmem:[#allocation8 + $0x130] sm:$0xff]
        %v1916 = vld [vmem:[#allocation8 + $0x138] sm:$0xff]
        %v1917 = vld [vmem:[#allocation8 + $0x140] sm:$0xff]
        %v1918 = vld [vmem:[#allocation8 + $0x148] sm:$0xff]
        %v1919 = vld [vmem:[#allocation8 + $0x150] sm:$0xff]
        %v1920 = vld [vmem:[#allocation8 + $0x158] sm:$0xff]
        %v1921 = vld [vmem:[#allocation8 + $0x160] sm:$0xff]
        %v1922 = vld [vmem:[#allocation8 + $0x168] sm:$0xff]
        %v1923 = vld [vmem:[#allocation8 + $0x170] sm:$0xff]
        %v1924 = vld [vmem:[#allocation8 + $0x178] sm:$0xff]
        %v1925 = vld [vmem:[#allocation8 + $0x180] sm:$0xff]
        %v1926 = vld [vmem:[#allocation8 + $0x188] sm:$0xff]
        %v1927 = vld [vmem:[#allocation8 + $0x190] sm:$0xff]
        %v1928 = vld [vmem:[#allocation8 + $0x198] sm:$0xff]
        %v1929 = vld [vmem:[#allocation8 + $0x1a0] sm:$0xff]
        %v1930 = vld [vmem:[#allocation8 + $0x1a8] sm:$0xff]
        %v1931 = vld [vmem:[#allocation8 + $0x1b0] sm:$0xff]
        %v1932 = vld [vmem:[#allocation8 + $0x1b8] sm:$0xff]
        %v1933 = vld [vmem:[#allocation8 + $0x1c0] sm:$0xff]
        %v1934 = vld [vmem:[#allocation8 + $0x1c8] sm:$0xff]
        %v1935 = vld [vmem:[#allocation8 + $0x1d0] sm:$0xff]
        %v1936 = vld [vmem:[#allocation8 + $0x1d8] sm:$0xff]
        %v1937 = vld [vmem:[#allocation8 + $0x1e0] sm:$0xff]
        %v1938 = vld [vmem:[#allocation8 + $0x1e8] sm:$0xff]
        %v1939 = vld [vmem:[#allocation8 + $0x1f0] sm:$0xff]
        %v1940 = vld [vmem:[#allocation8 + $0x1f8] sm:$0xff]
        %v1941 = vld [vmem:[#allocation8 + $0x200] sm:$0xff]
        %v1942 = vld [vmem:[#allocation8 + $0x208] sm:$0xff]
        %v1943 = vld [vmem:[#allocation8 + $0x210] sm:$0xff]
        %v1944 = vld [vmem:[#allocation8 + $0x218] sm:$0xff]
        %v1945 = vld [vmem:[#allocation8 + $0x220] sm:$0xff]
        %v1946 = vld [vmem:[#allocation8 + $0x228] sm:$0xff]
        %v1947 = vld [vmem:[#allocation8 + $0x230] sm:$0xff]
        %v1948 = vld [vmem:[#allocation8 + $0x238] sm:$0xff]
        %v1949 = vld [vmem:[#allocation8 + $0x240] sm:$0xff]
        %v1950 = vld [vmem:[#allocation8 + $0x248] sm:$0xff]
        %v1951 = vld [vmem:[#allocation8 + $0x250] sm:$0xff]
        %v1952 = vld [vmem:[#allocation8 + $0x258] sm:$0xff]
        %v1953 = vld [vmem:[#allocation8 + $0x260] sm:$0xff]
        %v1954 = vld [vmem:[#allocation8 + $0x268] sm:$0xff]
        %v1955 = vld [vmem:[#allocation8 + $0x270] sm:$0xff]
        %v1956 = vld [vmem:[#allocation8 + $0x278] sm:$0xff]
        %v1957 = vld [vmem:[#allocation8 + $0x280] sm:$0xff]
        %v1958 = vld [vmem:[#allocation8 + $0x288] sm:$0xff]
        %v1959 = vld [vmem:[#allocation8 + $0x290] sm:$0xff]
        %v1960 = vld [vmem:[#allocation8 + $0x298] sm:$0xff]
        %v1961 = vld [vmem:[#allocation8 + $0x2a0] sm:$0xff]
        %v1962 = vld [vmem:[#allocation8 + $0x2a8] sm:$0xff]
        %v1963 = vld [vmem:[#allocation8 + $0x2b0] sm:$0xff]
        %v1964 = vld [vmem:[#allocation8 + $0x2b8] sm:$0xff]
        %v1965 = vld [vmem:[#allocation8 + $0x2c0] sm:$0xff]
        %v1966 = vld [vmem:[#allocation8 + $0x2c8] sm:$0xff]
        %v1967 = vld [vmem:[#allocation8 + $0x2d0] sm:$0xff]
        %v1968 = vld [vmem:[#allocation8 + $0x2d8] sm:$0xff]
        %v1969 = vld [vmem:[#allocation8 + $0x2e0] sm:$0xff]
        %v1970 = vld [vmem:[#allocation8 + $0x2e8] sm:$0xff]
        %v1971 = vld [vmem:[#allocation8 + $0x2f0] sm:$0xff]
        %v1972 = vld [vmem:[#allocation8 + $0x2f8] sm:$0xff]
        %v1973 = vld [vmem:[#allocation8 + $0x300] sm:$0xff]
        %v1974 = vld [vmem:[#allocation8 + $0x308] sm:$0xff]
        %v1975 = vld [vmem:[#allocation8 + $0x310] sm:$0xff]
        %v1976 = vld [vmem:[#allocation8 + $0x318] sm:$0xff]
        %v1977 = vld [vmem:[#allocation8 + $0x320] sm:$0xff]
        %v1978 = vld [vmem:[#allocation8 + $0x328] sm:$0xff]
        %v1979 = vld [vmem:[#allocation8 + $0x330] sm:$0xff]
        %v1980 = vld [vmem:[#allocation8 + $0x338] sm:$0xff]
        %v1981 = vld [vmem:[#allocation8 + $0x340] sm:$0xff]
        %v1982 = vld [vmem:[#allocation8 + $0x348] sm:$0xff]
        %v1983 = vld [vmem:[#allocation8 + $0x350] sm:$0xff]
        %v1984 = vld [vmem:[#allocation8 + $0x358] sm:$0xff]
        %v1985 = vld [vmem:[#allocation8 + $0x360] sm:$0xff]
        %v1986 = vld [vmem:[#allocation8 + $0x368] sm:$0xff]
        %v1987 = vld [vmem:[#allocation8 + $0x370] sm:$0xff]
        %v1988 = vld [vmem:[#allocation8 + $0x378] sm:$0xff]
        %v1989 = vld [vmem:[#allocation8 + $0x380] sm:$0xff]
        %v1990 = vld [vmem:[#allocation8 + $0x388] sm:$0xff]
        %v1991 = vld [vmem:[#allocation8 + $0x390] sm:$0xff]
        %v1992 = vld [vmem:[#allocation8 + $0x398] sm:$0xff]
        %v1993 = vld [vmem:[#allocation8 + $0x3a0] sm:$0xff]
        %v1994 = vld [vmem:[#allocation8 + $0x3a8] sm:$0xff]
        %v1995 = vld [vmem:[#allocation8 + $0x3b0] sm:$0xff]
        %v1996 = vld [vmem:[#allocation8 + $0x3b8] sm:$0xff]
        %v1997 = vld [vmem:[#allocation8 + $0x3c0] sm:$0xff]
        %v1998 = vld [vmem:[#allocation8 + $0x3c8] sm:$0xff]
        %v1999 = vld [vmem:[#allocation8 + $0x3d0] sm:$0xff]
        %v2000 = vld [vmem:[#allocation8 + $0x3d8] sm:$0xff]
        %v2001 = vld [vmem:[#allocation8 + $0x3e0] sm:$0xff]
        %v2002 = vld [vmem:[#allocation8 + $0x3e8] sm:$0xff]
        %v2003 = vld [vmem:[#allocation8 + $0x3f0] sm:$0xff]
        %v2004 = vld [vmem:[#allocation8 + $0x3f8] sm:$0xff]
        %v2005 = vld [vmem:[%s4] sm:$0xf]
        %v2007 = vlaneseq
        %v2008 = vshrl.u32 %v2007, 7
        %v2009 = vsub.s32 0, %v2008
        %v2010 = vrot.slane %v2005, %v2009
        %v2011 = vlaneseq
        %v2012 = vshrl.u32 %v2011, 7
        %v2013 = vsub.s32 1, %v2012
        %v2014 = vrot.slane %v2005, %v2013
        %v2015 = vlaneseq
        %v2016 = vshrl.u32 %v2015, 7
        %v2017 = vsub.s32 2, %v2016
        %v2018 = vrot.slane %v2005, %v2017
        %v2019 = vlaneseq
        %v2020 = vshrl.u32 %v2019, 7
        %v2021 = vsub.s32 3, %v2020
        %v2022 = vrot.slane %v2005, %v2021
        %v2155 = vunpack.c.l.b16 %v1877
        %v2156 = vunpack.c.h.b16 %v1877
        %v2157 = vunpack.c.l.b16 %v1878
        %v2158 = vunpack.c.h.b16 %v1878
        %v2159 = vunpack.c.l.b16 %v1879
        %v2160 = vunpack.c.h.b16 %v1879
        %v2161 = vunpack.c.l.b16 %v1880
        %v2162 = vunpack.c.h.b16 %v1880
        %v2163 = vunpack.c.l.b16 %v1881
        %v2164 = vunpack.c.h.b16 %v1881
        %v2165 = vunpack.c.l.b16 %v1882
        %v2166 = vunpack.c.h.b16 %v1882
        %v2167 = vunpack.c.l.b16 %v1883
        %v2168 = vunpack.c.h.b16 %v1883
        %v2169 = vunpack.c.l.b16 %v1884
        %v2170 = vunpack.c.h.b16 %v1884
        %v2171 = vunpack.c.l.b16 %v1885
        %v2172 = vunpack.c.h.b16 %v1885
        %v2173 = vunpack.c.l.b16 %v1886
        %v2174 = vunpack.c.h.b16 %v1886
        %v2175 = vunpack.c.l.b16 %v1887
        %v2176 = vunpack.c.h.b16 %v1887
        %v2177 = vunpack.c.l.b16 %v1888
        %v2178 = vunpack.c.h.b16 %v1888
        %v2179 = vunpack.c.l.b16 %v1889
        %v2180 = vunpack.c.h.b16 %v1889
        %v2181 = vunpack.c.l.b16 %v1890
        %v2182 = vunpack.c.h.b16 %v1890
        %v2183 = vunpack.c.l.b16 %v1891
        %v2184 = vunpack.c.h.b16 %v1891
        %v2185 = vunpack.c.l.b16 %v1892
        %v2186 = vunpack.c.h.b16 %v1892
        %v2187 = vunpack.c.l.b16 %v1893
        %v2188 = vunpack.c.h.b16 %v1893
        %v2189 = vunpack.c.l.b16 %v1894
        %v2190 = vunpack.c.h.b16 %v1894
        %v2191 = vunpack.c.l.b16 %v1895
        %v2192 = vunpack.c.h.b16 %v1895
        %v2193 = vunpack.c.l.b16 %v1896
        %v2194 = vunpack.c.h.b16 %v1896
        %v2195 = vunpack.c.l.b16 %v1897
        %v2196 = vunpack.c.h.b16 %v1897
        %v2197 = vunpack.c.l.b16 %v1898
        %v2198 = vunpack.c.h.b16 %v1898
        %v2199 = vunpack.c.l.b16 %v1899
        %v2200 = vunpack.c.h.b16 %v1899
        %v2201 = vunpack.c.l.b16 %v1900
        %v2202 = vunpack.c.h.b16 %v1900
        %v2203 = vunpack.c.l.b16 %v1901
        %v2204 = vunpack.c.h.b16 %v1901
        %v2205 = vunpack.c.l.b16 %v1902
        %v2206 = vunpack.c.h.b16 %v1902
        %v2207 = vunpack.c.l.b16 %v1903
        %v2208 = vunpack.c.h.b16 %v1903
        %v2209 = vunpack.c.l.b16 %v1904
        %v2210 = vunpack.c.h.b16 %v1904
        %v2211 = vunpack.c.l.b16 %v1905
        %v2212 = vunpack.c.h.b16 %v1905
        %v2213 = vunpack.c.l.b16 %v1906
        %v2214 = vunpack.c.h.b16 %v1906
        %v2215 = vunpack.c.l.b16 %v1907
        %v2216 = vunpack.c.h.b16 %v1907
        %v2217 = vunpack.c.l.b16 %v1908
        %v2218 = vunpack.c.h.b16 %v1908
        %v2219 = vunpack.c.l.b16 %v1909
        %v2220 = vunpack.c.h.b16 %v1909
        %v2221 = vunpack.c.l.b16 %v1910
        %v2222 = vunpack.c.h.b16 %v1910
        %v2223 = vunpack.c.l.b16 %v1911
        %v2224 = vunpack.c.h.b16 %v1911
        %v2225 = vunpack.c.l.b16 %v1912
        %v2226 = vunpack.c.h.b16 %v1912
        %v2227 = vunpack.c.l.b16 %v1913
        %v2228 = vunpack.c.h.b16 %v1913
        %v2229 = vunpack.c.l.b16 %v1914
        %v2230 = vunpack.c.h.b16 %v1914
        %v2231 = vunpack.c.l.b16 %v1915
        %v2232 = vunpack.c.h.b16 %v1915
        %v2233 = vunpack.c.l.b16 %v1916
        %v2234 = vunpack.c.h.b16 %v1916
        %v2235 = vunpack.c.l.b16 %v1917
        %v2236 = vunpack.c.h.b16 %v1917
        %v2237 = vunpack.c.l.b16 %v1918
        %v2238 = vunpack.c.h.b16 %v1918
        %v2239 = vunpack.c.l.b16 %v1919
        %v2240 = vunpack.c.h.b16 %v1919
        %v2241 = vunpack.c.l.b16 %v1920
        %v2242 = vunpack.c.h.b16 %v1920
        %v2243 = vunpack.c.l.b16 %v1921
        %v2244 = vunpack.c.h.b16 %v1921
        %v2245 = vunpack.c.l.b16 %v1922
        %v2246 = vunpack.c.h.b16 %v1922
        %v2247 = vunpack.c.l.b16 %v1923
        %v2248 = vunpack.c.h.b16 %v1923
        %v2249 = vunpack.c.l.b16 %v1924
        %v2250 = vunpack.c.h.b16 %v1924
        %v2251 = vunpack.c.l.b16 %v1925
        %v2252 = vunpack.c.h.b16 %v1925
        %v2253 = vunpack.c.l.b16 %v1926
        %v2254 = vunpack.c.h.b16 %v1926
        %v2255 = vunpack.c.l.b16 %v1927
        %v2256 = vunpack.c.h.b16 %v1927
        %v2257 = vunpack.c.l.b16 %v1928
        %v2258 = vunpack.c.h.b16 %v1928
        %v2259 = vunpack.c.l.b16 %v1929
        %v2260 = vunpack.c.h.b16 %v1929
        %v2261 = vunpack.c.l.b16 %v1930
        %v2262 = vunpack.c.h.b16 %v1930
        %v2263 = vunpack.c.l.b16 %v1931
        %v2264 = vunpack.c.h.b16 %v1931
        %v2265 = vunpack.c.l.b16 %v1932
        %v2266 = vunpack.c.h.b16 %v1932
        %v2267 = vunpack.c.l.b16 %v1933
        %v2268 = vunpack.c.h.b16 %v1933
        %v2269 = vunpack.c.l.b16 %v1934
        %v2270 = vunpack.c.h.b16 %v1934
        %v2271 = vunpack.c.l.b16 %v1935
        %v2272 = vunpack.c.h.b16 %v1935
        %v2273 = vunpack.c.l.b16 %v1936
        %v2274 = vunpack.c.h.b16 %v1936
        %v2275 = vunpack.c.l.b16 %v1937
        %v2276 = vunpack.c.h.b16 %v1937
        %v2277 = vunpack.c.l.b16 %v1938
        %v2278 = vunpack.c.h.b16 %v1938
        %v2279 = vunpack.c.l.b16 %v1939
        %v2280 = vunpack.c.h.b16 %v1939
        %v2281 = vunpack.c.l.b16 %v1940
        %v2282 = vunpack.c.h.b16 %v1940
        %v2283 = vunpack.c.l.b16 %v1941
        %v2284 = vunpack.c.h.b16 %v1941
        %v2285 = vunpack.c.l.b16 %v1942
        %v2286 = vunpack.c.h.b16 %v1942
        %v2287 = vunpack.c.l.b16 %v1943
        %v2288 = vunpack.c.h.b16 %v1943
        %v2289 = vunpack.c.l.b16 %v1944
        %v2290 = vunpack.c.h.b16 %v1944
        %v2291 = vunpack.c.l.b16 %v1945
        %v2292 = vunpack.c.h.b16 %v1945
        %v2293 = vunpack.c.l.b16 %v1946
        %v2294 = vunpack.c.h.b16 %v1946
        %v2295 = vunpack.c.l.b16 %v1947
        %v2296 = vunpack.c.h.b16 %v1947
        %v2297 = vunpack.c.l.b16 %v1948
        %v2298 = vunpack.c.h.b16 %v1948
        %v2299 = vunpack.c.l.b16 %v1949
        %v2300 = vunpack.c.h.b16 %v1949
        %v2301 = vunpack.c.l.b16 %v1950
        %v2302 = vunpack.c.h.b16 %v1950
        %v2303 = vunpack.c.l.b16 %v1951
        %v2304 = vunpack.c.h.b16 %v1951
        %v2305 = vunpack.c.l.b16 %v1952
        %v2306 = vunpack.c.h.b16 %v1952
        %v2307 = vunpack.c.l.b16 %v1953
        %v2308 = vunpack.c.h.b16 %v1953
        %v2309 = vunpack.c.l.b16 %v1954
        %v2310 = vunpack.c.h.b16 %v1954
        %v2311 = vunpack.c.l.b16 %v1955
        %v2312 = vunpack.c.h.b16 %v1955
        %v2313 = vunpack.c.l.b16 %v1956
        %v2314 = vunpack.c.h.b16 %v1956
        %v2315 = vunpack.c.l.b16 %v1957
        %v2316 = vunpack.c.h.b16 %v1957
        %v2317 = vunpack.c.l.b16 %v1958
        %v2318 = vunpack.c.h.b16 %v1958
        %v2319 = vunpack.c.l.b16 %v1959
        %v2320 = vunpack.c.h.b16 %v1959
        %v2321 = vunpack.c.l.b16 %v1960
        %v2322 = vunpack.c.h.b16 %v1960
        %v2323 = vunpack.c.l.b16 %v1961
        %v2324 = vunpack.c.h.b16 %v1961
        %v2325 = vunpack.c.l.b16 %v1962
        %v2326 = vunpack.c.h.b16 %v1962
        %v2327 = vunpack.c.l.b16 %v1963
        %v2328 = vunpack.c.h.b16 %v1963
        %v2329 = vunpack.c.l.b16 %v1964
        %v2330 = vunpack.c.h.b16 %v1964
        %v2331 = vunpack.c.l.b16 %v1965
        %v2332 = vunpack.c.h.b16 %v1965
        %v2333 = vunpack.c.l.b16 %v1966
        %v2334 = vunpack.c.h.b16 %v1966
        %v2335 = vunpack.c.l.b16 %v1967
        %v2336 = vunpack.c.h.b16 %v1967
        %v2337 = vunpack.c.l.b16 %v1968
        %v2338 = vunpack.c.h.b16 %v1968
        %v2339 = vunpack.c.l.b16 %v1969
        %v2340 = vunpack.c.h.b16 %v1969
        %v2341 = vunpack.c.l.b16 %v1970
        %v2342 = vunpack.c.h.b16 %v1970
        %v2343 = vunpack.c.l.b16 %v1971
        %v2344 = vunpack.c.h.b16 %v1971
        %v2345 = vunpack.c.l.b16 %v1972
        %v2346 = vunpack.c.h.b16 %v1972
        %v2347 = vunpack.c.l.b16 %v1973
        %v2348 = vunpack.c.h.b16 %v1973
        %v2349 = vunpack.c.l.b16 %v1974
        %v2350 = vunpack.c.h.b16 %v1974
        %v2351 = vunpack.c.l.b16 %v1975
        %v2352 = vunpack.c.h.b16 %v1975
        %v2353 = vunpack.c.l.b16 %v1976
        %v2354 = vunpack.c.h.b16 %v1976
        %v2355 = vunpack.c.l.b16 %v1977
        %v2356 = vunpack.c.h.b16 %v1977
        %v2357 = vunpack.c.l.b16 %v1978
        %v2358 = vunpack.c.h.b16 %v1978
        %v2359 = vunpack.c.l.b16 %v1979
        %v2360 = vunpack.c.h.b16 %v1979
        %v2361 = vunpack.c.l.b16 %v1980
        %v2362 = vunpack.c.h.b16 %v1980
        %v2363 = vunpack.c.l.b16 %v1981
        %v2364 = vunpack.c.h.b16 %v1981
        %v2365 = vunpack.c.l.b16 %v1982
        %v2366 = vunpack.c.h.b16 %v1982
        %v2367 = vunpack.c.l.b16 %v1983
        %v2368 = vunpack.c.h.b16 %v1983
        %v2369 = vunpack.c.l.b16 %v1984
        %v2370 = vunpack.c.h.b16 %v1984
        %v2371 = vunpack.c.l.b16 %v1985
        %v2372 = vunpack.c.h.b16 %v1985
        %v2373 = vunpack.c.l.b16 %v1986
        %v2374 = vunpack.c.h.b16 %v1986
        %v2375 = vunpack.c.l.b16 %v1987
        %v2376 = vunpack.c.h.b16 %v1987
        %v2377 = vunpack.c.l.b16 %v1988
        %v2378 = vunpack.c.h.b16 %v1988
        %v2379 = vunpack.c.l.b16 %v1989
        %v2380 = vunpack.c.h.b16 %v1989
        %v2381 = vunpack.c.l.b16 %v1990
        %v2382 = vunpack.c.h.b16 %v1990
        %v2383 = vunpack.c.l.b16 %v1991
        %v2384 = vunpack.c.h.b16 %v1991
        %v2385 = vunpack.c.l.b16 %v1992
        %v2386 = vunpack.c.h.b16 %v1992
        %v2387 = vunpack.c.l.b16 %v1993
        %v2388 = vunpack.c.h.b16 %v1993
        %v2389 = vunpack.c.l.b16 %v1994
        %v2390 = vunpack.c.h.b16 %v1994
        %v2391 = vunpack.c.l.b16 %v1995
        %v2392 = vunpack.c.h.b16 %v1995
        %v2393 = vunpack.c.l.b16 %v1996
        %v2394 = vunpack.c.h.b16 %v1996
        %v2395 = vunpack.c.l.b16 %v1997
        %v2396 = vunpack.c.h.b16 %v1997
        %v2397 = vunpack.c.l.b16 %v1998
        %v2398 = vunpack.c.h.b16 %v1998
        %v2399 = vunpack.c.l.b16 %v1999
        %v2400 = vunpack.c.h.b16 %v1999
        %v2401 = vunpack.c.l.b16 %v2000
        %v2402 = vunpack.c.h.b16 %v2000
        %v2403 = vunpack.c.l.b16 %v2001
        %v2404 = vunpack.c.h.b16 %v2001
        %v2405 = vunpack.c.l.b16 %v2002
        %v2406 = vunpack.c.h.b16 %v2002
        %v2407 = vunpack.c.l.b16 %v2003
        %v2408 = vunpack.c.h.b16 %v2003
        %v2409 = vunpack.c.l.b16 %v2004
        %v2410 = vunpack.c.h.b16 %v2004
        %v2411 = vpack.c.b16 %v2159, %v2155
        %v2412 = vpack.c.b16 %v2160, %v2156
        %v2413 = vpack.c.b16 %v2161, %v2157
        %v2414 = vpack.c.b16 %v2162, %v2158
        %v2415 = vpack.c.b16 %v2167, %v2163
        %v2416 = vpack.c.b16 %v2168, %v2164
        %v2417 = vpack.c.b16 %v2169, %v2165
        %v2418 = vpack.c.b16 %v2170, %v2166
        %v2419 = vpack.c.b16 %v2175, %v2171
        %v2420 = vpack.c.b16 %v2176, %v2172
        %v2421 = vpack.c.b16 %v2177, %v2173
        %v2422 = vpack.c.b16 %v2178, %v2174
        %v2423 = vpack.c.b16 %v2183, %v2179
        %v2424 = vpack.c.b16 %v2184, %v2180
        %v2425 = vpack.c.b16 %v2185, %v2181
        %v2426 = vpack.c.b16 %v2186, %v2182
        %v2427 = vpack.c.b16 %v2191, %v2187
        %v2428 = vpack.c.b16 %v2192, %v2188
        %v2429 = vpack.c.b16 %v2193, %v2189
        %v2430 = vpack.c.b16 %v2194, %v2190
        %v2431 = vpack.c.b16 %v2199, %v2195
        %v2432 = vpack.c.b16 %v2200, %v2196
        %v2433 = vpack.c.b16 %v2201, %v2197
        %v2434 = vpack.c.b16 %v2202, %v2198
        %v2435 = vpack.c.b16 %v2207, %v2203
        %v2436 = vpack.c.b16 %v2208, %v2204
        %v2437 = vpack.c.b16 %v2209, %v2205
        %v2438 = vpack.c.b16 %v2210, %v2206
        %v2439 = vpack.c.b16 %v2215, %v2211
        %v2440 = vpack.c.b16 %v2216, %v2212
        %v2441 = vpack.c.b16 %v2217, %v2213
        %v2442 = vpack.c.b16 %v2218, %v2214
        %v2443 = vpack.c.b16 %v2223, %v2219
        %v2444 = vpack.c.b16 %v2224, %v2220
        %v2445 = vpack.c.b16 %v2225, %v2221
        %v2446 = vpack.c.b16 %v2226, %v2222
        %v2447 = vpack.c.b16 %v2231, %v2227
        %v2448 = vpack.c.b16 %v2232, %v2228
        %v2449 = vpack.c.b16 %v2233, %v2229
        %v2450 = vpack.c.b16 %v2234, %v2230
        %v2451 = vpack.c.b16 %v2239, %v2235
        %v2452 = vpack.c.b16 %v2240, %v2236
        %v2453 = vpack.c.b16 %v2241, %v2237
        %v2454 = vpack.c.b16 %v2242, %v2238
        %v2455 = vpack.c.b16 %v2247, %v2243
        %v2456 = vpack.c.b16 %v2248, %v2244
        %v2457 = vpack.c.b16 %v2249, %v2245
        %v2458 = vpack.c.b16 %v2250, %v2246
        %v2459 = vpack.c.b16 %v2255, %v2251
        %v2460 = vpack.c.b16 %v2256, %v2252
        %v2461 = vpack.c.b16 %v2257, %v2253
        %v2462 = vpack.c.b16 %v2258, %v2254
        %v2463 = vpack.c.b16 %v2263, %v2259
        %v2464 = vpack.c.b16 %v2264, %v2260
        %v2465 = vpack.c.b16 %v2265, %v2261
        %v2466 = vpack.c.b16 %v2266, %v2262
        %v2467 = vpack.c.b16 %v2271, %v2267
        %v2468 = vpack.c.b16 %v2272, %v2268
        %v2469 = vpack.c.b16 %v2273, %v2269
        %v2470 = vpack.c.b16 %v2274, %v2270
        %v2471 = vpack.c.b16 %v2279, %v2275
        %v2472 = vpack.c.b16 %v2280, %v2276
        %v2473 = vpack.c.b16 %v2281, %v2277
        %v2474 = vpack.c.b16 %v2282, %v2278
        %v2475 = vpack.c.b16 %v2287, %v2283
        %v2476 = vpack.c.b16 %v2288, %v2284
        %v2477 = vpack.c.b16 %v2289, %v2285
        %v2478 = vpack.c.b16 %v2290, %v2286
        %v2479 = vpack.c.b16 %v2295, %v2291
        %v2480 = vpack.c.b16 %v2296, %v2292
        %v2481 = vpack.c.b16 %v2297, %v2293
        %v2482 = vpack.c.b16 %v2298, %v2294
        %v2483 = vpack.c.b16 %v2303, %v2299
        %v2484 = vpack.c.b16 %v2304, %v2300
        %v2485 = vpack.c.b16 %v2305, %v2301
        %v2486 = vpack.c.b16 %v2306, %v2302
        %v2487 = vpack.c.b16 %v2311, %v2307
        %v2488 = vpack.c.b16 %v2312, %v2308
        %v2489 = vpack.c.b16 %v2313, %v2309
        %v2490 = vpack.c.b16 %v2314, %v2310
        %v2491 = vpack.c.b16 %v2319, %v2315
        %v2492 = vpack.c.b16 %v2320, %v2316
        %v2493 = vpack.c.b16 %v2321, %v2317
        %v2494 = vpack.c.b16 %v2322, %v2318
        %v2495 = vpack.c.b16 %v2327, %v2323
        %v2496 = vpack.c.b16 %v2328, %v2324
        %v2497 = vpack.c.b16 %v2329, %v2325
        %v2498 = vpack.c.b16 %v2330, %v2326
        %v2499 = vpack.c.b16 %v2335, %v2331
        %v2500 = vpack.c.b16 %v2336, %v2332
        %v2501 = vpack.c.b16 %v2337, %v2333
        %v2502 = vpack.c.b16 %v2338, %v2334
        %v2503 = vpack.c.b16 %v2343, %v2339
        %v2504 = vpack.c.b16 %v2344, %v2340
        %v2505 = vpack.c.b16 %v2345, %v2341
        %v2506 = vpack.c.b16 %v2346, %v2342
        %v2507 = vpack.c.b16 %v2351, %v2347
        %v2508 = vpack.c.b16 %v2352, %v2348
        %v2509 = vpack.c.b16 %v2353, %v2349
        %v2510 = vpack.c.b16 %v2354, %v2350
        %v2511 = vpack.c.b16 %v2359, %v2355
        %v2512 = vpack.c.b16 %v2360, %v2356
        %v2513 = vpack.c.b16 %v2361, %v2357
        %v2514 = vpack.c.b16 %v2362, %v2358
        %v2515 = vpack.c.b16 %v2367, %v2363
        %v2516 = vpack.c.b16 %v2368, %v2364
        %v2517 = vpack.c.b16 %v2369, %v2365
        %v2518 = vpack.c.b16 %v2370, %v2366
        %v2519 = vpack.c.b16 %v2375, %v2371
        %v2520 = vpack.c.b16 %v2376, %v2372
        %v2521 = vpack.c.b16 %v2377, %v2373
        %v2522 = vpack.c.b16 %v2378, %v2374
        %v2523 = vpack.c.b16 %v2383, %v2379
        %v2524 = vpack.c.b16 %v2384, %v2380
        %v2525 = vpack.c.b16 %v2385, %v2381
        %v2526 = vpack.c.b16 %v2386, %v2382
        %v2527 = vpack.c.b16 %v2391, %v2387
        %v2528 = vpack.c.b16 %v2392, %v2388
        %v2529 = vpack.c.b16 %v2393, %v2389
        %v2530 = vpack.c.b16 %v2394, %v2390
        %v2531 = vpack.c.b16 %v2399, %v2395
        %v2532 = vpack.c.b16 %v2400, %v2396
        %v2533 = vpack.c.b16 %v2401, %v2397
        %v2534 = vpack.c.b16 %v2402, %v2398
        %v2535 = vpack.c.b16 %v2407, %v2403
        %v2536 = vpack.c.b16 %v2408, %v2404
        %v2537 = vpack.c.b16 %v2409, %v2405
        %v2538 = vpack.c.b16 %v2410, %v2406
        %2667 = vmatprep.subr.bf16.mxu0 %v2440
        %2668 = vmatpush1.bf16.msra.mxu0 %v2439
        %2669 = vmatprep.subr.bf16.mxu0 %v2436
        %2670 = vmatpush1.bf16.msra.mxu0 %v2435
        %2671 = vmatprep.subr.bf16.mxu0 %v2432
        %2672 = vmatpush1.bf16.msra.mxu0 %v2431
        %2673 = vmatprep.subr.bf16.mxu0 %v2428
        %2674 = vmatpush1.bf16.msra.mxu0 %v2427
        %2675 = vmatprep.subr.bf16.mxu0 %v2424
        %2676 = vmatpush1.bf16.msra.mxu0 %v2423
        %2677 = vmatprep.subr.bf16.mxu0 %v2420
        %2678 = vmatpush1.bf16.msra.mxu0 %v2419
        %2679 = vmatprep.subr.bf16.mxu0 %v2416
        %2680 = vmatpush1.bf16.msra.mxu0 %v2415
        %2681 = vmatprep.subr.bf16.mxu0 %v2412
        %2682 = vmatpush1.bf16.msra.mxu0 %v2411
        %2683 = vmatprep.subr.bf16.mxu0 %v2472
        %2684 = vmatpush2.bf16.msra.mxu0 %v2471
        %2685 = vmatprep.subr.bf16.mxu0 %v2468
        %2686 = vmatpush2.bf16.msra.mxu0 %v2467
        %2687 = vmatprep.subr.bf16.mxu0 %v2464
        %2688 = vmatpush2.bf16.msra.mxu0 %v2463
        %2689 = vmatprep.subr.bf16.mxu0 %v2460
        %2690 = vmatpush2.bf16.msra.mxu0 %v2459
        %2691 = vmatprep.subr.bf16.mxu0 %v2456
        %2692 = vmatpush2.bf16.msra.mxu0 %v2455
        %2693 = vmatprep.subr.bf16.mxu0 %v2452
        %2694 = vmatpush2.bf16.msra.mxu0 %v2451
        %2695 = vmatprep.subr.bf16.mxu0 %v2448
        %2696 = vmatpush2.bf16.msra.mxu0 %v2447
        %2697 = vmatprep.subr.bf16.mxu0 %v2444
        %2698 = vmatpush2.bf16.msra.mxu0 %v2443
        %2699 = vmatprep.mubr.bf16.mxu0 %v1814
        %2700 = vmatmul.mubr.bf16.gmra.mxu0 %v1813
        %v2701 = vpop.f32.mrf.mxu0
        %v2702 = vadd.f32 %v2010, %v2701
        %v2703 = vpop.f32.mrf.mxu0
        %v2704 = vadd.f32 %v2014, %v2703
        %v2705 = vpop.f32.mrf.mxu0
        %v2706 = vadd.f32 %v2010, %v2705
        %v2707 = vpop.f32.mrf.mxu0
        %v2708 = vadd.f32 %v2014, %v2707
        %2709 = vmatprep.mubr.bf16.mxu0 %v1818
        %2710 = vmatmul.mubr.bf16.gmra.mxu0 %v1817
        %v2711 = vpop.f32.mrf.mxu0
        %v2712 = vadd.f32 %v2010, %v2711
        %v2713 = vpop.f32.mrf.mxu0
        %v2714 = vadd.f32 %v2014, %v2713
        %v2715 = vpop.f32.mrf.mxu0
        %v2716 = vadd.f32 %v2010, %v2715
        %v2717 = vpop.f32.mrf.mxu0
        %v2718 = vadd.f32 %v2014, %v2717
        %2719 = vmatprep.mubr.bf16.mxu0 %v1822
        %2720 = vmatmul.mubr.bf16.gmra.mxu0 %v1821
        %v2721 = vpop.f32.mrf.mxu0
        %v2722 = vadd.f32 %v2010, %v2721
        %v2723 = vpop.f32.mrf.mxu0
        %v2724 = vadd.f32 %v2014, %v2723
        %v2725 = vpop.f32.mrf.mxu0
        %v2726 = vadd.f32 %v2010, %v2725
        %v2727 = vpop.f32.mrf.mxu0
        %v2728 = vadd.f32 %v2014, %v2727
        %2729 = vmatprep.mubr.bf16.mxu0 %v1826
        %2730 = vmatmul.mubr.bf16.gmra.mxu0 %v1825
        %v2731 = vpop.f32.mrf.mxu0
        %v2732 = vadd.f32 %v2010, %v2731
        %v2733 = vpop.f32.mrf.mxu0
        %v2734 = vadd.f32 %v2014, %v2733
        %v2735 = vpop.f32.mrf.mxu0
        %v2736 = vadd.f32 %v2010, %v2735
        %v2737 = vpop.f32.mrf.mxu0
        %v2738 = vadd.f32 %v2014, %v2737
        %2739 = vmatprep.mubr.bf16.mxu0 %v1830
        %2740 = vmatmul.mubr.bf16.gmra.mxu0 %v1829
        %v2741 = vpop.f32.mrf.mxu0
        %v2742 = vadd.f32 %v2010, %v2741
        %v2743 = vpop.f32.mrf.mxu0
        %v2744 = vadd.f32 %v2014, %v2743
        %v2745 = vpop.f32.mrf.mxu0
        %v2746 = vadd.f32 %v2010, %v2745
        %v2747 = vpop.f32.mrf.mxu0
        %v2748 = vadd.f32 %v2014, %v2747
        %2749 = vmatprep.mubr.bf16.mxu0 %v1834
        %2750 = vmatmul.mubr.bf16.gmra.mxu0 %v1833
        %v2751 = vpop.f32.mrf.mxu0
        %v2752 = vadd.f32 %v2010, %v2751
        %v2753 = vpop.f32.mrf.mxu0
        %v2754 = vadd.f32 %v2014, %v2753
        %v2755 = vpop.f32.mrf.mxu0
        %v2756 = vadd.f32 %v2010, %v2755
        %v2757 = vpop.f32.mrf.mxu0
        %v2758 = vadd.f32 %v2014, %v2757
        %2759 = vmatprep.mubr.bf16.mxu0 %v1838
        %2760 = vmatmul.mubr.bf16.gmra.mxu0 %v1837
        %v2761 = vpop.f32.mrf.mxu0
        %v2762 = vadd.f32 %v2010, %v2761
        %v2763 = vpop.f32.mrf.mxu0
        %v2764 = vadd.f32 %v2014, %v2763
        %v2765 = vpop.f32.mrf.mxu0
        %v2766 = vadd.f32 %v2010, %v2765
        %v2767 = vpop.f32.mrf.mxu0
        %v2768 = vadd.f32 %v2014, %v2767
        %2769 = vmatprep.mubr.bf16.mxu0 %v1842
        %2770 = vmatmul.mubr.bf16.gmra.mxu0 %v1841
        %v2771 = vpop.f32.mrf.mxu0
        %v2772 = vadd.f32 %v2010, %v2771
        %v2773 = vpop.f32.mrf.mxu0
        %v2774 = vadd.f32 %v2014, %v2773
        %v2775 = vpop.f32.mrf.mxu0
        %v2776 = vadd.f32 %v2010, %v2775
        %v2777 = vpop.f32.mrf.mxu0
        %v2778 = vadd.f32 %v2014, %v2777
        %2779 = vmatprep.mubr.bf16.mxu0 %v1846
        %2780 = vmatmul.mubr.bf16.gmra.mxu0 %v1845
        %v2781 = vpop.f32.mrf.mxu0
        %v2782 = vadd.f32 %v2010, %v2781
        %v2783 = vpop.f32.mrf.mxu0
        %v2784 = vadd.f32 %v2014, %v2783
        %v2785 = vpop.f32.mrf.mxu0
        %v2786 = vadd.f32 %v2010, %v2785
        %v2787 = vpop.f32.mrf.mxu0
        %v2788 = vadd.f32 %v2014, %v2787
        %2789 = vmatprep.mubr.bf16.mxu0 %v1850
        %2790 = vmatmul.mubr.bf16.gmra.mxu0 %v1849
        %v2791 = vpop.f32.mrf.mxu0
        %v2792 = vadd.f32 %v2010, %v2791
        %v2793 = vpop.f32.mrf.mxu0
        %v2794 = vadd.f32 %v2014, %v2793
        %v2795 = vpop.f32.mrf.mxu0
        %v2796 = vadd.f32 %v2010, %v2795
        %v2797 = vpop.f32.mrf.mxu0
        %v2798 = vadd.f32 %v2014, %v2797
        %2799 = vmatprep.mubr.bf16.mxu0 %v1854
        %2800 = vmatmul.mubr.bf16.gmra.mxu0 %v1853
        %v2801 = vpop.f32.mrf.mxu0
        %v2802 = vadd.f32 %v2010, %v2801
        %v2803 = vpop.f32.mrf.mxu0
        %v2804 = vadd.f32 %v2014, %v2803
        %v2805 = vpop.f32.mrf.mxu0
        %v2806 = vadd.f32 %v2010, %v2805
        %v2807 = vpop.f32.mrf.mxu0
        %v2808 = vadd.f32 %v2014, %v2807
        %2809 = vmatprep.mubr.bf16.mxu0 %v1858
        %2810 = vmatmul.mubr.bf16.gmra.mxu0 %v1857
        %v2811 = vpop.f32.mrf.mxu0
        %v2812 = vadd.f32 %v2010, %v2811
        %v2813 = vpop.f32.mrf.mxu0
        %v2814 = vadd.f32 %v2014, %v2813
        %v2815 = vpop.f32.mrf.mxu0
        %v2816 = vadd.f32 %v2010, %v2815
        %v2817 = vpop.f32.mrf.mxu0
        %v2818 = vadd.f32 %v2014, %v2817
        %2819 = vmatprep.mubr.bf16.mxu0 %v1862
        %2820 = vmatmul.mubr.bf16.gmra.mxu0 %v1861
        %v2821 = vpop.f32.mrf.mxu0
        %v2822 = vadd.f32 %v2010, %v2821
        %v2823 = vpop.f32.mrf.mxu0
        %v2824 = vadd.f32 %v2014, %v2823
        %v2825 = vpop.f32.mrf.mxu0
        %v2826 = vadd.f32 %v2010, %v2825
        %v2827 = vpop.f32.mrf.mxu0
        %v2828 = vadd.f32 %v2014, %v2827
        %2829 = vmatprep.mubr.bf16.mxu0 %v1866
        %2830 = vmatmul.mubr.bf16.gmra.mxu0 %v1865
        %v2831 = vpop.f32.mrf.mxu0
        %v2832 = vadd.f32 %v2010, %v2831
        %v2833 = vpop.f32.mrf.mxu0
        %v2834 = vadd.f32 %v2014, %v2833
        %v2835 = vpop.f32.mrf.mxu0
        %v2836 = vadd.f32 %v2010, %v2835
        %v2837 = vpop.f32.mrf.mxu0
        %v2838 = vadd.f32 %v2014, %v2837
        %2839 = vmatprep.mubr.bf16.mxu0 %v1870
        %2840 = vmatmul.mubr.bf16.gmra.mxu0 %v1869
        %v2841 = vpop.f32.mrf.mxu0
        %v2842 = vadd.f32 %v2010, %v2841
        %v2843 = vpop.f32.mrf.mxu0
        %v2844 = vadd.f32 %v2014, %v2843
        %v2845 = vpop.f32.mrf.mxu0
        %v2846 = vadd.f32 %v2010, %v2845
        %v2847 = vpop.f32.mrf.mxu0
        %v2848 = vadd.f32 %v2014, %v2847
        %2849 = vmatprep.mubr.bf16.mxu0 %v1874
        %2850 = vmatmul.mubr.bf16.gmra.mxu0 %v1873
        %v2851 = vpop.f32.mrf.mxu0
        %v2852 = vadd.f32 %v2010, %v2851
        %v2853 = vpop.f32.mrf.mxu0
        %v2854 = vadd.f32 %v2014, %v2853
        %v2855 = vpop.f32.mrf.mxu0
        %v2856 = vadd.f32 %v2010, %v2855
        %v2857 = vpop.f32.mrf.mxu0
        %v2858 = vadd.f32 %v2014, %v2857
        %2859 = vdwg.mxu0
        %2860 = vmatprep.subr.bf16.mxu0 %v2504
        %2861 = vmatpush1.bf16.msra.mxu0 %v2503
        %2862 = vmatprep.subr.bf16.mxu0 %v2500
        %2863 = vmatpush1.bf16.msra.mxu0 %v2499
        %2864 = vmatprep.subr.bf16.mxu0 %v2496
        %2865 = vmatpush1.bf16.msra.mxu0 %v2495
        %2866 = vmatprep.subr.bf16.mxu0 %v2492
        %2867 = vmatpush1.bf16.msra.mxu0 %v2491
        %2868 = vmatprep.subr.bf16.mxu0 %v2488
        %2869 = vmatpush1.bf16.msra.mxu0 %v2487
        %2870 = vmatprep.subr.bf16.mxu0 %v2484
        %2871 = vmatpush1.bf16.msra.mxu0 %v2483
        %2872 = vmatprep.subr.bf16.mxu0 %v2480
        %2873 = vmatpush1.bf16.msra.mxu0 %v2479
        %2874 = vmatprep.subr.bf16.mxu0 %v2476
        %2875 = vmatpush1.bf16.msra.mxu0 %v2475
        %2876 = vmatprep.subr.bf16.mxu0 %v2536
        %2877 = vmatpush2.bf16.msra.mxu0 %v2535
        %2878 = vmatprep.subr.bf16.mxu0 %v2532
        %2879 = vmatpush2.bf16.msra.mxu0 %v2531
        %2880 = vmatprep.subr.bf16.mxu0 %v2528
        %2881 = vmatpush2.bf16.msra.mxu0 %v2527
        %2882 = vmatprep.subr.bf16.mxu0 %v2524
        %2883 = vmatpush2.bf16.msra.mxu0 %v2523
        %2884 = vmatprep.subr.bf16.mxu0 %v2520
        %2885 = vmatpush2.bf16.msra.mxu0 %v2519
        %2886 = vmatprep.subr.bf16.mxu0 %v2516
        %2887 = vmatpush2.bf16.msra.mxu0 %v2515
        %2888 = vmatprep.subr.bf16.mxu0 %v2512
        %2889 = vmatpush2.bf16.msra.mxu0 %v2511
        %2890 = vmatprep.subr.bf16.mxu0 %v2508
        %2891 = vmatpush2.bf16.msra.mxu0 %v2507
        %2892 = vmatprep.mubr.bf16.mxu0 %v1816
        %2893 = vmatmul.mubr.bf16.gmra.mxu0 %v1815
        %v2894 = vpop.f32.mrf.mxu0
        %v2895 = vadd.f32 %v2702, %v2894
        %v2896 = vpop.f32.mrf.mxu0
        %v2897 = vadd.f32 %v2704, %v2896
        %v2898 = vpop.f32.mrf.mxu0
        %v2899 = vadd.f32 %v2706, %v2898
        %v2900 = vpop.f32.mrf.mxu0
        %v2901 = vadd.f32 %v2708, %v2900
        %2902 = vmatprep.mubr.bf16.mxu0 %v1820
        %2903 = vmatmul.mubr.bf16.gmra.mxu0 %v1819
        %v2904 = vpop.f32.mrf.mxu0
        %v2905 = vadd.f32 %v2712, %v2904
        %v2906 = vpop.f32.mrf.mxu0
        %v2907 = vadd.f32 %v2714, %v2906
        %v2908 = vpop.f32.mrf.mxu0
        %v2909 = vadd.f32 %v2716, %v2908
        %v2910 = vpop.f32.mrf.mxu0
        %v2911 = vadd.f32 %v2718, %v2910
        %2912 = vmatprep.mubr.bf16.mxu0 %v1824
        %2913 = vmatmul.mubr.bf16.gmra.mxu0 %v1823
        %v2914 = vpop.f32.mrf.mxu0
        %v2915 = vadd.f32 %v2722, %v2914
        %v2916 = vpop.f32.mrf.mxu0
        %v2917 = vadd.f32 %v2724, %v2916
        %v2918 = vpop.f32.mrf.mxu0
        %v2919 = vadd.f32 %v2726, %v2918
        %v2920 = vpop.f32.mrf.mxu0
        %v2921 = vadd.f32 %v2728, %v2920
        %2922 = vmatprep.mubr.bf16.mxu0 %v1828
        %2923 = vmatmul.mubr.bf16.gmra.mxu0 %v1827
        %v2924 = vpop.f32.mrf.mxu0
        %v2925 = vadd.f32 %v2732, %v2924
        %v2926 = vpop.f32.mrf.mxu0
        %v2927 = vadd.f32 %v2734, %v2926
        %v2928 = vpop.f32.mrf.mxu0
        %v2929 = vadd.f32 %v2736, %v2928
        %v2930 = vpop.f32.mrf.mxu0
        %v2931 = vadd.f32 %v2738, %v2930
        %2932 = vmatprep.mubr.bf16.mxu0 %v1832
        %2933 = vmatmul.mubr.bf16.gmra.mxu0 %v1831
        %v2934 = vpop.f32.mrf.mxu0
        %v2935 = vadd.f32 %v2742, %v2934
        %v2936 = vpop.f32.mrf.mxu0
        %v2937 = vadd.f32 %v2744, %v2936
        %v2938 = vpop.f32.mrf.mxu0
        %v2939 = vadd.f32 %v2746, %v2938
        %v2940 = vpop.f32.mrf.mxu0
        %v2941 = vadd.f32 %v2748, %v2940
        %2942 = vmatprep.mubr.bf16.mxu0 %v1836
        %2943 = vmatmul.mubr.bf16.gmra.mxu0 %v1835
        %v2944 = vpop.f32.mrf.mxu0
        %v2945 = vadd.f32 %v2752, %v2944
        %v2946 = vpop.f32.mrf.mxu0
        %v2947 = vadd.f32 %v2754, %v2946
        %v2948 = vpop.f32.mrf.mxu0
        %v2949 = vadd.f32 %v2756, %v2948
        %v2950 = vpop.f32.mrf.mxu0
        %v2951 = vadd.f32 %v2758, %v2950
        %2952 = vmatprep.mubr.bf16.mxu0 %v1840
        %2953 = vmatmul.mubr.bf16.gmra.mxu0 %v1839
        %v2954 = vpop.f32.mrf.mxu0
        %v2955 = vadd.f32 %v2762, %v2954
        %v2956 = vpop.f32.mrf.mxu0
        %v2957 = vadd.f32 %v2764, %v2956
        %v2958 = vpop.f32.mrf.mxu0
        %v2959 = vadd.f32 %v2766, %v2958
        %v2960 = vpop.f32.mrf.mxu0
        %v2961 = vadd.f32 %v2768, %v2960
        %2962 = vmatprep.mubr.bf16.mxu0 %v1844
        %2963 = vmatmul.mubr.bf16.gmra.mxu0 %v1843
        %v2964 = vpop.f32.mrf.mxu0
        %v2965 = vadd.f32 %v2772, %v2964
        %v2966 = vpop.f32.mrf.mxu0
        %v2967 = vadd.f32 %v2774, %v2966
        %v2968 = vpop.f32.mrf.mxu0
        %v2969 = vadd.f32 %v2776, %v2968
        %v2970 = vpop.f32.mrf.mxu0
        %v2971 = vadd.f32 %v2778, %v2970
        %2972 = vmatprep.mubr.bf16.mxu0 %v1848
        %2973 = vmatmul.mubr.bf16.gmra.mxu0 %v1847
        %v2974 = vpop.f32.mrf.mxu0
        %v2975 = vadd.f32 %v2782, %v2974
        %v2976 = vpop.f32.mrf.mxu0
        %v2977 = vadd.f32 %v2784, %v2976
        %v2978 = vpop.f32.mrf.mxu0
        %v2979 = vadd.f32 %v2786, %v2978
        %v2980 = vpop.f32.mrf.mxu0
        %v2981 = vadd.f32 %v2788, %v2980
        %2982 = vmatprep.mubr.bf16.mxu0 %v1852
        %2983 = vmatmul.mubr.bf16.gmra.mxu0 %v1851
        %v2984 = vpop.f32.mrf.mxu0
        %v2985 = vadd.f32 %v2792, %v2984
        %v2986 = vpop.f32.mrf.mxu0
        %v2987 = vadd.f32 %v2794, %v2986
        %v2988 = vpop.f32.mrf.mxu0
        %v2989 = vadd.f32 %v2796, %v2988
        %v2990 = vpop.f32.mrf.mxu0
        %v2991 = vadd.f32 %v2798, %v2990
        %2992 = vmatprep.mubr.bf16.mxu0 %v1856
        %2993 = vmatmul.mubr.bf16.gmra.mxu0 %v1855
        %v2994 = vpop.f32.mrf.mxu0
        %v2995 = vadd.f32 %v2802, %v2994
        %v2996 = vpop.f32.mrf.mxu0
        %v2997 = vadd.f32 %v2804, %v2996
        %v2998 = vpop.f32.mrf.mxu0
        %v2999 = vadd.f32 %v2806, %v2998
        %v3000 = vpop.f32.mrf.mxu0
        %v3001 = vadd.f32 %v2808, %v3000
        %3002 = vmatprep.mubr.bf16.mxu0 %v1860
        %3003 = vmatmul.mubr.bf16.gmra.mxu0 %v1859
        %v3004 = vpop.f32.mrf.mxu0
        %v3005 = vadd.f32 %v2812, %v3004
        %v3006 = vpop.f32.mrf.mxu0
        %v3007 = vadd.f32 %v2814, %v3006
        %v3008 = vpop.f32.mrf.mxu0
        %v3009 = vadd.f32 %v2816, %v3008
        %v3010 = vpop.f32.mrf.mxu0
        %v3011 = vadd.f32 %v2818, %v3010
        %3012 = vmatprep.mubr.bf16.mxu0 %v1864
        %3013 = vmatmul.mubr.bf16.gmra.mxu0 %v1863
        %v3014 = vpop.f32.mrf.mxu0
        %v3015 = vadd.f32 %v2822, %v3014
        %v3016 = vpop.f32.mrf.mxu0
        %v3017 = vadd.f32 %v2824, %v3016
        %v3018 = vpop.f32.mrf.mxu0
        %v3019 = vadd.f32 %v2826, %v3018
        %v3020 = vpop.f32.mrf.mxu0
        %v3021 = vadd.f32 %v2828, %v3020
        %3022 = vmatprep.mubr.bf16.mxu0 %v1868
        %3023 = vmatmul.mubr.bf16.gmra.mxu0 %v1867
        %v3024 = vpop.f32.mrf.mxu0
        %v3025 = vadd.f32 %v2832, %v3024
        %v3026 = vpop.f32.mrf.mxu0
        %v3027 = vadd.f32 %v2834, %v3026
        %v3028 = vpop.f32.mrf.mxu0
        %v3029 = vadd.f32 %v2836, %v3028
        %v3030 = vpop.f32.mrf.mxu0
        %v3031 = vadd.f32 %v2838, %v3030
        %3032 = vmatprep.mubr.bf16.mxu0 %v1872
        %3033 = vmatmul.mubr.bf16.gmra.mxu0 %v1871
        %v3034 = vpop.f32.mrf.mxu0
        %v3035 = vadd.f32 %v2842, %v3034
        %v3036 = vpop.f32.mrf.mxu0
        %v3037 = vadd.f32 %v2844, %v3036
        %v3038 = vpop.f32.mrf.mxu0
        %v3039 = vadd.f32 %v2846, %v3038
        %v3040 = vpop.f32.mrf.mxu0
        %v3041 = vadd.f32 %v2848, %v3040
        %3042 = vmatprep.mubr.bf16.mxu0 %v1876
        %3043 = vmatmul.mubr.bf16.gmra.mxu0 %v1875
        %v3044 = vpop.f32.mrf.mxu0
        %v3045 = vadd.f32 %v2852, %v3044
        %v3046 = vpop.f32.mrf.mxu0
        %v3047 = vadd.f32 %v2854, %v3046
        %v3048 = vpop.f32.mrf.mxu0
        %v3049 = vadd.f32 %v2856, %v3048
        %v3050 = vpop.f32.mrf.mxu0
        %v3051 = vadd.f32 %v2858, %v3050
        %3052 = vdwg.mxu0
        %3053 = vmatprep.subr.bf16.mxu0 %v2442
        %3054 = vmatpush1.bf16.msra.mxu0 %v2441
        %3055 = vmatprep.subr.bf16.mxu0 %v2438
        %3056 = vmatpush1.bf16.msra.mxu0 %v2437
        %3057 = vmatprep.subr.bf16.mxu0 %v2434
        %3058 = vmatpush1.bf16.msra.mxu0 %v2433
        %3059 = vmatprep.subr.bf16.mxu0 %v2430
        %3060 = vmatpush1.bf16.msra.mxu0 %v2429
        %3061 = vmatprep.subr.bf16.mxu0 %v2426
        %3062 = vmatpush1.bf16.msra.mxu0 %v2425
        %3063 = vmatprep.subr.bf16.mxu0 %v2422
        %3064 = vmatpush1.bf16.msra.mxu0 %v2421
        %3065 = vmatprep.subr.bf16.mxu0 %v2418
        %3066 = vmatpush1.bf16.msra.mxu0 %v2417
        %3067 = vmatprep.subr.bf16.mxu0 %v2414
        %3068 = vmatpush1.bf16.msra.mxu0 %v2413
        %3069 = vmatprep.subr.bf16.mxu0 %v2474
        %3070 = vmatpush2.bf16.msra.mxu0 %v2473
        %3071 = vmatprep.subr.bf16.mxu0 %v2470
        %3072 = vmatpush2.bf16.msra.mxu0 %v2469
        %3073 = vmatprep.subr.bf16.mxu0 %v2466
        %3074 = vmatpush2.bf16.msra.mxu0 %v2465
        %3075 = vmatprep.subr.bf16.mxu0 %v2462
        %3076 = vmatpush2.bf16.msra.mxu0 %v2461
        %3077 = vmatprep.subr.bf16.mxu0 %v2458
        %3078 = vmatpush2.bf16.msra.mxu0 %v2457
        %3079 = vmatprep.subr.bf16.mxu0 %v2454
        %3080 = vmatpush2.bf16.msra.mxu0 %v2453
        %3081 = vmatprep.subr.bf16.mxu0 %v2450
        %3082 = vmatpush2.bf16.msra.mxu0 %v2449
        %3083 = vmatprep.subr.bf16.mxu0 %v2446
        %3084 = vmatpush2.bf16.msra.mxu0 %v2445
        %3085 = vmatprep.mubr.bf16.mxu0 %v1814
        %3086 = vmatmul.mubr.bf16.gmra.mxu0 %v1813
        %v3087 = vpop.f32.mrf.mxu0
        %v3088 = vadd.f32 %v2018, %v3087
        %v3089 = vpop.f32.mrf.mxu0
        %v3090 = vadd.f32 %v2022, %v3089
        %v3091 = vpop.f32.mrf.mxu0
        %v3092 = vadd.f32 %v2018, %v3091
        %v3093 = vpop.f32.mrf.mxu0
        %v3094 = vadd.f32 %v2022, %v3093
        %3095 = vmatprep.mubr.bf16.mxu0 %v1818
        %3096 = vmatmul.mubr.bf16.gmra.mxu0 %v1817
        %v3097 = vpop.f32.mrf.mxu0
        %v3098 = vadd.f32 %v2018, %v3097
        %v3099 = vpop.f32.mrf.mxu0
        %v3100 = vadd.f32 %v2022, %v3099
        %v3101 = vpop.f32.mrf.mxu0
        %v3102 = vadd.f32 %v2018, %v3101
        %v3103 = vpop.f32.mrf.mxu0
        %v3104 = vadd.f32 %v2022, %v3103
        %3105 = vmatprep.mubr.bf16.mxu0 %v1822
        %3106 = vmatmul.mubr.bf16.gmra.mxu0 %v1821
        %v3107 = vpop.f32.mrf.mxu0
        %v3108 = vadd.f32 %v2018, %v3107
        %v3109 = vpop.f32.mrf.mxu0
        %v3110 = vadd.f32 %v2022, %v3109
        %v3111 = vpop.f32.mrf.mxu0
        %v3112 = vadd.f32 %v2018, %v3111
        %v3113 = vpop.f32.mrf.mxu0
        %v3114 = vadd.f32 %v2022, %v3113
        %3115 = vmatprep.mubr.bf16.mxu0 %v1826
        %3116 = vmatmul.mubr.bf16.gmra.mxu0 %v1825
        %v3117 = vpop.f32.mrf.mxu0
        %v3118 = vadd.f32 %v2018, %v3117
        %v3119 = vpop.f32.mrf.mxu0
        %v3120 = vadd.f32 %v2022, %v3119
        %v3121 = vpop.f32.mrf.mxu0
        %v3122 = vadd.f32 %v2018, %v3121
        %v3123 = vpop.f32.mrf.mxu0
        %v3124 = vadd.f32 %v2022, %v3123
        %3125 = vmatprep.mubr.bf16.mxu0 %v1830
        %3126 = vmatmul.mubr.bf16.gmra.mxu0 %v1829
        %v3127 = vpop.f32.mrf.mxu0
        %v3128 = vadd.f32 %v2018, %v3127
        %v3129 = vpop.f32.mrf.mxu0
        %v3130 = vadd.f32 %v2022, %v3129
        %v3131 = vpop.f32.mrf.mxu0
        %v3132 = vadd.f32 %v2018, %v3131
        %v3133 = vpop.f32.mrf.mxu0
        %v3134 = vadd.f32 %v2022, %v3133
        %3135 = vmatprep.mubr.bf16.mxu0 %v1834
        %3136 = vmatmul.mubr.bf16.gmra.mxu0 %v1833
        %v3137 = vpop.f32.mrf.mxu0
        %v3138 = vadd.f32 %v2018, %v3137
        %v3139 = vpop.f32.mrf.mxu0
        %v3140 = vadd.f32 %v2022, %v3139
        %v3141 = vpop.f32.mrf.mxu0
        %v3142 = vadd.f32 %v2018, %v3141
        %v3143 = vpop.f32.mrf.mxu0
        %v3144 = vadd.f32 %v2022, %v3143
        %3145 = vmatprep.mubr.bf16.mxu0 %v1838
        %3146 = vmatmul.mubr.bf16.gmra.mxu0 %v1837
        %v3147 = vpop.f32.mrf.mxu0
        %v3148 = vadd.f32 %v2018, %v3147
        %v3149 = vpop.f32.mrf.mxu0
        %v3150 = vadd.f32 %v2022, %v3149
        %v3151 = vpop.f32.mrf.mxu0
        %v3152 = vadd.f32 %v2018, %v3151
        %v3153 = vpop.f32.mrf.mxu0
        %v3154 = vadd.f32 %v2022, %v3153
        %3155 = vmatprep.mubr.bf16.mxu0 %v1842
        %3156 = vmatmul.mubr.bf16.gmra.mxu0 %v1841
        %v3157 = vpop.f32.mrf.mxu0
        %v3158 = vadd.f32 %v2018, %v3157
        %v3159 = vpop.f32.mrf.mxu0
        %v3160 = vadd.f32 %v2022, %v3159
        %v3161 = vpop.f32.mrf.mxu0
        %v3162 = vadd.f32 %v2018, %v3161
        %v3163 = vpop.f32.mrf.mxu0
        %v3164 = vadd.f32 %v2022, %v3163
        %3165 = vmatprep.mubr.bf16.mxu0 %v1846
        %3166 = vmatmul.mubr.bf16.gmra.mxu0 %v1845
        %v3167 = vpop.f32.mrf.mxu0
        %v3168 = vadd.f32 %v2018, %v3167
        %v3169 = vpop.f32.mrf.mxu0
        %v3170 = vadd.f32 %v2022, %v3169
        %v3171 = vpop.f32.mrf.mxu0
        %v3172 = vadd.f32 %v2018, %v3171
        %v3173 = vpop.f32.mrf.mxu0
        %v3174 = vadd.f32 %v2022, %v3173
        %3175 = vmatprep.mubr.bf16.mxu0 %v1850
        %3176 = vmatmul.mubr.bf16.gmra.mxu0 %v1849
        %v3177 = vpop.f32.mrf.mxu0
        %v3178 = vadd.f32 %v2018, %v3177
        %v3179 = vpop.f32.mrf.mxu0
        %v3180 = vadd.f32 %v2022, %v3179
        %v3181 = vpop.f32.mrf.mxu0
        %v3182 = vadd.f32 %v2018, %v3181
        %v3183 = vpop.f32.mrf.mxu0
        %v3184 = vadd.f32 %v2022, %v3183
        %3185 = vmatprep.mubr.bf16.mxu0 %v1854
        %3186 = vmatmul.mubr.bf16.gmra.mxu0 %v1853
        %v3187 = vpop.f32.mrf.mxu0
        %v3188 = vadd.f32 %v2018, %v3187
        %v3189 = vpop.f32.mrf.mxu0
        %v3190 = vadd.f32 %v2022, %v3189
        %v3191 = vpop.f32.mrf.mxu0
        %v3192 = vadd.f32 %v2018, %v3191
        %v3193 = vpop.f32.mrf.mxu0
        %v3194 = vadd.f32 %v2022, %v3193
        %3195 = vmatprep.mubr.bf16.mxu0 %v1858
        %3196 = vmatmul.mubr.bf16.gmra.mxu0 %v1857
        %v3197 = vpop.f32.mrf.mxu0
        %v3198 = vadd.f32 %v2018, %v3197
        %v3199 = vpop.f32.mrf.mxu0
        %v3200 = vadd.f32 %v2022, %v3199
        %v3201 = vpop.f32.mrf.mxu0
        %v3202 = vadd.f32 %v2018, %v3201
        %v3203 = vpop.f32.mrf.mxu0
        %v3204 = vadd.f32 %v2022, %v3203
        %3205 = vmatprep.mubr.bf16.mxu0 %v1862
        %3206 = vmatmul.mubr.bf16.gmra.mxu0 %v1861
        %v3207 = vpop.f32.mrf.mxu0
        %v3208 = vadd.f32 %v2018, %v3207
        %v3209 = vpop.f32.mrf.mxu0
        %v3210 = vadd.f32 %v2022, %v3209
        %v3211 = vpop.f32.mrf.mxu0
        %v3212 = vadd.f32 %v2018, %v3211
        %v3213 = vpop.f32.mrf.mxu0
        %v3214 = vadd.f32 %v2022, %v3213
        %3215 = vmatprep.mubr.bf16.mxu0 %v1866
        %3216 = vmatmul.mubr.bf16.gmra.mxu0 %v1865
        %v3217 = vpop.f32.mrf.mxu0
        %v3218 = vadd.f32 %v2018, %v3217
        %v3219 = vpop.f32.mrf.mxu0
        %v3220 = vadd.f32 %v2022, %v3219
        %v3221 = vpop.f32.mrf.mxu0
        %v3222 = vadd.f32 %v2018, %v3221
        %v3223 = vpop.f32.mrf.mxu0
        %v3224 = vadd.f32 %v2022, %v3223
        %3225 = vmatprep.mubr.bf16.mxu0 %v1870
        %3226 = vmatmul.mubr.bf16.gmra.mxu0 %v1869
        %v3227 = vpop.f32.mrf.mxu0
        %v3228 = vadd.f32 %v2018, %v3227
        %v3229 = vpop.f32.mrf.mxu0
        %v3230 = vadd.f32 %v2022, %v3229
        %v3231 = vpop.f32.mrf.mxu0
        %v3232 = vadd.f32 %v2018, %v3231
        %v3233 = vpop.f32.mrf.mxu0
        %v3234 = vadd.f32 %v2022, %v3233
        %3235 = vmatprep.mubr.bf16.mxu0 %v1874
        %3236 = vmatmul.mubr.bf16.gmra.mxu0 %v1873
        %v3237 = vpop.f32.mrf.mxu0
        %v3238 = vadd.f32 %v2018, %v3237
        %v3239 = vpop.f32.mrf.mxu0
        %v3240 = vadd.f32 %v2022, %v3239
        %v3241 = vpop.f32.mrf.mxu0
        %v3242 = vadd.f32 %v2018, %v3241
        %v3243 = vpop.f32.mrf.mxu0
        %v3244 = vadd.f32 %v2022, %v3243
        %3245 = vdwg.mxu0
        %3246 = vmatprep.subr.bf16.mxu0 %v2506
        %3247 = vmatpush1.bf16.msra.mxu0 %v2505
        %3248 = vmatprep.subr.bf16.mxu0 %v2502
        %3249 = vmatpush1.bf16.msra.mxu0 %v2501
        %3250 = vmatprep.subr.bf16.mxu0 %v2498
        %3251 = vmatpush1.bf16.msra.mxu0 %v2497
        %3252 = vmatprep.subr.bf16.mxu0 %v2494
        %3253 = vmatpush1.bf16.msra.mxu0 %v2493
        %3254 = vmatprep.subr.bf16.mxu0 %v2490
        %3255 = vmatpush1.bf16.msra.mxu0 %v2489
        %3256 = vmatprep.subr.bf16.mxu0 %v2486
        %3257 = vmatpush1.bf16.msra.mxu0 %v2485
        %3258 = vmatprep.subr.bf16.mxu0 %v2482
        %3259 = vmatpush1.bf16.msra.mxu0 %v2481
        %3260 = vmatprep.subr.bf16.mxu0 %v2478
        %3261 = vmatpush1.bf16.msra.mxu0 %v2477
        %3262 = vmatprep.subr.bf16.mxu0 %v2538
        %3263 = vmatpush2.bf16.msra.mxu0 %v2537
        %3264 = vmatprep.subr.bf16.mxu0 %v2534
        %3265 = vmatpush2.bf16.msra.mxu0 %v2533
        %3266 = vmatprep.subr.bf16.mxu0 %v2530
        %3267 = vmatpush2.bf16.msra.mxu0 %v2529
        %3268 = vmatprep.subr.bf16.mxu0 %v2526
        %3269 = vmatpush2.bf16.msra.mxu0 %v2525
        %3270 = vmatprep.subr.bf16.mxu0 %v2522
        %3271 = vmatpush2.bf16.msra.mxu0 %v2521
        %3272 = vmatprep.subr.bf16.mxu0 %v2518
        %3273 = vmatpush2.bf16.msra.mxu0 %v2517
        %3274 = vmatprep.subr.bf16.mxu0 %v2514
        %3275 = vmatpush2.bf16.msra.mxu0 %v2513
        %3276 = vmatprep.subr.bf16.mxu0 %v2510
        %3277 = vmatpush2.bf16.msra.mxu0 %v2509
        %3278 = vmatprep.mubr.bf16.mxu0 %v1816
        %3279 = vmatmul.mubr.bf16.gmra.mxu0 %v1815
        %v3280 = vpop.f32.mrf.mxu0
        %v3281 = vadd.f32 %v3088, %v3280
        %v3282 = vpop.f32.mrf.mxu0
        %v3283 = vadd.f32 %v3090, %v3282
        %v3284 = vpop.f32.mrf.mxu0
        %v3285 = vadd.f32 %v3092, %v3284
        %v3286 = vpop.f32.mrf.mxu0
        %v3287 = vadd.f32 %v3094, %v3286
        %3288 = vmatprep.mubr.bf16.mxu0 %v1820
        %3289 = vmatmul.mubr.bf16.gmra.mxu0 %v1819
        %v3290 = vpop.f32.mrf.mxu0
        %v3291 = vadd.f32 %v3098, %v3290
        %v3292 = vpop.f32.mrf.mxu0
        %v3293 = vadd.f32 %v3100, %v3292
        %v3294 = vpop.f32.mrf.mxu0
        %v3295 = vadd.f32 %v3102, %v3294
        %v3296 = vpop.f32.mrf.mxu0
        %v3297 = vadd.f32 %v3104, %v3296
        %3298 = vmatprep.mubr.bf16.mxu0 %v1824
        %3299 = vmatmul.mubr.bf16.gmra.mxu0 %v1823
        %v3300 = vpop.f32.mrf.mxu0
        %v3301 = vadd.f32 %v3108, %v3300
        %v3302 = vpop.f32.mrf.mxu0
        %v3303 = vadd.f32 %v3110, %v3302
        %v3304 = vpop.f32.mrf.mxu0
        %v3305 = vadd.f32 %v3112, %v3304
        %v3306 = vpop.f32.mrf.mxu0
        %v3307 = vadd.f32 %v3114, %v3306
        %3308 = vmatprep.mubr.bf16.mxu0 %v1828
        %3309 = vmatmul.mubr.bf16.gmra.mxu0 %v1827
        %v3310 = vpop.f32.mrf.mxu0
        %v3311 = vadd.f32 %v3118, %v3310
        %v3312 = vpop.f32.mrf.mxu0
        %v3313 = vadd.f32 %v3120, %v3312
        %v3314 = vpop.f32.mrf.mxu0
        %v3315 = vadd.f32 %v3122, %v3314
        %v3316 = vpop.f32.mrf.mxu0
        %v3317 = vadd.f32 %v3124, %v3316
        %3318 = vmatprep.mubr.bf16.mxu0 %v1832
        %3319 = vmatmul.mubr.bf16.gmra.mxu0 %v1831
        %v3320 = vpop.f32.mrf.mxu0
        %v3321 = vadd.f32 %v3128, %v3320
        %v3322 = vpop.f32.mrf.mxu0
        %v3323 = vadd.f32 %v3130, %v3322
        %v3324 = vpop.f32.mrf.mxu0
        %v3325 = vadd.f32 %v3132, %v3324
        %v3326 = vpop.f32.mrf.mxu0
        %v3327 = vadd.f32 %v3134, %v3326
        %3328 = vmatprep.mubr.bf16.mxu0 %v1836
        %3329 = vmatmul.mubr.bf16.gmra.mxu0 %v1835
        %v3330 = vpop.f32.mrf.mxu0
        %v3331 = vadd.f32 %v3138, %v3330
        %v3332 = vpop.f32.mrf.mxu0
        %v3333 = vadd.f32 %v3140, %v3332
        %v3334 = vpop.f32.mrf.mxu0
        %v3335 = vadd.f32 %v3142, %v3334
        %v3336 = vpop.f32.mrf.mxu0
        %v3337 = vadd.f32 %v3144, %v3336
        %3338 = vmatprep.mubr.bf16.mxu0 %v1840
        %3339 = vmatmul.mubr.bf16.gmra.mxu0 %v1839
        %v3340 = vpop.f32.mrf.mxu0
        %v3341 = vadd.f32 %v3148, %v3340
        %v3342 = vpop.f32.mrf.mxu0
        %v3343 = vadd.f32 %v3150, %v3342
        %v3344 = vpop.f32.mrf.mxu0
        %v3345 = vadd.f32 %v3152, %v3344
        %v3346 = vpop.f32.mrf.mxu0
        %v3347 = vadd.f32 %v3154, %v3346
        %3348 = vmatprep.mubr.bf16.mxu0 %v1844
        %3349 = vmatmul.mubr.bf16.gmra.mxu0 %v1843
        %v3350 = vpop.f32.mrf.mxu0
        %v3351 = vadd.f32 %v3158, %v3350
        %v3352 = vpop.f32.mrf.mxu0
        %v3353 = vadd.f32 %v3160, %v3352
        %v3354 = vpop.f32.mrf.mxu0
        %v3355 = vadd.f32 %v3162, %v3354
        %v3356 = vpop.f32.mrf.mxu0
        %v3357 = vadd.f32 %v3164, %v3356
        %3358 = vmatprep.mubr.bf16.mxu0 %v1848
        %3359 = vmatmul.mubr.bf16.gmra.mxu0 %v1847
        %v3360 = vpop.f32.mrf.mxu0
        %v3361 = vadd.f32 %v3168, %v3360
        %v3362 = vpop.f32.mrf.mxu0
        %v3363 = vadd.f32 %v3170, %v3362
        %v3364 = vpop.f32.mrf.mxu0
        %v3365 = vadd.f32 %v3172, %v3364
        %v3366 = vpop.f32.mrf.mxu0
        %v3367 = vadd.f32 %v3174, %v3366
        %3368 = vmatprep.mubr.bf16.mxu0 %v1852
        %3369 = vmatmul.mubr.bf16.gmra.mxu0 %v1851
        %v3370 = vpop.f32.mrf.mxu0
        %v3371 = vadd.f32 %v3178, %v3370
        %v3372 = vpop.f32.mrf.mxu0
        %v3373 = vadd.f32 %v3180, %v3372
        %v3374 = vpop.f32.mrf.mxu0
        %v3375 = vadd.f32 %v3182, %v3374
        %v3376 = vpop.f32.mrf.mxu0
        %v3377 = vadd.f32 %v3184, %v3376
        %3378 = vmatprep.mubr.bf16.mxu0 %v1856
        %3379 = vmatmul.mubr.bf16.gmra.mxu0 %v1855
        %v3380 = vpop.f32.mrf.mxu0
        %v3381 = vadd.f32 %v3188, %v3380
        %v3382 = vpop.f32.mrf.mxu0
        %v3383 = vadd.f32 %v3190, %v3382
        %v3384 = vpop.f32.mrf.mxu0
        %v3385 = vadd.f32 %v3192, %v3384
        %v3386 = vpop.f32.mrf.mxu0
        %v3387 = vadd.f32 %v3194, %v3386
        %3388 = vmatprep.mubr.bf16.mxu0 %v1860
        %3389 = vmatmul.mubr.bf16.gmra.mxu0 %v1859
        %v3390 = vpop.f32.mrf.mxu0
        %v3391 = vadd.f32 %v3198, %v3390
        %v3392 = vpop.f32.mrf.mxu0
        %v3393 = vadd.f32 %v3200, %v3392
        %v3394 = vpop.f32.mrf.mxu0
        %v3395 = vadd.f32 %v3202, %v3394
        %v3396 = vpop.f32.mrf.mxu0
        %v3397 = vadd.f32 %v3204, %v3396
        %3398 = vmatprep.mubr.bf16.mxu0 %v1864
        %3399 = vmatmul.mubr.bf16.gmra.mxu0 %v1863
        %v3400 = vpop.f32.mrf.mxu0
        %v3401 = vadd.f32 %v3208, %v3400
        %v3402 = vpop.f32.mrf.mxu0
        %v3403 = vadd.f32 %v3210, %v3402
        %v3404 = vpop.f32.mrf.mxu0
        %v3405 = vadd.f32 %v3212, %v3404
        %v3406 = vpop.f32.mrf.mxu0
        %v3407 = vadd.f32 %v3214, %v3406
        %3408 = vmatprep.mubr.bf16.mxu0 %v1868
        %3409 = vmatmul.mubr.bf16.gmra.mxu0 %v1867
        %v3410 = vpop.f32.mrf.mxu0
        %v3411 = vadd.f32 %v3218, %v3410
        %v3412 = vpop.f32.mrf.mxu0
        %v3413 = vadd.f32 %v3220, %v3412
        %v3414 = vpop.f32.mrf.mxu0
        %v3415 = vadd.f32 %v3222, %v3414
        %v3416 = vpop.f32.mrf.mxu0
        %v3417 = vadd.f32 %v3224, %v3416
        %3418 = vmatprep.mubr.bf16.mxu0 %v1872
        %3419 = vmatmul.mubr.bf16.gmra.mxu0 %v1871
        %v3420 = vpop.f32.mrf.mxu0
        %v3421 = vadd.f32 %v3228, %v3420
        %v3422 = vpop.f32.mrf.mxu0
        %v3423 = vadd.f32 %v3230, %v3422
        %v3424 = vpop.f32.mrf.mxu0
        %v3425 = vadd.f32 %v3232, %v3424
        %v3426 = vpop.f32.mrf.mxu0
        %v3427 = vadd.f32 %v3234, %v3426
        %3428 = vmatprep.mubr.bf16.mxu0 %v1876
        %3429 = vmatmul.mubr.bf16.gmra.mxu0 %v1875
        %v3430 = vpop.f32.mrf.mxu0
        %v3431 = vadd.f32 %v3238, %v3430
        %v3432 = vpop.f32.mrf.mxu0
        %v3433 = vadd.f32 %v3240, %v3432
        %v3434 = vpop.f32.mrf.mxu0
        %v3435 = vadd.f32 %v3242, %v3434
        %v3436 = vpop.f32.mrf.mxu0
        %v3437 = vadd.f32 %v3244, %v3436
        %3438 = vdwg.mxu0
        %v3439 = vtanh.pop %v2895
        %v3440 = vtanh.pop %v2897
        %v3441 = vtanh.pop %v2899
        %v3442 = vtanh.pop %v2901
        %v3443 = vtanh.pop %v2905
        %v3444 = vtanh.pop %v2907
        %v3445 = vtanh.pop %v2909
        %v3446 = vtanh.pop %v2911
        %v3447 = vtanh.pop %v2915
        %v3448 = vtanh.pop %v2917
        %v3449 = vtanh.pop %v2919
        %v3450 = vtanh.pop %v2921
        %v3451 = vtanh.pop %v2925
        %v3452 = vtanh.pop %v2927
        %v3453 = vtanh.pop %v2929
        %v3454 = vtanh.pop %v2931
        %v3455 = vtanh.pop %v2935
        %v3456 = vtanh.pop %v2937
        %v3457 = vtanh.pop %v2939
        %v3458 = vtanh.pop %v2941
        %v3459 = vtanh.pop %v2945
        %v3460 = vtanh.pop %v2947
        %v3461 = vtanh.pop %v2949
        %v3462 = vtanh.pop %v2951
        %v3463 = vtanh.pop %v2955
        %v3464 = vtanh.pop %v2957
        %v3465 = vtanh.pop %v2959
        %v3466 = vtanh.pop %v2961
        %v3467 = vtanh.pop %v2965
        %v3468 = vtanh.pop %v2967
        %v3469 = vtanh.pop %v2969
        %v3470 = vtanh.pop %v2971
        %v3471 = vtanh.pop %v2975
        %v3472 = vtanh.pop %v2977
        %v3473 = vtanh.pop %v2979
        %v3474 = vtanh.pop %v2981
        %v3475 = vtanh.pop %v2985
        %v3476 = vtanh.pop %v2987
        %v3477 = vtanh.pop %v2989
        %v3478 = vtanh.pop %v2991
        %v3479 = vtanh.pop %v2995
        %v3480 = vtanh.pop %v2997
        %v3481 = vtanh.pop %v2999
        %v3482 = vtanh.pop %v3001
        %v3483 = vtanh.pop %v3005
        %v3484 = vtanh.pop %v3007
        %v3485 = vtanh.pop %v3009
        %v3486 = vtanh.pop %v3011
        %v3487 = vtanh.pop %v3015
        %v3488 = vtanh.pop %v3017
        %v3489 = vtanh.pop %v3019
        %v3490 = vtanh.pop %v3021
        %v3491 = vtanh.pop %v3025
        %v3492 = vtanh.pop %v3027
        %v3493 = vtanh.pop %v3029
        %v3494 = vtanh.pop %v3031
        %v3495 = vtanh.pop %v3035
        %v3496 = vtanh.pop %v3037
        %v3497 = vtanh.pop %v3039
        %v3498 = vtanh.pop %v3041
        %v3499 = vtanh.pop %v3045
        %v3500 = vtanh.pop %v3047
        %v3501 = vtanh.pop %v3049
        %v3502 = vtanh.pop %v3051
        %v3503 = vxor.u32 %v3281, 2147483648
        %v3504 = vxor.u32 %v3283, 2147483648
        %v3505 = vxor.u32 %v3285, 2147483648
        %v3506 = vxor.u32 %v3287, 2147483648
        %v3507 = vxor.u32 %v3291, 2147483648
        %v3508 = vxor.u32 %v3293, 2147483648
        %v3509 = vxor.u32 %v3295, 2147483648
        %v3510 = vxor.u32 %v3297, 2147483648
        %v3511 = vxor.u32 %v3301, 2147483648
        %v3512 = vxor.u32 %v3303, 2147483648
        %v3513 = vxor.u32 %v3305, 2147483648
        %v3514 = vxor.u32 %v3307, 2147483648
        %v3515 = vxor.u32 %v3311, 2147483648
        %v3516 = vxor.u32 %v3313, 2147483648
        %v3517 = vxor.u32 %v3315, 2147483648
        %v3518 = vxor.u32 %v3317, 2147483648
        %v3519 = vxor.u32 %v3321, 2147483648
        %v3520 = vxor.u32 %v3323, 2147483648
        %v3521 = vxor.u32 %v3325, 2147483648
        %v3522 = vxor.u32 %v3327, 2147483648
        %v3523 = vxor.u32 %v3331, 2147483648
        %v3524 = vxor.u32 %v3333, 2147483648
        %v3525 = vxor.u32 %v3335, 2147483648
        %v3526 = vxor.u32 %v3337, 2147483648
        %v3527 = vxor.u32 %v3341, 2147483648
        %v3528 = vxor.u32 %v3343, 2147483648
        %v3529 = vxor.u32 %v3345, 2147483648
        %v3530 = vxor.u32 %v3347, 2147483648
        %v3531 = vxor.u32 %v3351, 2147483648
        %v3532 = vxor.u32 %v3353, 2147483648
        %v3533 = vxor.u32 %v3355, 2147483648
        %v3534 = vxor.u32 %v3357, 2147483648
        %v3535 = vxor.u32 %v3361, 2147483648
        %v3536 = vxor.u32 %v3363, 2147483648
        %v3537 = vxor.u32 %v3365, 2147483648
        %v3538 = vxor.u32 %v3367, 2147483648
        %v3539 = vxor.u32 %v3371, 2147483648
        %v3540 = vxor.u32 %v3373, 2147483648
        %v3541 = vxor.u32 %v3375, 2147483648
        %v3542 = vxor.u32 %v3377, 2147483648
        %v3543 = vxor.u32 %v3381, 2147483648
        %v3544 = vxor.u32 %v3383, 2147483648
        %v3545 = vxor.u32 %v3385, 2147483648
        %v3546 = vxor.u32 %v3387, 2147483648
        %v3547 = vxor.u32 %v3391, 2147483648
        %v3548 = vxor.u32 %v3393, 2147483648
        %v3549 = vxor.u32 %v3395, 2147483648
        %v3550 = vxor.u32 %v3397, 2147483648
        %v3551 = vxor.u32 %v3401, 2147483648
        %v3552 = vxor.u32 %v3403, 2147483648
        %v3553 = vxor.u32 %v3405, 2147483648
        %v3554 = vxor.u32 %v3407, 2147483648
        %v3555 = vxor.u32 %v3411, 2147483648
        %v3556 = vxor.u32 %v3413, 2147483648
        %v3557 = vxor.u32 %v3415, 2147483648
        %v3558 = vxor.u32 %v3417, 2147483648
        %v3559 = vxor.u32 %v3421, 2147483648
        %v3560 = vxor.u32 %v3423, 2147483648
        %v3561 = vxor.u32 %v3425, 2147483648
        %v3562 = vxor.u32 %v3427, 2147483648
        %v3563 = vxor.u32 %v3431, 2147483648
        %v3564 = vxor.u32 %v3433, 2147483648
        %v3565 = vxor.u32 %v3435, 2147483648
        %v3566 = vxor.u32 %v3437, 2147483648
        %v3567 = vmul.f32 %v3503, 1.442695
        %v3568 = vpow.pop %v3567
        %v3569 = vmul.f32 %v3504, 1.442695
        %v3570 = vpow.pop %v3569
        %v3571 = vmul.f32 %v3505, 1.442695
        %v3572 = vpow.pop %v3571
        %v3573 = vmul.f32 %v3506, 1.442695
        %v3574 = vpow.pop %v3573
        %v3575 = vmul.f32 %v3507, 1.442695
        %v3576 = vpow.pop %v3575
        %v3577 = vmul.f32 %v3508, 1.442695
        %v3578 = vpow.pop %v3577
        %v3579 = vmul.f32 %v3509, 1.442695
        %v3580 = vpow.pop %v3579
        %v3581 = vmul.f32 %v3510, 1.442695
        %v3582 = vpow.pop %v3581
        %v3583 = vmul.f32 %v3511, 1.442695
        %v3584 = vpow.pop %v3583
        %v3585 = vmul.f32 %v3512, 1.442695
        %v3586 = vpow.pop %v3585
        %v3587 = vmul.f32 %v3513, 1.442695
        %v3588 = vpow.pop %v3587
        %v3589 = vmul.f32 %v3514, 1.442695
        %v3590 = vpow.pop %v3589
        %v3591 = vmul.f32 %v3515, 1.442695
        %v3592 = vpow.pop %v3591
        %v3593 = vmul.f32 %v3516, 1.442695
        %v3594 = vpow.pop %v3593
        %v3595 = vmul.f32 %v3517, 1.442695
        %v3596 = vpow.pop %v3595
        %v3597 = vmul.f32 %v3518, 1.442695
        %v3598 = vpow.pop %v3597
        %v3599 = vmul.f32 %v3519, 1.442695
        %v3600 = vpow.pop %v3599
        %v3601 = vmul.f32 %v3520, 1.442695
        %v3602 = vpow.pop %v3601
        %v3603 = vmul.f32 %v3521, 1.442695
        %v3604 = vpow.pop %v3603
        %v3605 = vmul.f32 %v3522, 1.442695
        %v3606 = vpow.pop %v3605
        %v3607 = vmul.f32 %v3523, 1.442695
        %v3608 = vpow.pop %v3607
        %v3609 = vmul.f32 %v3524, 1.442695
        %v3610 = vpow.pop %v3609
        %v3611 = vmul.f32 %v3525, 1.442695
        %v3612 = vpow.pop %v3611
        %v3613 = vmul.f32 %v3526, 1.442695
        %v3614 = vpow.pop %v3613
        %v3615 = vmul.f32 %v3527, 1.442695
        %v3616 = vpow.pop %v3615
        %v3617 = vmul.f32 %v3528, 1.442695
        %v3618 = vpow.pop %v3617
        %v3619 = vmul.f32 %v3529, 1.442695
        %v3620 = vpow.pop %v3619
        %v3621 = vmul.f32 %v3530, 1.442695
        %v3622 = vpow.pop %v3621
        %v3623 = vmul.f32 %v3531, 1.442695
        %v3624 = vpow.pop %v3623
        %v3625 = vmul.f32 %v3532, 1.442695
        %v3626 = vpow.pop %v3625
        %v3627 = vmul.f32 %v3533, 1.442695
        %v3628 = vpow.pop %v3627
        %v3629 = vmul.f32 %v3534, 1.442695
        %v3630 = vpow.pop %v3629
        %v3631 = vmul.f32 %v3535, 1.442695
        %v3632 = vpow.pop %v3631
        %v3633 = vmul.f32 %v3536, 1.442695
        %v3634 = vpow.pop %v3633
        %v3635 = vmul.f32 %v3537, 1.442695
        %v3636 = vpow.pop %v3635
        %v3637 = vmul.f32 %v3538, 1.442695
        %v3638 = vpow.pop %v3637
        %v3639 = vmul.f32 %v3539, 1.442695
        %v3640 = vpow.pop %v3639
        %v3641 = vmul.f32 %v3540, 1.442695
        %v3642 = vpow.pop %v3641
        %v3643 = vmul.f32 %v3541, 1.442695
        %v3644 = vpow.pop %v3643
        %v3645 = vmul.f32 %v3542, 1.442695
        %v3646 = vpow.pop %v3645
        %v3647 = vmul.f32 %v3543, 1.442695
        %v3648 = vpow.pop %v3647
        %v3649 = vmul.f32 %v3544, 1.442695
        %v3650 = vpow.pop %v3649
        %v3651 = vmul.f32 %v3545, 1.442695
        %v3652 = vpow.pop %v3651
        %v3653 = vmul.f32 %v3546, 1.442695
        %v3654 = vpow.pop %v3653
        %v3655 = vmul.f32 %v3547, 1.442695
        %v3656 = vpow.pop %v3655
        %v3657 = vmul.f32 %v3548, 1.442695
        %v3658 = vpow.pop %v3657
        %v3659 = vmul.f32 %v3549, 1.442695
        %v3660 = vpow.pop %v3659
        %v3661 = vmul.f32 %v3550, 1.442695
        %v3662 = vpow.pop %v3661
        %v3663 = vmul.f32 %v3551, 1.442695
        %v3664 = vpow.pop %v3663
        %v3665 = vmul.f32 %v3552, 1.442695
        %v3666 = vpow.pop %v3665
        %v3667 = vmul.f32 %v3553, 1.442695
        %v3668 = vpow.pop %v3667
        %v3669 = vmul.f32 %v3554, 1.442695
        %v3670 = vpow.pop %v3669
        %v3671 = vmul.f32 %v3555, 1.442695
        %v3672 = vpow.pop %v3671
        %v3673 = vmul.f32 %v3556, 1.442695
        %v3674 = vpow.pop %v3673
        %v3675 = vmul.f32 %v3557, 1.442695
        %v3676 = vpow.pop %v3675
        %v3677 = vmul.f32 %v3558, 1.442695
        %v3678 = vpow.pop %v3677
        %v3679 = vmul.f32 %v3559, 1.442695
        %v3680 = vpow.pop %v3679
        %v3681 = vmul.f32 %v3560, 1.442695
        %v3682 = vpow.pop %v3681
        %v3683 = vmul.f32 %v3561, 1.442695
        %v3684 = vpow.pop %v3683
        %v3685 = vmul.f32 %v3562, 1.442695
        %v3686 = vpow.pop %v3685
        %v3687 = vmul.f32 %v3563, 1.442695
        %v3688 = vpow.pop %v3687
        %v3689 = vmul.f32 %v3564, 1.442695
        %v3690 = vpow.pop %v3689
        %v3691 = vmul.f32 %v3565, 1.442695
        %v3692 = vpow.pop %v3691
        %v3693 = vmul.f32 %v3566, 1.442695
        %v3694 = vpow.pop %v3693
        %v3695 = vadd.f32 %v3568, 1.0
        %v3696 = vadd.f32 %v3570, 1.0
        %v3697 = vadd.f32 %v3572, 1.0
        %v3698 = vadd.f32 %v3574, 1.0
        %v3699 = vadd.f32 %v3576, 1.0
        %v3700 = vadd.f32 %v3578, 1.0
        %v3701 = vadd.f32 %v3580, 1.0
        %v3702 = vadd.f32 %v3582, 1.0
        %v3703 = vadd.f32 %v3584, 1.0
        %v3704 = vadd.f32 %v3586, 1.0
        %v3705 = vadd.f32 %v3588, 1.0
        %v3706 = vadd.f32 %v3590, 1.0
        %v3707 = vadd.f32 %v3592, 1.0
        %v3708 = vadd.f32 %v3594, 1.0
        %v3709 = vadd.f32 %v3596, 1.0
        %v3710 = vadd.f32 %v3598, 1.0
        %v3711 = vadd.f32 %v3600, 1.0
        %v3712 = vadd.f32 %v3602, 1.0
        %v3713 = vadd.f32 %v3604, 1.0
        %v3714 = vadd.f32 %v3606, 1.0
        %v3715 = vadd.f32 %v3608, 1.0
        %v3716 = vadd.f32 %v3610, 1.0
        %v3717 = vadd.f32 %v3612, 1.0
        %v3718 = vadd.f32 %v3614, 1.0
        %v3719 = vadd.f32 %v3616, 1.0
        %v3720 = vadd.f32 %v3618, 1.0
        %v3721 = vadd.f32 %v3620, 1.0
        %v3722 = vadd.f32 %v3622, 1.0
        %v3723 = vadd.f32 %v3624, 1.0
        %v3724 = vadd.f32 %v3626, 1.0
        %v3725 = vadd.f32 %v3628, 1.0
        %v3726 = vadd.f32 %v3630, 1.0
        %v3727 = vadd.f32 %v3632, 1.0
        %v3728 = vadd.f32 %v3634, 1.0
        %v3729 = vadd.f32 %v3636, 1.0
        %v3730 = vadd.f32 %v3638, 1.0
        %v3731 = vadd.f32 %v3640, 1.0
        %v3732 = vadd.f32 %v3642, 1.0
        %v3733 = vadd.f32 %v3644, 1.0
        %v3734 = vadd.f32 %v3646, 1.0
        %v3735 = vadd.f32 %v3648, 1.0
        %v3736 = vadd.f32 %v3650, 1.0
        %v3737 = vadd.f32 %v3652, 1.0
        %v3738 = vadd.f32 %v3654, 1.0
        %v3739 = vadd.f32 %v3656, 1.0
        %v3740 = vadd.f32 %v3658, 1.0
        %v3741 = vadd.f32 %v3660, 1.0
        %v3742 = vadd.f32 %v3662, 1.0
        %v3743 = vadd.f32 %v3664, 1.0
        %v3744 = vadd.f32 %v3666, 1.0
        %v3745 = vadd.f32 %v3668, 1.0
        %v3746 = vadd.f32 %v3670, 1.0
        %v3747 = vadd.f32 %v3672, 1.0
        %v3748 = vadd.f32 %v3674, 1.0
        %v3749 = vadd.f32 %v3676, 1.0
        %v3750 = vadd.f32 %v3678, 1.0
        %v3751 = vadd.f32 %v3680, 1.0
        %v3752 = vadd.f32 %v3682, 1.0
        %v3753 = vadd.f32 %v3684, 1.0
        %v3754 = vadd.f32 %v3686, 1.0
        %v3755 = vadd.f32 %v3688, 1.0
        %v3756 = vadd.f32 %v3690, 1.0
        %v3757 = vadd.f32 %v3692, 1.0
        %v3758 = vadd.f32 %v3694, 1.0
        %v3759 = vrcp.pop %v3695
        %v3760 = vmul.f32 1.0, %v3759
        %v3761 = vrcp.pop %v3696
        %v3762 = vmul.f32 1.0, %v3761
        %v3763 = vrcp.pop %v3697
        %v3764 = vmul.f32 1.0, %v3763
        %v3765 = vrcp.pop %v3698
        %v3766 = vmul.f32 1.0, %v3765
        %v3767 = vrcp.pop %v3699
        %v3768 = vmul.f32 1.0, %v3767
        %v3769 = vrcp.pop %v3700
        %v3770 = vmul.f32 1.0, %v3769
        %v3771 = vrcp.pop %v3701
        %v3772 = vmul.f32 1.0, %v3771
        %v3773 = vrcp.pop %v3702
        %v3774 = vmul.f32 1.0, %v3773
        %v3775 = vrcp.pop %v3703
        %v3776 = vmul.f32 1.0, %v3775
        %v3777 = vrcp.pop %v3704
        %v3778 = vmul.f32 1.0, %v3777
        %v3779 = vrcp.pop %v3705
        %v3780 = vmul.f32 1.0, %v3779
        %v3781 = vrcp.pop %v3706
        %v3782 = vmul.f32 1.0, %v3781
        %v3783 = vrcp.pop %v3707
        %v3784 = vmul.f32 1.0, %v3783
        %v3785 = vrcp.pop %v3708
        %v3786 = vmul.f32 1.0, %v3785
        %v3787 = vrcp.pop %v3709
        %v3788 = vmul.f32 1.0, %v3787
        %v3789 = vrcp.pop %v3710
        %v3790 = vmul.f32 1.0, %v3789
        %v3791 = vrcp.pop %v3711
        %v3792 = vmul.f32 1.0, %v3791
        %v3793 = vrcp.pop %v3712
        %v3794 = vmul.f32 1.0, %v3793
        %v3795 = vrcp.pop %v3713
        %v3796 = vmul.f32 1.0, %v3795
        %v3797 = vrcp.pop %v3714
        %v3798 = vmul.f32 1.0, %v3797
        %v3799 = vrcp.pop %v3715
        %v3800 = vmul.f32 1.0, %v3799
        %v3801 = vrcp.pop %v3716
        %v3802 = vmul.f32 1.0, %v3801
        %v3803 = vrcp.pop %v3717
        %v3804 = vmul.f32 1.0, %v3803
        %v3805 = vrcp.pop %v3718
        %v3806 = vmul.f32 1.0, %v3805
        %v3807 = vrcp.pop %v3719
        %v3808 = vmul.f32 1.0, %v3807
        %v3809 = vrcp.pop %v3720
        %v3810 = vmul.f32 1.0, %v3809
        %v3811 = vrcp.pop %v3721
        %v3812 = vmul.f32 1.0, %v3811
        %v3813 = vrcp.pop %v3722
        %v3814 = vmul.f32 1.0, %v3813
        %v3815 = vrcp.pop %v3723
        %v3816 = vmul.f32 1.0, %v3815
        %v3817 = vrcp.pop %v3724
        %v3818 = vmul.f32 1.0, %v3817
        %v3819 = vrcp.pop %v3725
        %v3820 = vmul.f32 1.0, %v3819
        %v3821 = vrcp.pop %v3726
        %v3822 = vmul.f32 1.0, %v3821
        %v3823 = vrcp.pop %v3727
        %v3824 = vmul.f32 1.0, %v3823
        %v3825 = vrcp.pop %v3728
        %v3826 = vmul.f32 1.0, %v3825
        %v3827 = vrcp.pop %v3729
        %v3828 = vmul.f32 1.0, %v3827
        %v3829 = vrcp.pop %v3730
        %v3830 = vmul.f32 1.0, %v3829
        %v3831 = vrcp.pop %v3731
        %v3832 = vmul.f32 1.0, %v3831
        %v3833 = vrcp.pop %v3732
        %v3834 = vmul.f32 1.0, %v3833
        %v3835 = vrcp.pop %v3733
        %v3836 = vmul.f32 1.0, %v3835
        %v3837 = vrcp.pop %v3734
        %v3838 = vmul.f32 1.0, %v3837
        %v3839 = vrcp.pop %v3735
        %v3840 = vmul.f32 1.0, %v3839
        %v3841 = vrcp.pop %v3736
        %v3842 = vmul.f32 1.0, %v3841
        %v3843 = vrcp.pop %v3737
        %v3844 = vmul.f32 1.0, %v3843
        %v3845 = vrcp.pop %v3738
        %v3846 = vmul.f32 1.0, %v3845
        %v3847 = vrcp.pop %v3739
        %v3848 = vmul.f32 1.0, %v3847
        %v3849 = vrcp.pop %v3740
        %v3850 = vmul.f32 1.0, %v3849
        %v3851 = vrcp.pop %v3741
        %v3852 = vmul.f32 1.0, %v3851
        %v3853 = vrcp.pop %v3742
        %v3854 = vmul.f32 1.0, %v3853
        %v3855 = vrcp.pop %v3743
        %v3856 = vmul.f32 1.0, %v3855
        %v3857 = vrcp.pop %v3744
        %v3858 = vmul.f32 1.0, %v3857
        %v3859 = vrcp.pop %v3745
        %v3860 = vmul.f32 1.0, %v3859
        %v3861 = vrcp.pop %v3746
        %v3862 = vmul.f32 1.0, %v3861
        %v3863 = vrcp.pop %v3747
        %v3864 = vmul.f32 1.0, %v3863
        %v3865 = vrcp.pop %v3748
        %v3866 = vmul.f32 1.0, %v3865
        %v3867 = vrcp.pop %v3749
        %v3868 = vmul.f32 1.0, %v3867
        %v3869 = vrcp.pop %v3750
        %v3870 = vmul.f32 1.0, %v3869
        %v3871 = vrcp.pop %v3751
        %v3872 = vmul.f32 1.0, %v3871
        %v3873 = vrcp.pop %v3752
        %v3874 = vmul.f32 1.0, %v3873
        %v3875 = vrcp.pop %v3753
        %v3876 = vmul.f32 1.0, %v3875
        %v3877 = vrcp.pop %v3754
        %v3878 = vmul.f32 1.0, %v3877
        %v3879 = vrcp.pop %v3755
        %v3880 = vmul.f32 1.0, %v3879
        %v3881 = vrcp.pop %v3756
        %v3882 = vmul.f32 1.0, %v3881
        %v3883 = vrcp.pop %v3757
        %v3884 = vmul.f32 1.0, %v3883
        %v3885 = vrcp.pop %v3758
        %v3886 = vmul.f32 1.0, %v3885
        %v3887 = vmul.f32 %v3439, %v3760
        %v3888 = vmul.f32 %v3440, %v3762
        %v3889 = vmul.f32 %v3441, %v3764
        %v3890 = vmul.f32 %v3442, %v3766
        %v3891 = vmul.f32 %v3443, %v3768
        %v3892 = vmul.f32 %v3444, %v3770
        %v3893 = vmul.f32 %v3445, %v3772
        %v3894 = vmul.f32 %v3446, %v3774
        %v3895 = vmul.f32 %v3447, %v3776
        %v3896 = vmul.f32 %v3448, %v3778
        %v3897 = vmul.f32 %v3449, %v3780
        %v3898 = vmul.f32 %v3450, %v3782
        %v3899 = vmul.f32 %v3451, %v3784
        %v3900 = vmul.f32 %v3452, %v3786
        %v3901 = vmul.f32 %v3453, %v3788
        %v3902 = vmul.f32 %v3454, %v3790
        %v3903 = vmul.f32 %v3455, %v3792
        %v3904 = vmul.f32 %v3456, %v3794
        %v3905 = vmul.f32 %v3457, %v3796
        %v3906 = vmul.f32 %v3458, %v3798
        %v3907 = vmul.f32 %v3459, %v3800
        %v3908 = vmul.f32 %v3460, %v3802
        %v3909 = vmul.f32 %v3461, %v3804
        %v3910 = vmul.f32 %v3462, %v3806
        %v3911 = vmul.f32 %v3463, %v3808
        %v3912 = vmul.f32 %v3464, %v3810
        %v3913 = vmul.f32 %v3465, %v3812
        %v3914 = vmul.f32 %v3466, %v3814
        %v3915 = vmul.f32 %v3467, %v3816
        %v3916 = vmul.f32 %v3468, %v3818
        %v3917 = vmul.f32 %v3469, %v3820
        %v3918 = vmul.f32 %v3470, %v3822
        %v3919 = vmul.f32 %v3471, %v3824
        %v3920 = vmul.f32 %v3472, %v3826
        %v3921 = vmul.f32 %v3473, %v3828
        %v3922 = vmul.f32 %v3474, %v3830
        %v3923 = vmul.f32 %v3475, %v3832
        %v3924 = vmul.f32 %v3476, %v3834
        %v3925 = vmul.f32 %v3477, %v3836
        %v3926 = vmul.f32 %v3478, %v3838
        %v3927 = vmul.f32 %v3479, %v3840
        %v3928 = vmul.f32 %v3480, %v3842
        %v3929 = vmul.f32 %v3481, %v3844
        %v3930 = vmul.f32 %v3482, %v3846
        %v3931 = vmul.f32 %v3483, %v3848
        %v3932 = vmul.f32 %v3484, %v3850
        %v3933 = vmul.f32 %v3485, %v3852
        %v3934 = vmul.f32 %v3486, %v3854
        %v3935 = vmul.f32 %v3487, %v3856
        %v3936 = vmul.f32 %v3488, %v3858
        %v3937 = vmul.f32 %v3489, %v3860
        %v3938 = vmul.f32 %v3490, %v3862
        %v3939 = vmul.f32 %v3491, %v3864
        %v3940 = vmul.f32 %v3492, %v3866
        %v3941 = vmul.f32 %v3493, %v3868
        %v3942 = vmul.f32 %v3494, %v3870
        %v3943 = vmul.f32 %v3495, %v3872
        %v3944 = vmul.f32 %v3496, %v3874
        %v3945 = vmul.f32 %v3497, %v3876
        %v3946 = vmul.f32 %v3498, %v3878
        %v3947 = vmul.f32 %v3499, %v3880
        %v3948 = vmul.f32 %v3500, %v3882
        %v3949 = vmul.f32 %v3501, %v3884
        %v3950 = vmul.f32 %v3502, %v3886
        %v3951 = vpack.c.bf16 %v3889, %v3887
        %v3952 = vpack.c.bf16 %v3890, %v3888
        %v3953 = vpack.c.bf16 %v3893, %v3891
        %v3954 = vpack.c.bf16 %v3894, %v3892
        %v3955 = vpack.c.bf16 %v3897, %v3895
        %v3956 = vpack.c.bf16 %v3898, %v3896
        %v3957 = vpack.c.bf16 %v3901, %v3899
        %v3958 = vpack.c.bf16 %v3902, %v3900
        %v3959 = vpack.c.bf16 %v3905, %v3903
        %v3960 = vpack.c.bf16 %v3906, %v3904
        %v3961 = vpack.c.bf16 %v3909, %v3907
        %v3962 = vpack.c.bf16 %v3910, %v3908
        %v3963 = vpack.c.bf16 %v3913, %v3911
        %v3964 = vpack.c.bf16 %v3914, %v3912
        %v3965 = vpack.c.bf16 %v3917, %v3915
        %v3966 = vpack.c.bf16 %v3918, %v3916
        %v3967 = vpack.c.bf16 %v3921, %v3919
        %v3968 = vpack.c.bf16 %v3922, %v3920
        %v3969 = vpack.c.bf16 %v3925, %v3923
        %v3970 = vpack.c.bf16 %v3926, %v3924
        %v3971 = vpack.c.bf16 %v3929, %v3927
        %v3972 = vpack.c.bf16 %v3930, %v3928
        %v3973 = vpack.c.bf16 %v3933, %v3931
        %v3974 = vpack.c.bf16 %v3934, %v3932
        %v3975 = vpack.c.bf16 %v3937, %v3935
        %v3976 = vpack.c.bf16 %v3938, %v3936
        %v3977 = vpack.c.bf16 %v3941, %v3939
        %v3978 = vpack.c.bf16 %v3942, %v3940
        %v3979 = vpack.c.bf16 %v3945, %v3943
        %v3980 = vpack.c.bf16 %v3946, %v3944
        %v3981 = vpack.c.bf16 %v3949, %v3947
        %v3982 = vpack.c.bf16 %v3950, %v3948
        %v3983 = vld [vmem:[%s5] sm:$0xf]
        %v3984 = vld [vmem:[%s5 + $0x4] sm:$0xf]
        %v3985 = vld [vmem:[%s5 + $0x8] sm:$0xf]
        %v3986 = vld [vmem:[%s5 + $0xc] sm:$0xf]
        %v3987 = vld [vmem:[%s5 + $0x10] sm:$0xf]
        %v3988 = vld [vmem:[%s5 + $0x14] sm:$0xf]
        %v3989 = vld [vmem:[%s5 + $0x18] sm:$0xf]
        %v3990 = vld [vmem:[%s5 + $0x1c] sm:$0xf]
        %v3991 = vld [vmem:[%s5 + $0x20] sm:$0xf]
        %v3992 = vld [vmem:[%s5 + $0x24] sm:$0xf]
        %v3993 = vld [vmem:[%s5 + $0x28] sm:$0xf]
        %v3994 = vld [vmem:[%s5 + $0x2c] sm:$0xf]
        %v3995 = vld [vmem:[%s5 + $0x30] sm:$0xf]
        %v3996 = vld [vmem:[%s5 + $0x34] sm:$0xf]
        %v3997 = vld [vmem:[%s5 + $0x38] sm:$0xf]
        %v3998 = vld [vmem:[%s5 + $0x3c] sm:$0xf]
        %v3999 = vld [vmem:[%s5 + $0x40] sm:$0xf]
        %v4000 = vld [vmem:[%s5 + $0x44] sm:$0xf]
        %v4001 = vld [vmem:[%s5 + $0x48] sm:$0xf]
        %v4002 = vld [vmem:[%s5 + $0x4c] sm:$0xf]
        %v4003 = vld [vmem:[%s5 + $0x50] sm:$0xf]
        %v4004 = vld [vmem:[%s5 + $0x54] sm:$0xf]
        %v4005 = vld [vmem:[%s5 + $0x58] sm:$0xf]
        %v4006 = vld [vmem:[%s5 + $0x5c] sm:$0xf]
        %v4007 = vld [vmem:[%s5 + $0x60] sm:$0xf]
        %v4008 = vld [vmem:[%s5 + $0x64] sm:$0xf]
        %v4009 = vld [vmem:[%s5 + $0x68] sm:$0xf]
        %v4010 = vld [vmem:[%s5 + $0x6c] sm:$0xf]
        %v4011 = vld [vmem:[%s5 + $0x70] sm:$0xf]
        %v4012 = vld [vmem:[%s5 + $0x74] sm:$0xf]
        %v4013 = vld [vmem:[%s5 + $0x78] sm:$0xf]
        %v4014 = vld [vmem:[%s5 + $0x7c] sm:$0xf]
        %v4015 = vld [vmem:[#allocation2] sm:$0x1]
        %v4017 = vlaneseq
        %v4018 = vshrl.u32 %v4017, 7
        %v4019 = vsub.s32 0, %v4018
        %v4020 = vrot.slane %v4015, %v4019
        %v4054 = vunpack.c.l.b16 %v3983
        %v4055 = vunpack.c.l.b16 %v3984
        %v4056 = vunpack.c.l.b16 %v3985
        %v4057 = vunpack.c.l.b16 %v3986
        %v4058 = vunpack.c.l.b16 %v3987
        %v4059 = vunpack.c.l.b16 %v3988
        %v4060 = vunpack.c.l.b16 %v3989
        %v4061 = vunpack.c.l.b16 %v3990
        %v4062 = vunpack.c.l.b16 %v3991
        %v4063 = vunpack.c.l.b16 %v3992
        %v4064 = vunpack.c.l.b16 %v3993
        %v4065 = vunpack.c.l.b16 %v3994
        %v4066 = vunpack.c.l.b16 %v3995
        %v4067 = vunpack.c.l.b16 %v3996
        %v4068 = vunpack.c.l.b16 %v3997
        %v4069 = vunpack.c.l.b16 %v3998
        %v4070 = vunpack.c.l.b16 %v3999
        %v4071 = vunpack.c.l.b16 %v4000
        %v4072 = vunpack.c.l.b16 %v4001
        %v4073 = vunpack.c.l.b16 %v4002
        %v4074 = vunpack.c.l.b16 %v4003
        %v4075 = vunpack.c.l.b16 %v4004
        %v4076 = vunpack.c.l.b16 %v4005
        %v4077 = vunpack.c.l.b16 %v4006
        %v4078 = vunpack.c.l.b16 %v4007
        %v4079 = vunpack.c.l.b16 %v4008
        %v4080 = vunpack.c.l.b16 %v4009
        %v4081 = vunpack.c.l.b16 %v4010
        %v4082 = vunpack.c.l.b16 %v4011
        %v4083 = vunpack.c.l.b16 %v4012
        %v4084 = vunpack.c.l.b16 %v4013
        %v4085 = vunpack.c.l.b16 %v4014
        %v4086 = vpack.c.b16 %v4055, %v4054
        %v4087 = vpack.c.b16 %v4057, %v4056
        %v4088 = vpack.c.b16 %v4059, %v4058
        %v4089 = vpack.c.b16 %v4061, %v4060
        %v4090 = vpack.c.b16 %v4063, %v4062
        %v4091 = vpack.c.b16 %v4065, %v4064
        %v4092 = vpack.c.b16 %v4067, %v4066
        %v4093 = vpack.c.b16 %v4069, %v4068
        %v4094 = vpack.c.b16 %v4071, %v4070
        %v4095 = vpack.c.b16 %v4073, %v4072
        %v4096 = vpack.c.b16 %v4075, %v4074
        %v4097 = vpack.c.b16 %v4077, %v4076
        %v4098 = vpack.c.b16 %v4079, %v4078
        %v4099 = vpack.c.b16 %v4081, %v4080
        %v4100 = vpack.c.b16 %v4083, %v4082
        %v4101 = vpack.c.b16 %v4085, %v4084
        %4118 = vmatprep.subr.bf16.mxu0 0
        %4119 = vmatpush1.bf16.msra.mxu0 %v4093
        %4120 = vmatprep.subr.bf16.mxu0 0
        %4121 = vmatpush1.bf16.msra.mxu0 %v4092
        %4122 = vmatprep.subr.bf16.mxu0 0
        %4123 = vmatpush1.bf16.msra.mxu0 %v4091
        %4124 = vmatprep.subr.bf16.mxu0 0
        %4125 = vmatpush1.bf16.msra.mxu0 %v4090
        %4126 = vmatprep.subr.bf16.mxu0 0
        %4127 = vmatpush1.bf16.msra.mxu0 %v4089
        %4128 = vmatprep.subr.bf16.mxu0 0
        %4129 = vmatpush1.bf16.msra.mxu0 %v4088
        %4130 = vmatprep.subr.bf16.mxu0 0
        %4131 = vmatpush1.bf16.msra.mxu0 %v4087
        %4132 = vmatprep.subr.bf16.mxu0 0
        %4133 = vmatpush1.bf16.msra.mxu0 %v4086
        %4134 = vmatprep.subr.bf16.mxu0 0
        %4135 = vmatpush2.bf16.msra.mxu0 %v4101
        %4136 = vmatprep.subr.bf16.mxu0 0
        %4137 = vmatpush2.bf16.msra.mxu0 %v4100
        %4138 = vmatprep.subr.bf16.mxu0 0
        %4139 = vmatpush2.bf16.msra.mxu0 %v4099
        %4140 = vmatprep.subr.bf16.mxu0 0
        %4141 = vmatpush2.bf16.msra.mxu0 %v4098
        %4142 = vmatprep.subr.bf16.mxu0 0
        %4143 = vmatpush2.bf16.msra.mxu0 %v4097
        %4144 = vmatprep.subr.bf16.mxu0 0
        %4145 = vmatpush2.bf16.msra.mxu0 %v4096
        %4146 = vmatprep.subr.bf16.mxu0 0
        %4147 = vmatpush2.bf16.msra.mxu0 %v4095
        %4148 = vmatprep.subr.bf16.mxu0 0
        %4149 = vmatpush2.bf16.msra.mxu0 %v4094
        %4150 = vmatprep.mubr.bf16.mxu0 %v3952
        %4151 = vmatmul.mubr.bf16.gmra.mxu0 %v3951
        %v4152 = vpop.f32.mrf.mxu0
        %v4153 = vadd.f32 %v4020, %v4152
        %v4154 = vpop.f32.mrf.mxu0
        %v4155 = vpop.f32.mrf.mxu0
        %v4156 = vadd.f32 %v4020, %v4155
        %v4157 = vpop.f32.mrf.mxu0
        %4158 = vmatprep.mubr.bf16.mxu0 %v3954
        %4159 = vmatmul.mubr.bf16.gmra.mxu0 %v3953
        %v4160 = vpop.f32.mrf.mxu0
        %v4161 = vadd.f32 %v4020, %v4160
        %v4162 = vpop.f32.mrf.mxu0
        %v4163 = vpop.f32.mrf.mxu0
        %v4164 = vadd.f32 %v4020, %v4163
        %v4165 = vpop.f32.mrf.mxu0
        %4166 = vmatprep.mubr.bf16.mxu0 %v3956
        %4167 = vmatmul.mubr.bf16.gmra.mxu0 %v3955
        %v4168 = vpop.f32.mrf.mxu0
        %v4169 = vadd.f32 %v4020, %v4168
        %v4170 = vpop.f32.mrf.mxu0
        %v4171 = vpop.f32.mrf.mxu0
        %v4172 = vadd.f32 %v4020, %v4171
        %v4173 = vpop.f32.mrf.mxu0
        %4174 = vmatprep.mubr.bf16.mxu0 %v3958
        %4175 = vmatmul.mubr.bf16.gmra.mxu0 %v3957
        %v4176 = vpop.f32.mrf.mxu0
        %v4177 = vadd.f32 %v4020, %v4176
        %v4178 = vpop.f32.mrf.mxu0
        %v4179 = vpop.f32.mrf.mxu0
        %v4180 = vadd.f32 %v4020, %v4179
        %v4181 = vpop.f32.mrf.mxu0
        %4182 = vmatprep.mubr.bf16.mxu0 %v3960
        %4183 = vmatmul.mubr.bf16.gmra.mxu0 %v3959
        %v4184 = vpop.f32.mrf.mxu0
        %v4185 = vadd.f32 %v4020, %v4184
        %v4186 = vpop.f32.mrf.mxu0
        %v4187 = vpop.f32.mrf.mxu0
        %v4188 = vadd.f32 %v4020, %v4187
        %v4189 = vpop.f32.mrf.mxu0
        %4190 = vmatprep.mubr.bf16.mxu0 %v3962
        %4191 = vmatmul.mubr.bf16.gmra.mxu0 %v3961
        %v4192 = vpop.f32.mrf.mxu0
        %v4193 = vadd.f32 %v4020, %v4192
        %v4194 = vpop.f32.mrf.mxu0
        %v4195 = vpop.f32.mrf.mxu0
        %v4196 = vadd.f32 %v4020, %v4195
        %v4197 = vpop.f32.mrf.mxu0
        %4198 = vmatprep.mubr.bf16.mxu0 %v3964
        %4199 = vmatmul.mubr.bf16.gmra.mxu0 %v3963
        %v4200 = vpop.f32.mrf.mxu0
        %v4201 = vadd.f32 %v4020, %v4200
        %v4202 = vpop.f32.mrf.mxu0
        %v4203 = vpop.f32.mrf.mxu0
        %v4204 = vadd.f32 %v4020, %v4203
        %v4205 = vpop.f32.mrf.mxu0
        %4206 = vmatprep.mubr.bf16.mxu0 %v3966
        %4207 = vmatmul.mubr.bf16.gmra.mxu0 %v3965
        %v4208 = vpop.f32.mrf.mxu0
        %v4209 = vadd.f32 %v4020, %v4208
        %v4210 = vpop.f32.mrf.mxu0
        %v4211 = vpop.f32.mrf.mxu0
        %v4212 = vadd.f32 %v4020, %v4211
        %v4213 = vpop.f32.mrf.mxu0
        %4214 = vmatprep.mubr.bf16.mxu0 %v3968
        %4215 = vmatmul.mubr.bf16.gmra.mxu0 %v3967
        %v4216 = vpop.f32.mrf.mxu0
        %v4217 = vadd.f32 %v4020, %v4216
        %v4218 = vpop.f32.mrf.mxu0
        %v4219 = vpop.f32.mrf.mxu0
        %v4220 = vadd.f32 %v4020, %v4219
        %v4221 = vpop.f32.mrf.mxu0
        %4222 = vmatprep.mubr.bf16.mxu0 %v3970
        %4223 = vmatmul.mubr.bf16.gmra.mxu0 %v3969
        %v4224 = vpop.f32.mrf.mxu0
        %v4225 = vadd.f32 %v4020, %v4224
        %v4226 = vpop.f32.mrf.mxu0
        %v4227 = vpop.f32.mrf.mxu0
        %v4228 = vadd.f32 %v4020, %v4227
        %v4229 = vpop.f32.mrf.mxu0
        %4230 = vmatprep.mubr.bf16.mxu0 %v3972
        %4231 = vmatmul.mubr.bf16.gmra.mxu0 %v3971
        %v4232 = vpop.f32.mrf.mxu0
        %v4233 = vadd.f32 %v4020, %v4232
        %v4234 = vpop.f32.mrf.mxu0
        %v4235 = vpop.f32.mrf.mxu0
        %v4236 = vadd.f32 %v4020, %v4235
        %v4237 = vpop.f32.mrf.mxu0
        %4238 = vmatprep.mubr.bf16.mxu0 %v3974
        %4239 = vmatmul.mubr.bf16.gmra.mxu0 %v3973
        %v4240 = vpop.f32.mrf.mxu0
        %v4241 = vadd.f32 %v4020, %v4240
        %v4242 = vpop.f32.mrf.mxu0
        %v4243 = vpop.f32.mrf.mxu0
        %v4244 = vadd.f32 %v4020, %v4243
        %v4245 = vpop.f32.mrf.mxu0
        %4246 = vmatprep.mubr.bf16.mxu0 %v3976
        %4247 = vmatmul.mubr.bf16.gmra.mxu0 %v3975
        %v4248 = vpop.f32.mrf.mxu0
        %v4249 = vadd.f32 %v4020, %v4248
        %v4250 = vpop.f32.mrf.mxu0
        %v4251 = vpop.f32.mrf.mxu0
        %v4252 = vadd.f32 %v4020, %v4251
        %v4253 = vpop.f32.mrf.mxu0
        %4254 = vmatprep.mubr.bf16.mxu0 %v3978
        %4255 = vmatmul.mubr.bf16.gmra.mxu0 %v3977
        %v4256 = vpop.f32.mrf.mxu0
        %v4257 = vadd.f32 %v4020, %v4256
        %v4258 = vpop.f32.mrf.mxu0
        %v4259 = vpop.f32.mrf.mxu0
        %v4260 = vadd.f32 %v4020, %v4259
        %v4261 = vpop.f32.mrf.mxu0
        %4262 = vmatprep.mubr.bf16.mxu0 %v3980
        %4263 = vmatmul.mubr.bf16.gmra.mxu0 %v3979
        %v4264 = vpop.f32.mrf.mxu0
        %v4265 = vadd.f32 %v4020, %v4264
        %v4266 = vpop.f32.mrf.mxu0
        %v4267 = vpop.f32.mrf.mxu0
        %v4268 = vadd.f32 %v4020, %v4267
        %v4269 = vpop.f32.mrf.mxu0
        %4270 = vmatprep.mubr.bf16.mxu0 %v3982
        %4271 = vmatmul.mubr.bf16.gmra.mxu0 %v3981
        %v4272 = vpop.f32.mrf.mxu0
        %v4273 = vadd.f32 %v4020, %v4272
        %v4274 = vpop.f32.mrf.mxu0
        %v4275 = vpop.f32.mrf.mxu0
        %v4276 = vadd.f32 %v4020, %v4275
        %v4277 = vpop.f32.mrf.mxu0
        %4278 = vdwg.mxu0
        %vm4279 = vcmask 7168
        %4280 = vst.msk [vmem:[%s481] sm:$0xff] %vm4279, %v4153
        %4281 = vst.msk [vmem:[%s481 + $0x8] sm:$0xff] %vm4279, %v4156
        %4282 = vst.msk [vmem:[%s481 + $0x10] sm:$0xff] %vm4279, %v4161
        %4283 = vst.msk [vmem:[%s481 + $0x18] sm:$0xff] %vm4279, %v4164
        %4284 = vst.msk [vmem:[%s481 + $0x20] sm:$0xff] %vm4279, %v4169
        %4285 = vst.msk [vmem:[%s481 + $0x28] sm:$0xff] %vm4279, %v4172
        %4286 = vst.msk [vmem:[%s481 + $0x30] sm:$0xff] %vm4279, %v4177
        %4287 = vst.msk [vmem:[%s481 + $0x38] sm:$0xff] %vm4279, %v4180
        %4288 = vst.msk [vmem:[%s481 + $0x40] sm:$0xff] %vm4279, %v4185
        %4289 = vst.msk [vmem:[%s481 + $0x48] sm:$0xff] %vm4279, %v4188
        %4290 = vst.msk [vmem:[%s481 + $0x50] sm:$0xff] %vm4279, %v4193
        %4291 = vst.msk [vmem:[%s481 + $0x58] sm:$0xff] %vm4279, %v4196
        %4292 = vst.msk [vmem:[%s481 + $0x60] sm:$0xff] %vm4279, %v4201
        %4293 = vst.msk [vmem:[%s481 + $0x68] sm:$0xff] %vm4279, %v4204
        %4294 = vst.msk [vmem:[%s481 + $0x70] sm:$0xff] %vm4279, %v4209
        %4295 = vst.msk [vmem:[%s481 + $0x78] sm:$0xff] %vm4279, %v4212
        %4296 = vst.msk [vmem:[%s481 + $0x80] sm:$0xff] %vm4279, %v4217
        %4297 = vst.msk [vmem:[%s481 + $0x88] sm:$0xff] %vm4279, %v4220
        %4298 = vst.msk [vmem:[%s481 + $0x90] sm:$0xff] %vm4279, %v4225
        %4299 = vst.msk [vmem:[%s481 + $0x98] sm:$0xff] %vm4279, %v4228
        %4300 = vst.msk [vmem:[%s481 + $0xa0] sm:$0xff] %vm4279, %v4233
        %4301 = vst.msk [vmem:[%s481 + $0xa8] sm:$0xff] %vm4279, %v4236
        %4302 = vst.msk [vmem:[%s481 + $0xb0] sm:$0xff] %vm4279, %v4241
        %4303 = vst.msk [vmem:[%s481 + $0xb8] sm:$0xff] %vm4279, %v4244
        %4304 = vst.msk [vmem:[%s481 + $0xc0] sm:$0xff] %vm4279, %v4249
        %4305 = vst.msk [vmem:[%s481 + $0xc8] sm:$0xff] %vm4279, %v4252
        %4306 = vst.msk [vmem:[%s481 + $0xd0] sm:$0xff] %vm4279, %v4257
        %4307 = vst.msk [vmem:[%s481 + $0xd8] sm:$0xff] %vm4279, %v4260
        %4308 = vst.msk [vmem:[%s481 + $0xe0] sm:$0xff] %vm4279, %v4265
        %4309 = vst.msk [vmem:[%s481 + $0xe8] sm:$0xff] %vm4279, %v4268
        %4310 = vst.msk [vmem:[%s481 + $0xf0] sm:$0xff] %vm4279, %v4273
        %4311 = vst.msk [vmem:[%s481 + $0xf8] sm:$0xff] %vm4279, %v4276
        %v4312 = vsel %vm1589, %v4153, -1e+30
        %v4313 = vsel %vm1590, %v4156, -1e+30
        %v4314 = vsel %vm1591, %v4161, -1e+30
        %v4315 = vsel %vm1592, %v4164, -1e+30
        %v4316 = vsel %vm1593, %v4169, -1e+30
        %v4317 = vsel %vm1594, %v4172, -1e+30
        %v4318 = vsel %vm1595, %v4177, -1e+30
        %v4319 = vsel %vm1596, %v4180, -1e+30
        %v4320 = vsel %vm1597, %v4185, -1e+30
        %v4321 = vsel %vm1598, %v4188, -1e+30
        %v4322 = vsel %vm1599, %v4193, -1e+30
        %v4323 = vsel %vm1600, %v4196, -1e+30
        %v4324 = vsel %vm1601, %v4201, -1e+30
        %v4325 = vsel %vm1602, %v4204, -1e+30
        %v4326 = vsel %vm1603, %v4209, -1e+30
        %v4327 = vsel %vm1604, %v4212, -1e+30
        %v4328 = vsel %vm1605, %v4217, -1e+30
        %v4329 = vsel %vm1606, %v4220, -1e+30
        %v4330 = vsel %vm1607, %v4225, -1e+30
        %v4331 = vsel %vm1608, %v4228, -1e+30
        %v4332 = vsel %vm1609, %v4233, -1e+30
        %v4333 = vsel %vm1610, %v4236, -1e+30
        %v4334 = vsel %vm1611, %v4241, -1e+30
        %v4335 = vsel %vm1612, %v4244, -1e+30
        %v4336 = vsel %vm1613, %v4249, -1e+30
        %v4337 = vsel %vm1614, %v4252, -1e+30
        %v4338 = vsel %vm1615, %v4257, -1e+30
        %v4339 = vsel %vm1616, %v4260, -1e+30
        %v4340 = vsel %vm1617, %v4265, -1e+30
        %v4341 = vsel %vm1618, %v4268, -1e+30
        %v4342 = vsel %vm1619, %v4273, -1e+30
        %v4343 = vsel %vm1620, %v4276, -1e+30
        %v4344 = vld [vmem:[%s487] sm:$0x1]
        %v4345 = vsel %vm4279, %v4312, -inf
        %v4346 = vsel %vm4279, %v4313, -inf
        %v4347 = vsel %vm4279, %v4314, -inf
        %v4348 = vsel %vm4279, %v4315, -inf
        %v4349 = vsel %vm4279, %v4316, -inf
        %v4350 = vmax.f32 %v4345, %v4349
        %v4351 = vsel %vm4279, %v4317, -inf
        %v4352 = vmax.f32 %v4346, %v4351
        %v4353 = vsel %vm4279, %v4318, -inf
        %v4354 = vmax.f32 %v4347, %v4353
        %v4355 = vsel %vm4279, %v4319, -inf
        %v4356 = vmax.f32 %v4348, %v4355
        %v4357 = vsel %vm4279, %v4320, -inf
        %v4358 = vmax.f32 %v4350, %v4357
        %v4359 = vsel %vm4279, %v4321, -inf
        %v4360 = vmax.f32 %v4352, %v4359
        %v4361 = vsel %vm4279, %v4322, -inf
        %v4362 = vmax.f32 %v4354, %v4361
        %v4363 = vsel %vm4279, %v4323, -inf
        %v4364 = vmax.f32 %v4356, %v4363
        %v4365 = vsel %vm4279, %v4324, -inf
        %v4366 = vmax.f32 %v4358, %v4365
        %v4367 = vsel %vm4279, %v4325, -inf
        %v4368 = vmax.f32 %v4360, %v4367
        %v4369 = vsel %vm4279, %v4326, -inf
        %v4370 = vmax.f32 %v4362, %v4369
        %v4371 = vsel %vm4279, %v4327, -inf
        %v4372 = vmax.f32 %v4364, %v4371
        %v4373 = vsel %vm4279, %v4328, -inf
        %v4374 = vmax.f32 %v4366, %v4373
        %v4375 = vsel %vm4279, %v4329, -inf
        %v4376 = vmax.f32 %v4368, %v4375
        %v4377 = vsel %vm4279, %v4330, -inf
        %v4378 = vmax.f32 %v4370, %v4377
        %v4379 = vsel %vm4279, %v4331, -inf
        %v4380 = vmax.f32 %v4372, %v4379
        %v4381 = vsel %vm4279, %v4332, -inf
        %v4382 = vmax.f32 %v4374, %v4381
        %v4383 = vsel %vm4279, %v4333, -inf
        %v4384 = vmax.f32 %v4376, %v4383
        %v4385 = vsel %vm4279, %v4334, -inf
        %v4386 = vmax.f32 %v4378, %v4385
        %v4387 = vsel %vm4279, %v4335, -inf
        %v4388 = vmax.f32 %v4380, %v4387
        %v4389 = vsel %vm4279, %v4336, -inf
        %v4390 = vmax.f32 %v4382, %v4389
        %v4391 = vsel %vm4279, %v4337, -inf
        %v4392 = vmax.f32 %v4384, %v4391
        %v4393 = vsel %vm4279, %v4338, -inf
        %v4394 = vmax.f32 %v4386, %v4393
        %v4395 = vsel %vm4279, %v4339, -inf
        %v4396 = vmax.f32 %v4388, %v4395
        %v4397 = vsel %vm4279, %v4340, -inf
        %v4398 = vmax.f32 %v4390, %v4397
        %v4399 = vsel %vm4279, %v4341, -inf
        %v4400 = vmax.f32 %v4392, %v4399
        %v4401 = vsel %vm4279, %v4342, -inf
        %v4402 = vmax.f32 %v4394, %v4401
        %v4403 = vsel %vm4279, %v4343, -inf
        %v4404 = vmax.f32 %v4396, %v4403
        %v4405 = vmax.f32 %v4398, %v4400
        %v4406 = vmax.f32 %v4402, %v4404
        %v4407 = vmax.f32 %v4405, %v4406
        %v4408 = vrot.slane %v4407, 4
        %v4409 = vmax.f32 %v4407, %v4408
        %v4410 = vrot.slane %v4409, 2
        %v4411 = vmax.f32 %v4409, %v4410
        %v4412 = vrot.slane %v4411, 1
        %v4413 = vmax.f32 %v4411, %v4412
        %v4414 = vmax.f32 %v4344, %v4413
        %v4415 = vsub.f32 %v4344, %v4414
        %v4416 = vmul.f32 %v4415, 1.442695
        %v4417 = vpow.pop %v4416
        %v4419 = vlaneseq
        %v4420 = vshrl.u32 %v4419, 7
        %v4421 = vsub.s32 0, %v4420
        %v4422 = vrot.slane %v4414, %v4421
        %v4424 = vsub.f32 %v4312, %v4422
        %v4425 = vsub.f32 %v4313, %v4422
        %v4426 = vsub.f32 %v4314, %v4422
        %v4427 = vsub.f32 %v4315, %v4422
        %v4428 = vsub.f32 %v4316, %v4422
        %v4429 = vsub.f32 %v4317, %v4422
        %v4430 = vsub.f32 %v4318, %v4422
        %v4431 = vsub.f32 %v4319, %v4422
        %v4432 = vsub.f32 %v4320, %v4422
        %v4433 = vsub.f32 %v4321, %v4422
        %v4434 = vsub.f32 %v4322, %v4422
        %v4435 = vsub.f32 %v4323, %v4422
        %v4436 = vsub.f32 %v4324, %v4422
        %v4437 = vsub.f32 %v4325, %v4422
        %v4438 = vsub.f32 %v4326, %v4422
        %v4439 = vsub.f32 %v4327, %v4422
        %v4440 = vsub.f32 %v4328, %v4422
        %v4441 = vsub.f32 %v4329, %v4422
        %v4442 = vsub.f32 %v4330, %v4422
        %v4443 = vsub.f32 %v4331, %v4422
        %v4444 = vsub.f32 %v4332, %v4422
        %v4445 = vsub.f32 %v4333, %v4422
        %v4446 = vsub.f32 %v4334, %v4422
        %v4447 = vsub.f32 %v4335, %v4422
        %v4448 = vsub.f32 %v4336, %v4422
        %v4449 = vsub.f32 %v4337, %v4422
        %v4450 = vsub.f32 %v4338, %v4422
        %v4451 = vsub.f32 %v4339, %v4422
        %v4452 = vsub.f32 %v4340, %v4422
        %v4453 = vsub.f32 %v4341, %v4422
        %v4454 = vsub.f32 %v4342, %v4422
        %v4455 = vsub.f32 %v4343, %v4422
        %v4456 = vmul.f32 %v4424, 1.442695
        %v4457 = vpow.pop %v4456
        %v4458 = vmul.f32 %v4425, 1.442695
        %v4459 = vpow.pop %v4458
        %v4460 = vmul.f32 %v4426, 1.442695
        %v4461 = vpow.pop %v4460
        %v4462 = vmul.f32 %v4427, 1.442695
        %v4463 = vpow.pop %v4462
        %v4464 = vmul.f32 %v4428, 1.442695
        %v4465 = vpow.pop %v4464
        %v4466 = vmul.f32 %v4429, 1.442695
        %v4467 = vpow.pop %v4466
        %v4468 = vmul.f32 %v4430, 1.442695
        %v4469 = vpow.pop %v4468
        %v4470 = vmul.f32 %v4431, 1.442695
        %v4471 = vpow.pop %v4470
        %v4472 = vmul.f32 %v4432, 1.442695
        %v4473 = vpow.pop %v4472
        %v4474 = vmul.f32 %v4433, 1.442695
        %v4475 = vpow.pop %v4474
        %v4476 = vmul.f32 %v4434, 1.442695
        %v4477 = vpow.pop %v4476
        %v4478 = vmul.f32 %v4435, 1.442695
        %v4479 = vpow.pop %v4478
        %v4480 = vmul.f32 %v4436, 1.442695
        %v4481 = vpow.pop %v4480
        %v4482 = vmul.f32 %v4437, 1.442695
        %v4483 = vpow.pop %v4482
        %v4484 = vmul.f32 %v4438, 1.442695
        %v4485 = vpow.pop %v4484
        %v4486 = vmul.f32 %v4439, 1.442695
        %v4487 = vpow.pop %v4486
        %v4488 = vmul.f32 %v4440, 1.442695
        %v4489 = vpow.pop %v4488
        %v4490 = vmul.f32 %v4441, 1.442695
        %v4491 = vpow.pop %v4490
        %v4492 = vmul.f32 %v4442, 1.442695
        %v4493 = vpow.pop %v4492
        %v4494 = vmul.f32 %v4443, 1.442695
        %v4495 = vpow.pop %v4494
        %v4496 = vmul.f32 %v4444, 1.442695
        %v4497 = vpow.pop %v4496
        %v4498 = vmul.f32 %v4445, 1.442695
        %v4499 = vpow.pop %v4498
        %v4500 = vmul.f32 %v4446, 1.442695
        %v4501 = vpow.pop %v4500
        %v4502 = vmul.f32 %v4447, 1.442695
        %v4503 = vpow.pop %v4502
        %v4504 = vmul.f32 %v4448, 1.442695
        %v4505 = vpow.pop %v4504
        %v4506 = vmul.f32 %v4449, 1.442695
        %v4507 = vpow.pop %v4506
        %v4508 = vmul.f32 %v4450, 1.442695
        %v4509 = vpow.pop %v4508
        %v4510 = vmul.f32 %v4451, 1.442695
        %v4511 = vpow.pop %v4510
        %v4512 = vmul.f32 %v4452, 1.442695
        %v4513 = vpow.pop %v4512
        %v4514 = vmul.f32 %v4453, 1.442695
        %v4515 = vpow.pop %v4514
        %v4516 = vmul.f32 %v4454, 1.442695
        %v4517 = vpow.pop %v4516
        %v4518 = vmul.f32 %v4455, 1.442695
        %v4519 = vpow.pop %v4518
        %v4520 = vld [vmem:[%s490] sm:$0x1]
        %v4521 = vmul.f32 %v4417, %v4520
        %v4522 = vsel %vm4279, %v4457, 0.0
        %v4523 = vsel %vm4279, %v4459, 0.0
        %v4524 = vadd.f32 %v4522, %v4523
        %v4525 = vsel %vm4279, %v4461, 0.0
        %v4526 = vadd.f32 %v4524, %v4525
        %v4527 = vsel %vm4279, %v4463, 0.0
        %v4528 = vadd.f32 %v4526, %v4527
        %v4529 = vsel %vm4279, %v4465, 0.0
        %v4530 = vadd.f32 %v4528, %v4529
        %v4531 = vsel %vm4279, %v4467, 0.0
        %v4532 = vadd.f32 %v4530, %v4531
        %v4533 = vsel %vm4279, %v4469, 0.0
        %v4534 = vadd.f32 %v4532, %v4533
        %v4535 = vsel %vm4279, %v4471, 0.0
        %v4536 = vadd.f32 %v4534, %v4535
        %v4537 = vsel %vm4279, %v4473, 0.0
        %v4538 = vadd.f32 %v4536, %v4537
        %v4539 = vsel %vm4279, %v4475, 0.0
        %v4540 = vadd.f32 %v4538, %v4539
        %v4541 = vsel %vm4279, %v4477, 0.0
        %v4542 = vadd.f32 %v4540, %v4541
        %v4543 = vsel %vm4279, %v4479, 0.0
        %v4544 = vadd.f32 %v4542, %v4543
        %v4545 = vsel %vm4279, %v4481, 0.0
        %v4546 = vadd.f32 %v4544, %v4545
        %v4547 = vsel %vm4279, %v4483, 0.0
        %v4548 = vadd.f32 %v4546, %v4547
        %v4549 = vsel %vm4279, %v4485, 0.0
        %v4550 = vadd.f32 %v4548, %v4549
        %v4551 = vsel %vm4279, %v4487, 0.0
        %v4552 = vadd.f32 %v4550, %v4551
        %v4553 = vsel %vm4279, %v4489, 0.0
        %v4554 = vadd.f32 %v4552, %v4553
        %v4555 = vsel %vm4279, %v4491, 0.0
        %v4556 = vadd.f32 %v4554, %v4555
        %v4557 = vsel %vm4279, %v4493, 0.0
        %v4558 = vadd.f32 %v4556, %v4557
        %v4559 = vsel %vm4279, %v4495, 0.0
        %v4560 = vadd.f32 %v4558, %v4559
        %v4561 = vsel %vm4279, %v4497, 0.0
        %v4562 = vadd.f32 %v4560, %v4561
        %v4563 = vsel %vm4279, %v4499, 0.0
        %v4564 = vadd.f32 %v4562, %v4563
        %v4565 = vsel %vm4279, %v4501, 0.0
        %v4566 = vadd.f32 %v4564, %v4565
        %v4567 = vsel %vm4279, %v4503, 0.0
        %v4568 = vadd.f32 %v4566, %v4567
        %v4569 = vsel %vm4279, %v4505, 0.0
        %v4570 = vadd.f32 %v4568, %v4569
        %v4571 = vsel %vm4279, %v4507, 0.0
        %v4572 = vadd.f32 %v4570, %v4571
        %v4573 = vsel %vm4279, %v4509, 0.0
        %v4574 = vadd.f32 %v4572, %v4573
        %v4575 = vsel %vm4279, %v4511, 0.0
        %v4576 = vadd.f32 %v4574, %v4575
        %v4577 = vsel %vm4279, %v4513, 0.0
        %v4578 = vadd.f32 %v4576, %v4577
        %v4579 = vsel %vm4279, %v4515, 0.0
        %v4580 = vadd.f32 %v4578, %v4579
        %v4581 = vsel %vm4279, %v4517, 0.0
        %v4582 = vadd.f32 %v4580, %v4581
        %v4583 = vsel %vm4279, %v4519, 0.0
        %v4584 = vadd.f32 %v4582, %v4583
        %v4585 = vrot.slane %v4584, 4
        %v4586 = vadd.f32 %v4584, %v4585
        %v4587 = vrot.slane %v4586, 2
        %v4588 = vadd.f32 %v4586, %v4587
        %v4589 = vrot.slane %v4588, 1
        %v4590 = vadd.f32 %v4588, %v4589
        %v4591 = vadd.f32 %v4521, %v4590
        %vm4592 = vcmask 0
        %4593 = vst.msk [vmem:[%s490] sm:$0x1] %vm4592, %v4591
        %v4594 = vld [vmem:[%s464] sm:$0xf]
        %4596 = vset.pattern.permute.xlu0 0
        %4597 = vperm.xlu0 %4596, %v4417
        %v4598 = vpop.permute.xlu0 %4597
        %v4600 = vlaneseq
        %v4601 = vshrl.u32 %v4600, 7
        %v4602 = vsub.s32 0, %v4601
        %v4603 = vrot.slane %v4598, %v4602
        %v4604 = vmul.f32 %v4603, %v4594
        %4605 = vxpose.xlu0.b32.start [1/16] %v4457, 128
        %4606 = vxpose.xlu0.b32.cont [2/16] %v4459, 128
        %4607 = vxpose.xlu0.b32.cont [3/16] %v4461, 128
        %4608 = vxpose.xlu0.b32.cont [4/16] %v4463, 128
        %4609 = vxpose.xlu0.b32.cont [5/16] %v4465, 128
        %4610 = vxpose.xlu0.b32.cont [6/16] %v4467, 128
        %4611 = vxpose.xlu0.b32.cont [7/16] %v4469, 128
        %4612 = vxpose.xlu0.b32.cont [8/16] %v4471, 128
        %4613 = vxpose.xlu0.b32.cont [9/16] %v4473, 128
        %4614 = vxpose.xlu0.b32.cont [10/16] %v4475, 128
        %4615 = vxpose.xlu0.b32.cont [11/16] %v4477, 128
        %4616 = vxpose.xlu0.b32.cont [12/16] %v4479, 128
        %4617 = vxpose.xlu0.b32.cont [13/16] %v4481, 128
        %4618 = vxpose.xlu0.b32.cont [14/16] %v4483, 128
        %4619 = vxpose.xlu0.b32.cont [15/16] %v4485, 128
        %4620 = vxpose.xlu0.b32.end [16/16] %v4487, 128
        %v4621 = vpop.trf.xlu0
        %v4622 = vpop.trf.xlu0
        %v4623 = vpop.trf.xlu0
        %v4624 = vpop.trf.xlu0
        %v4625 = vpop.trf.xlu0
        %v4626 = vpop.trf.xlu0
        %v4627 = vpop.trf.xlu0
        %v4628 = vpop.trf.xlu0
        %v4629 = vpop.trf.xlu0
        %v4630 = vpop.trf.xlu0
        %v4631 = vpop.trf.xlu0
        %v4632 = vpop.trf.xlu0
        %v4633 = vpop.trf.xlu0
        %v4634 = vpop.trf.xlu0
        %v4635 = vpop.trf.xlu0
        %v4636 = vpop.trf.xlu0
        %4637 = vxpose.xlu0.b32.start [1/16] %v4489, 128
        %4638 = vxpose.xlu0.b32.cont [2/16] %v4491, 128
        %4639 = vxpose.xlu0.b32.cont [3/16] %v4493, 128
        %4640 = vxpose.xlu0.b32.cont [4/16] %v4495, 128
        %4641 = vxpose.xlu0.b32.cont [5/16] %v4497, 128
        %4642 = vxpose.xlu0.b32.cont [6/16] %v4499, 128
        %4643 = vxpose.xlu0.b32.cont [7/16] %v4501, 128
        %4644 = vxpose.xlu0.b32.cont [8/16] %v4503, 128
        %4645 = vxpose.xlu0.b32.cont [9/16] %v4505, 128
        %4646 = vxpose.xlu0.b32.cont [10/16] %v4507, 128
        %4647 = vxpose.xlu0.b32.cont [11/16] %v4509, 128
        %4648 = vxpose.xlu0.b32.cont [12/16] %v4511, 128
        %4649 = vxpose.xlu0.b32.cont [13/16] %v4513, 128
        %4650 = vxpose.xlu0.b32.cont [14/16] %v4515, 128
        %4651 = vxpose.xlu0.b32.cont [15/16] %v4517, 128
        %4652 = vxpose.xlu0.b32.end [16/16] %v4519, 128
        %v4653 = vpop.trf.xlu0
        %v4654 = vpop.trf.xlu0
        %v4655 = vpop.trf.xlu0
        %v4656 = vpop.trf.xlu0
        %v4657 = vpop.trf.xlu0
        %v4658 = vpop.trf.xlu0
        %v4659 = vpop.trf.xlu0
        %v4660 = vpop.trf.xlu0
        %v4661 = vpop.trf.xlu0
        %v4662 = vpop.trf.xlu0
        %v4663 = vpop.trf.xlu0
        %v4664 = vpop.trf.xlu0
        %v4665 = vpop.trf.xlu0
        %v4666 = vpop.trf.xlu0
        %v4667 = vpop.trf.xlu0
        %v4668 = vpop.trf.xlu0
        %4669 = vmatprep.subr.mxu0 %v1746
        %4670 = vmatpush1.msra.mxu0 %v1745
        %4671 = vmatprep.subr.mxu0 %v1742
        %4672 = vmatpush1.msra.mxu0 %v1741
        %4673 = vmatprep.subr.mxu0 %v1738
        %4674 = vmatpush1.msra.mxu0 %v1737
        %4675 = vmatprep.subr.mxu0 %v1734
        %4676 = vmatpush1.msra.mxu0 %v1733
        %4677 = vmatprep.subr.mxu0 %v1730
        %4678 = vmatpush1.msra.mxu0 %v1729
        %4679 = vmatprep.subr.mxu0 %v1726
        %4680 = vmatpush1.msra.mxu0 %v1725
        %4681 = vmatprep.subr.mxu0 %v1722
        %4682 = vmatpush1.msra.mxu0 %v1721
        %4683 = vmatprep.subr.mxu0 %v1718
        %4684 = vmatpush1.msra.mxu0 %v1717
        %4685 = vmatprep.subr.mxu0 %v1714
        %4686 = vmatpush1.msra.mxu0 %v1713
        %4687 = vmatprep.subr.mxu0 %v1710
        %4688 = vmatpush1.msra.mxu0 %v1709
        %4689 = vmatprep.subr.mxu0 %v1706
        %4690 = vmatpush1.msra.mxu0 %v1705
        %4691 = vmatprep.subr.mxu0 %v1702
        %4692 = vmatpush1.msra.mxu0 %v1701
        %4693 = vmatprep.subr.mxu0 %v1698
        %4694 = vmatpush1.msra.mxu0 %v1697
        %4695 = vmatprep.subr.mxu0 %v1694
        %4696 = vmatpush1.msra.mxu0 %v1693
        %4697 = vmatprep.subr.mxu0 %v1690
        %4698 = vmatpush1.msra.mxu0 %v1689
        %4699 = vmatprep.subr.mxu0 %v1686
        %4700 = vmatpush1.msra.mxu0 %v1685
        %4701 = vmatprep.subr.mxu0 %v1810
        %4702 = vmatpush2.msra.mxu0 %v1809
        %4703 = vmatprep.subr.mxu0 %v1806
        %4704 = vmatpush2.msra.mxu0 %v1805
        %4705 = vmatprep.subr.mxu0 %v1802
        %4706 = vmatpush2.msra.mxu0 %v1801
        %4707 = vmatprep.subr.mxu0 %v1798
        %4708 = vmatpush2.msra.mxu0 %v1797
        %4709 = vmatprep.subr.mxu0 %v1794
        %4710 = vmatpush2.msra.mxu0 %v1793
        %4711 = vmatprep.subr.mxu0 %v1790
        %4712 = vmatpush2.msra.mxu0 %v1789
        %4713 = vmatprep.subr.mxu0 %v1786
        %4714 = vmatpush2.msra.mxu0 %v1785
        %4715 = vmatprep.subr.mxu0 %v1782
        %4716 = vmatpush2.msra.mxu0 %v1781
        %4717 = vmatprep.subr.mxu0 %v1778
        %4718 = vmatpush2.msra.mxu0 %v1777
        %4719 = vmatprep.subr.mxu0 %v1774
        %4720 = vmatpush2.msra.mxu0 %v1773
        %4721 = vmatprep.subr.mxu0 %v1770
        %4722 = vmatpush2.msra.mxu0 %v1769
        %4723 = vmatprep.subr.mxu0 %v1766
        %4724 = vmatpush2.msra.mxu0 %v1765
        %4725 = vmatprep.subr.mxu0 %v1762
        %4726 = vmatpush2.msra.mxu0 %v1761
        %4727 = vmatprep.subr.mxu0 %v1758
        %4728 = vmatpush2.msra.mxu0 %v1757
        %4729 = vmatprep.subr.mxu0 %v1754
        %4730 = vmatpush2.msra.mxu0 %v1753
        %4731 = vmatprep.subr.mxu0 %v1750
        %4732 = vmatpush2.msra.mxu0 %v1749
        %4733 = vmatprep.mubr.f32.mxu0 %v4653
        %4734 = vmatmul.mubr.f32.gmra.mxu0 %v4621
        %v4735 = vpop.f32.mrf.mxu0
        %v4736 = vadd.f32 0.0, %v4735
        %v4737 = vpop.f32.mrf.mxu0
        %v4738 = vadd.f32 0.0, %v4737
        %4739 = vdwg.mxu0
        %4740 = vmatprep.subr.mxu0 %v1748
        %4741 = vmatpush1.msra.mxu0 %v1747
        %4742 = vmatprep.subr.mxu0 %v1744
        %4743 = vmatpush1.msra.mxu0 %v1743
        %4744 = vmatprep.subr.mxu0 %v1740
        %4745 = vmatpush1.msra.mxu0 %v1739
        %4746 = vmatprep.subr.mxu0 %v1736
        %4747 = vmatpush1.msra.mxu0 %v1735
        %4748 = vmatprep.subr.mxu0 %v1732
        %4749 = vmatpush1.msra.mxu0 %v1731
        %4750 = vmatprep.subr.mxu0 %v1728
        %4751 = vmatpush1.msra.mxu0 %v1727
        %4752 = vmatprep.subr.mxu0 %v1724
        %4753 = vmatpush1.msra.mxu0 %v1723
        %4754 = vmatprep.subr.mxu0 %v1720
        %4755 = vmatpush1.msra.mxu0 %v1719
        %4756 = vmatprep.subr.mxu0 %v1716
        %4757 = vmatpush1.msra.mxu0 %v1715
        %4758 = vmatprep.subr.mxu0 %v1712
        %4759 = vmatpush1.msra.mxu0 %v1711
        %4760 = vmatprep.subr.mxu0 %v1708
        %4761 = vmatpush1.msra.mxu0 %v1707
        %4762 = vmatprep.subr.mxu0 %v1704
        %4763 = vmatpush1.msra.mxu0 %v1703
        %4764 = vmatprep.subr.mxu0 %v1700
        %4765 = vmatpush1.msra.mxu0 %v1699
        %4766 = vmatprep.subr.mxu0 %v1696
        %4767 = vmatpush1.msra.mxu0 %v1695
        %4768 = vmatprep.subr.mxu0 %v1692
        %4769 = vmatpush1.msra.mxu0 %v1691
        %4770 = vmatprep.subr.mxu0 %v1688
        %4771 = vmatpush1.msra.mxu0 %v1687
        %4772 = vmatprep.subr.mxu0 %v1812
        %4773 = vmatpush2.msra.mxu0 %v1811
        %4774 = vmatprep.subr.mxu0 %v1808
        %4775 = vmatpush2.msra.mxu0 %v1807
        %4776 = vmatprep.subr.mxu0 %v1804
        %4777 = vmatpush2.msra.mxu0 %v1803
        %4778 = vmatprep.subr.mxu0 %v1800
        %4779 = vmatpush2.msra.mxu0 %v1799
        %4780 = vmatprep.subr.mxu0 %v1796
        %4781 = vmatpush2.msra.mxu0 %v1795
        %4782 = vmatprep.subr.mxu0 %v1792
        %4783 = vmatpush2.msra.mxu0 %v1791
        %4784 = vmatprep.subr.mxu0 %v1788
        %4785 = vmatpush2.msra.mxu0 %v1787
        %4786 = vmatprep.subr.mxu0 %v1784
        %4787 = vmatpush2.msra.mxu0 %v1783
        %4788 = vmatprep.subr.mxu0 %v1780
        %4789 = vmatpush2.msra.mxu0 %v1779
        %4790 = vmatprep.subr.mxu0 %v1776
        %4791 = vmatpush2.msra.mxu0 %v1775
        %4792 = vmatprep.subr.mxu0 %v1772
        %4793 = vmatpush2.msra.mxu0 %v1771
        %4794 = vmatprep.subr.mxu0 %v1768
        %4795 = vmatpush2.msra.mxu0 %v1767
        %4796 = vmatprep.subr.mxu0 %v1764
        %4797 = vmatpush2.msra.mxu0 %v1763
        %4798 = vmatprep.subr.mxu0 %v1760
        %4799 = vmatpush2.msra.mxu0 %v1759
        %4800 = vmatprep.subr.mxu0 %v1756
        %4801 = vmatpush2.msra.mxu0 %v1755
        %4802 = vmatprep.subr.mxu0 %v1752
        %4803 = vmatpush2.msra.mxu0 %v1751
        %4804 = vmatprep.mubr.f32.mxu0 %v4653
        %4805 = vmatmul.mubr.f32.gmra.mxu0 %v4621
        %v4806 = vpop.f32.mrf.mxu0
        %v4807 = vadd.f32 0.0, %v4806
        %v4808 = vpop.f32.mrf.mxu0
        %v4809 = vadd.f32 0.0, %v4808
        %4810 = vdwg.mxu0
        %v4815 = vcombine.low %v4736, %v4738
        %v4816 = vcombine.low %v4807, %v4809
        %v4818 = vunpack.c.l.s4 1966171168
        %v4819 = vunpack.c.0.s8 %v4818
        %v4820 = vlaneseq
        %v4821 = vshrl.u32 %v4820, 7
        %v4822 = vsub.s32 %v4819, %v4821
        %v4823 = vrot.slane %v4815, %v4822
        %v4825 = vunpack.c.l.s4 1966171168
        %v4826 = vunpack.c.0.s8 %v4825
        %v4827 = vlaneseq
        %v4828 = vshrl.u32 %v4827, 7
        %v4829 = vsub.s32 %v4826, %v4828
        %v4830 = vrot.slane %v4816, %v4829
        %v4831 = vcombine.low %v4823, %v4830
        %v4833 = vunpack.c.l.s4 1966171168
        %v4834 = vunpack.c.0.s8 %v4833
        %v4835 = vlaneseq
        %v4836 = vshrl.u32 %v4835, 7
        %v4837 = vsub.s32 %v4834, %v4836
        %v4838 = vrot.slane %v4831, %v4837
        %v4840 = vadd.f32 %v4604, %v4838
        %v4841 = vlaneseq
        %vm4842 = vcmp.ge.s32.totalorder %v4841, 0
        %vm4843 = vcmp.lt.s32.totalorder %v4841, 512
        %vm4844 = vmand %vm4842, %vm4843
        %4845 = vst.msk [vmem:[%s464] sm:$0xf] %vm4844, %v4840
        %4846 = vst.msk [vmem:[%s487] sm:$0x1] %vm4592, %v4414
        %s4847 = smul.u32 %s35, 2
        %s4848 = sadd.s32 %s4847, %s36
        %s4849 = smul.u32 32, %s4848
        %p4850 = scmp.lt.s32.totalorder %s4849, 127
        %s4851 = scalar_select %p4850, %s4849, 127
        %s4852 = smul.addr %s4851, 8
        %s4853 = scalar_lea.vmem %s7, %s4852
        %p4854 = scmp.lt.s32.totalorder %s35, 1
        %s4855 = scalar_select %p4854, %s35, 1
        %s4856 = scalar_lea.vmem %s8, %s4855
        %p4857 = scmp.lt.s32.totalorder %s35, 1
        %s4858 = scalar_select %p4857, %s35, 1
        %s4859 = scalar_lea.vmem %s9, %s4858
        %s4860 = sand.u32 %s293, 1
        %s4861 = scalar_lea.sflag [#allocation5], %s4860
        %s4862 = sand.u32 %s293, 1
        %s4863 = smul.addr %s4862, 4
        %s4864 = scalar_lea.vmem [#allocation9], %s4863
        // Predicated region
        $region65: #{tpu_custom_call.1} parent=47 // pred_check
          %p4865 = pneg %p225
        $region66: #{tpu_custom_call.1} parent=47 // pred_check_branch
          %4867 = sbr.rel (%p4865) target = $region68
        $region67: #{tpu_custom_call.1} parent=47 // pred_region
          %s4868 = smul.u32 %s35, 2
          %s4869 = sadd.s32 %s4868, %s36
          %s4870 = smul.u32 32, %s4869
        $region68: #{tpu_custom_call.1} parent=47 // pred_fallthru
          _
        // Predicated region
        $region69: #{tpu_custom_call.1} parent=47 // pred_check
          %p4871 = pneg %p251
        $region70: #{tpu_custom_call.1} parent=47 // pred_check_branch
          %4873 = sbr.rel (%p4871) target = $region72
        $region71: #{tpu_custom_call.1} parent=47 // pred_region
          _
        $region72: #{tpu_custom_call.1} parent=47 // pred_fallthru
          _
        // Predicated region
        $region73: #{tpu_custom_call.1} parent=47 // pred_check
          %p4874 = pneg %p277
        $region74: #{tpu_custom_call.1} parent=47 // pred_check_branch
          %4876 = sbr.rel (%p4874) target = $region76
        $region75: #{tpu_custom_call.1} parent=47 // pred_region
          _
        $region76: #{tpu_custom_call.1} parent=47 // pred_fallthru
          _
        // Predicated region
        $region77: #{tpu_custom_call.1} parent=47 // pred_check
          %p4877 = pneg %p303
        $region78: #{tpu_custom_call.1} parent=47 // pred_check_branch
          %4879 = sbr.rel (%p4877) target = $region80
        $region79: #{tpu_custom_call.1} parent=47 // pred_region
          %s4881 = ssub.s32 64, 64
          %4882 = vsyncadd %s4861, %s4881
          %s4883 = smul.addr %s35, 4
          %s4884 = smul.addr %s4883, 16
          %s4885 = scalar_lea.hbm %s10, %s4884
          %s4887 = sshll.u32 %s4864, 4
          %s4888 = int_to_ptr.vmem [resolvable:$true] %s4887
          %4890 = dma.vmem_to_hbm [thread:$0]  %s4888, 64, %s4885, %s4861
        $region80: #{tpu_custom_call.1} parent=47 // pred_fallthru
          _
      $region48: #{tpu_custom_call.1} parent=5 // pred_fallthru
        _
      %p4891 = scmp.le.s32.totalorder 2, %s26
      // Predicated region
      $region81: #{tpu_custom_call.1} parent=5 // pred_check
        %p4892 = pneg %p4891
      $region82: #{tpu_custom_call.1} parent=5 // pred_check_branch
        %4894 = sbr.rel (%p4892) target = $region84
      $region83: #{tpu_custom_call.1} parent=5 // pred_region
        %s4895 = ssub.s32 %s26, 2
        // Predicated region
        $region85: #{tpu_custom_call.1} parent=83 // pred_check
          %p4896 = pneg %p231
        $region86: #{tpu_custom_call.1} parent=83 // pred_check_branch
          %4898 = sbr.rel (%p4896) target = $region88
        $region87: #{tpu_custom_call.1} parent=83 // pred_region
          %s4899 = smul.u32 %s37, 2
          %s4900 = sadd.s32 %s4899, %s38
          %s4901 = smul.u32 32, %s4900
          %p4902 = scmp.lt.s32.totalorder %s4901, 127
          %s4903 = scalar_select %p4902, %s4901, 127
          %s4904 = smul.addr %s4903, 8
          %s4905 = scalar_lea.vmem %s7, %s4904
        $region88: #{tpu_custom_call.1} parent=83 // pred_fallthru
          _
        // Predicated region
        $region89: #{tpu_custom_call.1} parent=83 // pred_check
          %p4906 = pneg %p257
        $region90: #{tpu_custom_call.1} parent=83 // pred_check_branch
          %4908 = sbr.rel (%p4906) target = $region92
        $region91: #{tpu_custom_call.1} parent=83 // pred_region
          %p4909 = scmp.lt.s32.totalorder %s37, 1
          %s4910 = scalar_select %p4909, %s37, 1
          %s4911 = scalar_lea.vmem %s8, %s4910
        $region92: #{tpu_custom_call.1} parent=83 // pred_fallthru
          _
        // Predicated region
        $region93: #{tpu_custom_call.1} parent=83 // pred_check
          %p4912 = pneg %p283
        $region94: #{tpu_custom_call.1} parent=83 // pred_check_branch
          %4914 = sbr.rel (%p4912) target = $region96
        $region95: #{tpu_custom_call.1} parent=83 // pred_region
          %p4915 = scmp.lt.s32.totalorder %s37, 1
          %s4916 = scalar_select %p4915, %s37, 1
          %s4917 = scalar_lea.vmem %s9, %s4916
        $region96: #{tpu_custom_call.1} parent=83 // pred_fallthru
          _
        // Predicated region
        $region97: #{tpu_custom_call.1} parent=83 // pred_check
          %p4918 = pneg %p309
        $region98: #{tpu_custom_call.1} parent=83 // pred_check_branch
          %4920 = sbr.rel (%p4918) target = $region100
        $region99: #{tpu_custom_call.1} parent=83 // pred_region
          %s4921 = sand.u32 %s294, 1
          %s4922 = scalar_lea.sflag [#allocation5], %s4921
          %s4923 = sand.u32 %s294, 1
          %s4924 = smul.addr %s4923, 4
          %s4925 = scalar_lea.vmem [#allocation9], %s4924
          %4926 = dma.done %s4922, 64
        $region100: #{tpu_custom_call.1} parent=83 // pred_fallthru
          _
      $region84: #{tpu_custom_call.1} parent=5 // pred_fallthru
        _
    $region6: #{tpu_custom_call.1} parent=1 // loop_footer
      %s30 = sadd.s32 1, %s26
    $region7: #{tpu_custom_call.1} parent=1 // loop_footer_branch
      %25 = sbr.rel target = $region3
    $region8: #{tpu_custom_call.1} parent=1 // loop_exit
      _
    %4927 = vsyncpa [#allocation4], 1
    %s4928 = scalar_lea.sflag [#allocation4], 1
    %4929 = vsyncpa %s4928, 1
    %4930 = vsyncpa [#allocation7], 1
    %4931 = vsyncpa [#allocation5], 1
    %s4932 = scalar_lea.sflag [#allocation5], 1
    %4933 = vsyncpa %s4932, 1

</llo_original>
